<compile_context>
chip_gen: v5e
topology: v5e:2x2
jax: 0.10.0
libtpu: 0.0.40
codegen_flags: <defaults>
</compile_context>

<pallas_src>
import functools

import jax
import jax.numpy as jnp
from jax.experimental import pallas as pl
from jax.experimental.pallas import tpu as pltpu

# Module constants (from the PyTorch file)
SPECIFIC_FIRST_LAYER = 800
SPECIFIC_SECOND_LAYER = 1100


def _elu(x):
    # PyTorch nn.ELU(alpha=1.0).  exp(min(x,0))-1 kept (vs expm1) for guaranteed Mosaic lowering.
    return jnp.where(x > 0, x, jnp.exp(jnp.minimum(x, 0.0)) - 1.0)


def _softmax_last(x):
    m = jnp.max(x, axis=-1, keepdims=True)
    e = jnp.exp(x - m)
    return e / jnp.sum(e, axis=-1, keepdims=True)


def vae_kernel(x_ref, eps_ref,
               w1_ref, b1_ref, w2_ref, b2_ref,
               wmu_ref, bmu_ref, wls_ref, bls_ref,
               wd1_ref, bd1_ref, wd2_ref, bd2_ref,
               wd3_ref, bd3_ref,
               out_ref, mu_ref, ls_ref,
               *, max_len):
    bf16 = jnp.bfloat16
    x = x_ref[...]                                                    # (TB, (L+1)*E) bf16

    # ---- encoder (bf16 MXU operands, f32 accumulate, f32 elementwise) ----
    h1 = _elu(jnp.dot(x, w1_ref[...], preferred_element_type=jnp.float32) + b1_ref[...])
    h2 = _elu(jnp.dot(h1.astype(bf16), w2_ref[...],
                      preferred_element_type=jnp.float32) + b2_ref[...])

    # ---- mu / log_sigma ----
    h2b = h2.astype(bf16)
    mu = jnp.dot(h2b, wmu_ref[...], preferred_element_type=jnp.float32) + bmu_ref[...]
    ls = jnp.dot(h2b, wls_ref[...], preferred_element_type=jnp.float32) + bls_ref[...]
    mu_ref[...] = mu
    ls_ref[...] = ls

    # ---- reparameterize (f32) ----
    z = mu + eps_ref[...] * jnp.exp(0.5 * ls)

    # ---- decoder trunk ----
    d1 = _elu(jnp.dot(z.astype(bf16), wd1_ref[...],
                      preferred_element_type=jnp.float32) + bd1_ref[...])
    d2 = _elu(jnp.dot(d1.astype(bf16), wd2_ref[...],
                      preferred_element_type=jnp.float32) + bd2_ref[...])

    # ---- fused head: single lane-dense matmul -> (TB, max_len*21 + vgenes_dim) ----
    logits = jnp.dot(d2.astype(bf16), wd3_ref[...],
                     preferred_element_type=jnp.float32) + bd3_ref[...]

    # Per-position 21-way softmaxes + v-gene softmax on column slices of the dense tile.
    for i in range(max_len):                          # static unroll; max_len is small
        lo = i * 21
        out_ref[:, lo:lo + 21] = _softmax_last(logits[:, lo:lo + 21])
    out_ref[:, max_len * 21:] = _softmax_last(logits[:, max_len * 21:])


def init_params(key, max_len, embedding_dim, vgenes_dim, encoding_dim):
    vocab_size = max_len * 20 + 2 + vgenes_dim
    in_dim = embedding_dim * (max_len + 1)
    out_dim = max_len * 21 + vgenes_dim

    keys = jax.random.split(key, 15)

    def linear(kw, kb, fan_in, fan_out):
        lim = 1.0 / (fan_in ** 0.5)
        w = jax.random.uniform(kw, (fan_in, fan_out), jnp.float32, -lim, lim)
        b = jax.random.uniform(kb, (1, fan_out), jnp.float32, -lim, lim)
        # Weights in bf16 (MXU operands / half the HBM->VMEM traffic); biases stay f32.
        return w.astype(jnp.bfloat16), b

    emb = jax.random.normal(keys[0], (vocab_size, embedding_dim), jnp.float32)
    emb = emb.at[vocab_size - 1].set(0.0)             # padding_idx = -1 -> last row zeroed

    w1, b1 = linear(keys[1], keys[2], in_dim, SPECIFIC_FIRST_LAYER)
    w2, b2 = linear(keys[3], keys[4], SPECIFIC_FIRST_LAYER, SPECIFIC_SECOND_LAYER)
    wmu, bmu = linear(keys[5], keys[6], SPECIFIC_SECOND_LAYER, encoding_dim)
    wls, bls = linear(keys[7], keys[8], SPECIFIC_SECOND_LAYER, encoding_dim)
    wd1, bd1 = linear(keys[9], keys[10], encoding_dim, SPECIFIC_SECOND_LAYER)
    wd2, bd2 = linear(keys[11], keys[12], SPECIFIC_SECOND_LAYER, SPECIFIC_FIRST_LAYER)
    wd3, bd3 = linear(keys[13], keys[14], SPECIFIC_FIRST_LAYER, out_dim)   # un-split, lane-dense

    return dict(embedding=emb,
                w1=w1, b1=b1, w2=w2, b2=b2,
                wmu=wmu, bmu=bmu, wls=wls, bls=bls,
                wd1=wd1, bd1=bd1, wd2=wd2, bd2=bd2,
                wd3=wd3, bd3=bd3)


_WEIGHT_ORDER = ("w1", "b1", "w2", "b2", "wmu", "bmu", "wls", "bls",
                 "wd1", "bd1", "wd2", "bd2", "wd3", "bd3")


@functools.partial(jax.jit, static_argnames=("max_len", "vgenes_dim", "encoding_dim"))
def cyclic_vae_forward(padded_input, eps, params, *, max_len, vgenes_dim, encoding_dim):
    B = padded_input.shape[0]
    vocab_size = max_len * 20 + 2 + vgenes_dim
    in_dim = params["w1"].shape[0]
    out_dim = max_len * 21 + vgenes_dim

    # Glue: embedding gather + flatten (torch: embedding(padded_input.long()).view(...)).
    # jnp.take clips under jit, so map negative (padding) ids to the zeroed last row.
    ids = jnp.where(padded_input < 0, vocab_size - 1, padded_input).astype(jnp.int32)
    x_emb = jnp.take(params["embedding"], ids, axis=0)
    x_flat = x_emb.reshape(B, -1).astype(jnp.bfloat16)

    # Batch tiling: weights stay resident (constant index_map), activations pipeline.
    tile_b = B if B <= 256 else 256
    grid = (pl.cdiv(B, tile_b),)

    def act_spec(feat):
        return pl.BlockSpec((tile_b, feat), lambda i: (i, 0))

    def const_spec(arr):
        return pl.BlockSpec(arr.shape, lambda i, _nd=arr.ndim: (0,) * _nd)

    weights = [params[k] for k in _WEIGHT_ORDER]
    kernel = functools.partial(vae_kernel, max_len=max_len)

    out, mu, ls = pl.pallas_call(
        kernel,
        grid=grid,
        out_shape=(
            jax.ShapeDtypeStruct((B, out_dim), jnp.float32),
            jax.ShapeDtypeStruct((B, encoding_dim), jnp.float32),
            jax.ShapeDtypeStruct((B, encoding_dim), jnp.float32),
        ),
        in_specs=[act_spec(in_dim), act_spec(encoding_dim)]
                 + [const_spec(w) for w in weights],
        out_specs=(act_spec(out_dim), act_spec(encoding_dim), act_spec(encoding_dim)),
        compiler_params=pltpu.CompilerParams(
            dimension_semantics=("parallel",),
            vmem_limit_bytes=32 << 20),
    )(x_flat, eps, *weights)

    # Output is already the concatenated (tcr softmaxes | v-gene softmax) tile.
    return out, mu, ls


if __name__ == "__main__":
    # Small shapes consistent with the module's forward.
    max_len = 8
    embedding_dim = 16
    vgenes_dim = 10
    encoding_dim = 30
    B = 2
    vocab_size = max_len * 20 + 2 + vgenes_dim    # 172

    key = jax.random.PRNGKey(0)
    k_params, k_tok, k_eps = jax.random.split(key, 3)

    params = init_params(k_params, max_len, embedding_dim, vgenes_dim, encoding_dim)
    padded_input = jax.random.randint(k_tok, (B, max_len + 1), 0, vocab_size, jnp.int32)
    padded_input = padded_input.at[:, -1].set(-1)   # exercise padding_idx=-1 path
    eps = jax.random.normal(k_eps, (B, encoding_dim), jnp.float32)

    output, x_mu, x_log_sigma = cyclic_vae_forward(
        padded_input, eps, params,
        max_len=max_len, vgenes_dim=vgenes_dim, encoding_dim=encoding_dim)

    jax.block_until_ready((output, x_mu, x_log_sigma))

    assert output.shape == (B, max_len * 21 + vgenes_dim)
    assert x_mu.shape == (B, encoding_dim)
    assert x_log_sigma.shape == (B, encoding_dim)
    assert bool(jnp.all(jnp.isfinite(output)))
    print("KERNEL_OK")
</pallas_src>

<mosaic_0001>
module attributes {stable_mosaic.version = 11 : i64} {
  func.func @vae_kernel(%arg0: i32, %arg1: memref<2x144xbf16, #tpu.memory_space<vmem>>, %arg2: memref<2x30xf32, #tpu.memory_space<vmem>>, %arg3: memref<144x800xbf16, #tpu.memory_space<vmem>>, %arg4: memref<1x800xf32, #tpu.memory_space<vmem>>, %arg5: memref<800x1100xbf16, #tpu.memory_space<vmem>>, %arg6: memref<1x1100xf32, #tpu.memory_space<vmem>>, %arg7: memref<1100x30xbf16, #tpu.memory_space<vmem>>, %arg8: memref<1x30xf32, #tpu.memory_space<vmem>>, %arg9: memref<1100x30xbf16, #tpu.memory_space<vmem>>, %arg10: memref<1x30xf32, #tpu.memory_space<vmem>>, %arg11: memref<30x1100xbf16, #tpu.memory_space<vmem>>, %arg12: memref<1x1100xf32, #tpu.memory_space<vmem>>, %arg13: memref<1100x800xbf16, #tpu.memory_space<vmem>>, %arg14: memref<1x800xf32, #tpu.memory_space<vmem>>, %arg15: memref<800x178xbf16, #tpu.memory_space<vmem>>, %arg16: memref<1x178xf32, #tpu.memory_space<vmem>>, %arg17: memref<2x178xf32, #tpu.memory_space<vmem>>, %arg18: memref<2x30xf32, #tpu.memory_space<vmem>>, %arg19: memref<2x30xf32, #tpu.memory_space<vmem>>) attributes {dimension_semantics = [#tpu.dimension_semantics<parallel>], iteration_bounds = array<i64: 1>, scalar_prefetch = 0 : i64, scratch_operands = 0 : i64, tpu.core_type = #tpu.core_type<tc>, window_params = [{transform_indices = @transform_0, window_bounds = array<i64: 2, 144>}, {transform_indices = @transform_1, window_bounds = array<i64: 2, 30>}, {pipeline_mode = #tpu.pipeline_mode<synchronous>, transform_indices = @transform_2, window_bounds = array<i64: 144, 800>}, {pipeline_mode = #tpu.pipeline_mode<synchronous>, transform_indices = @transform_3, window_bounds = array<i64: 1, 800>}, {pipeline_mode = #tpu.pipeline_mode<synchronous>, transform_indices = @transform_4, window_bounds = array<i64: 800, 1100>}, {pipeline_mode = #tpu.pipeline_mode<synchronous>, transform_indices = @transform_5, window_bounds = array<i64: 1, 1100>}, {pipeline_mode = #tpu.pipeline_mode<synchronous>, transform_indices = @transform_6, window_bounds = array<i64: 1100, 30>}, {pipeline_mode = #tpu.pipeline_mode<synchronous>, transform_indices = @transform_7, window_bounds = array<i64: 1, 30>}, {pipeline_mode = #tpu.pipeline_mode<synchronous>, transform_indices = @transform_8, window_bounds = array<i64: 1100, 30>}, {pipeline_mode = #tpu.pipeline_mode<synchronous>, transform_indices = @transform_9, window_bounds = array<i64: 1, 30>}, {pipeline_mode = #tpu.pipeline_mode<synchronous>, transform_indices = @transform_10, window_bounds = array<i64: 30, 1100>}, {pipeline_mode = #tpu.pipeline_mode<synchronous>, transform_indices = @transform_11, window_bounds = array<i64: 1, 1100>}, {pipeline_mode = #tpu.pipeline_mode<synchronous>, transform_indices = @transform_12, window_bounds = array<i64: 1100, 800>}, {pipeline_mode = #tpu.pipeline_mode<synchronous>, transform_indices = @transform_13, window_bounds = array<i64: 1, 800>}, {pipeline_mode = #tpu.pipeline_mode<synchronous>, transform_indices = @transform_14, window_bounds = array<i64: 800, 178>}, {pipeline_mode = #tpu.pipeline_mode<synchronous>, transform_indices = @transform_15, window_bounds = array<i64: 1, 178>}, {transform_indices = @transform_16, window_bounds = array<i64: 2, 178>}, {transform_indices = @transform_17, window_bounds = array<i64: 2, 30>}, {transform_indices = @transform_18, window_bounds = array<i64: 2, 30>}]} {
    %c0 = arith.constant 0 : index
    %c0_0 = arith.constant 0 : index
    %0 = vector.load %arg1[%c0, %c0_0] : memref<2x144xbf16, #tpu.memory_space<vmem>>, vector<2x144xbf16>
    %c0_1 = arith.constant 0 : index
    %c0_2 = arith.constant 0 : index
    %1 = vector.load %arg3[%c0_1, %c0_2] : memref<144x800xbf16, #tpu.memory_space<vmem>>, vector<144x800xbf16>
    %cst = arith.constant dense<0.000000e+00> : vector<2x800xf32>
    %2 = tpu.matmul %0, %1, %cst {dimension_numbers = #tpu.dot_dimension_numbers<[1], [0], [0], [1], [0, 0, 1, 1], [], []>} : vector<2x144xbf16>, vector<144x800xbf16>, vector<2x800xf32> -> vector<2x800xf32>
    %c0_3 = arith.constant 0 : index
    %c0_4 = arith.constant 0 : index
    %3 = vector.load %arg4[%c0_3, %c0_4] : memref<1x800xf32, #tpu.memory_space<vmem>>, vector<1x800xf32>
    %4 = vector.broadcast %3 : vector<1x800xf32> to vector<2x800xf32>
    %5 = arith.addf %2, %4 : vector<2x800xf32>
    %cst_5 = arith.constant 0.000000e+00 : f32
    %6 = vector.broadcast %cst_5 : f32 to vector<2x800xf32>
    %7 = arith.cmpf ogt, %5, %6 : vector<2x800xf32>
    %cst_6 = arith.constant 0.000000e+00 : f32
    %8 = vector.broadcast %cst_6 : f32 to vector<2x800xf32>
    %9 = arith.minimumf %5, %8 : vector<2x800xf32>
    %10 = math.exp %9 : vector<2x800xf32>
    %cst_7 = arith.constant 1.000000e+00 : f32
    %11 = vector.broadcast %cst_7 : f32 to vector<2x800xf32>
    %12 = arith.subf %10, %11 : vector<2x800xf32>
    %13 = arith.select %7, %5, %12 : vector<2x800xi1>, vector<2x800xf32>
    %14 = arith.truncf %13 : vector<2x800xf32> to vector<2x800xbf16>
    %c0_8 = arith.constant 0 : index
    %c0_9 = arith.constant 0 : index
    %15 = vector.load %arg5[%c0_8, %c0_9] : memref<800x1100xbf16, #tpu.memory_space<vmem>>, vector<800x1100xbf16>
    %cst_10 = arith.constant dense<0.000000e+00> : vector<2x1100xf32>
    %16 = tpu.matmul %14, %15, %cst_10 {dimension_numbers = #tpu.dot_dimension_numbers<[1], [0], [0], [1], [0, 0, 1, 1], [], []>} : vector<2x800xbf16>, vector<800x1100xbf16>, vector<2x1100xf32> -> vector<2x1100xf32>
    %c0_11 = arith.constant 0 : index
    %c0_12 = arith.constant 0 : index
    %17 = vector.load %arg6[%c0_11, %c0_12] : memref<1x1100xf32, #tpu.memory_space<vmem>>, vector<1x1100xf32>
    %18 = vector.broadcast %17 : vector<1x1100xf32> to vector<2x1100xf32>
    %19 = arith.addf %16, %18 : vector<2x1100xf32>
    %cst_13 = arith.constant 0.000000e+00 : f32
    %20 = vector.broadcast %cst_13 : f32 to vector<2x1100xf32>
    %21 = arith.cmpf ogt, %19, %20 : vector<2x1100xf32>
    %cst_14 = arith.constant 0.000000e+00 : f32
    %22 = vector.broadcast %cst_14 : f32 to vector<2x1100xf32>
    %23 = arith.minimumf %19, %22 : vector<2x1100xf32>
    %24 = math.exp %23 : vector<2x1100xf32>
    %cst_15 = arith.constant 1.000000e+00 : f32
    %25 = vector.broadcast %cst_15 : f32 to vector<2x1100xf32>
    %26 = arith.subf %24, %25 : vector<2x1100xf32>
    %27 = arith.select %21, %19, %26 : vector<2x1100xi1>, vector<2x1100xf32>
    %28 = arith.truncf %27 : vector<2x1100xf32> to vector<2x1100xbf16>
    %c0_16 = arith.constant 0 : index
    %c0_17 = arith.constant 0 : index
    %29 = vector.load %arg7[%c0_16, %c0_17] : memref<1100x30xbf16, #tpu.memory_space<vmem>>, vector<1100x30xbf16>
    %cst_18 = arith.constant dense<0.000000e+00> : vector<2x30xf32>
    %30 = tpu.matmul %28, %29, %cst_18 {dimension_numbers = #tpu.dot_dimension_numbers<[1], [0], [0], [1], [0, 0, 1, 1], [], []>} : vector<2x1100xbf16>, vector<1100x30xbf16>, vector<2x30xf32> -> vector<2x30xf32>
    %c0_19 = arith.constant 0 : index
    %c0_20 = arith.constant 0 : index
    %31 = vector.load %arg8[%c0_19, %c0_20] : memref<1x30xf32, #tpu.memory_space<vmem>>, vector<1x30xf32>
    %32 = vector.broadcast %31 : vector<1x30xf32> to vector<2x30xf32>
    %33 = arith.addf %30, %32 : vector<2x30xf32>
    %c0_21 = arith.constant 0 : index
    %c0_22 = arith.constant 0 : index
    %34 = vector.load %arg9[%c0_21, %c0_22] : memref<1100x30xbf16, #tpu.memory_space<vmem>>, vector<1100x30xbf16>
    %cst_23 = arith.constant dense<0.000000e+00> : vector<2x30xf32>
    %35 = tpu.matmul %28, %34, %cst_23 {dimension_numbers = #tpu.dot_dimension_numbers<[1], [0], [0], [1], [0, 0, 1, 1], [], []>} : vector<2x1100xbf16>, vector<1100x30xbf16>, vector<2x30xf32> -> vector<2x30xf32>
    %c0_24 = arith.constant 0 : index
    %c0_25 = arith.constant 0 : index
    %36 = vector.load %arg10[%c0_24, %c0_25] : memref<1x30xf32, #tpu.memory_space<vmem>>, vector<1x30xf32>
    %37 = vector.broadcast %36 : vector<1x30xf32> to vector<2x30xf32>
    %38 = arith.addf %35, %37 : vector<2x30xf32>
    %c0_26 = arith.constant 0 : index
    %c0_27 = arith.constant 0 : index
    %39 = vector.load %arg18[%c0_26, %c0_27] : memref<2x30xf32, #tpu.memory_space<vmem>>, vector<2x30xf32>
    tpu.vector_store %arg18[%c0_26, %c0_27], %33 {strides = array<i32>} : memref<2x30xf32, #tpu.memory_space<vmem>>, vector<2x30xf32>,
    %c0_28 = arith.constant 0 : index
    %c0_29 = arith.constant 0 : index
    %40 = vector.load %arg19[%c0_28, %c0_29] : memref<2x30xf32, #tpu.memory_space<vmem>>, vector<2x30xf32>
    tpu.vector_store %arg19[%c0_28, %c0_29], %38 {strides = array<i32>} : memref<2x30xf32, #tpu.memory_space<vmem>>, vector<2x30xf32>,
    %c0_30 = arith.constant 0 : index
    %c0_31 = arith.constant 0 : index
    %41 = vector.load %arg2[%c0_30, %c0_31] : memref<2x30xf32, #tpu.memory_space<vmem>>, vector<2x30xf32>
    %cst_32 = arith.constant 5.000000e-01 : f32
    %42 = vector.broadcast %cst_32 : f32 to vector<2x30xf32>
    %43 = arith.mulf %42, %38 : vector<2x30xf32>
    %44 = math.exp %43 : vector<2x30xf32>
    %45 = arith.mulf %41, %44 : vector<2x30xf32>
    %46 = arith.addf %33, %45 : vector<2x30xf32>
    %47 = arith.truncf %46 : vector<2x30xf32> to vector<2x30xbf16>
    %c0_33 = arith.constant 0 : index
    %c0_34 = arith.constant 0 : index
    %48 = vector.load %arg11[%c0_33, %c0_34] : memref<30x1100xbf16, #tpu.memory_space<vmem>>, vector<30x1100xbf16>
    %cst_35 = arith.constant dense<0.000000e+00> : vector<2x1100xf32>
    %49 = tpu.matmul %47, %48, %cst_35 {dimension_numbers = #tpu.dot_dimension_numbers<[1], [0], [0], [1], [0, 0, 1, 1], [], []>} : vector<2x30xbf16>, vector<30x1100xbf16>, vector<2x1100xf32> -> vector<2x1100xf32>
    %c0_36 = arith.constant 0 : index
    %c0_37 = arith.constant 0 : index
    %50 = vector.load %arg12[%c0_36, %c0_37] : memref<1x1100xf32, #tpu.memory_space<vmem>>, vector<1x1100xf32>
    %51 = vector.broadcast %50 : vector<1x1100xf32> to vector<2x1100xf32>
    %52 = arith.addf %49, %51 : vector<2x1100xf32>
    %cst_38 = arith.constant 0.000000e+00 : f32
    %53 = vector.broadcast %cst_38 : f32 to vector<2x1100xf32>
    %54 = arith.cmpf ogt, %52, %53 : vector<2x1100xf32>
    %cst_39 = arith.constant 0.000000e+00 : f32
    %55 = vector.broadcast %cst_39 : f32 to vector<2x1100xf32>
    %56 = arith.minimumf %52, %55 : vector<2x1100xf32>
    %57 = math.exp %56 : vector<2x1100xf32>
    %cst_40 = arith.constant 1.000000e+00 : f32
    %58 = vector.broadcast %cst_40 : f32 to vector<2x1100xf32>
    %59 = arith.subf %57, %58 : vector<2x1100xf32>
    %60 = arith.select %54, %52, %59 : vector<2x1100xi1>, vector<2x1100xf32>
    %61 = arith.truncf %60 : vector<2x1100xf32> to vector<2x1100xbf16>
    %c0_41 = arith.constant 0 : index
    %c0_42 = arith.constant 0 : index
    %62 = vector.load %arg13[%c0_41, %c0_42] : memref<1100x800xbf16, #tpu.memory_space<vmem>>, vector<1100x800xbf16>
    %cst_43 = arith.constant dense<0.000000e+00> : vector<2x800xf32>
    %63 = tpu.matmul %61, %62, %cst_43 {dimension_numbers = #tpu.dot_dimension_numbers<[1], [0], [0], [1], [0, 0, 1, 1], [], []>} : vector<2x1100xbf16>, vector<1100x800xbf16>, vector<2x800xf32> -> vector<2x800xf32>
    %c0_44 = arith.constant 0 : index
    %c0_45 = arith.constant 0 : index
    %64 = vector.load %arg14[%c0_44, %c0_45] : memref<1x800xf32, #tpu.memory_space<vmem>>, vector<1x800xf32>
    %65 = vector.broadcast %64 : vector<1x800xf32> to vector<2x800xf32>
    %66 = arith.addf %63, %65 : vector<2x800xf32>
    %cst_46 = arith.constant 0.000000e+00 : f32
    %67 = vector.broadcast %cst_46 : f32 to vector<2x800xf32>
    %68 = arith.cmpf ogt, %66, %67 : vector<2x800xf32>
    %cst_47 = arith.constant 0.000000e+00 : f32
    %69 = vector.broadcast %cst_47 : f32 to vector<2x800xf32>
    %70 = arith.minimumf %66, %69 : vector<2x800xf32>
    %71 = math.exp %70 : vector<2x800xf32>
    %cst_48 = arith.constant 1.000000e+00 : f32
    %72 = vector.broadcast %cst_48 : f32 to vector<2x800xf32>
    %73 = arith.subf %71, %72 : vector<2x800xf32>
    %74 = arith.select %68, %66, %73 : vector<2x800xi1>, vector<2x800xf32>
    %75 = arith.truncf %74 : vector<2x800xf32> to vector<2x800xbf16>
    %c0_49 = arith.constant 0 : index
    %c0_50 = arith.constant 0 : index
    %76 = vector.load %arg15[%c0_49, %c0_50] : memref<800x178xbf16, #tpu.memory_space<vmem>>, vector<800x178xbf16>
    %cst_51 = arith.constant dense<0.000000e+00> : vector<2x178xf32>
    %77 = tpu.matmul %75, %76, %cst_51 {dimension_numbers = #tpu.dot_dimension_numbers<[1], [0], [0], [1], [0, 0, 1, 1], [], []>} : vector<2x800xbf16>, vector<800x178xbf16>, vector<2x178xf32> -> vector<2x178xf32>
    %c0_52 = arith.constant 0 : index
    %c0_53 = arith.constant 0 : index
    %78 = vector.load %arg16[%c0_52, %c0_53] : memref<1x178xf32, #tpu.memory_space<vmem>>, vector<1x178xf32>
    %79 = vector.broadcast %78 : vector<1x178xf32> to vector<2x178xf32>
    %80 = arith.addf %77, %79 : vector<2x178xf32>
    %81 = vector.extract_strided_slice %80 {offsets = [0, 0], sizes = [2, 21], strides = [1, 1]} : vector<2x178xf32> to vector<2x21xf32>
    %cst_54 = arith.constant dense<0xFF800000> : vector<2xf32>
    %82 = vector.multi_reduction <maximumf>, %81, %cst_54 [1] : vector<2x21xf32> to vector<2xf32>
    %83 = vector.shape_cast %82 : vector<2xf32> to vector<2x1xf32>
    %84 = vector.broadcast %83 : vector<2x1xf32> to vector<2x21xf32>
    %85 = arith.subf %81, %84 : vector<2x21xf32>
    %86 = math.exp %85 : vector<2x21xf32>
    %cst_55 = arith.constant dense<0.000000e+00> : vector<2xf32>
    %87 = vector.multi_reduction <add>, %86, %cst_55 [1] : vector<2x21xf32> to vector<2xf32>
    %88 = vector.shape_cast %87 : vector<2xf32> to vector<2x1xf32>
    %89 = vector.broadcast %88 : vector<2x1xf32> to vector<2x21xf32>
    %90 = arith.divf %86, %89 : vector<2x21xf32>
    %c0_56 = arith.constant 0 : index
    %c0_57 = arith.constant 0 : index
    %91 = vector.load %arg17[%c0_56, %c0_57] : memref<2x178xf32, #tpu.memory_space<vmem>>, vector<2x21xf32>
    tpu.vector_store %arg17[%c0_56, %c0_57], %90 {strides = array<i32>} : memref<2x178xf32, #tpu.memory_space<vmem>>, vector<2x21xf32>,
    %92 = vector.extract_strided_slice %80 {offsets = [0, 21], sizes = [2, 21], strides = [1, 1]} : vector<2x178xf32> to vector<2x21xf32>
    %cst_58 = arith.constant dense<0xFF800000> : vector<2xf32>
    %93 = vector.multi_reduction <maximumf>, %92, %cst_58 [1] : vector<2x21xf32> to vector<2xf32>
    %94 = vector.shape_cast %93 : vector<2xf32> to vector<2x1xf32>
    %95 = vector.broadcast %94 : vector<2x1xf32> to vector<2x21xf32>
    %96 = arith.subf %92, %95 : vector<2x21xf32>
    %97 = math.exp %96 : vector<2x21xf32>
    %cst_59 = arith.constant dense<0.000000e+00> : vector<2xf32>
    %98 = vector.multi_reduction <add>, %97, %cst_59 [1] : vector<2x21xf32> to vector<2xf32>
    %99 = vector.shape_cast %98 : vector<2xf32> to vector<2x1xf32>
    %100 = vector.broadcast %99 : vector<2x1xf32> to vector<2x21xf32>
    %101 = arith.divf %97, %100 : vector<2x21xf32>
    %c0_60 = arith.constant 0 : index
    %c21 = arith.constant 21 : index
    %102 = vector.load %arg17[%c0_60, %c21] : memref<2x178xf32, #tpu.memory_space<vmem>>, vector<2x21xf32>
    tpu.vector_store %arg17[%c0_60, %c21], %101 {strides = array<i32>} : memref<2x178xf32, #tpu.memory_space<vmem>>, vector<2x21xf32>,
    %103 = vector.extract_strided_slice %80 {offsets = [0, 42], sizes = [2, 21], strides = [1, 1]} : vector<2x178xf32> to vector<2x21xf32>
    %cst_61 = arith.constant dense<0xFF800000> : vector<2xf32>
    %104 = vector.multi_reduction <maximumf>, %103, %cst_61 [1] : vector<2x21xf32> to vector<2xf32>
    %105 = vector.shape_cast %104 : vector<2xf32> to vector<2x1xf32>
    %106 = vector.broadcast %105 : vector<2x1xf32> to vector<2x21xf32>
    %107 = arith.subf %103, %106 : vector<2x21xf32>
    %108 = math.exp %107 : vector<2x21xf32>
    %cst_62 = arith.constant dense<0.000000e+00> : vector<2xf32>
    %109 = vector.multi_reduction <add>, %108, %cst_62 [1] : vector<2x21xf32> to vector<2xf32>
    %110 = vector.shape_cast %109 : vector<2xf32> to vector<2x1xf32>
    %111 = vector.broadcast %110 : vector<2x1xf32> to vector<2x21xf32>
    %112 = arith.divf %108, %111 : vector<2x21xf32>
    %c0_63 = arith.constant 0 : index
    %c42 = arith.constant 42 : index
    %113 = vector.load %arg17[%c0_63, %c42] : memref<2x178xf32, #tpu.memory_space<vmem>>, vector<2x21xf32>
    tpu.vector_store %arg17[%c0_63, %c42], %112 {strides = array<i32>} : memref<2x178xf32, #tpu.memory_space<vmem>>, vector<2x21xf32>,
    %114 = vector.extract_strided_slice %80 {offsets = [0, 63], sizes = [2, 21], strides = [1, 1]} : vector<2x178xf32> to vector<2x21xf32>
    %cst_64 = arith.constant dense<0xFF800000> : vector<2xf32>
    %115 = vector.multi_reduction <maximumf>, %114, %cst_64 [1] : vector<2x21xf32> to vector<2xf32>
    %116 = vector.shape_cast %115 : vector<2xf32> to vector<2x1xf32>
    %117 = vector.broadcast %116 : vector<2x1xf32> to vector<2x21xf32>
    %118 = arith.subf %114, %117 : vector<2x21xf32>
    %119 = math.exp %118 : vector<2x21xf32>
    %cst_65 = arith.constant dense<0.000000e+00> : vector<2xf32>
    %120 = vector.multi_reduction <add>, %119, %cst_65 [1] : vector<2x21xf32> to vector<2xf32>
    %121 = vector.shape_cast %120 : vector<2xf32> to vector<2x1xf32>
    %122 = vector.broadcast %121 : vector<2x1xf32> to vector<2x21xf32>
    %123 = arith.divf %119, %122 : vector<2x21xf32>
    %c0_66 = arith.constant 0 : index
    %c63 = arith.constant 63 : index
    %124 = vector.load %arg17[%c0_66, %c63] : memref<2x178xf32, #tpu.memory_space<vmem>>, vector<2x21xf32>
    tpu.vector_store %arg17[%c0_66, %c63], %123 {strides = array<i32>} : memref<2x178xf32, #tpu.memory_space<vmem>>, vector<2x21xf32>,
    %125 = vector.extract_strided_slice %80 {offsets = [0, 84], sizes = [2, 21], strides = [1, 1]} : vector<2x178xf32> to vector<2x21xf32>
    %cst_67 = arith.constant dense<0xFF800000> : vector<2xf32>
    %126 = vector.multi_reduction <maximumf>, %125, %cst_67 [1] : vector<2x21xf32> to vector<2xf32>
    %127 = vector.shape_cast %126 : vector<2xf32> to vector<2x1xf32>
    %128 = vector.broadcast %127 : vector<2x1xf32> to vector<2x21xf32>
    %129 = arith.subf %125, %128 : vector<2x21xf32>
    %130 = math.exp %129 : vector<2x21xf32>
    %cst_68 = arith.constant dense<0.000000e+00> : vector<2xf32>
    %131 = vector.multi_reduction <add>, %130, %cst_68 [1] : vector<2x21xf32> to vector<2xf32>
    %132 = vector.shape_cast %131 : vector<2xf32> to vector<2x1xf32>
    %133 = vector.broadcast %132 : vector<2x1xf32> to vector<2x21xf32>
    %134 = arith.divf %130, %133 : vector<2x21xf32>
    %c0_69 = arith.constant 0 : index
    %c84 = arith.constant 84 : index
    %135 = vector.load %arg17[%c0_69, %c84] : memref<2x178xf32, #tpu.memory_space<vmem>>, vector<2x21xf32>
    tpu.vector_store %arg17[%c0_69, %c84], %134 {strides = array<i32>} : memref<2x178xf32, #tpu.memory_space<vmem>>, vector<2x21xf32>,
    %136 = vector.extract_strided_slice %80 {offsets = [0, 105], sizes = [2, 21], strides = [1, 1]} : vector<2x178xf32> to vector<2x21xf32>
    %cst_70 = arith.constant dense<0xFF800000> : vector<2xf32>
    %137 = vector.multi_reduction <maximumf>, %136, %cst_70 [1] : vector<2x21xf32> to vector<2xf32>
    %138 = vector.shape_cast %137 : vector<2xf32> to vector<2x1xf32>
    %139 = vector.broadcast %138 : vector<2x1xf32> to vector<2x21xf32>
    %140 = arith.subf %136, %139 : vector<2x21xf32>
    %141 = math.exp %140 : vector<2x21xf32>
    %cst_71 = arith.constant dense<0.000000e+00> : vector<2xf32>
    %142 = vector.multi_reduction <add>, %141, %cst_71 [1] : vector<2x21xf32> to vector<2xf32>
    %143 = vector.shape_cast %142 : vector<2xf32> to vector<2x1xf32>
    %144 = vector.broadcast %143 : vector<2x1xf32> to vector<2x21xf32>
    %145 = arith.divf %141, %144 : vector<2x21xf32>
    %c0_72 = arith.constant 0 : index
    %c105 = arith.constant 105 : index
    %146 = vector.load %arg17[%c0_72, %c105] : memref<2x178xf32, #tpu.memory_space<vmem>>, vector<2x21xf32>
    tpu.vector_store %arg17[%c0_72, %c105], %145 {strides = array<i32>} : memref<2x178xf32, #tpu.memory_space<vmem>>, vector<2x21xf32>,
    %147 = vector.extract_strided_slice %80 {offsets = [0, 126], sizes = [2, 21], strides = [1, 1]} : vector<2x178xf32> to vector<2x21xf32>
    %cst_73 = arith.constant dense<0xFF800000> : vector<2xf32>
    %148 = vector.multi_reduction <maximumf>, %147, %cst_73 [1] : vector<2x21xf32> to vector<2xf32>
    %149 = vector.shape_cast %148 : vector<2xf32> to vector<2x1xf32>
    %150 = vector.broadcast %149 : vector<2x1xf32> to vector<2x21xf32>
    %151 = arith.subf %147, %150 : vector<2x21xf32>
    %152 = math.exp %151 : vector<2x21xf32>
    %cst_74 = arith.constant dense<0.000000e+00> : vector<2xf32>
    %153 = vector.multi_reduction <add>, %152, %cst_74 [1] : vector<2x21xf32> to vector<2xf32>
    %154 = vector.shape_cast %153 : vector<2xf32> to vector<2x1xf32>
    %155 = vector.broadcast %154 : vector<2x1xf32> to vector<2x21xf32>
    %156 = arith.divf %152, %155 : vector<2x21xf32>
    %c0_75 = arith.constant 0 : index
    %c126 = arith.constant 126 : index
    %157 = vector.load %arg17[%c0_75, %c126] : memref<2x178xf32, #tpu.memory_space<vmem>>, vector<2x21xf32>
    tpu.vector_store %arg17[%c0_75, %c126], %156 {strides = array<i32>} : memref<2x178xf32, #tpu.memory_space<vmem>>, vector<2x21xf32>,
    %158 = vector.extract_strided_slice %80 {offsets = [0, 147], sizes = [2, 21], strides = [1, 1]} : vector<2x178xf32> to vector<2x21xf32>
    %cst_76 = arith.constant dense<0xFF800000> : vector<2xf32>
    %159 = vector.multi_reduction <maximumf>, %158, %cst_76 [1] : vector<2x21xf32> to vector<2xf32>
    %160 = vector.shape_cast %159 : vector<2xf32> to vector<2x1xf32>
    %161 = vector.broadcast %160 : vector<2x1xf32> to vector<2x21xf32>
    %162 = arith.subf %158, %161 : vector<2x21xf32>
    %163 = math.exp %162 : vector<2x21xf32>
    %cst_77 = arith.constant dense<0.000000e+00> : vector<2xf32>
    %164 = vector.multi_reduction <add>, %163, %cst_77 [1] : vector<2x21xf32> to vector<2xf32>
    %165 = vector.shape_cast %164 : vector<2xf32> to vector<2x1xf32>
    %166 = vector.broadcast %165 : vector<2x1xf32> to vector<2x21xf32>
    %167 = arith.divf %163, %166 : vector<2x21xf32>
    %c0_78 = arith.constant 0 : index
    %c147 = arith.constant 147 : index
    %168 = vector.load %arg17[%c0_78, %c147] : memref<2x178xf32, #tpu.memory_space<vmem>>, vector<2x21xf32>
    tpu.vector_store %arg17[%c0_78, %c147], %167 {strides = array<i32>} : memref<2x178xf32, #tpu.memory_space<vmem>>, vector<2x21xf32>,
    %169 = vector.extract_strided_slice %80 {offsets = [0, 168], sizes = [2, 10], strides = [1, 1]} : vector<2x178xf32> to vector<2x10xf32>
    %cst_79 = arith.constant dense<0xFF800000> : vector<2xf32>
    %170 = vector.multi_reduction <maximumf>, %169, %cst_79 [1] : vector<2x10xf32> to vector<2xf32>
    %171 = vector.shape_cast %170 : vector<2xf32> to vector<2x1xf32>
    %172 = vector.broadcast %171 : vector<2x1xf32> to vector<2x10xf32>
    %173 = arith.subf %169, %172 : vector<2x10xf32>
    %174 = math.exp %173 : vector<2x10xf32>
    %cst_80 = arith.constant dense<0.000000e+00> : vector<2xf32>
    %175 = vector.multi_reduction <add>, %174, %cst_80 [1] : vector<2x10xf32> to vector<2xf32>
    %176 = vector.shape_cast %175 : vector<2xf32> to vector<2x1xf32>
    %177 = vector.broadcast %176 : vector<2x1xf32> to vector<2x10xf32>
    %178 = arith.divf %174, %177 : vector<2x10xf32>
    %c0_81 = arith.constant 0 : index
    %c168 = arith.constant 168 : index
    %179 = vector.load %arg17[%c0_81, %c168] : memref<2x178xf32, #tpu.memory_space<vmem>>, vector<2x10xf32>
    tpu.vector_store %arg17[%c0_81, %c168], %178 {strides = array<i32>} : memref<2x178xf32, #tpu.memory_space<vmem>>, vector<2x10xf32>,
    return
  }
  func.func @transform_0(%arg0: i32) -> (i32, i32) {
    %c0_i32 = arith.constant 0 : i32
    %c0_i32_0 = arith.constant 0 : i32
    return %arg0, %c0_i32 : i32, i32
  }
  func.func @transform_1(%arg0: i32) -> (i32, i32) {
    %c0_i32 = arith.constant 0 : i32
    %c0_i32_0 = arith.constant 0 : i32
    return %arg0, %c0_i32 : i32, i32
  }
  func.func @transform_2(%arg0: i32) -> (i32, i32) {
    %c0_i32 = arith.constant 0 : i32
    %c0_i32_0 = arith.constant 0 : i32
    %c0_i32_1 = arith.constant 0 : i32
    return %c0_i32, %c0_i32_0 : i32, i32
  }
  func.func @transform_3(%arg0: i32) -> (i32, i32) {
    %c0_i32 = arith.constant 0 : i32
    %c0_i32_0 = arith.constant 0 : i32
    %c0_i32_1 = arith.constant 0 : i32
    return %c0_i32, %c0_i32_0 : i32, i32
  }
  func.func @transform_4(%arg0: i32) -> (i32, i32) {
    %c0_i32 = arith.constant 0 : i32
    %c0_i32_0 = arith.constant 0 : i32
    %c0_i32_1 = arith.constant 0 : i32
    return %c0_i32, %c0_i32_0 : i32, i32
  }
  func.func @transform_5(%arg0: i32) -> (i32, i32) {
    %c0_i32 = arith.constant 0 : i32
    %c0_i32_0 = arith.constant 0 : i32
    %c0_i32_1 = arith.constant 0 : i32
    return %c0_i32, %c0_i32_0 : i32, i32
  }
  func.func @transform_6(%arg0: i32) -> (i32, i32) {
    %c0_i32 = arith.constant 0 : i32
    %c0_i32_0 = arith.constant 0 : i32
    %c0_i32_1 = arith.constant 0 : i32
    return %c0_i32, %c0_i32_0 : i32, i32
  }
  func.func @transform_7(%arg0: i32) -> (i32, i32) {
    %c0_i32 = arith.constant 0 : i32
    %c0_i32_0 = arith.constant 0 : i32
    %c0_i32_1 = arith.constant 0 : i32
    return %c0_i32, %c0_i32_0 : i32, i32
  }
  func.func @transform_8(%arg0: i32) -> (i32, i32) {
    %c0_i32 = arith.constant 0 : i32
    %c0_i32_0 = arith.constant 0 : i32
    %c0_i32_1 = arith.constant 0 : i32
    return %c0_i32, %c0_i32_0 : i32, i32
  }
  func.func @transform_9(%arg0: i32) -> (i32, i32) {
    %c0_i32 = arith.constant 0 : i32
    %c0_i32_0 = arith.constant 0 : i32
    %c0_i32_1 = arith.constant 0 : i32
    return %c0_i32, %c0_i32_0 : i32, i32
  }
  func.func @transform_10(%arg0: i32) -> (i32, i32) {
    %c0_i32 = arith.constant 0 : i32
    %c0_i32_0 = arith.constant 0 : i32
    %c0_i32_1 = arith.constant 0 : i32
    return %c0_i32, %c0_i32_0 : i32, i32
  }
  func.func @transform_11(%arg0: i32) -> (i32, i32) {
    %c0_i32 = arith.constant 0 : i32
    %c0_i32_0 = arith.constant 0 : i32
    %c0_i32_1 = arith.constant 0 : i32
    return %c0_i32, %c0_i32_0 : i32, i32
  }
  func.func @transform_12(%arg0: i32) -> (i32, i32) {
    %c0_i32 = arith.constant 0 : i32
    %c0_i32_0 = arith.constant 0 : i32
    %c0_i32_1 = arith.constant 0 : i32
    return %c0_i32, %c0_i32_0 : i32, i32
  }
  func.func @transform_13(%arg0: i32) -> (i32, i32) {
    %c0_i32 = arith.constant 0 : i32
    %c0_i32_0 = arith.constant 0 : i32
    %c0_i32_1 = arith.constant 0 : i32
    return %c0_i32, %c0_i32_0 : i32, i32
  }
  func.func @transform_14(%arg0: i32) -> (i32, i32) {
    %c0_i32 = arith.constant 0 : i32
    %c0_i32_0 = arith.constant 0 : i32
    %c0_i32_1 = arith.constant 0 : i32
    return %c0_i32, %c0_i32_0 : i32, i32
  }
  func.func @transform_15(%arg0: i32) -> (i32, i32) {
    %c0_i32 = arith.constant 0 : i32
    %c0_i32_0 = arith.constant 0 : i32
    %c0_i32_1 = arith.constant 0 : i32
    return %c0_i32, %c0_i32_0 : i32, i32
  }
  func.func @transform_16(%arg0: i32) -> (i32, i32) {
    %c0_i32 = arith.constant 0 : i32
    %c0_i32_0 = arith.constant 0 : i32
    return %arg0, %c0_i32 : i32, i32
  }
  func.func @transform_17(%arg0: i32) -> (i32, i32) {
    %c0_i32 = arith.constant 0 : i32
    %c0_i32_0 = arith.constant 0 : i32
    return %arg0, %c0_i32 : i32, i32
  }
  func.func @transform_18(%arg0: i32) -> (i32, i32) {
    %c0_i32 = arith.constant 0 : i32
    %c0_i32_0 = arith.constant 0 : i32
    return %arg0, %c0_i32 : i32, i32
  }
}

</mosaic_0001>

<llo_original>
// kernel: cyclic_vae_forward.1
$region0: #{cyclic_vae_forward.1}
  #allocation0 [shape = 'u32[]', space=smem, size = 0x4, offset = 0x4, fixed_abs, tag = 'smem constant byte address 0x4 - core index']
  #allocation1 [shape = 'u32[72,128]{1,0:T(1,128)}', space=vmem, size = 0x9000, scoped, tag = 'internal scratch']
  %s0 = inlined_call_operand.vmem [shape: bf16[2,144], index: 0, kind: input, shape index: {}]
  %s1 = inlined_call_operand.vmem [shape: f32[2,30], index: 1, kind: input, shape index: {}]
  %s2 = inlined_call_operand.vmem [shape: bf16[144,800], index: 2, kind: input, shape index: {}]
  %s3 = inlined_call_operand.vmem [shape: f32[1,800], index: 3, kind: input, shape index: {}]
  %s4 = inlined_call_operand.vmem [shape: bf16[800,1100], index: 4, kind: input, shape index: {}]
  %s5 = inlined_call_operand.vmem [shape: f32[1,1100], index: 5, kind: input, shape index: {}]
  %s6 = inlined_call_operand.vmem [shape: bf16[1100,30], index: 6, kind: input, shape index: {}]
  %s7 = inlined_call_operand.vmem [shape: f32[1,30], index: 7, kind: input, shape index: {}]
  %s8 = inlined_call_operand.vmem [shape: bf16[1100,30], index: 8, kind: input, shape index: {}]
  %s9 = inlined_call_operand.vmem [shape: f32[1,30], index: 9, kind: input, shape index: {}]
  %s10 = inlined_call_operand.vmem [shape: bf16[30,1100], index: 10, kind: input, shape index: {}]
  %s11 = inlined_call_operand.vmem [shape: f32[1,1100], index: 11, kind: input, shape index: {}]
  %s12 = inlined_call_operand.vmem [shape: bf16[1100,800], index: 12, kind: input, shape index: {}]
  %s13 = inlined_call_operand.vmem [shape: f32[1,800], index: 13, kind: input, shape index: {}]
  %s14 = inlined_call_operand.vmem [shape: bf16[800,178], index: 14, kind: input, shape index: {}]
  %s15 = inlined_call_operand.vmem [shape: f32[1,178], index: 15, kind: input, shape index: {}]
  %s16 = inlined_call_operand.hbm [shape: f32[2,178], index: 16, kind: output, shape index: {0}]
  %s17 = inlined_call_operand.hbm [shape: f32[2,30], index: 17, kind: output, shape index: {1}]
  %s18 = inlined_call_operand.hbm [shape: f32[2,30], index: 18, kind: output, shape index: {2}]
  %19 = xla_tuple %s16, %s17, %s18
  %s20 = sld [smem:[#allocation0]]
  $region90: #{cyclic_vae_forward.1} parent=0
    _
  %s22 = ssub.s32 1, %s20
  %s23 = scalar_select 0, %s22, %s20
  $region1: #{cyclic_vae_forward.1} parent=0
    #allocation2 [shape = 'u8[2048]{0}', space=vmem, size = 0x800, scoped, tag = 'output window, operand 0, single buffered']
    #allocation3 [shape = 's32[1]{0}', space=sflag, size = 0x4, scoped, tag = 'scoped memory for cyclic_vae_forward.1']
    #allocation4 [shape = 'u8[1024]{0}', space=vmem, size = 0x400, scoped, tag = 'output window, operand 1, single buffered']
    #allocation5 [shape = 's32[1]{0}', space=sflag, size = 0x4, scoped, tag = 'scoped memory for cyclic_vae_forward.1']
    #allocation6 [shape = 'u8[1024]{0}', space=vmem, size = 0x400, scoped, tag = 'output window, operand 2, single buffered']
    %24 = vsyncpa [#allocation3], 0
    %25 = vsyncpa [#allocation5], 0
    // Predicated region
    $region2: #{cyclic_vae_forward.1} parent=1 // pred_check
      _
    $region3: #{cyclic_vae_forward.1} parent=1 // pred_check_branch
      %27 = sbr.rel (0) target = $region5
    $region4: #{cyclic_vae_forward.1} parent=1 // pred_region
      _
    $region5: #{cyclic_vae_forward.1} parent=1 // pred_fallthru
      _
    // Predicated region
    $region6: #{cyclic_vae_forward.1} parent=1 // pred_check
      _
    $region7: #{cyclic_vae_forward.1} parent=1 // pred_check_branch
      %29 = sbr.rel (0) target = $region9
    $region8: #{cyclic_vae_forward.1} parent=1 // pred_region
      _
    $region9: #{cyclic_vae_forward.1} parent=1 // pred_fallthru
      _
    // Predicated region
    $region10: #{cyclic_vae_forward.1} parent=1 // pred_check
      _
    $region11: #{cyclic_vae_forward.1} parent=1 // pred_check_branch
      %31 = sbr.rel (0) target = $region13
    $region12: #{cyclic_vae_forward.1} parent=1 // pred_region
      _
    $region13: #{cyclic_vae_forward.1} parent=1 // pred_fallthru
      _
    // Predicated region
    $region14: #{cyclic_vae_forward.1} parent=1 // pred_check
      _
    $region15: #{cyclic_vae_forward.1} parent=1 // pred_check_branch
      %33 = sbr.rel (0) target = $region17
    $region16: #{cyclic_vae_forward.1} parent=1 // pred_region
      _
    $region17: #{cyclic_vae_forward.1} parent=1 // pred_fallthru
      _
    // Predicated region
    $region18: #{cyclic_vae_forward.1} parent=1 // pred_check
      _
    $region19: #{cyclic_vae_forward.1} parent=1 // pred_check_branch
      %35 = sbr.rel (0) target = $region21
    $region20: #{cyclic_vae_forward.1} parent=1 // pred_region
      _
    $region21: #{cyclic_vae_forward.1} parent=1 // pred_fallthru
      _
    // Predicated region
    $region22: #{cyclic_vae_forward.1} parent=1 // pred_check
      _
    $region23: #{cyclic_vae_forward.1} parent=1 // pred_check_branch
      %37 = sbr.rel (0) target = $region25
    $region24: #{cyclic_vae_forward.1} parent=1 // pred_region
      _
    $region25: #{cyclic_vae_forward.1} parent=1 // pred_fallthru
      _
    // Predicated region
    $region26: #{cyclic_vae_forward.1} parent=1 // pred_check
      _
    $region27: #{cyclic_vae_forward.1} parent=1 // pred_check_branch
      %39 = sbr.rel (0) target = $region29
    $region28: #{cyclic_vae_forward.1} parent=1 // pred_region
      _
    $region29: #{cyclic_vae_forward.1} parent=1 // pred_fallthru
      _
    // Predicated region
    $region30: #{cyclic_vae_forward.1} parent=1 // pred_check
      _
    $region31: #{cyclic_vae_forward.1} parent=1 // pred_check_branch
      %41 = sbr.rel (0) target = $region33
    $region32: #{cyclic_vae_forward.1} parent=1 // pred_region
      _
    $region33: #{cyclic_vae_forward.1} parent=1 // pred_fallthru
      _
    // Predicated region
    $region34: #{cyclic_vae_forward.1} parent=1 // pred_check
      _
    $region35: #{cyclic_vae_forward.1} parent=1 // pred_check_branch
      %43 = sbr.rel (0) target = $region37
    $region36: #{cyclic_vae_forward.1} parent=1 // pred_region
      _
    $region37: #{cyclic_vae_forward.1} parent=1 // pred_fallthru
      _
    // Predicated region
    $region38: #{cyclic_vae_forward.1} parent=1 // pred_check
      _
    $region39: #{cyclic_vae_forward.1} parent=1 // pred_check_branch
      %45 = sbr.rel (0) target = $region41
    $region40: #{cyclic_vae_forward.1} parent=1 // pred_region
      _
    $region41: #{cyclic_vae_forward.1} parent=1 // pred_fallthru
      _
    // Predicated region
    $region42: #{cyclic_vae_forward.1} parent=1 // pred_check
      _
    $region43: #{cyclic_vae_forward.1} parent=1 // pred_check_branch
      %47 = sbr.rel (0) target = $region45
    $region44: #{cyclic_vae_forward.1} parent=1 // pred_region
      _
    $region45: #{cyclic_vae_forward.1} parent=1 // pred_fallthru
      _
    // Predicated region
    $region46: #{cyclic_vae_forward.1} parent=1 // pred_check
      _
    $region47: #{cyclic_vae_forward.1} parent=1 // pred_check_branch
      %49 = sbr.rel (0) target = $region49
    $region48: #{cyclic_vae_forward.1} parent=1 // pred_region
      _
    $region49: #{cyclic_vae_forward.1} parent=1 // pred_fallthru
      _
    // Predicated region
    $region50: #{cyclic_vae_forward.1} parent=1 // pred_check
      _
    $region51: #{cyclic_vae_forward.1} parent=1 // pred_check_branch
      %51 = sbr.rel (0) target = $region53
    $region52: #{cyclic_vae_forward.1} parent=1 // pred_region
      _
    $region53: #{cyclic_vae_forward.1} parent=1 // pred_fallthru
      _
    // Predicated region
    $region54: #{cyclic_vae_forward.1} parent=1 // pred_check
      _
    $region55: #{cyclic_vae_forward.1} parent=1 // pred_check_branch
      %53 = sbr.rel (0) target = $region57
    $region56: #{cyclic_vae_forward.1} parent=1 // pred_region
      _
    $region57: #{cyclic_vae_forward.1} parent=1 // pred_fallthru
      _
    // Predicated region
    $region58: #{cyclic_vae_forward.1} parent=1 // pred_check
      _
    $region59: #{cyclic_vae_forward.1} parent=1 // pred_check_branch
      %55 = sbr.rel (0) target = $region61
    $region60: #{cyclic_vae_forward.1} parent=1 // pred_region
      _
    $region61: #{cyclic_vae_forward.1} parent=1 // pred_fallthru
      _
    // Predicated region
    $region62: #{cyclic_vae_forward.1} parent=1 // pred_check
      _
    $region63: #{cyclic_vae_forward.1} parent=1 // pred_check_branch
      %57 = sbr.rel (0) target = $region65
    $region64: #{cyclic_vae_forward.1} parent=1 // pred_region
      _
    $region65: #{cyclic_vae_forward.1} parent=1 // pred_fallthru
      _
    %v59 = vld [vmem:[%s0] sm:$0x3]
    %v60 = vld [vmem:[%s2] sm:$0xff]
    %v61 = vld [vmem:[%s2 + $0x8] sm:$0xff]
    %v62 = vld [vmem:[%s2 + $0x10] sm:$0xff]
    %v63 = vld [vmem:[%s2 + $0x18] sm:$0xf]
    %v64 = vld [vmem:[%s2 + $0x1c] sm:$0xff]
    %v65 = vld [vmem:[%s2 + $0x24] sm:$0xff]
    %v66 = vld [vmem:[%s2 + $0x2c] sm:$0xff]
    %v67 = vld [vmem:[%s2 + $0x34] sm:$0xf]
    %v68 = vld [vmem:[%s2 + $0x38] sm:$0xff]
    %v69 = vld [vmem:[%s2 + $0x40] sm:$0xff]
    %v70 = vld [vmem:[%s2 + $0x48] sm:$0xff]
    %v71 = vld [vmem:[%s2 + $0x50] sm:$0xf]
    %v72 = vld [vmem:[%s2 + $0x54] sm:$0xff]
    %v73 = vld [vmem:[%s2 + $0x5c] sm:$0xff]
    %v74 = vld [vmem:[%s2 + $0x64] sm:$0xff]
    %v75 = vld [vmem:[%s2 + $0x6c] sm:$0xf]
    %v76 = vld [vmem:[%s2 + $0x70] sm:$0xff]
    %v77 = vld [vmem:[%s2 + $0x78] sm:$0xff]
    %v78 = vld [vmem:[%s2 + $0x80] sm:$0xff]
    %v79 = vld [vmem:[%s2 + $0x88] sm:$0xf]
    %v80 = vld [vmem:[%s2 + $0x8c] sm:$0xff]
    %v81 = vld [vmem:[%s2 + $0x94] sm:$0xff]
    %v82 = vld [vmem:[%s2 + $0x9c] sm:$0xff]
    %v83 = vld [vmem:[%s2 + $0xa4] sm:$0xf]
    %v84 = vld [vmem:[%s2 + $0xa8] sm:$0xff]
    %v85 = vld [vmem:[%s2 + $0xb0] sm:$0xff]
    %v86 = vld [vmem:[%s2 + $0xb8] sm:$0xff]
    %v87 = vld [vmem:[%s2 + $0xc0] sm:$0xf]
    %v88 = vld [vmem:[%s2 + $0xc4] sm:$0xff]
    %v89 = vld [vmem:[%s2 + $0xcc] sm:$0xff]
    %v90 = vld [vmem:[%s2 + $0xd4] sm:$0xff]
    %v91 = vld [vmem:[%s2 + $0xdc] sm:$0xf]
    %v92 = vld [vmem:[%s2 + $0xe0] sm:$0xff]
    %v93 = vld [vmem:[%s2 + $0xe8] sm:$0xff]
    %v94 = vld [vmem:[%s2 + $0xf0] sm:$0xff]
    %v95 = vld [vmem:[%s2 + $0xf8] sm:$0xf]
    %v96 = vld [vmem:[%s2 + $0xfc] sm:$0xff]
    %v97 = vld [vmem:[%s2 + $0x104] sm:$0xff]
    %v98 = vld [vmem:[%s2 + $0x10c] sm:$0xff]
    %v99 = vld [vmem:[%s2 + $0x114] sm:$0xf]
    %v100 = vld [vmem:[%s2 + $0x118] sm:$0xff]
    %v101 = vld [vmem:[%s2 + $0x120] sm:$0xff]
    %v102 = vld [vmem:[%s2 + $0x128] sm:$0xff]
    %v103 = vld [vmem:[%s2 + $0x130] sm:$0xf]
    %v104 = vld [vmem:[%s2 + $0x134] sm:$0xff]
    %v105 = vld [vmem:[%s2 + $0x13c] sm:$0xff]
    %v106 = vld [vmem:[%s2 + $0x144] sm:$0xff]
    %v107 = vld [vmem:[%s2 + $0x14c] sm:$0xf]
    %v108 = vld [vmem:[%s2 + $0x150] sm:$0xff]
    %v109 = vld [vmem:[%s2 + $0x158] sm:$0xff]
    %v110 = vld [vmem:[%s2 + $0x160] sm:$0xff]
    %v111 = vld [vmem:[%s2 + $0x168] sm:$0xf]
    %v112 = vld [vmem:[%s2 + $0x16c] sm:$0xff]
    %v113 = vld [vmem:[%s2 + $0x174] sm:$0xff]
    %v114 = vld [vmem:[%s2 + $0x17c] sm:$0xff]
    %v115 = vld [vmem:[%s2 + $0x184] sm:$0xf]
    %v116 = vld [vmem:[%s2 + $0x188] sm:$0xff]
    %v117 = vld [vmem:[%s2 + $0x190] sm:$0xff]
    %v118 = vld [vmem:[%s2 + $0x198] sm:$0xff]
    %v119 = vld [vmem:[%s2 + $0x1a0] sm:$0xf]
    %v120 = vld [vmem:[%s2 + $0x1a4] sm:$0xff]
    %v121 = vld [vmem:[%s2 + $0x1ac] sm:$0xff]
    %v122 = vld [vmem:[%s2 + $0x1b4] sm:$0xff]
    %v123 = vld [vmem:[%s2 + $0x1bc] sm:$0xf]
    %v124 = vld [vmem:[%s2 + $0x1c0] sm:$0xff]
    %v125 = vld [vmem:[%s2 + $0x1c8] sm:$0xff]
    %v126 = vld [vmem:[%s2 + $0x1d0] sm:$0xff]
    %v127 = vld [vmem:[%s2 + $0x1d8] sm:$0xf]
    %v128 = vld [vmem:[%s2 + $0x1dc] sm:$0xff]
    %v129 = vld [vmem:[%s2 + $0x1e4] sm:$0xff]
    %v130 = vld [vmem:[%s2 + $0x1ec] sm:$0xff]
    %v131 = vld [vmem:[%s2 + $0x1f4] sm:$0xf]
    %v132 = vld [vmem:[%s3] sm:$0x7f]
    %v134 = vperm.slane %v132, 0
    %v135 = vperm.slane %v132, 1
    %v136 = vperm.slane %v132, 2
    %v137 = vperm.slane %v132, 3
    %v138 = vperm.slane %v132, 4
    %v139 = vperm.slane %v132, 5
    %v140 = vperm.slane %v132, 6
    %149 = vst [vmem:[#allocation1] ss:$9 sm:$0xff] %v59
    %v150 = vld [vmem:[#allocation1] sm:$0xff]
    %v151 = vld [vmem:[#allocation1 + $0x9] sm:$0xff]
    %v225 = vunpack.c.l.b16 %v60
    %v226 = vunpack.c.h.b16 %v60
    %v227 = vunpack.c.l.b16 %v61
    %v228 = vunpack.c.h.b16 %v61
    %v229 = vunpack.c.l.b16 %v62
    %v230 = vunpack.c.h.b16 %v62
    %v231 = vunpack.c.l.b16 %v63
    %v232 = vunpack.c.l.b16 %v64
    %v233 = vunpack.c.h.b16 %v64
    %v234 = vunpack.c.l.b16 %v65
    %v235 = vunpack.c.h.b16 %v65
    %v236 = vunpack.c.l.b16 %v66
    %v237 = vunpack.c.h.b16 %v66
    %v238 = vunpack.c.l.b16 %v67
    %v239 = vunpack.c.l.b16 %v68
    %v240 = vunpack.c.h.b16 %v68
    %v241 = vunpack.c.l.b16 %v69
    %v242 = vunpack.c.h.b16 %v69
    %v243 = vunpack.c.l.b16 %v70
    %v244 = vunpack.c.h.b16 %v70
    %v245 = vunpack.c.l.b16 %v71
    %v246 = vunpack.c.l.b16 %v72
    %v247 = vunpack.c.h.b16 %v72
    %v248 = vunpack.c.l.b16 %v73
    %v249 = vunpack.c.h.b16 %v73
    %v250 = vunpack.c.l.b16 %v74
    %v251 = vunpack.c.h.b16 %v74
    %v252 = vunpack.c.l.b16 %v75
    %v253 = vunpack.c.l.b16 %v76
    %v254 = vunpack.c.h.b16 %v76
    %v255 = vunpack.c.l.b16 %v77
    %v256 = vunpack.c.h.b16 %v77
    %v257 = vunpack.c.l.b16 %v78
    %v258 = vunpack.c.h.b16 %v78
    %v259 = vunpack.c.l.b16 %v79
    %v260 = vunpack.c.l.b16 %v80
    %v261 = vunpack.c.h.b16 %v80
    %v262 = vunpack.c.l.b16 %v81
    %v263 = vunpack.c.h.b16 %v81
    %v264 = vunpack.c.l.b16 %v82
    %v265 = vunpack.c.h.b16 %v82
    %v266 = vunpack.c.l.b16 %v83
    %v267 = vunpack.c.l.b16 %v84
    %v268 = vunpack.c.h.b16 %v84
    %v269 = vunpack.c.l.b16 %v85
    %v270 = vunpack.c.h.b16 %v85
    %v271 = vunpack.c.l.b16 %v86
    %v272 = vunpack.c.h.b16 %v86
    %v273 = vunpack.c.l.b16 %v87
    %v274 = vunpack.c.l.b16 %v88
    %v275 = vunpack.c.h.b16 %v88
    %v276 = vunpack.c.l.b16 %v89
    %v277 = vunpack.c.h.b16 %v89
    %v278 = vunpack.c.l.b16 %v90
    %v279 = vunpack.c.h.b16 %v90
    %v280 = vunpack.c.l.b16 %v91
    %v281 = vunpack.c.l.b16 %v92
    %v282 = vunpack.c.h.b16 %v92
    %v283 = vunpack.c.l.b16 %v93
    %v284 = vunpack.c.h.b16 %v93
    %v285 = vunpack.c.l.b16 %v94
    %v286 = vunpack.c.h.b16 %v94
    %v287 = vunpack.c.l.b16 %v95
    %v288 = vunpack.c.l.b16 %v96
    %v289 = vunpack.c.h.b16 %v96
    %v290 = vunpack.c.l.b16 %v97
    %v291 = vunpack.c.h.b16 %v97
    %v292 = vunpack.c.l.b16 %v98
    %v293 = vunpack.c.h.b16 %v98
    %v294 = vunpack.c.l.b16 %v99
    %v295 = vunpack.c.l.b16 %v100
    %v296 = vunpack.c.h.b16 %v100
    %v297 = vunpack.c.l.b16 %v101
    %v298 = vunpack.c.h.b16 %v101
    %v299 = vunpack.c.l.b16 %v102
    %v300 = vunpack.c.h.b16 %v102
    %v301 = vunpack.c.l.b16 %v103
    %v302 = vunpack.c.l.b16 %v104
    %v303 = vunpack.c.h.b16 %v104
    %v304 = vunpack.c.l.b16 %v105
    %v305 = vunpack.c.h.b16 %v105
    %v306 = vunpack.c.l.b16 %v106
    %v307 = vunpack.c.h.b16 %v106
    %v308 = vunpack.c.l.b16 %v107
    %v309 = vunpack.c.l.b16 %v108
    %v310 = vunpack.c.h.b16 %v108
    %v311 = vunpack.c.l.b16 %v109
    %v312 = vunpack.c.h.b16 %v109
    %v313 = vunpack.c.l.b16 %v110
    %v314 = vunpack.c.h.b16 %v110
    %v315 = vunpack.c.l.b16 %v111
    %v316 = vunpack.c.l.b16 %v112
    %v317 = vunpack.c.h.b16 %v112
    %v318 = vunpack.c.l.b16 %v113
    %v319 = vunpack.c.h.b16 %v113
    %v320 = vunpack.c.l.b16 %v114
    %v321 = vunpack.c.h.b16 %v114
    %v322 = vunpack.c.l.b16 %v115
    %v323 = vunpack.c.l.b16 %v116
    %v324 = vunpack.c.h.b16 %v116
    %v325 = vunpack.c.l.b16 %v117
    %v326 = vunpack.c.h.b16 %v117
    %v327 = vunpack.c.l.b16 %v118
    %v328 = vunpack.c.h.b16 %v118
    %v329 = vunpack.c.l.b16 %v119
    %v330 = vunpack.c.l.b16 %v120
    %v331 = vunpack.c.h.b16 %v120
    %v332 = vunpack.c.l.b16 %v121
    %v333 = vunpack.c.h.b16 %v121
    %v334 = vunpack.c.l.b16 %v122
    %v335 = vunpack.c.h.b16 %v122
    %v336 = vunpack.c.l.b16 %v123
    %v337 = vunpack.c.l.b16 %v124
    %v338 = vunpack.c.h.b16 %v124
    %v339 = vunpack.c.l.b16 %v125
    %v340 = vunpack.c.h.b16 %v125
    %v341 = vunpack.c.l.b16 %v126
    %v342 = vunpack.c.h.b16 %v126
    %v343 = vunpack.c.l.b16 %v127
    %v344 = vunpack.c.l.b16 %v128
    %v345 = vunpack.c.h.b16 %v128
    %v346 = vunpack.c.l.b16 %v129
    %v347 = vunpack.c.h.b16 %v129
    %v348 = vunpack.c.l.b16 %v130
    %v349 = vunpack.c.h.b16 %v130
    %v350 = vunpack.c.l.b16 %v131
    %v351 = vpack.c.b16 %v232, %v225
    %v352 = vpack.c.b16 %v233, %v226
    %v353 = vpack.c.b16 %v234, %v227
    %v354 = vpack.c.b16 %v235, %v228
    %v355 = vpack.c.b16 %v236, %v229
    %v356 = vpack.c.b16 %v237, %v230
    %v357 = vpack.c.b16 %v238, %v231
    %v358 = vpack.c.b16 %v246, %v239
    %v359 = vpack.c.b16 %v247, %v240
    %v360 = vpack.c.b16 %v248, %v241
    %v361 = vpack.c.b16 %v249, %v242
    %v362 = vpack.c.b16 %v250, %v243
    %v363 = vpack.c.b16 %v251, %v244
    %v364 = vpack.c.b16 %v252, %v245
    %v365 = vpack.c.b16 %v260, %v253
    %v366 = vpack.c.b16 %v261, %v254
    %v367 = vpack.c.b16 %v262, %v255
    %v368 = vpack.c.b16 %v263, %v256
    %v369 = vpack.c.b16 %v264, %v257
    %v370 = vpack.c.b16 %v265, %v258
    %v371 = vpack.c.b16 %v266, %v259
    %v372 = vpack.c.b16 %v274, %v267
    %v373 = vpack.c.b16 %v275, %v268
    %v374 = vpack.c.b16 %v276, %v269
    %v375 = vpack.c.b16 %v277, %v270
    %v376 = vpack.c.b16 %v278, %v271
    %v377 = vpack.c.b16 %v279, %v272
    %v378 = vpack.c.b16 %v280, %v273
    %v379 = vpack.c.b16 %v288, %v281
    %v380 = vpack.c.b16 %v289, %v282
    %v381 = vpack.c.b16 %v290, %v283
    %v382 = vpack.c.b16 %v291, %v284
    %v383 = vpack.c.b16 %v292, %v285
    %v384 = vpack.c.b16 %v293, %v286
    %v385 = vpack.c.b16 %v294, %v287
    %v386 = vpack.c.b16 %v302, %v295
    %v387 = vpack.c.b16 %v303, %v296
    %v388 = vpack.c.b16 %v304, %v297
    %v389 = vpack.c.b16 %v305, %v298
    %v390 = vpack.c.b16 %v306, %v299
    %v391 = vpack.c.b16 %v307, %v300
    %v392 = vpack.c.b16 %v308, %v301
    %v393 = vpack.c.b16 %v316, %v309
    %v394 = vpack.c.b16 %v317, %v310
    %v395 = vpack.c.b16 %v318, %v311
    %v396 = vpack.c.b16 %v319, %v312
    %v397 = vpack.c.b16 %v320, %v313
    %v398 = vpack.c.b16 %v321, %v314
    %v399 = vpack.c.b16 %v322, %v315
    %v400 = vpack.c.b16 %v330, %v323
    %v401 = vpack.c.b16 %v331, %v324
    %v402 = vpack.c.b16 %v332, %v325
    %v403 = vpack.c.b16 %v333, %v326
    %v404 = vpack.c.b16 %v334, %v327
    %v405 = vpack.c.b16 %v335, %v328
    %v406 = vpack.c.b16 %v336, %v329
    %v407 = vpack.c.b16 %v344, %v337
    %v408 = vpack.c.b16 %v345, %v338
    %v409 = vpack.c.b16 %v346, %v339
    %v410 = vpack.c.b16 %v347, %v340
    %v411 = vpack.c.b16 %v348, %v341
    %v412 = vpack.c.b16 %v349, %v342
    %v413 = vpack.c.b16 %v350, %v343
    %vm477 = vcmask 130048
    %v478 = vsel %vm477, %v151, 0
    %480 = vmatpush.bf16.msra.mxu0 %v400
    %481 = vmatpush.bf16.msra.mxu0 %v393
    %482 = vmatpush.bf16.msra.mxu0 %v386
    %483 = vmatpush.bf16.msra.mxu0 %v379
    %484 = vmatpush.bf16.msra.mxu0 %v372
    %485 = vmatpush.bf16.msra.mxu0 %v365
    %486 = vmatpush.bf16.msra.mxu0 %v358
    %487 = vmatpush.bf16.msra.mxu0 %v351
    %488 = vmatmul.bf16.gmra.mxu0 %v150
    %v489 = vpop.f32.mrf.mxu0
    %v490 = vadd.f32 %v134, %v489
    %v491 = vpop.f32.mrf.mxu0
    %492 = vdwg.mxu0
    %493 = vmatpush.bf16.msra.mxu0 0
    %494 = vmatpush.bf16.msra.mxu0 0
    %495 = vmatpush.bf16.msra.mxu0 0
    %496 = vmatpush.bf16.msra.mxu0 0
    %497 = vmatpush.bf16.msra.mxu0 0
    %498 = vmatpush.bf16.msra.mxu0 0
    %499 = vmatpush.bf16.msra.mxu0 0
    %500 = vmatpush.bf16.msra.mxu0 %v407
    %501 = vmatmul.bf16.gmra.mxu0 %v478
    %v502 = vpop.f32.mrf.mxu0
    %v503 = vadd.f32 %v490, %v502
    %v504 = vpop.f32.mrf.mxu0
    %505 = vdwg.mxu0
    %506 = vmatpush.bf16.msra.mxu0 %v401
    %507 = vmatpush.bf16.msra.mxu0 %v394
    %508 = vmatpush.bf16.msra.mxu0 %v387
    %509 = vmatpush.bf16.msra.mxu0 %v380
    %510 = vmatpush.bf16.msra.mxu0 %v373
    %511 = vmatpush.bf16.msra.mxu0 %v366
    %512 = vmatpush.bf16.msra.mxu0 %v359
    %513 = vmatpush.bf16.msra.mxu0 %v352
    %514 = vmatmul.bf16.gmra.mxu0 %v150
    %v515 = vpop.f32.mrf.mxu0
    %v516 = vadd.f32 %v135, %v515
    %v517 = vpop.f32.mrf.mxu0
    %518 = vdwg.mxu0
    %519 = vmatpush.bf16.msra.mxu0 0
    %520 = vmatpush.bf16.msra.mxu0 0
    %521 = vmatpush.bf16.msra.mxu0 0
    %522 = vmatpush.bf16.msra.mxu0 0
    %523 = vmatpush.bf16.msra.mxu0 0
    %524 = vmatpush.bf16.msra.mxu0 0
    %525 = vmatpush.bf16.msra.mxu0 0
    %526 = vmatpush.bf16.msra.mxu0 %v408
    %527 = vmatmul.bf16.gmra.mxu0 %v478
    %v528 = vpop.f32.mrf.mxu0
    %v529 = vadd.f32 %v516, %v528
    %v530 = vpop.f32.mrf.mxu0
    %531 = vdwg.mxu0
    %532 = vmatpush.bf16.msra.mxu0 %v402
    %533 = vmatpush.bf16.msra.mxu0 %v395
    %534 = vmatpush.bf16.msra.mxu0 %v388
    %535 = vmatpush.bf16.msra.mxu0 %v381
    %536 = vmatpush.bf16.msra.mxu0 %v374
    %537 = vmatpush.bf16.msra.mxu0 %v367
    %538 = vmatpush.bf16.msra.mxu0 %v360
    %539 = vmatpush.bf16.msra.mxu0 %v353
    %540 = vmatmul.bf16.gmra.mxu0 %v150
    %v541 = vpop.f32.mrf.mxu0
    %v542 = vadd.f32 %v136, %v541
    %v543 = vpop.f32.mrf.mxu0
    %544 = vdwg.mxu0
    %545 = vmatpush.bf16.msra.mxu0 0
    %546 = vmatpush.bf16.msra.mxu0 0
    %547 = vmatpush.bf16.msra.mxu0 0
    %548 = vmatpush.bf16.msra.mxu0 0
    %549 = vmatpush.bf16.msra.mxu0 0
    %550 = vmatpush.bf16.msra.mxu0 0
    %551 = vmatpush.bf16.msra.mxu0 0
    %552 = vmatpush.bf16.msra.mxu0 %v409
    %553 = vmatmul.bf16.gmra.mxu0 %v478
    %v554 = vpop.f32.mrf.mxu0
    %v555 = vadd.f32 %v542, %v554
    %v556 = vpop.f32.mrf.mxu0
    %557 = vdwg.mxu0
    %558 = vmatpush.bf16.msra.mxu0 %v403
    %559 = vmatpush.bf16.msra.mxu0 %v396
    %560 = vmatpush.bf16.msra.mxu0 %v389
    %561 = vmatpush.bf16.msra.mxu0 %v382
    %562 = vmatpush.bf16.msra.mxu0 %v375
    %563 = vmatpush.bf16.msra.mxu0 %v368
    %564 = vmatpush.bf16.msra.mxu0 %v361
    %565 = vmatpush.bf16.msra.mxu0 %v354
    %566 = vmatmul.bf16.gmra.mxu0 %v150
    %v567 = vpop.f32.mrf.mxu0
    %v568 = vadd.f32 %v137, %v567
    %v569 = vpop.f32.mrf.mxu0
    %570 = vdwg.mxu0
    %571 = vmatpush.bf16.msra.mxu0 0
    %572 = vmatpush.bf16.msra.mxu0 0
    %573 = vmatpush.bf16.msra.mxu0 0
    %574 = vmatpush.bf16.msra.mxu0 0
    %575 = vmatpush.bf16.msra.mxu0 0
    %576 = vmatpush.bf16.msra.mxu0 0
    %577 = vmatpush.bf16.msra.mxu0 0
    %578 = vmatpush.bf16.msra.mxu0 %v410
    %579 = vmatmul.bf16.gmra.mxu0 %v478
    %v580 = vpop.f32.mrf.mxu0
    %v581 = vadd.f32 %v568, %v580
    %v582 = vpop.f32.mrf.mxu0
    %583 = vdwg.mxu0
    %584 = vmatpush.bf16.msra.mxu0 %v404
    %585 = vmatpush.bf16.msra.mxu0 %v397
    %586 = vmatpush.bf16.msra.mxu0 %v390
    %587 = vmatpush.bf16.msra.mxu0 %v383
    %588 = vmatpush.bf16.msra.mxu0 %v376
    %589 = vmatpush.bf16.msra.mxu0 %v369
    %590 = vmatpush.bf16.msra.mxu0 %v362
    %591 = vmatpush.bf16.msra.mxu0 %v355
    %592 = vmatmul.bf16.gmra.mxu0 %v150
    %v593 = vpop.f32.mrf.mxu0
    %v594 = vadd.f32 %v138, %v593
    %v595 = vpop.f32.mrf.mxu0
    %596 = vdwg.mxu0
    %597 = vmatpush.bf16.msra.mxu0 0
    %598 = vmatpush.bf16.msra.mxu0 0
    %599 = vmatpush.bf16.msra.mxu0 0
    %600 = vmatpush.bf16.msra.mxu0 0
    %601 = vmatpush.bf16.msra.mxu0 0
    %602 = vmatpush.bf16.msra.mxu0 0
    %603 = vmatpush.bf16.msra.mxu0 0
    %604 = vmatpush.bf16.msra.mxu0 %v411
    %605 = vmatmul.bf16.gmra.mxu0 %v478
    %v606 = vpop.f32.mrf.mxu0
    %v607 = vadd.f32 %v594, %v606
    %v608 = vpop.f32.mrf.mxu0
    %609 = vdwg.mxu0
    %610 = vmatpush.bf16.msra.mxu0 %v405
    %611 = vmatpush.bf16.msra.mxu0 %v398
    %612 = vmatpush.bf16.msra.mxu0 %v391
    %613 = vmatpush.bf16.msra.mxu0 %v384
    %614 = vmatpush.bf16.msra.mxu0 %v377
    %615 = vmatpush.bf16.msra.mxu0 %v370
    %616 = vmatpush.bf16.msra.mxu0 %v363
    %617 = vmatpush.bf16.msra.mxu0 %v356
    %618 = vmatmul.bf16.gmra.mxu0 %v150
    %v619 = vpop.f32.mrf.mxu0
    %v620 = vadd.f32 %v139, %v619
    %v621 = vpop.f32.mrf.mxu0
    %622 = vdwg.mxu0
    %623 = vmatpush.bf16.msra.mxu0 0
    %624 = vmatpush.bf16.msra.mxu0 0
    %625 = vmatpush.bf16.msra.mxu0 0
    %626 = vmatpush.bf16.msra.mxu0 0
    %627 = vmatpush.bf16.msra.mxu0 0
    %628 = vmatpush.bf16.msra.mxu0 0
    %629 = vmatpush.bf16.msra.mxu0 0
    %630 = vmatpush.bf16.msra.mxu0 %v412
    %631 = vmatmul.bf16.gmra.mxu0 %v478
    %v632 = vpop.f32.mrf.mxu0
    %v633 = vadd.f32 %v620, %v632
    %v634 = vpop.f32.mrf.mxu0
    %635 = vdwg.mxu0
    %636 = vmatpush.bf16.msra.mxu0 %v406
    %637 = vmatpush.bf16.msra.mxu0 %v399
    %638 = vmatpush.bf16.msra.mxu0 %v392
    %639 = vmatpush.bf16.msra.mxu0 %v385
    %640 = vmatpush.bf16.msra.mxu0 %v378
    %641 = vmatpush.bf16.msra.mxu0 %v371
    %642 = vmatpush.bf16.msra.mxu0 %v364
    %643 = vmatpush.bf16.msra.mxu0 %v357
    %644 = vmatmul.bf16.gmra.mxu0 %v150
    %v645 = vpop.f32.mrf.mxu0
    %v646 = vadd.f32 %v140, %v645
    %v647 = vpop.f32.mrf.mxu0
    %648 = vdwg.mxu0
    %649 = vmatpush.bf16.msra.mxu0 0
    %650 = vmatpush.bf16.msra.mxu0 0
    %651 = vmatpush.bf16.msra.mxu0 0
    %652 = vmatpush.bf16.msra.mxu0 0
    %653 = vmatpush.bf16.msra.mxu0 0
    %654 = vmatpush.bf16.msra.mxu0 0
    %655 = vmatpush.bf16.msra.mxu0 0
    %656 = vmatpush.bf16.msra.mxu0 %v413
    %657 = vmatmul.bf16.gmra.mxu0 %v478
    %v658 = vpop.f32.mrf.mxu0
    %v659 = vadd.f32 %v646, %v658
    %v660 = vpop.f32.mrf.mxu0
    %661 = vdwg.mxu0
    %vm662 = vcmp.gt.f32.partialorder %v503, 0.0
    %vm663 = vcmp.gt.f32.partialorder %v529, 0.0
    %vm664 = vcmp.gt.f32.partialorder %v555, 0.0
    %vm665 = vcmp.gt.f32.partialorder %v581, 0.0
    %vm666 = vcmp.gt.f32.partialorder %v607, 0.0
    %vm667 = vcmp.gt.f32.partialorder %v633, 0.0
    %vm668 = vcmp.gt.f32.partialorder %v659, 0.0
    %v669 = vmin.f32 %v503, 0.0
    %v670 = vmin.f32 %v529, 0.0
    %v671 = vmin.f32 %v555, 0.0
    %v672 = vmin.f32 %v581, 0.0
    %v673 = vmin.f32 %v607, 0.0
    %v674 = vmin.f32 %v633, 0.0
    %v675 = vmin.f32 %v659, 0.0
    %v676 = vmul.f32 %v669, 1.442695
    %v677 = vpow.pop %v676
    %v678 = vmul.f32 %v670, 1.442695
    %v679 = vpow.pop %v678
    %v680 = vmul.f32 %v671, 1.442695
    %v681 = vpow.pop %v680
    %v682 = vmul.f32 %v672, 1.442695
    %v683 = vpow.pop %v682
    %v684 = vmul.f32 %v673, 1.442695
    %v685 = vpow.pop %v684
    %v686 = vmul.f32 %v674, 1.442695
    %v687 = vpow.pop %v686
    %v688 = vmul.f32 %v675, 1.442695
    %v689 = vpow.pop %v688
    %v690 = vsub.f32 %v677, 1.0
    %v691 = vsub.f32 %v679, 1.0
    %v692 = vsub.f32 %v681, 1.0
    %v693 = vsub.f32 %v683, 1.0
    %v694 = vsub.f32 %v685, 1.0
    %v695 = vsub.f32 %v687, 1.0
    %v696 = vsub.f32 %v689, 1.0
    %v697 = vsel %vm662, %v503, %v690
    %v698 = vsel %vm663, %v529, %v691
    %v699 = vsel %vm664, %v555, %v692
    %v700 = vsel %vm665, %v581, %v693
    %v701 = vsel %vm666, %v607, %v694
    %v702 = vsel %vm667, %v633, %v695
    %v703 = vsel %vm668, %v659, %v696
    %v704 = vpack.c.bf16 %v697, %v697
    %v705 = vpack.c.bf16 %v698, %v698
    %v706 = vpack.c.bf16 %v699, %v699
    %v707 = vpack.c.bf16 %v700, %v700
    %v708 = vpack.c.bf16 %v701, %v701
    %v709 = vpack.c.bf16 %v702, %v702
    %v710 = vpack.c.bf16 %v703, %v703
    %v711 = vld [vmem:[%s4] sm:$0xff]
    %v712 = vld [vmem:[%s4 + $0x8] sm:$0xff]
    %v713 = vld [vmem:[%s4 + $0x10] sm:$0xff]
    %v714 = vld [vmem:[%s4 + $0x18] sm:$0xff]
    %v715 = vld [vmem:[%s4 + $0x20] sm:$0xf]
    %v716 = vld [vmem:[%s4 + $0x24] sm:$0xff]
    %v717 = vld [vmem:[%s4 + $0x2c] sm:$0xff]
    %v718 = vld [vmem:[%s4 + $0x34] sm:$0xff]
    %v719 = vld [vmem:[%s4 + $0x3c] sm:$0xff]
    %v720 = vld [vmem:[%s4 + $0x44] sm:$0xf]
    %v721 = vld [vmem:[%s4 + $0x48] sm:$0xff]
    %v722 = vld [vmem:[%s4 + $0x50] sm:$0xff]
    %v723 = vld [vmem:[%s4 + $0x58] sm:$0xff]
    %v724 = vld [vmem:[%s4 + $0x60] sm:$0xff]
    %v725 = vld [vmem:[%s4 + $0x68] sm:$0xf]
    %v726 = vld [vmem:[%s4 + $0x6c] sm:$0xff]
    %v727 = vld [vmem:[%s4 + $0x74] sm:$0xff]
    %v728 = vld [vmem:[%s4 + $0x7c] sm:$0xff]
    %v729 = vld [vmem:[%s4 + $0x84] sm:$0xff]
    %v730 = vld [vmem:[%s4 + $0x8c] sm:$0xf]
    %v731 = vld [vmem:[%s4 + $0x90] sm:$0xff]
    %v732 = vld [vmem:[%s4 + $0x98] sm:$0xff]
    %v733 = vld [vmem:[%s4 + $0xa0] sm:$0xff]
    %v734 = vld [vmem:[%s4 + $0xa8] sm:$0xff]
    %v735 = vld [vmem:[%s4 + $0xb0] sm:$0xf]
    %v736 = vld [vmem:[%s4 + $0xb4] sm:$0xff]
    %v737 = vld [vmem:[%s4 + $0xbc] sm:$0xff]
    %v738 = vld [vmem:[%s4 + $0xc4] sm:$0xff]
    %v739 = vld [vmem:[%s4 + $0xcc] sm:$0xff]
    %v740 = vld [vmem:[%s4 + $0xd4] sm:$0xf]
    %v741 = vld [vmem:[%s4 + $0xd8] sm:$0xff]
    %v742 = vld [vmem:[%s4 + $0xe0] sm:$0xff]
    %v743 = vld [vmem:[%s4 + $0xe8] sm:$0xff]
    %v744 = vld [vmem:[%s4 + $0xf0] sm:$0xff]
    %v745 = vld [vmem:[%s4 + $0xf8] sm:$0xf]
    %v746 = vld [vmem:[%s4 + $0xfc] sm:$0xff]
    %v747 = vld [vmem:[%s4 + $0x104] sm:$0xff]
    %v748 = vld [vmem:[%s4 + $0x10c] sm:$0xff]
    %v749 = vld [vmem:[%s4 + $0x114] sm:$0xff]
    %v750 = vld [vmem:[%s4 + $0x11c] sm:$0xf]
    %v751 = vld [vmem:[%s4 + $0x120] sm:$0xff]
    %v752 = vld [vmem:[%s4 + $0x128] sm:$0xff]
    %v753 = vld [vmem:[%s4 + $0x130] sm:$0xff]
    %v754 = vld [vmem:[%s4 + $0x138] sm:$0xff]
    %v755 = vld [vmem:[%s4 + $0x140] sm:$0xf]
    %v756 = vld [vmem:[%s4 + $0x144] sm:$0xff]
    %v757 = vld [vmem:[%s4 + $0x14c] sm:$0xff]
    %v758 = vld [vmem:[%s4 + $0x154] sm:$0xff]
    %v759 = vld [vmem:[%s4 + $0x15c] sm:$0xff]
    %v760 = vld [vmem:[%s4 + $0x164] sm:$0xf]
    %v761 = vld [vmem:[%s4 + $0x168] sm:$0xff]
    %v762 = vld [vmem:[%s4 + $0x170] sm:$0xff]
    %v763 = vld [vmem:[%s4 + $0x178] sm:$0xff]
    %v764 = vld [vmem:[%s4 + $0x180] sm:$0xff]
    %v765 = vld [vmem:[%s4 + $0x188] sm:$0xf]
    %v766 = vld [vmem:[%s4 + $0x18c] sm:$0xff]
    %v767 = vld [vmem:[%s4 + $0x194] sm:$0xff]
    %v768 = vld [vmem:[%s4 + $0x19c] sm:$0xff]
    %v769 = vld [vmem:[%s4 + $0x1a4] sm:$0xff]
    %v770 = vld [vmem:[%s4 + $0x1ac] sm:$0xf]
    %v771 = vld [vmem:[%s4 + $0x1b0] sm:$0xff]
    %v772 = vld [vmem:[%s4 + $0x1b8] sm:$0xff]
    %v773 = vld [vmem:[%s4 + $0x1c0] sm:$0xff]
    %v774 = vld [vmem:[%s4 + $0x1c8] sm:$0xff]
    %v775 = vld [vmem:[%s4 + $0x1d0] sm:$0xf]
    %v776 = vld [vmem:[%s4 + $0x1d4] sm:$0xff]
    %v777 = vld [vmem:[%s4 + $0x1dc] sm:$0xff]
    %v778 = vld [vmem:[%s4 + $0x1e4] sm:$0xff]
    %v779 = vld [vmem:[%s4 + $0x1ec] sm:$0xff]
    %v780 = vld [vmem:[%s4 + $0x1f4] sm:$0xf]
    %v781 = vld [vmem:[%s4 + $0x1f8] sm:$0xff]
    %v782 = vld [vmem:[%s4 + $0x200] sm:$0xff]
    %v783 = vld [vmem:[%s4 + $0x208] sm:$0xff]
    %v784 = vld [vmem:[%s4 + $0x210] sm:$0xff]
    %v785 = vld [vmem:[%s4 + $0x218] sm:$0xf]
    %v786 = vld [vmem:[%s4 + $0x21c] sm:$0xff]
    %v787 = vld [vmem:[%s4 + $0x224] sm:$0xff]
    %v788 = vld [vmem:[%s4 + $0x22c] sm:$0xff]
    %v789 = vld [vmem:[%s4 + $0x234] sm:$0xff]
    %v790 = vld [vmem:[%s4 + $0x23c] sm:$0xf]
    %v791 = vld [vmem:[%s4 + $0x240] sm:$0xff]
    %v792 = vld [vmem:[%s4 + $0x248] sm:$0xff]
    %v793 = vld [vmem:[%s4 + $0x250] sm:$0xff]
    %v794 = vld [vmem:[%s4 + $0x258] sm:$0xff]
    %v795 = vld [vmem:[%s4 + $0x260] sm:$0xf]
    %v796 = vld [vmem:[%s4 + $0x264] sm:$0xff]
    %v797 = vld [vmem:[%s4 + $0x26c] sm:$0xff]
    %v798 = vld [vmem:[%s4 + $0x274] sm:$0xff]
    %v799 = vld [vmem:[%s4 + $0x27c] sm:$0xff]
    %v800 = vld [vmem:[%s4 + $0x284] sm:$0xf]
    %v801 = vld [vmem:[%s4 + $0x288] sm:$0xff]
    %v802 = vld [vmem:[%s4 + $0x290] sm:$0xff]
    %v803 = vld [vmem:[%s4 + $0x298] sm:$0xff]
    %v804 = vld [vmem:[%s4 + $0x2a0] sm:$0xff]
    %v805 = vld [vmem:[%s4 + $0x2a8] sm:$0xf]
    %v806 = vld [vmem:[%s4 + $0x2ac] sm:$0xff]
    %v807 = vld [vmem:[%s4 + $0x2b4] sm:$0xff]
    %v808 = vld [vmem:[%s4 + $0x2bc] sm:$0xff]
    %v809 = vld [vmem:[%s4 + $0x2c4] sm:$0xff]
    %v810 = vld [vmem:[%s4 + $0x2cc] sm:$0xf]
    %v811 = vld [vmem:[%s4 + $0x2d0] sm:$0xff]
    %v812 = vld [vmem:[%s4 + $0x2d8] sm:$0xff]
    %v813 = vld [vmem:[%s4 + $0x2e0] sm:$0xff]
    %v814 = vld [vmem:[%s4 + $0x2e8] sm:$0xff]
    %v815 = vld [vmem:[%s4 + $0x2f0] sm:$0xf]
    %v816 = vld [vmem:[%s4 + $0x2f4] sm:$0xff]
    %v817 = vld [vmem:[%s4 + $0x2fc] sm:$0xff]
    %v818 = vld [vmem:[%s4 + $0x304] sm:$0xff]
    %v819 = vld [vmem:[%s4 + $0x30c] sm:$0xff]
    %v820 = vld [vmem:[%s4 + $0x314] sm:$0xf]
    %v821 = vld [vmem:[%s4 + $0x318] sm:$0xff]
    %v822 = vld [vmem:[%s4 + $0x320] sm:$0xff]
    %v823 = vld [vmem:[%s4 + $0x328] sm:$0xff]
    %v824 = vld [vmem:[%s4 + $0x330] sm:$0xff]
    %v825 = vld [vmem:[%s4 + $0x338] sm:$0xf]
    %v826 = vld [vmem:[%s4 + $0x33c] sm:$0xff]
    %v827 = vld [vmem:[%s4 + $0x344] sm:$0xff]
    %v828 = vld [vmem:[%s4 + $0x34c] sm:$0xff]
    %v829 = vld [vmem:[%s4 + $0x354] sm:$0xff]
    %v830 = vld [vmem:[%s4 + $0x35c] sm:$0xf]
    %v831 = vld [vmem:[%s4 + $0x360] sm:$0xff]
    %v832 = vld [vmem:[%s4 + $0x368] sm:$0xff]
    %v833 = vld [vmem:[%s4 + $0x370] sm:$0xff]
    %v834 = vld [vmem:[%s4 + $0x378] sm:$0xff]
    %v835 = vld [vmem:[%s4 + $0x380] sm:$0xf]
    %v836 = vld [vmem:[%s4 + $0x384] sm:$0xff]
    %v837 = vld [vmem:[%s4 + $0x38c] sm:$0xff]
    %v838 = vld [vmem:[%s4 + $0x394] sm:$0xff]
    %v839 = vld [vmem:[%s4 + $0x39c] sm:$0xff]
    %v840 = vld [vmem:[%s4 + $0x3a4] sm:$0xf]
    %v841 = vld [vmem:[%s4 + $0x3a8] sm:$0xff]
    %v842 = vld [vmem:[%s4 + $0x3b0] sm:$0xff]
    %v843 = vld [vmem:[%s4 + $0x3b8] sm:$0xff]
    %v844 = vld [vmem:[%s4 + $0x3c0] sm:$0xff]
    %v845 = vld [vmem:[%s4 + $0x3c8] sm:$0xf]
    %v846 = vld [vmem:[%s4 + $0x3cc] sm:$0xff]
    %v847 = vld [vmem:[%s4 + $0x3d4] sm:$0xff]
    %v848 = vld [vmem:[%s4 + $0x3dc] sm:$0xff]
    %v849 = vld [vmem:[%s4 + $0x3e4] sm:$0xff]
    %v850 = vld [vmem:[%s4 + $0x3ec] sm:$0xf]
    %v851 = vld [vmem:[%s4 + $0x3f0] sm:$0xff]
    %v852 = vld [vmem:[%s4 + $0x3f8] sm:$0xff]
    %v853 = vld [vmem:[%s4 + $0x400] sm:$0xff]
    %v854 = vld [vmem:[%s4 + $0x408] sm:$0xff]
    %v855 = vld [vmem:[%s4 + $0x410] sm:$0xf]
    %v856 = vld [vmem:[%s4 + $0x414] sm:$0xff]
    %v857 = vld [vmem:[%s4 + $0x41c] sm:$0xff]
    %v858 = vld [vmem:[%s4 + $0x424] sm:$0xff]
    %v859 = vld [vmem:[%s4 + $0x42c] sm:$0xff]
    %v860 = vld [vmem:[%s4 + $0x434] sm:$0xf]
    %v861 = vld [vmem:[%s4 + $0x438] sm:$0xff]
    %v862 = vld [vmem:[%s4 + $0x440] sm:$0xff]
    %v863 = vld [vmem:[%s4 + $0x448] sm:$0xff]
    %v864 = vld [vmem:[%s4 + $0x450] sm:$0xff]
    %v865 = vld [vmem:[%s4 + $0x458] sm:$0xf]
    %v866 = vld [vmem:[%s4 + $0x45c] sm:$0xff]
    %v867 = vld [vmem:[%s4 + $0x464] sm:$0xff]
    %v868 = vld [vmem:[%s4 + $0x46c] sm:$0xff]
    %v869 = vld [vmem:[%s4 + $0x474] sm:$0xff]
    %v870 = vld [vmem:[%s4 + $0x47c] sm:$0xf]
    %v871 = vld [vmem:[%s4 + $0x480] sm:$0xff]
    %v872 = vld [vmem:[%s4 + $0x488] sm:$0xff]
    %v873 = vld [vmem:[%s4 + $0x490] sm:$0xff]
    %v874 = vld [vmem:[%s4 + $0x498] sm:$0xff]
    %v875 = vld [vmem:[%s4 + $0x4a0] sm:$0xf]
    %v876 = vld [vmem:[%s4 + $0x4a4] sm:$0xff]
    %v877 = vld [vmem:[%s4 + $0x4ac] sm:$0xff]
    %v878 = vld [vmem:[%s4 + $0x4b4] sm:$0xff]
    %v879 = vld [vmem:[%s4 + $0x4bc] sm:$0xff]
    %v880 = vld [vmem:[%s4 + $0x4c4] sm:$0xf]
    %v881 = vld [vmem:[%s4 + $0x4c8] sm:$0xff]
    %v882 = vld [vmem:[%s4 + $0x4d0] sm:$0xff]
    %v883 = vld [vmem:[%s4 + $0x4d8] sm:$0xff]
    %v884 = vld [vmem:[%s4 + $0x4e0] sm:$0xff]
    %v885 = vld [vmem:[%s4 + $0x4e8] sm:$0xf]
    %v886 = vld [vmem:[%s4 + $0x4ec] sm:$0xff]
    %v887 = vld [vmem:[%s4 + $0x4f4] sm:$0xff]
    %v888 = vld [vmem:[%s4 + $0x4fc] sm:$0xff]
    %v889 = vld [vmem:[%s4 + $0x504] sm:$0xff]
    %v890 = vld [vmem:[%s4 + $0x50c] sm:$0xf]
    %v891 = vld [vmem:[%s4 + $0x510] sm:$0xff]
    %v892 = vld [vmem:[%s4 + $0x518] sm:$0xff]
    %v893 = vld [vmem:[%s4 + $0x520] sm:$0xff]
    %v894 = vld [vmem:[%s4 + $0x528] sm:$0xff]
    %v895 = vld [vmem:[%s4 + $0x530] sm:$0xf]
    %v896 = vld [vmem:[%s4 + $0x534] sm:$0xff]
    %v897 = vld [vmem:[%s4 + $0x53c] sm:$0xff]
    %v898 = vld [vmem:[%s4 + $0x544] sm:$0xff]
    %v899 = vld [vmem:[%s4 + $0x54c] sm:$0xff]
    %v900 = vld [vmem:[%s4 + $0x554] sm:$0xf]
    %v901 = vld [vmem:[%s4 + $0x558] sm:$0xff]
    %v902 = vld [vmem:[%s4 + $0x560] sm:$0xff]
    %v903 = vld [vmem:[%s4 + $0x568] sm:$0xff]
    %v904 = vld [vmem:[%s4 + $0x570] sm:$0xff]
    %v905 = vld [vmem:[%s4 + $0x578] sm:$0xf]
    %v906 = vld [vmem:[%s4 + $0x57c] sm:$0xff]
    %v907 = vld [vmem:[%s4 + $0x584] sm:$0xff]
    %v908 = vld [vmem:[%s4 + $0x58c] sm:$0xff]
    %v909 = vld [vmem:[%s4 + $0x594] sm:$0xff]
    %v910 = vld [vmem:[%s4 + $0x59c] sm:$0xf]
    %v911 = vld [vmem:[%s4 + $0x5a0] sm:$0xff]
    %v912 = vld [vmem:[%s4 + $0x5a8] sm:$0xff]
    %v913 = vld [vmem:[%s4 + $0x5b0] sm:$0xff]
    %v914 = vld [vmem:[%s4 + $0x5b8] sm:$0xff]
    %v915 = vld [vmem:[%s4 + $0x5c0] sm:$0xf]
    %v916 = vld [vmem:[%s4 + $0x5c4] sm:$0xff]
    %v917 = vld [vmem:[%s4 + $0x5cc] sm:$0xff]
    %v918 = vld [vmem:[%s4 + $0x5d4] sm:$0xff]
    %v919 = vld [vmem:[%s4 + $0x5dc] sm:$0xff]
    %v920 = vld [vmem:[%s4 + $0x5e4] sm:$0xf]
    %v921 = vld [vmem:[%s4 + $0x5e8] sm:$0xff]
    %v922 = vld [vmem:[%s4 + $0x5f0] sm:$0xff]
    %v923 = vld [vmem:[%s4 + $0x5f8] sm:$0xff]
    %v924 = vld [vmem:[%s4 + $0x600] sm:$0xff]
    %v925 = vld [vmem:[%s4 + $0x608] sm:$0xf]
    %v926 = vld [vmem:[%s4 + $0x60c] sm:$0xff]
    %v927 = vld [vmem:[%s4 + $0x614] sm:$0xff]
    %v928 = vld [vmem:[%s4 + $0x61c] sm:$0xff]
    %v929 = vld [vmem:[%s4 + $0x624] sm:$0xff]
    %v930 = vld [vmem:[%s4 + $0x62c] sm:$0xf]
    %v931 = vld [vmem:[%s4 + $0x630] sm:$0xff]
    %v932 = vld [vmem:[%s4 + $0x638] sm:$0xff]
    %v933 = vld [vmem:[%s4 + $0x640] sm:$0xff]
    %v934 = vld [vmem:[%s4 + $0x648] sm:$0xff]
    %v935 = vld [vmem:[%s4 + $0x650] sm:$0xf]
    %v936 = vld [vmem:[%s4 + $0x654] sm:$0xff]
    %v937 = vld [vmem:[%s4 + $0x65c] sm:$0xff]
    %v938 = vld [vmem:[%s4 + $0x664] sm:$0xff]
    %v939 = vld [vmem:[%s4 + $0x66c] sm:$0xff]
    %v940 = vld [vmem:[%s4 + $0x674] sm:$0xf]
    %v941 = vld [vmem:[%s4 + $0x678] sm:$0xff]
    %v942 = vld [vmem:[%s4 + $0x680] sm:$0xff]
    %v943 = vld [vmem:[%s4 + $0x688] sm:$0xff]
    %v944 = vld [vmem:[%s4 + $0x690] sm:$0xff]
    %v945 = vld [vmem:[%s4 + $0x698] sm:$0xf]
    %v946 = vld [vmem:[%s4 + $0x69c] sm:$0xff]
    %v947 = vld [vmem:[%s4 + $0x6a4] sm:$0xff]
    %v948 = vld [vmem:[%s4 + $0x6ac] sm:$0xff]
    %v949 = vld [vmem:[%s4 + $0x6b4] sm:$0xff]
    %v950 = vld [vmem:[%s4 + $0x6bc] sm:$0xf]
    %v951 = vld [vmem:[%s4 + $0x6c0] sm:$0xff]
    %v952 = vld [vmem:[%s4 + $0x6c8] sm:$0xff]
    %v953 = vld [vmem:[%s4 + $0x6d0] sm:$0xff]
    %v954 = vld [vmem:[%s4 + $0x6d8] sm:$0xff]
    %v955 = vld [vmem:[%s4 + $0x6e0] sm:$0xf]
    %v956 = vld [vmem:[%s4 + $0x6e4] sm:$0xff]
    %v957 = vld [vmem:[%s4 + $0x6ec] sm:$0xff]
    %v958 = vld [vmem:[%s4 + $0x6f4] sm:$0xff]
    %v959 = vld [vmem:[%s4 + $0x6fc] sm:$0xff]
    %v960 = vld [vmem:[%s4 + $0x704] sm:$0xf]
    %v961 = vld [vmem:[%s4 + $0x708] sm:$0xff]
    %v962 = vld [vmem:[%s4 + $0x710] sm:$0xff]
    %v963 = vld [vmem:[%s4 + $0x718] sm:$0xff]
    %v964 = vld [vmem:[%s4 + $0x720] sm:$0xff]
    %v965 = vld [vmem:[%s4 + $0x728] sm:$0xf]
    %v966 = vld [vmem:[%s4 + $0x72c] sm:$0xff]
    %v967 = vld [vmem:[%s4 + $0x734] sm:$0xff]
    %v968 = vld [vmem:[%s4 + $0x73c] sm:$0xff]
    %v969 = vld [vmem:[%s4 + $0x744] sm:$0xff]
    %v970 = vld [vmem:[%s4 + $0x74c] sm:$0xf]
    %v971 = vld [vmem:[%s4 + $0x750] sm:$0xff]
    %v972 = vld [vmem:[%s4 + $0x758] sm:$0xff]
    %v973 = vld [vmem:[%s4 + $0x760] sm:$0xff]
    %v974 = vld [vmem:[%s4 + $0x768] sm:$0xff]
    %v975 = vld [vmem:[%s4 + $0x770] sm:$0xf]
    %v976 = vld [vmem:[%s4 + $0x774] sm:$0xff]
    %v977 = vld [vmem:[%s4 + $0x77c] sm:$0xff]
    %v978 = vld [vmem:[%s4 + $0x784] sm:$0xff]
    %v979 = vld [vmem:[%s4 + $0x78c] sm:$0xff]
    %v980 = vld [vmem:[%s4 + $0x794] sm:$0xf]
    %v981 = vld [vmem:[%s4 + $0x798] sm:$0xff]
    %v982 = vld [vmem:[%s4 + $0x7a0] sm:$0xff]
    %v983 = vld [vmem:[%s4 + $0x7a8] sm:$0xff]
    %v984 = vld [vmem:[%s4 + $0x7b0] sm:$0xff]
    %v985 = vld [vmem:[%s4 + $0x7b8] sm:$0xf]
    %v986 = vld [vmem:[%s4 + $0x7bc] sm:$0xff]
    %v987 = vld [vmem:[%s4 + $0x7c4] sm:$0xff]
    %v988 = vld [vmem:[%s4 + $0x7cc] sm:$0xff]
    %v989 = vld [vmem:[%s4 + $0x7d4] sm:$0xff]
    %v990 = vld [vmem:[%s4 + $0x7dc] sm:$0xf]
    %v991 = vld [vmem:[%s4 + $0x7e0] sm:$0xff]
    %v992 = vld [vmem:[%s4 + $0x7e8] sm:$0xff]
    %v993 = vld [vmem:[%s4 + $0x7f0] sm:$0xff]
    %v994 = vld [vmem:[%s4 + $0x7f8] sm:$0xff]
    %v995 = vld [vmem:[%s4 + $0x800] sm:$0xf]
    %v996 = vld [vmem:[%s4 + $0x804] sm:$0xff]
    %v997 = vld [vmem:[%s4 + $0x80c] sm:$0xff]
    %v998 = vld [vmem:[%s4 + $0x814] sm:$0xff]
    %v999 = vld [vmem:[%s4 + $0x81c] sm:$0xff]
    %v1000 = vld [vmem:[%s4 + $0x824] sm:$0xf]
    %v1001 = vld [vmem:[%s4 + $0x828] sm:$0xff]
    %v1002 = vld [vmem:[%s4 + $0x830] sm:$0xff]
    %v1003 = vld [vmem:[%s4 + $0x838] sm:$0xff]
    %v1004 = vld [vmem:[%s4 + $0x840] sm:$0xff]
    %v1005 = vld [vmem:[%s4 + $0x848] sm:$0xf]
    %v1006 = vld [vmem:[%s4 + $0x84c] sm:$0xff]
    %v1007 = vld [vmem:[%s4 + $0x854] sm:$0xff]
    %v1008 = vld [vmem:[%s4 + $0x85c] sm:$0xff]
    %v1009 = vld [vmem:[%s4 + $0x864] sm:$0xff]
    %v1010 = vld [vmem:[%s4 + $0x86c] sm:$0xf]
    %v1011 = vld [vmem:[%s4 + $0x870] sm:$0xff]
    %v1012 = vld [vmem:[%s4 + $0x878] sm:$0xff]
    %v1013 = vld [vmem:[%s4 + $0x880] sm:$0xff]
    %v1014 = vld [vmem:[%s4 + $0x888] sm:$0xff]
    %v1015 = vld [vmem:[%s4 + $0x890] sm:$0xf]
    %v1016 = vld [vmem:[%s4 + $0x894] sm:$0xff]
    %v1017 = vld [vmem:[%s4 + $0x89c] sm:$0xff]
    %v1018 = vld [vmem:[%s4 + $0x8a4] sm:$0xff]
    %v1019 = vld [vmem:[%s4 + $0x8ac] sm:$0xff]
    %v1020 = vld [vmem:[%s4 + $0x8b4] sm:$0xf]
    %v1021 = vld [vmem:[%s4 + $0x8b8] sm:$0xff]
    %v1022 = vld [vmem:[%s4 + $0x8c0] sm:$0xff]
    %v1023 = vld [vmem:[%s4 + $0x8c8] sm:$0xff]
    %v1024 = vld [vmem:[%s4 + $0x8d0] sm:$0xff]
    %v1025 = vld [vmem:[%s4 + $0x8d8] sm:$0xf]
    %v1026 = vld [vmem:[%s4 + $0x8dc] sm:$0xff]
    %v1027 = vld [vmem:[%s4 + $0x8e4] sm:$0xff]
    %v1028 = vld [vmem:[%s4 + $0x8ec] sm:$0xff]
    %v1029 = vld [vmem:[%s4 + $0x8f4] sm:$0xff]
    %v1030 = vld [vmem:[%s4 + $0x8fc] sm:$0xf]
    %v1031 = vld [vmem:[%s4 + $0x900] sm:$0xff]
    %v1032 = vld [vmem:[%s4 + $0x908] sm:$0xff]
    %v1033 = vld [vmem:[%s4 + $0x910] sm:$0xff]
    %v1034 = vld [vmem:[%s4 + $0x918] sm:$0xff]
    %v1035 = vld [vmem:[%s4 + $0x920] sm:$0xf]
    %v1036 = vld [vmem:[%s4 + $0x924] sm:$0xff]
    %v1037 = vld [vmem:[%s4 + $0x92c] sm:$0xff]
    %v1038 = vld [vmem:[%s4 + $0x934] sm:$0xff]
    %v1039 = vld [vmem:[%s4 + $0x93c] sm:$0xff]
    %v1040 = vld [vmem:[%s4 + $0x944] sm:$0xf]
    %v1041 = vld [vmem:[%s4 + $0x948] sm:$0xff]
    %v1042 = vld [vmem:[%s4 + $0x950] sm:$0xff]
    %v1043 = vld [vmem:[%s4 + $0x958] sm:$0xff]
    %v1044 = vld [vmem:[%s4 + $0x960] sm:$0xff]
    %v1045 = vld [vmem:[%s4 + $0x968] sm:$0xf]
    %v1046 = vld [vmem:[%s4 + $0x96c] sm:$0xff]
    %v1047 = vld [vmem:[%s4 + $0x974] sm:$0xff]
    %v1048 = vld [vmem:[%s4 + $0x97c] sm:$0xff]
    %v1049 = vld [vmem:[%s4 + $0x984] sm:$0xff]
    %v1050 = vld [vmem:[%s4 + $0x98c] sm:$0xf]
    %v1051 = vld [vmem:[%s4 + $0x990] sm:$0xff]
    %v1052 = vld [vmem:[%s4 + $0x998] sm:$0xff]
    %v1053 = vld [vmem:[%s4 + $0x9a0] sm:$0xff]
    %v1054 = vld [vmem:[%s4 + $0x9a8] sm:$0xff]
    %v1055 = vld [vmem:[%s4 + $0x9b0] sm:$0xf]
    %v1056 = vld [vmem:[%s4 + $0x9b4] sm:$0xff]
    %v1057 = vld [vmem:[%s4 + $0x9bc] sm:$0xff]
    %v1058 = vld [vmem:[%s4 + $0x9c4] sm:$0xff]
    %v1059 = vld [vmem:[%s4 + $0x9cc] sm:$0xff]
    %v1060 = vld [vmem:[%s4 + $0x9d4] sm:$0xf]
    %v1061 = vld [vmem:[%s4 + $0x9d8] sm:$0xff]
    %v1062 = vld [vmem:[%s4 + $0x9e0] sm:$0xff]
    %v1063 = vld [vmem:[%s4 + $0x9e8] sm:$0xff]
    %v1064 = vld [vmem:[%s4 + $0x9f0] sm:$0xff]
    %v1065 = vld [vmem:[%s4 + $0x9f8] sm:$0xf]
    %v1066 = vld [vmem:[%s4 + $0x9fc] sm:$0xff]
    %v1067 = vld [vmem:[%s4 + $0xa04] sm:$0xff]
    %v1068 = vld [vmem:[%s4 + $0xa0c] sm:$0xff]
    %v1069 = vld [vmem:[%s4 + $0xa14] sm:$0xff]
    %v1070 = vld [vmem:[%s4 + $0xa1c] sm:$0xf]
    %v1071 = vld [vmem:[%s4 + $0xa20] sm:$0xff]
    %v1072 = vld [vmem:[%s4 + $0xa28] sm:$0xff]
    %v1073 = vld [vmem:[%s4 + $0xa30] sm:$0xff]
    %v1074 = vld [vmem:[%s4 + $0xa38] sm:$0xff]
    %v1075 = vld [vmem:[%s4 + $0xa40] sm:$0xf]
    %v1076 = vld [vmem:[%s4 + $0xa44] sm:$0xff]
    %v1077 = vld [vmem:[%s4 + $0xa4c] sm:$0xff]
    %v1078 = vld [vmem:[%s4 + $0xa54] sm:$0xff]
    %v1079 = vld [vmem:[%s4 + $0xa5c] sm:$0xff]
    %v1080 = vld [vmem:[%s4 + $0xa64] sm:$0xf]
    %v1081 = vld [vmem:[%s4 + $0xa68] sm:$0xff]
    %v1082 = vld [vmem:[%s4 + $0xa70] sm:$0xff]
    %v1083 = vld [vmem:[%s4 + $0xa78] sm:$0xff]
    %v1084 = vld [vmem:[%s4 + $0xa80] sm:$0xff]
    %v1085 = vld [vmem:[%s4 + $0xa88] sm:$0xf]
    %v1086 = vld [vmem:[%s4 + $0xa8c] sm:$0xff]
    %v1087 = vld [vmem:[%s4 + $0xa94] sm:$0xff]
    %v1088 = vld [vmem:[%s4 + $0xa9c] sm:$0xff]
    %v1089 = vld [vmem:[%s4 + $0xaa4] sm:$0xff]
    %v1090 = vld [vmem:[%s4 + $0xaac] sm:$0xf]
    %v1091 = vld [vmem:[%s4 + $0xab0] sm:$0xff]
    %v1092 = vld [vmem:[%s4 + $0xab8] sm:$0xff]
    %v1093 = vld [vmem:[%s4 + $0xac0] sm:$0xff]
    %v1094 = vld [vmem:[%s4 + $0xac8] sm:$0xff]
    %v1095 = vld [vmem:[%s4 + $0xad0] sm:$0xf]
    %v1096 = vld [vmem:[%s4 + $0xad4] sm:$0xff]
    %v1097 = vld [vmem:[%s4 + $0xadc] sm:$0xff]
    %v1098 = vld [vmem:[%s4 + $0xae4] sm:$0xff]
    %v1099 = vld [vmem:[%s4 + $0xaec] sm:$0xff]
    %v1100 = vld [vmem:[%s4 + $0xaf4] sm:$0xf]
    %v1101 = vld [vmem:[%s4 + $0xaf8] sm:$0xff]
    %v1102 = vld [vmem:[%s4 + $0xb00] sm:$0xff]
    %v1103 = vld [vmem:[%s4 + $0xb08] sm:$0xff]
    %v1104 = vld [vmem:[%s4 + $0xb10] sm:$0xff]
    %v1105 = vld [vmem:[%s4 + $0xb18] sm:$0xf]
    %v1106 = vld [vmem:[%s4 + $0xb1c] sm:$0xff]
    %v1107 = vld [vmem:[%s4 + $0xb24] sm:$0xff]
    %v1108 = vld [vmem:[%s4 + $0xb2c] sm:$0xff]
    %v1109 = vld [vmem:[%s4 + $0xb34] sm:$0xff]
    %v1110 = vld [vmem:[%s4 + $0xb3c] sm:$0xf]
    %v1111 = vld [vmem:[%s4 + $0xb40] sm:$0xff]
    %v1112 = vld [vmem:[%s4 + $0xb48] sm:$0xff]
    %v1113 = vld [vmem:[%s4 + $0xb50] sm:$0xff]
    %v1114 = vld [vmem:[%s4 + $0xb58] sm:$0xff]
    %v1115 = vld [vmem:[%s4 + $0xb60] sm:$0xf]
    %v1116 = vld [vmem:[%s4 + $0xb64] sm:$0xff]
    %v1117 = vld [vmem:[%s4 + $0xb6c] sm:$0xff]
    %v1118 = vld [vmem:[%s4 + $0xb74] sm:$0xff]
    %v1119 = vld [vmem:[%s4 + $0xb7c] sm:$0xff]
    %v1120 = vld [vmem:[%s4 + $0xb84] sm:$0xf]
    %v1121 = vld [vmem:[%s4 + $0xb88] sm:$0xff]
    %v1122 = vld [vmem:[%s4 + $0xb90] sm:$0xff]
    %v1123 = vld [vmem:[%s4 + $0xb98] sm:$0xff]
    %v1124 = vld [vmem:[%s4 + $0xba0] sm:$0xff]
    %v1125 = vld [vmem:[%s4 + $0xba8] sm:$0xf]
    %v1126 = vld [vmem:[%s4 + $0xbac] sm:$0xff]
    %v1127 = vld [vmem:[%s4 + $0xbb4] sm:$0xff]
    %v1128 = vld [vmem:[%s4 + $0xbbc] sm:$0xff]
    %v1129 = vld [vmem:[%s4 + $0xbc4] sm:$0xff]
    %v1130 = vld [vmem:[%s4 + $0xbcc] sm:$0xf]
    %v1131 = vld [vmem:[%s4 + $0xbd0] sm:$0xff]
    %v1132 = vld [vmem:[%s4 + $0xbd8] sm:$0xff]
    %v1133 = vld [vmem:[%s4 + $0xbe0] sm:$0xff]
    %v1134 = vld [vmem:[%s4 + $0xbe8] sm:$0xff]
    %v1135 = vld [vmem:[%s4 + $0xbf0] sm:$0xf]
    %v1136 = vld [vmem:[%s4 + $0xbf4] sm:$0xff]
    %v1137 = vld [vmem:[%s4 + $0xbfc] sm:$0xff]
    %v1138 = vld [vmem:[%s4 + $0xc04] sm:$0xff]
    %v1139 = vld [vmem:[%s4 + $0xc0c] sm:$0xff]
    %v1140 = vld [vmem:[%s4 + $0xc14] sm:$0xf]
    %v1141 = vld [vmem:[%s4 + $0xc18] sm:$0xff]
    %v1142 = vld [vmem:[%s4 + $0xc20] sm:$0xff]
    %v1143 = vld [vmem:[%s4 + $0xc28] sm:$0xff]
    %v1144 = vld [vmem:[%s4 + $0xc30] sm:$0xff]
    %v1145 = vld [vmem:[%s4 + $0xc38] sm:$0xf]
    %v1146 = vld [vmem:[%s4 + $0xc3c] sm:$0xff]
    %v1147 = vld [vmem:[%s4 + $0xc44] sm:$0xff]
    %v1148 = vld [vmem:[%s4 + $0xc4c] sm:$0xff]
    %v1149 = vld [vmem:[%s4 + $0xc54] sm:$0xff]
    %v1150 = vld [vmem:[%s4 + $0xc5c] sm:$0xf]
    %v1151 = vld [vmem:[%s4 + $0xc60] sm:$0xff]
    %v1152 = vld [vmem:[%s4 + $0xc68] sm:$0xff]
    %v1153 = vld [vmem:[%s4 + $0xc70] sm:$0xff]
    %v1154 = vld [vmem:[%s4 + $0xc78] sm:$0xff]
    %v1155 = vld [vmem:[%s4 + $0xc80] sm:$0xf]
    %v1156 = vld [vmem:[%s4 + $0xc84] sm:$0xff]
    %v1157 = vld [vmem:[%s4 + $0xc8c] sm:$0xff]
    %v1158 = vld [vmem:[%s4 + $0xc94] sm:$0xff]
    %v1159 = vld [vmem:[%s4 + $0xc9c] sm:$0xff]
    %v1160 = vld [vmem:[%s4 + $0xca4] sm:$0xf]
    %v1161 = vld [vmem:[%s4 + $0xca8] sm:$0xff]
    %v1162 = vld [vmem:[%s4 + $0xcb0] sm:$0xff]
    %v1163 = vld [vmem:[%s4 + $0xcb8] sm:$0xff]
    %v1164 = vld [vmem:[%s4 + $0xcc0] sm:$0xff]
    %v1165 = vld [vmem:[%s4 + $0xcc8] sm:$0xf]
    %v1166 = vld [vmem:[%s4 + $0xccc] sm:$0xff]
    %v1167 = vld [vmem:[%s4 + $0xcd4] sm:$0xff]
    %v1168 = vld [vmem:[%s4 + $0xcdc] sm:$0xff]
    %v1169 = vld [vmem:[%s4 + $0xce4] sm:$0xff]
    %v1170 = vld [vmem:[%s4 + $0xcec] sm:$0xf]
    %v1171 = vld [vmem:[%s4 + $0xcf0] sm:$0xff]
    %v1172 = vld [vmem:[%s4 + $0xcf8] sm:$0xff]
    %v1173 = vld [vmem:[%s4 + $0xd00] sm:$0xff]
    %v1174 = vld [vmem:[%s4 + $0xd08] sm:$0xff]
    %v1175 = vld [vmem:[%s4 + $0xd10] sm:$0xf]
    %v1176 = vld [vmem:[%s4 + $0xd14] sm:$0xff]
    %v1177 = vld [vmem:[%s4 + $0xd1c] sm:$0xff]
    %v1178 = vld [vmem:[%s4 + $0xd24] sm:$0xff]
    %v1179 = vld [vmem:[%s4 + $0xd2c] sm:$0xff]
    %v1180 = vld [vmem:[%s4 + $0xd34] sm:$0xf]
    %v1181 = vld [vmem:[%s4 + $0xd38] sm:$0xff]
    %v1182 = vld [vmem:[%s4 + $0xd40] sm:$0xff]
    %v1183 = vld [vmem:[%s4 + $0xd48] sm:$0xff]
    %v1184 = vld [vmem:[%s4 + $0xd50] sm:$0xff]
    %v1185 = vld [vmem:[%s4 + $0xd58] sm:$0xf]
    %v1186 = vld [vmem:[%s4 + $0xd5c] sm:$0xff]
    %v1187 = vld [vmem:[%s4 + $0xd64] sm:$0xff]
    %v1188 = vld [vmem:[%s4 + $0xd6c] sm:$0xff]
    %v1189 = vld [vmem:[%s4 + $0xd74] sm:$0xff]
    %v1190 = vld [vmem:[%s4 + $0xd7c] sm:$0xf]
    %v1191 = vld [vmem:[%s4 + $0xd80] sm:$0xff]
    %v1192 = vld [vmem:[%s4 + $0xd88] sm:$0xff]
    %v1193 = vld [vmem:[%s4 + $0xd90] sm:$0xff]
    %v1194 = vld [vmem:[%s4 + $0xd98] sm:$0xff]
    %v1195 = vld [vmem:[%s4 + $0xda0] sm:$0xf]
    %v1196 = vld [vmem:[%s4 + $0xda4] sm:$0xff]
    %v1197 = vld [vmem:[%s4 + $0xdac] sm:$0xff]
    %v1198 = vld [vmem:[%s4 + $0xdb4] sm:$0xff]
    %v1199 = vld [vmem:[%s4 + $0xdbc] sm:$0xff]
    %v1200 = vld [vmem:[%s4 + $0xdc4] sm:$0xf]
    %v1201 = vld [vmem:[%s4 + $0xdc8] sm:$0xff]
    %v1202 = vld [vmem:[%s4 + $0xdd0] sm:$0xff]
    %v1203 = vld [vmem:[%s4 + $0xdd8] sm:$0xff]
    %v1204 = vld [vmem:[%s4 + $0xde0] sm:$0xff]
    %v1205 = vld [vmem:[%s4 + $0xde8] sm:$0xf]
    %v1206 = vld [vmem:[%s4 + $0xdec] sm:$0xff]
    %v1207 = vld [vmem:[%s4 + $0xdf4] sm:$0xff]
    %v1208 = vld [vmem:[%s4 + $0xdfc] sm:$0xff]
    %v1209 = vld [vmem:[%s4 + $0xe04] sm:$0xff]
    %v1210 = vld [vmem:[%s4 + $0xe0c] sm:$0xf]
    %v1211 = vld [vmem:[%s5] sm:$0xff]
    %v1212 = vld [vmem:[%s5 + $0x8] sm:$0x1]
    %v1215 = vperm.slane %v1211, 0
    %v1216 = vperm.slane %v1211, 1
    %v1217 = vperm.slane %v1211, 2
    %v1218 = vperm.slane %v1211, 3
    %v1219 = vperm.slane %v1211, 4
    %v1220 = vperm.slane %v1211, 5
    %v1221 = vperm.slane %v1211, 6
    %v1222 = vperm.slane %v1211, 7
    %v1223 = vperm.slane %v1212, 0
    %v1733 = vunpack.c.l.b16 %v711
    %v1734 = vunpack.c.h.b16 %v711
    %v1735 = vunpack.c.l.b16 %v712
    %v1736 = vunpack.c.h.b16 %v712
    %v1737 = vunpack.c.l.b16 %v713
    %v1738 = vunpack.c.h.b16 %v713
    %v1739 = vunpack.c.l.b16 %v714
    %v1740 = vunpack.c.h.b16 %v714
    %v1741 = vunpack.c.l.b16 %v715
    %v1742 = vunpack.c.l.b16 %v716
    %v1743 = vunpack.c.h.b16 %v716
    %v1744 = vunpack.c.l.b16 %v717
    %v1745 = vunpack.c.h.b16 %v717
    %v1746 = vunpack.c.l.b16 %v718
    %v1747 = vunpack.c.h.b16 %v718
    %v1748 = vunpack.c.l.b16 %v719
    %v1749 = vunpack.c.h.b16 %v719
    %v1750 = vunpack.c.l.b16 %v720
    %v1751 = vunpack.c.l.b16 %v721
    %v1752 = vunpack.c.h.b16 %v721
    %v1753 = vunpack.c.l.b16 %v722
    %v1754 = vunpack.c.h.b16 %v722
    %v1755 = vunpack.c.l.b16 %v723
    %v1756 = vunpack.c.h.b16 %v723
    %v1757 = vunpack.c.l.b16 %v724
    %v1758 = vunpack.c.h.b16 %v724
    %v1759 = vunpack.c.l.b16 %v725
    %v1760 = vunpack.c.l.b16 %v726
    %v1761 = vunpack.c.h.b16 %v726
    %v1762 = vunpack.c.l.b16 %v727
    %v1763 = vunpack.c.h.b16 %v727
    %v1764 = vunpack.c.l.b16 %v728
    %v1765 = vunpack.c.h.b16 %v728
    %v1766 = vunpack.c.l.b16 %v729
    %v1767 = vunpack.c.h.b16 %v729
    %v1768 = vunpack.c.l.b16 %v730
    %v1769 = vunpack.c.l.b16 %v731
    %v1770 = vunpack.c.h.b16 %v731
    %v1771 = vunpack.c.l.b16 %v732
    %v1772 = vunpack.c.h.b16 %v732
    %v1773 = vunpack.c.l.b16 %v733
    %v1774 = vunpack.c.h.b16 %v733
    %v1775 = vunpack.c.l.b16 %v734
    %v1776 = vunpack.c.h.b16 %v734
    %v1777 = vunpack.c.l.b16 %v735
    %v1778 = vunpack.c.l.b16 %v736
    %v1779 = vunpack.c.h.b16 %v736
    %v1780 = vunpack.c.l.b16 %v737
    %v1781 = vunpack.c.h.b16 %v737
    %v1782 = vunpack.c.l.b16 %v738
    %v1783 = vunpack.c.h.b16 %v738
    %v1784 = vunpack.c.l.b16 %v739
    %v1785 = vunpack.c.h.b16 %v739
    %v1786 = vunpack.c.l.b16 %v740
    %v1787 = vunpack.c.l.b16 %v741
    %v1788 = vunpack.c.h.b16 %v741
    %v1789 = vunpack.c.l.b16 %v742
    %v1790 = vunpack.c.h.b16 %v742
    %v1791 = vunpack.c.l.b16 %v743
    %v1792 = vunpack.c.h.b16 %v743
    %v1793 = vunpack.c.l.b16 %v744
    %v1794 = vunpack.c.h.b16 %v744
    %v1795 = vunpack.c.l.b16 %v745
    %v1796 = vunpack.c.l.b16 %v746
    %v1797 = vunpack.c.h.b16 %v746
    %v1798 = vunpack.c.l.b16 %v747
    %v1799 = vunpack.c.h.b16 %v747
    %v1800 = vunpack.c.l.b16 %v748
    %v1801 = vunpack.c.h.b16 %v748
    %v1802 = vunpack.c.l.b16 %v749
    %v1803 = vunpack.c.h.b16 %v749
    %v1804 = vunpack.c.l.b16 %v750
    %v1805 = vunpack.c.l.b16 %v751
    %v1806 = vunpack.c.h.b16 %v751
    %v1807 = vunpack.c.l.b16 %v752
    %v1808 = vunpack.c.h.b16 %v752
    %v1809 = vunpack.c.l.b16 %v753
    %v1810 = vunpack.c.h.b16 %v753
    %v1811 = vunpack.c.l.b16 %v754
    %v1812 = vunpack.c.h.b16 %v754
    %v1813 = vunpack.c.l.b16 %v755
    %v1814 = vunpack.c.l.b16 %v756
    %v1815 = vunpack.c.h.b16 %v756
    %v1816 = vunpack.c.l.b16 %v757
    %v1817 = vunpack.c.h.b16 %v757
    %v1818 = vunpack.c.l.b16 %v758
    %v1819 = vunpack.c.h.b16 %v758
    %v1820 = vunpack.c.l.b16 %v759
    %v1821 = vunpack.c.h.b16 %v759
    %v1822 = vunpack.c.l.b16 %v760
    %v1823 = vunpack.c.l.b16 %v761
    %v1824 = vunpack.c.h.b16 %v761
    %v1825 = vunpack.c.l.b16 %v762
    %v1826 = vunpack.c.h.b16 %v762
    %v1827 = vunpack.c.l.b16 %v763
    %v1828 = vunpack.c.h.b16 %v763
    %v1829 = vunpack.c.l.b16 %v764
    %v1830 = vunpack.c.h.b16 %v764
    %v1831 = vunpack.c.l.b16 %v765
    %v1832 = vunpack.c.l.b16 %v766
    %v1833 = vunpack.c.h.b16 %v766
    %v1834 = vunpack.c.l.b16 %v767
    %v1835 = vunpack.c.h.b16 %v767
    %v1836 = vunpack.c.l.b16 %v768
    %v1837 = vunpack.c.h.b16 %v768
    %v1838 = vunpack.c.l.b16 %v769
    %v1839 = vunpack.c.h.b16 %v769
    %v1840 = vunpack.c.l.b16 %v770
    %v1841 = vunpack.c.l.b16 %v771
    %v1842 = vunpack.c.h.b16 %v771
    %v1843 = vunpack.c.l.b16 %v772
    %v1844 = vunpack.c.h.b16 %v772
    %v1845 = vunpack.c.l.b16 %v773
    %v1846 = vunpack.c.h.b16 %v773
    %v1847 = vunpack.c.l.b16 %v774
    %v1848 = vunpack.c.h.b16 %v774
    %v1849 = vunpack.c.l.b16 %v775
    %v1850 = vunpack.c.l.b16 %v776
    %v1851 = vunpack.c.h.b16 %v776
    %v1852 = vunpack.c.l.b16 %v777
    %v1853 = vunpack.c.h.b16 %v777
    %v1854 = vunpack.c.l.b16 %v778
    %v1855 = vunpack.c.h.b16 %v778
    %v1856 = vunpack.c.l.b16 %v779
    %v1857 = vunpack.c.h.b16 %v779
    %v1858 = vunpack.c.l.b16 %v780
    %v1859 = vunpack.c.l.b16 %v781
    %v1860 = vunpack.c.h.b16 %v781
    %v1861 = vunpack.c.l.b16 %v782
    %v1862 = vunpack.c.h.b16 %v782
    %v1863 = vunpack.c.l.b16 %v783
    %v1864 = vunpack.c.h.b16 %v783
    %v1865 = vunpack.c.l.b16 %v784
    %v1866 = vunpack.c.h.b16 %v784
    %v1867 = vunpack.c.l.b16 %v785
    %v1868 = vunpack.c.l.b16 %v786
    %v1869 = vunpack.c.h.b16 %v786
    %v1870 = vunpack.c.l.b16 %v787
    %v1871 = vunpack.c.h.b16 %v787
    %v1872 = vunpack.c.l.b16 %v788
    %v1873 = vunpack.c.h.b16 %v788
    %v1874 = vunpack.c.l.b16 %v789
    %v1875 = vunpack.c.h.b16 %v789
    %v1876 = vunpack.c.l.b16 %v790
    %v1877 = vunpack.c.l.b16 %v791
    %v1878 = vunpack.c.h.b16 %v791
    %v1879 = vunpack.c.l.b16 %v792
    %v1880 = vunpack.c.h.b16 %v792
    %v1881 = vunpack.c.l.b16 %v793
    %v1882 = vunpack.c.h.b16 %v793
    %v1883 = vunpack.c.l.b16 %v794
    %v1884 = vunpack.c.h.b16 %v794
    %v1885 = vunpack.c.l.b16 %v795
    %v1886 = vunpack.c.l.b16 %v796
    %v1887 = vunpack.c.h.b16 %v796
    %v1888 = vunpack.c.l.b16 %v797
    %v1889 = vunpack.c.h.b16 %v797
    %v1890 = vunpack.c.l.b16 %v798
    %v1891 = vunpack.c.h.b16 %v798
    %v1892 = vunpack.c.l.b16 %v799
    %v1893 = vunpack.c.h.b16 %v799
    %v1894 = vunpack.c.l.b16 %v800
    %v1895 = vunpack.c.l.b16 %v801
    %v1896 = vunpack.c.h.b16 %v801
    %v1897 = vunpack.c.l.b16 %v802
    %v1898 = vunpack.c.h.b16 %v802
    %v1899 = vunpack.c.l.b16 %v803
    %v1900 = vunpack.c.h.b16 %v803
    %v1901 = vunpack.c.l.b16 %v804
    %v1902 = vunpack.c.h.b16 %v804
    %v1903 = vunpack.c.l.b16 %v805
    %v1904 = vunpack.c.l.b16 %v806
    %v1905 = vunpack.c.h.b16 %v806
    %v1906 = vunpack.c.l.b16 %v807
    %v1907 = vunpack.c.h.b16 %v807
    %v1908 = vunpack.c.l.b16 %v808
    %v1909 = vunpack.c.h.b16 %v808
    %v1910 = vunpack.c.l.b16 %v809
    %v1911 = vunpack.c.h.b16 %v809
    %v1912 = vunpack.c.l.b16 %v810
    %v1913 = vunpack.c.l.b16 %v811
    %v1914 = vunpack.c.h.b16 %v811
    %v1915 = vunpack.c.l.b16 %v812
    %v1916 = vunpack.c.h.b16 %v812
    %v1917 = vunpack.c.l.b16 %v813
    %v1918 = vunpack.c.h.b16 %v813
    %v1919 = vunpack.c.l.b16 %v814
    %v1920 = vunpack.c.h.b16 %v814
    %v1921 = vunpack.c.l.b16 %v815
    %v1922 = vunpack.c.l.b16 %v816
    %v1923 = vunpack.c.h.b16 %v816
    %v1924 = vunpack.c.l.b16 %v817
    %v1925 = vunpack.c.h.b16 %v817
    %v1926 = vunpack.c.l.b16 %v818
    %v1927 = vunpack.c.h.b16 %v818
    %v1928 = vunpack.c.l.b16 %v819
    %v1929 = vunpack.c.h.b16 %v819
    %v1930 = vunpack.c.l.b16 %v820
    %v1931 = vunpack.c.l.b16 %v821
    %v1932 = vunpack.c.h.b16 %v821
    %v1933 = vunpack.c.l.b16 %v822
    %v1934 = vunpack.c.h.b16 %v822
    %v1935 = vunpack.c.l.b16 %v823
    %v1936 = vunpack.c.h.b16 %v823
    %v1937 = vunpack.c.l.b16 %v824
    %v1938 = vunpack.c.h.b16 %v824
    %v1939 = vunpack.c.l.b16 %v825
    %v1940 = vunpack.c.l.b16 %v826
    %v1941 = vunpack.c.h.b16 %v826
    %v1942 = vunpack.c.l.b16 %v827
    %v1943 = vunpack.c.h.b16 %v827
    %v1944 = vunpack.c.l.b16 %v828
    %v1945 = vunpack.c.h.b16 %v828
    %v1946 = vunpack.c.l.b16 %v829
    %v1947 = vunpack.c.h.b16 %v829
    %v1948 = vunpack.c.l.b16 %v830
    %v1949 = vunpack.c.l.b16 %v831
    %v1950 = vunpack.c.h.b16 %v831
    %v1951 = vunpack.c.l.b16 %v832
    %v1952 = vunpack.c.h.b16 %v832
    %v1953 = vunpack.c.l.b16 %v833
    %v1954 = vunpack.c.h.b16 %v833
    %v1955 = vunpack.c.l.b16 %v834
    %v1956 = vunpack.c.h.b16 %v834
    %v1957 = vunpack.c.l.b16 %v835
    %v1958 = vunpack.c.l.b16 %v836
    %v1959 = vunpack.c.h.b16 %v836
    %v1960 = vunpack.c.l.b16 %v837
    %v1961 = vunpack.c.h.b16 %v837
    %v1962 = vunpack.c.l.b16 %v838
    %v1963 = vunpack.c.h.b16 %v838
    %v1964 = vunpack.c.l.b16 %v839
    %v1965 = vunpack.c.h.b16 %v839
    %v1966 = vunpack.c.l.b16 %v840
    %v1967 = vunpack.c.l.b16 %v841
    %v1968 = vunpack.c.h.b16 %v841
    %v1969 = vunpack.c.l.b16 %v842
    %v1970 = vunpack.c.h.b16 %v842
    %v1971 = vunpack.c.l.b16 %v843
    %v1972 = vunpack.c.h.b16 %v843
    %v1973 = vunpack.c.l.b16 %v844
    %v1974 = vunpack.c.h.b16 %v844
    %v1975 = vunpack.c.l.b16 %v845
    %v1976 = vunpack.c.l.b16 %v846
    %v1977 = vunpack.c.h.b16 %v846
    %v1978 = vunpack.c.l.b16 %v847
    %v1979 = vunpack.c.h.b16 %v847
    %v1980 = vunpack.c.l.b16 %v848
    %v1981 = vunpack.c.h.b16 %v848
    %v1982 = vunpack.c.l.b16 %v849
    %v1983 = vunpack.c.h.b16 %v849
    %v1984 = vunpack.c.l.b16 %v850
    %v1985 = vunpack.c.l.b16 %v851
    %v1986 = vunpack.c.h.b16 %v851
    %v1987 = vunpack.c.l.b16 %v852
    %v1988 = vunpack.c.h.b16 %v852
    %v1989 = vunpack.c.l.b16 %v853
    %v1990 = vunpack.c.h.b16 %v853
    %v1991 = vunpack.c.l.b16 %v854
    %v1992 = vunpack.c.h.b16 %v854
    %v1993 = vunpack.c.l.b16 %v855
    %v1994 = vunpack.c.l.b16 %v856
    %v1995 = vunpack.c.h.b16 %v856
    %v1996 = vunpack.c.l.b16 %v857
    %v1997 = vunpack.c.h.b16 %v857
    %v1998 = vunpack.c.l.b16 %v858
    %v1999 = vunpack.c.h.b16 %v858
    %v2000 = vunpack.c.l.b16 %v859
    %v2001 = vunpack.c.h.b16 %v859
    %v2002 = vunpack.c.l.b16 %v860
    %v2003 = vunpack.c.l.b16 %v861
    %v2004 = vunpack.c.h.b16 %v861
    %v2005 = vunpack.c.l.b16 %v862
    %v2006 = vunpack.c.h.b16 %v862
    %v2007 = vunpack.c.l.b16 %v863
    %v2008 = vunpack.c.h.b16 %v863
    %v2009 = vunpack.c.l.b16 %v864
    %v2010 = vunpack.c.h.b16 %v864
    %v2011 = vunpack.c.l.b16 %v865
    %v2012 = vunpack.c.l.b16 %v866
    %v2013 = vunpack.c.h.b16 %v866
    %v2014 = vunpack.c.l.b16 %v867
    %v2015 = vunpack.c.h.b16 %v867
    %v2016 = vunpack.c.l.b16 %v868
    %v2017 = vunpack.c.h.b16 %v868
    %v2018 = vunpack.c.l.b16 %v869
    %v2019 = vunpack.c.h.b16 %v869
    %v2020 = vunpack.c.l.b16 %v870
    %v2021 = vunpack.c.l.b16 %v871
    %v2022 = vunpack.c.h.b16 %v871
    %v2023 = vunpack.c.l.b16 %v872
    %v2024 = vunpack.c.h.b16 %v872
    %v2025 = vunpack.c.l.b16 %v873
    %v2026 = vunpack.c.h.b16 %v873
    %v2027 = vunpack.c.l.b16 %v874
    %v2028 = vunpack.c.h.b16 %v874
    %v2029 = vunpack.c.l.b16 %v875
    %v2030 = vunpack.c.l.b16 %v876
    %v2031 = vunpack.c.h.b16 %v876
    %v2032 = vunpack.c.l.b16 %v877
    %v2033 = vunpack.c.h.b16 %v877
    %v2034 = vunpack.c.l.b16 %v878
    %v2035 = vunpack.c.h.b16 %v878
    %v2036 = vunpack.c.l.b16 %v879
    %v2037 = vunpack.c.h.b16 %v879
    %v2038 = vunpack.c.l.b16 %v880
    %v2039 = vunpack.c.l.b16 %v881
    %v2040 = vunpack.c.h.b16 %v881
    %v2041 = vunpack.c.l.b16 %v882
    %v2042 = vunpack.c.h.b16 %v882
    %v2043 = vunpack.c.l.b16 %v883
    %v2044 = vunpack.c.h.b16 %v883
    %v2045 = vunpack.c.l.b16 %v884
    %v2046 = vunpack.c.h.b16 %v884
    %v2047 = vunpack.c.l.b16 %v885
    %v2048 = vunpack.c.l.b16 %v886
    %v2049 = vunpack.c.h.b16 %v886
    %v2050 = vunpack.c.l.b16 %v887
    %v2051 = vunpack.c.h.b16 %v887
    %v2052 = vunpack.c.l.b16 %v888
    %v2053 = vunpack.c.h.b16 %v888
    %v2054 = vunpack.c.l.b16 %v889
    %v2055 = vunpack.c.h.b16 %v889
    %v2056 = vunpack.c.l.b16 %v890
    %v2057 = vunpack.c.l.b16 %v891
    %v2058 = vunpack.c.h.b16 %v891
    %v2059 = vunpack.c.l.b16 %v892
    %v2060 = vunpack.c.h.b16 %v892
    %v2061 = vunpack.c.l.b16 %v893
    %v2062 = vunpack.c.h.b16 %v893
    %v2063 = vunpack.c.l.b16 %v894
    %v2064 = vunpack.c.h.b16 %v894
    %v2065 = vunpack.c.l.b16 %v895
    %v2066 = vunpack.c.l.b16 %v896
    %v2067 = vunpack.c.h.b16 %v896
    %v2068 = vunpack.c.l.b16 %v897
    %v2069 = vunpack.c.h.b16 %v897
    %v2070 = vunpack.c.l.b16 %v898
    %v2071 = vunpack.c.h.b16 %v898
    %v2072 = vunpack.c.l.b16 %v899
    %v2073 = vunpack.c.h.b16 %v899
    %v2074 = vunpack.c.l.b16 %v900
    %v2075 = vunpack.c.l.b16 %v901
    %v2076 = vunpack.c.h.b16 %v901
    %v2077 = vunpack.c.l.b16 %v902
    %v2078 = vunpack.c.h.b16 %v902
    %v2079 = vunpack.c.l.b16 %v903
    %v2080 = vunpack.c.h.b16 %v903
    %v2081 = vunpack.c.l.b16 %v904
    %v2082 = vunpack.c.h.b16 %v904
    %v2083 = vunpack.c.l.b16 %v905
    %v2084 = vunpack.c.l.b16 %v906
    %v2085 = vunpack.c.h.b16 %v906
    %v2086 = vunpack.c.l.b16 %v907
    %v2087 = vunpack.c.h.b16 %v907
    %v2088 = vunpack.c.l.b16 %v908
    %v2089 = vunpack.c.h.b16 %v908
    %v2090 = vunpack.c.l.b16 %v909
    %v2091 = vunpack.c.h.b16 %v909
    %v2092 = vunpack.c.l.b16 %v910
    %v2093 = vunpack.c.l.b16 %v911
    %v2094 = vunpack.c.h.b16 %v911
    %v2095 = vunpack.c.l.b16 %v912
    %v2096 = vunpack.c.h.b16 %v912
    %v2097 = vunpack.c.l.b16 %v913
    %v2098 = vunpack.c.h.b16 %v913
    %v2099 = vunpack.c.l.b16 %v914
    %v2100 = vunpack.c.h.b16 %v914
    %v2101 = vunpack.c.l.b16 %v915
    %v2102 = vunpack.c.l.b16 %v916
    %v2103 = vunpack.c.h.b16 %v916
    %v2104 = vunpack.c.l.b16 %v917
    %v2105 = vunpack.c.h.b16 %v917
    %v2106 = vunpack.c.l.b16 %v918
    %v2107 = vunpack.c.h.b16 %v918
    %v2108 = vunpack.c.l.b16 %v919
    %v2109 = vunpack.c.h.b16 %v919
    %v2110 = vunpack.c.l.b16 %v920
    %v2111 = vunpack.c.l.b16 %v921
    %v2112 = vunpack.c.h.b16 %v921
    %v2113 = vunpack.c.l.b16 %v922
    %v2114 = vunpack.c.h.b16 %v922
    %v2115 = vunpack.c.l.b16 %v923
    %v2116 = vunpack.c.h.b16 %v923
    %v2117 = vunpack.c.l.b16 %v924
    %v2118 = vunpack.c.h.b16 %v924
    %v2119 = vunpack.c.l.b16 %v925
    %v2120 = vunpack.c.l.b16 %v926
    %v2121 = vunpack.c.h.b16 %v926
    %v2122 = vunpack.c.l.b16 %v927
    %v2123 = vunpack.c.h.b16 %v927
    %v2124 = vunpack.c.l.b16 %v928
    %v2125 = vunpack.c.h.b16 %v928
    %v2126 = vunpack.c.l.b16 %v929
    %v2127 = vunpack.c.h.b16 %v929
    %v2128 = vunpack.c.l.b16 %v930
    %v2129 = vunpack.c.l.b16 %v931
    %v2130 = vunpack.c.h.b16 %v931
    %v2131 = vunpack.c.l.b16 %v932
    %v2132 = vunpack.c.h.b16 %v932
    %v2133 = vunpack.c.l.b16 %v933
    %v2134 = vunpack.c.h.b16 %v933
    %v2135 = vunpack.c.l.b16 %v934
    %v2136 = vunpack.c.h.b16 %v934
    %v2137 = vunpack.c.l.b16 %v935
    %v2138 = vunpack.c.l.b16 %v936
    %v2139 = vunpack.c.h.b16 %v936
    %v2140 = vunpack.c.l.b16 %v937
    %v2141 = vunpack.c.h.b16 %v937
    %v2142 = vunpack.c.l.b16 %v938
    %v2143 = vunpack.c.h.b16 %v938
    %v2144 = vunpack.c.l.b16 %v939
    %v2145 = vunpack.c.h.b16 %v939
    %v2146 = vunpack.c.l.b16 %v940
    %v2147 = vunpack.c.l.b16 %v941
    %v2148 = vunpack.c.h.b16 %v941
    %v2149 = vunpack.c.l.b16 %v942
    %v2150 = vunpack.c.h.b16 %v942
    %v2151 = vunpack.c.l.b16 %v943
    %v2152 = vunpack.c.h.b16 %v943
    %v2153 = vunpack.c.l.b16 %v944
    %v2154 = vunpack.c.h.b16 %v944
    %v2155 = vunpack.c.l.b16 %v945
    %v2156 = vunpack.c.l.b16 %v946
    %v2157 = vunpack.c.h.b16 %v946
    %v2158 = vunpack.c.l.b16 %v947
    %v2159 = vunpack.c.h.b16 %v947
    %v2160 = vunpack.c.l.b16 %v948
    %v2161 = vunpack.c.h.b16 %v948
    %v2162 = vunpack.c.l.b16 %v949
    %v2163 = vunpack.c.h.b16 %v949
    %v2164 = vunpack.c.l.b16 %v950
    %v2165 = vunpack.c.l.b16 %v951
    %v2166 = vunpack.c.h.b16 %v951
    %v2167 = vunpack.c.l.b16 %v952
    %v2168 = vunpack.c.h.b16 %v952
    %v2169 = vunpack.c.l.b16 %v953
    %v2170 = vunpack.c.h.b16 %v953
    %v2171 = vunpack.c.l.b16 %v954
    %v2172 = vunpack.c.h.b16 %v954
    %v2173 = vunpack.c.l.b16 %v955
    %v2174 = vunpack.c.l.b16 %v956
    %v2175 = vunpack.c.h.b16 %v956
    %v2176 = vunpack.c.l.b16 %v957
    %v2177 = vunpack.c.h.b16 %v957
    %v2178 = vunpack.c.l.b16 %v958
    %v2179 = vunpack.c.h.b16 %v958
    %v2180 = vunpack.c.l.b16 %v959
    %v2181 = vunpack.c.h.b16 %v959
    %v2182 = vunpack.c.l.b16 %v960
    %v2183 = vunpack.c.l.b16 %v961
    %v2184 = vunpack.c.h.b16 %v961
    %v2185 = vunpack.c.l.b16 %v962
    %v2186 = vunpack.c.h.b16 %v962
    %v2187 = vunpack.c.l.b16 %v963
    %v2188 = vunpack.c.h.b16 %v963
    %v2189 = vunpack.c.l.b16 %v964
    %v2190 = vunpack.c.h.b16 %v964
    %v2191 = vunpack.c.l.b16 %v965
    %v2192 = vunpack.c.l.b16 %v966
    %v2193 = vunpack.c.h.b16 %v966
    %v2194 = vunpack.c.l.b16 %v967
    %v2195 = vunpack.c.h.b16 %v967
    %v2196 = vunpack.c.l.b16 %v968
    %v2197 = vunpack.c.h.b16 %v968
    %v2198 = vunpack.c.l.b16 %v969
    %v2199 = vunpack.c.h.b16 %v969
    %v2200 = vunpack.c.l.b16 %v970
    %v2201 = vunpack.c.l.b16 %v971
    %v2202 = vunpack.c.h.b16 %v971
    %v2203 = vunpack.c.l.b16 %v972
    %v2204 = vunpack.c.h.b16 %v972
    %v2205 = vunpack.c.l.b16 %v973
    %v2206 = vunpack.c.h.b16 %v973
    %v2207 = vunpack.c.l.b16 %v974
    %v2208 = vunpack.c.h.b16 %v974
    %v2209 = vunpack.c.l.b16 %v975
    %v2210 = vunpack.c.l.b16 %v976
    %v2211 = vunpack.c.h.b16 %v976
    %v2212 = vunpack.c.l.b16 %v977
    %v2213 = vunpack.c.h.b16 %v977
    %v2214 = vunpack.c.l.b16 %v978
    %v2215 = vunpack.c.h.b16 %v978
    %v2216 = vunpack.c.l.b16 %v979
    %v2217 = vunpack.c.h.b16 %v979
    %v2218 = vunpack.c.l.b16 %v980
    %v2219 = vunpack.c.l.b16 %v981
    %v2220 = vunpack.c.h.b16 %v981
    %v2221 = vunpack.c.l.b16 %v982
    %v2222 = vunpack.c.h.b16 %v982
    %v2223 = vunpack.c.l.b16 %v983
    %v2224 = vunpack.c.h.b16 %v983
    %v2225 = vunpack.c.l.b16 %v984
    %v2226 = vunpack.c.h.b16 %v984
    %v2227 = vunpack.c.l.b16 %v985
    %v2228 = vunpack.c.l.b16 %v986
    %v2229 = vunpack.c.h.b16 %v986
    %v2230 = vunpack.c.l.b16 %v987
    %v2231 = vunpack.c.h.b16 %v987
    %v2232 = vunpack.c.l.b16 %v988
    %v2233 = vunpack.c.h.b16 %v988
    %v2234 = vunpack.c.l.b16 %v989
    %v2235 = vunpack.c.h.b16 %v989
    %v2236 = vunpack.c.l.b16 %v990
    %v2237 = vunpack.c.l.b16 %v991
    %v2238 = vunpack.c.h.b16 %v991
    %v2239 = vunpack.c.l.b16 %v992
    %v2240 = vunpack.c.h.b16 %v992
    %v2241 = vunpack.c.l.b16 %v993
    %v2242 = vunpack.c.h.b16 %v993
    %v2243 = vunpack.c.l.b16 %v994
    %v2244 = vunpack.c.h.b16 %v994
    %v2245 = vunpack.c.l.b16 %v995
    %v2246 = vunpack.c.l.b16 %v996
    %v2247 = vunpack.c.h.b16 %v996
    %v2248 = vunpack.c.l.b16 %v997
    %v2249 = vunpack.c.h.b16 %v997
    %v2250 = vunpack.c.l.b16 %v998
    %v2251 = vunpack.c.h.b16 %v998
    %v2252 = vunpack.c.l.b16 %v999
    %v2253 = vunpack.c.h.b16 %v999
    %v2254 = vunpack.c.l.b16 %v1000
    %v2255 = vunpack.c.l.b16 %v1001
    %v2256 = vunpack.c.h.b16 %v1001
    %v2257 = vunpack.c.l.b16 %v1002
    %v2258 = vunpack.c.h.b16 %v1002
    %v2259 = vunpack.c.l.b16 %v1003
    %v2260 = vunpack.c.h.b16 %v1003
    %v2261 = vunpack.c.l.b16 %v1004
    %v2262 = vunpack.c.h.b16 %v1004
    %v2263 = vunpack.c.l.b16 %v1005
    %v2264 = vunpack.c.l.b16 %v1006
    %v2265 = vunpack.c.h.b16 %v1006
    %v2266 = vunpack.c.l.b16 %v1007
    %v2267 = vunpack.c.h.b16 %v1007
    %v2268 = vunpack.c.l.b16 %v1008
    %v2269 = vunpack.c.h.b16 %v1008
    %v2270 = vunpack.c.l.b16 %v1009
    %v2271 = vunpack.c.h.b16 %v1009
    %v2272 = vunpack.c.l.b16 %v1010
    %v2273 = vunpack.c.l.b16 %v1011
    %v2274 = vunpack.c.h.b16 %v1011
    %v2275 = vunpack.c.l.b16 %v1012
    %v2276 = vunpack.c.h.b16 %v1012
    %v2277 = vunpack.c.l.b16 %v1013
    %v2278 = vunpack.c.h.b16 %v1013
    %v2279 = vunpack.c.l.b16 %v1014
    %v2280 = vunpack.c.h.b16 %v1014
    %v2281 = vunpack.c.l.b16 %v1015
    %v2282 = vunpack.c.l.b16 %v1016
    %v2283 = vunpack.c.h.b16 %v1016
    %v2284 = vunpack.c.l.b16 %v1017
    %v2285 = vunpack.c.h.b16 %v1017
    %v2286 = vunpack.c.l.b16 %v1018
    %v2287 = vunpack.c.h.b16 %v1018
    %v2288 = vunpack.c.l.b16 %v1019
    %v2289 = vunpack.c.h.b16 %v1019
    %v2290 = vunpack.c.l.b16 %v1020
    %v2291 = vunpack.c.l.b16 %v1021
    %v2292 = vunpack.c.h.b16 %v1021
    %v2293 = vunpack.c.l.b16 %v1022
    %v2294 = vunpack.c.h.b16 %v1022
    %v2295 = vunpack.c.l.b16 %v1023
    %v2296 = vunpack.c.h.b16 %v1023
    %v2297 = vunpack.c.l.b16 %v1024
    %v2298 = vunpack.c.h.b16 %v1024
    %v2299 = vunpack.c.l.b16 %v1025
    %v2300 = vunpack.c.l.b16 %v1026
    %v2301 = vunpack.c.h.b16 %v1026
    %v2302 = vunpack.c.l.b16 %v1027
    %v2303 = vunpack.c.h.b16 %v1027
    %v2304 = vunpack.c.l.b16 %v1028
    %v2305 = vunpack.c.h.b16 %v1028
    %v2306 = vunpack.c.l.b16 %v1029
    %v2307 = vunpack.c.h.b16 %v1029
    %v2308 = vunpack.c.l.b16 %v1030
    %v2309 = vunpack.c.l.b16 %v1031
    %v2310 = vunpack.c.h.b16 %v1031
    %v2311 = vunpack.c.l.b16 %v1032
    %v2312 = vunpack.c.h.b16 %v1032
    %v2313 = vunpack.c.l.b16 %v1033
    %v2314 = vunpack.c.h.b16 %v1033
    %v2315 = vunpack.c.l.b16 %v1034
    %v2316 = vunpack.c.h.b16 %v1034
    %v2317 = vunpack.c.l.b16 %v1035
    %v2318 = vunpack.c.l.b16 %v1036
    %v2319 = vunpack.c.h.b16 %v1036
    %v2320 = vunpack.c.l.b16 %v1037
    %v2321 = vunpack.c.h.b16 %v1037
    %v2322 = vunpack.c.l.b16 %v1038
    %v2323 = vunpack.c.h.b16 %v1038
    %v2324 = vunpack.c.l.b16 %v1039
    %v2325 = vunpack.c.h.b16 %v1039
    %v2326 = vunpack.c.l.b16 %v1040
    %v2327 = vunpack.c.l.b16 %v1041
    %v2328 = vunpack.c.h.b16 %v1041
    %v2329 = vunpack.c.l.b16 %v1042
    %v2330 = vunpack.c.h.b16 %v1042
    %v2331 = vunpack.c.l.b16 %v1043
    %v2332 = vunpack.c.h.b16 %v1043
    %v2333 = vunpack.c.l.b16 %v1044
    %v2334 = vunpack.c.h.b16 %v1044
    %v2335 = vunpack.c.l.b16 %v1045
    %v2336 = vunpack.c.l.b16 %v1046
    %v2337 = vunpack.c.h.b16 %v1046
    %v2338 = vunpack.c.l.b16 %v1047
    %v2339 = vunpack.c.h.b16 %v1047
    %v2340 = vunpack.c.l.b16 %v1048
    %v2341 = vunpack.c.h.b16 %v1048
    %v2342 = vunpack.c.l.b16 %v1049
    %v2343 = vunpack.c.h.b16 %v1049
    %v2344 = vunpack.c.l.b16 %v1050
    %v2345 = vunpack.c.l.b16 %v1051
    %v2346 = vunpack.c.h.b16 %v1051
    %v2347 = vunpack.c.l.b16 %v1052
    %v2348 = vunpack.c.h.b16 %v1052
    %v2349 = vunpack.c.l.b16 %v1053
    %v2350 = vunpack.c.h.b16 %v1053
    %v2351 = vunpack.c.l.b16 %v1054
    %v2352 = vunpack.c.h.b16 %v1054
    %v2353 = vunpack.c.l.b16 %v1055
    %v2354 = vunpack.c.l.b16 %v1056
    %v2355 = vunpack.c.h.b16 %v1056
    %v2356 = vunpack.c.l.b16 %v1057
    %v2357 = vunpack.c.h.b16 %v1057
    %v2358 = vunpack.c.l.b16 %v1058
    %v2359 = vunpack.c.h.b16 %v1058
    %v2360 = vunpack.c.l.b16 %v1059
    %v2361 = vunpack.c.h.b16 %v1059
    %v2362 = vunpack.c.l.b16 %v1060
    %v2363 = vunpack.c.l.b16 %v1061
    %v2364 = vunpack.c.h.b16 %v1061
    %v2365 = vunpack.c.l.b16 %v1062
    %v2366 = vunpack.c.h.b16 %v1062
    %v2367 = vunpack.c.l.b16 %v1063
    %v2368 = vunpack.c.h.b16 %v1063
    %v2369 = vunpack.c.l.b16 %v1064
    %v2370 = vunpack.c.h.b16 %v1064
    %v2371 = vunpack.c.l.b16 %v1065
    %v2372 = vunpack.c.l.b16 %v1066
    %v2373 = vunpack.c.h.b16 %v1066
    %v2374 = vunpack.c.l.b16 %v1067
    %v2375 = vunpack.c.h.b16 %v1067
    %v2376 = vunpack.c.l.b16 %v1068
    %v2377 = vunpack.c.h.b16 %v1068
    %v2378 = vunpack.c.l.b16 %v1069
    %v2379 = vunpack.c.h.b16 %v1069
    %v2380 = vunpack.c.l.b16 %v1070
    %v2381 = vunpack.c.l.b16 %v1071
    %v2382 = vunpack.c.h.b16 %v1071
    %v2383 = vunpack.c.l.b16 %v1072
    %v2384 = vunpack.c.h.b16 %v1072
    %v2385 = vunpack.c.l.b16 %v1073
    %v2386 = vunpack.c.h.b16 %v1073
    %v2387 = vunpack.c.l.b16 %v1074
    %v2388 = vunpack.c.h.b16 %v1074
    %v2389 = vunpack.c.l.b16 %v1075
    %v2390 = vunpack.c.l.b16 %v1076
    %v2391 = vunpack.c.h.b16 %v1076
    %v2392 = vunpack.c.l.b16 %v1077
    %v2393 = vunpack.c.h.b16 %v1077
    %v2394 = vunpack.c.l.b16 %v1078
    %v2395 = vunpack.c.h.b16 %v1078
    %v2396 = vunpack.c.l.b16 %v1079
    %v2397 = vunpack.c.h.b16 %v1079
    %v2398 = vunpack.c.l.b16 %v1080
    %v2399 = vunpack.c.l.b16 %v1081
    %v2400 = vunpack.c.h.b16 %v1081
    %v2401 = vunpack.c.l.b16 %v1082
    %v2402 = vunpack.c.h.b16 %v1082
    %v2403 = vunpack.c.l.b16 %v1083
    %v2404 = vunpack.c.h.b16 %v1083
    %v2405 = vunpack.c.l.b16 %v1084
    %v2406 = vunpack.c.h.b16 %v1084
    %v2407 = vunpack.c.l.b16 %v1085
    %v2408 = vunpack.c.l.b16 %v1086
    %v2409 = vunpack.c.h.b16 %v1086
    %v2410 = vunpack.c.l.b16 %v1087
    %v2411 = vunpack.c.h.b16 %v1087
    %v2412 = vunpack.c.l.b16 %v1088
    %v2413 = vunpack.c.h.b16 %v1088
    %v2414 = vunpack.c.l.b16 %v1089
    %v2415 = vunpack.c.h.b16 %v1089
    %v2416 = vunpack.c.l.b16 %v1090
    %v2417 = vunpack.c.l.b16 %v1091
    %v2418 = vunpack.c.h.b16 %v1091
    %v2419 = vunpack.c.l.b16 %v1092
    %v2420 = vunpack.c.h.b16 %v1092
    %v2421 = vunpack.c.l.b16 %v1093
    %v2422 = vunpack.c.h.b16 %v1093
    %v2423 = vunpack.c.l.b16 %v1094
    %v2424 = vunpack.c.h.b16 %v1094
    %v2425 = vunpack.c.l.b16 %v1095
    %v2426 = vunpack.c.l.b16 %v1096
    %v2427 = vunpack.c.h.b16 %v1096
    %v2428 = vunpack.c.l.b16 %v1097
    %v2429 = vunpack.c.h.b16 %v1097
    %v2430 = vunpack.c.l.b16 %v1098
    %v2431 = vunpack.c.h.b16 %v1098
    %v2432 = vunpack.c.l.b16 %v1099
    %v2433 = vunpack.c.h.b16 %v1099
    %v2434 = vunpack.c.l.b16 %v1100
    %v2435 = vunpack.c.l.b16 %v1101
    %v2436 = vunpack.c.h.b16 %v1101
    %v2437 = vunpack.c.l.b16 %v1102
    %v2438 = vunpack.c.h.b16 %v1102
    %v2439 = vunpack.c.l.b16 %v1103
    %v2440 = vunpack.c.h.b16 %v1103
    %v2441 = vunpack.c.l.b16 %v1104
    %v2442 = vunpack.c.h.b16 %v1104
    %v2443 = vunpack.c.l.b16 %v1105
    %v2444 = vunpack.c.l.b16 %v1106
    %v2445 = vunpack.c.h.b16 %v1106
    %v2446 = vunpack.c.l.b16 %v1107
    %v2447 = vunpack.c.h.b16 %v1107
    %v2448 = vunpack.c.l.b16 %v1108
    %v2449 = vunpack.c.h.b16 %v1108
    %v2450 = vunpack.c.l.b16 %v1109
    %v2451 = vunpack.c.h.b16 %v1109
    %v2452 = vunpack.c.l.b16 %v1110
    %v2453 = vunpack.c.l.b16 %v1111
    %v2454 = vunpack.c.h.b16 %v1111
    %v2455 = vunpack.c.l.b16 %v1112
    %v2456 = vunpack.c.h.b16 %v1112
    %v2457 = vunpack.c.l.b16 %v1113
    %v2458 = vunpack.c.h.b16 %v1113
    %v2459 = vunpack.c.l.b16 %v1114
    %v2460 = vunpack.c.h.b16 %v1114
    %v2461 = vunpack.c.l.b16 %v1115
    %v2462 = vunpack.c.l.b16 %v1116
    %v2463 = vunpack.c.h.b16 %v1116
    %v2464 = vunpack.c.l.b16 %v1117
    %v2465 = vunpack.c.h.b16 %v1117
    %v2466 = vunpack.c.l.b16 %v1118
    %v2467 = vunpack.c.h.b16 %v1118
    %v2468 = vunpack.c.l.b16 %v1119
    %v2469 = vunpack.c.h.b16 %v1119
    %v2470 = vunpack.c.l.b16 %v1120
    %v2471 = vunpack.c.l.b16 %v1121
    %v2472 = vunpack.c.h.b16 %v1121
    %v2473 = vunpack.c.l.b16 %v1122
    %v2474 = vunpack.c.h.b16 %v1122
    %v2475 = vunpack.c.l.b16 %v1123
    %v2476 = vunpack.c.h.b16 %v1123
    %v2477 = vunpack.c.l.b16 %v1124
    %v2478 = vunpack.c.h.b16 %v1124
    %v2479 = vunpack.c.l.b16 %v1125
    %v2480 = vunpack.c.l.b16 %v1126
    %v2481 = vunpack.c.h.b16 %v1126
    %v2482 = vunpack.c.l.b16 %v1127
    %v2483 = vunpack.c.h.b16 %v1127
    %v2484 = vunpack.c.l.b16 %v1128
    %v2485 = vunpack.c.h.b16 %v1128
    %v2486 = vunpack.c.l.b16 %v1129
    %v2487 = vunpack.c.h.b16 %v1129
    %v2488 = vunpack.c.l.b16 %v1130
    %v2489 = vunpack.c.l.b16 %v1131
    %v2490 = vunpack.c.h.b16 %v1131
    %v2491 = vunpack.c.l.b16 %v1132
    %v2492 = vunpack.c.h.b16 %v1132
    %v2493 = vunpack.c.l.b16 %v1133
    %v2494 = vunpack.c.h.b16 %v1133
    %v2495 = vunpack.c.l.b16 %v1134
    %v2496 = vunpack.c.h.b16 %v1134
    %v2497 = vunpack.c.l.b16 %v1135
    %v2498 = vunpack.c.l.b16 %v1136
    %v2499 = vunpack.c.h.b16 %v1136
    %v2500 = vunpack.c.l.b16 %v1137
    %v2501 = vunpack.c.h.b16 %v1137
    %v2502 = vunpack.c.l.b16 %v1138
    %v2503 = vunpack.c.h.b16 %v1138
    %v2504 = vunpack.c.l.b16 %v1139
    %v2505 = vunpack.c.h.b16 %v1139
    %v2506 = vunpack.c.l.b16 %v1140
    %v2507 = vunpack.c.l.b16 %v1141
    %v2508 = vunpack.c.h.b16 %v1141
    %v2509 = vunpack.c.l.b16 %v1142
    %v2510 = vunpack.c.h.b16 %v1142
    %v2511 = vunpack.c.l.b16 %v1143
    %v2512 = vunpack.c.h.b16 %v1143
    %v2513 = vunpack.c.l.b16 %v1144
    %v2514 = vunpack.c.h.b16 %v1144
    %v2515 = vunpack.c.l.b16 %v1145
    %v2516 = vunpack.c.l.b16 %v1146
    %v2517 = vunpack.c.h.b16 %v1146
    %v2518 = vunpack.c.l.b16 %v1147
    %v2519 = vunpack.c.h.b16 %v1147
    %v2520 = vunpack.c.l.b16 %v1148
    %v2521 = vunpack.c.h.b16 %v1148
    %v2522 = vunpack.c.l.b16 %v1149
    %v2523 = vunpack.c.h.b16 %v1149
    %v2524 = vunpack.c.l.b16 %v1150
    %v2525 = vunpack.c.l.b16 %v1151
    %v2526 = vunpack.c.h.b16 %v1151
    %v2527 = vunpack.c.l.b16 %v1152
    %v2528 = vunpack.c.h.b16 %v1152
    %v2529 = vunpack.c.l.b16 %v1153
    %v2530 = vunpack.c.h.b16 %v1153
    %v2531 = vunpack.c.l.b16 %v1154
    %v2532 = vunpack.c.h.b16 %v1154
    %v2533 = vunpack.c.l.b16 %v1155
    %v2534 = vunpack.c.l.b16 %v1156
    %v2535 = vunpack.c.h.b16 %v1156
    %v2536 = vunpack.c.l.b16 %v1157
    %v2537 = vunpack.c.h.b16 %v1157
    %v2538 = vunpack.c.l.b16 %v1158
    %v2539 = vunpack.c.h.b16 %v1158
    %v2540 = vunpack.c.l.b16 %v1159
    %v2541 = vunpack.c.h.b16 %v1159
    %v2542 = vunpack.c.l.b16 %v1160
    %v2543 = vunpack.c.l.b16 %v1161
    %v2544 = vunpack.c.h.b16 %v1161
    %v2545 = vunpack.c.l.b16 %v1162
    %v2546 = vunpack.c.h.b16 %v1162
    %v2547 = vunpack.c.l.b16 %v1163
    %v2548 = vunpack.c.h.b16 %v1163
    %v2549 = vunpack.c.l.b16 %v1164
    %v2550 = vunpack.c.h.b16 %v1164
    %v2551 = vunpack.c.l.b16 %v1165
    %v2552 = vunpack.c.l.b16 %v1166
    %v2553 = vunpack.c.h.b16 %v1166
    %v2554 = vunpack.c.l.b16 %v1167
    %v2555 = vunpack.c.h.b16 %v1167
    %v2556 = vunpack.c.l.b16 %v1168
    %v2557 = vunpack.c.h.b16 %v1168
    %v2558 = vunpack.c.l.b16 %v1169
    %v2559 = vunpack.c.h.b16 %v1169
    %v2560 = vunpack.c.l.b16 %v1170
    %v2561 = vunpack.c.l.b16 %v1171
    %v2562 = vunpack.c.h.b16 %v1171
    %v2563 = vunpack.c.l.b16 %v1172
    %v2564 = vunpack.c.h.b16 %v1172
    %v2565 = vunpack.c.l.b16 %v1173
    %v2566 = vunpack.c.h.b16 %v1173
    %v2567 = vunpack.c.l.b16 %v1174
    %v2568 = vunpack.c.h.b16 %v1174
    %v2569 = vunpack.c.l.b16 %v1175
    %v2570 = vunpack.c.l.b16 %v1176
    %v2571 = vunpack.c.h.b16 %v1176
    %v2572 = vunpack.c.l.b16 %v1177
    %v2573 = vunpack.c.h.b16 %v1177
    %v2574 = vunpack.c.l.b16 %v1178
    %v2575 = vunpack.c.h.b16 %v1178
    %v2576 = vunpack.c.l.b16 %v1179
    %v2577 = vunpack.c.h.b16 %v1179
    %v2578 = vunpack.c.l.b16 %v1180
    %v2579 = vunpack.c.l.b16 %v1181
    %v2580 = vunpack.c.h.b16 %v1181
    %v2581 = vunpack.c.l.b16 %v1182
    %v2582 = vunpack.c.h.b16 %v1182
    %v2583 = vunpack.c.l.b16 %v1183
    %v2584 = vunpack.c.h.b16 %v1183
    %v2585 = vunpack.c.l.b16 %v1184
    %v2586 = vunpack.c.h.b16 %v1184
    %v2587 = vunpack.c.l.b16 %v1185
    %v2588 = vunpack.c.l.b16 %v1186
    %v2589 = vunpack.c.h.b16 %v1186
    %v2590 = vunpack.c.l.b16 %v1187
    %v2591 = vunpack.c.h.b16 %v1187
    %v2592 = vunpack.c.l.b16 %v1188
    %v2593 = vunpack.c.h.b16 %v1188
    %v2594 = vunpack.c.l.b16 %v1189
    %v2595 = vunpack.c.h.b16 %v1189
    %v2596 = vunpack.c.l.b16 %v1190
    %v2597 = vunpack.c.l.b16 %v1191
    %v2598 = vunpack.c.h.b16 %v1191
    %v2599 = vunpack.c.l.b16 %v1192
    %v2600 = vunpack.c.h.b16 %v1192
    %v2601 = vunpack.c.l.b16 %v1193
    %v2602 = vunpack.c.h.b16 %v1193
    %v2603 = vunpack.c.l.b16 %v1194
    %v2604 = vunpack.c.h.b16 %v1194
    %v2605 = vunpack.c.l.b16 %v1195
    %v2606 = vunpack.c.l.b16 %v1196
    %v2607 = vunpack.c.h.b16 %v1196
    %v2608 = vunpack.c.l.b16 %v1197
    %v2609 = vunpack.c.h.b16 %v1197
    %v2610 = vunpack.c.l.b16 %v1198
    %v2611 = vunpack.c.h.b16 %v1198
    %v2612 = vunpack.c.l.b16 %v1199
    %v2613 = vunpack.c.h.b16 %v1199
    %v2614 = vunpack.c.l.b16 %v1200
    %v2615 = vunpack.c.l.b16 %v1201
    %v2616 = vunpack.c.h.b16 %v1201
    %v2617 = vunpack.c.l.b16 %v1202
    %v2618 = vunpack.c.h.b16 %v1202
    %v2619 = vunpack.c.l.b16 %v1203
    %v2620 = vunpack.c.h.b16 %v1203
    %v2621 = vunpack.c.l.b16 %v1204
    %v2622 = vunpack.c.h.b16 %v1204
    %v2623 = vunpack.c.l.b16 %v1205
    %v2624 = vunpack.c.l.b16 %v1206
    %v2625 = vunpack.c.h.b16 %v1206
    %v2626 = vunpack.c.l.b16 %v1207
    %v2627 = vunpack.c.h.b16 %v1207
    %v2628 = vunpack.c.l.b16 %v1208
    %v2629 = vunpack.c.h.b16 %v1208
    %v2630 = vunpack.c.l.b16 %v1209
    %v2631 = vunpack.c.h.b16 %v1209
    %v2632 = vunpack.c.l.b16 %v1210
    %v2633 = vpack.c.b16 %v1742, %v1733
    %v2634 = vpack.c.b16 %v1743, %v1734
    %v2635 = vpack.c.b16 %v1744, %v1735
    %v2636 = vpack.c.b16 %v1745, %v1736
    %v2637 = vpack.c.b16 %v1746, %v1737
    %v2638 = vpack.c.b16 %v1747, %v1738
    %v2639 = vpack.c.b16 %v1748, %v1739
    %v2640 = vpack.c.b16 %v1749, %v1740
    %v2641 = vpack.c.b16 %v1750, %v1741
    %v2642 = vpack.c.b16 %v1760, %v1751
    %v2643 = vpack.c.b16 %v1761, %v1752
    %v2644 = vpack.c.b16 %v1762, %v1753
    %v2645 = vpack.c.b16 %v1763, %v1754
    %v2646 = vpack.c.b16 %v1764, %v1755
    %v2647 = vpack.c.b16 %v1765, %v1756
    %v2648 = vpack.c.b16 %v1766, %v1757
    %v2649 = vpack.c.b16 %v1767, %v1758
    %v2650 = vpack.c.b16 %v1768, %v1759
    %v2651 = vpack.c.b16 %v1778, %v1769
    %v2652 = vpack.c.b16 %v1779, %v1770
    %v2653 = vpack.c.b16 %v1780, %v1771
    %v2654 = vpack.c.b16 %v1781, %v1772
    %v2655 = vpack.c.b16 %v1782, %v1773
    %v2656 = vpack.c.b16 %v1783, %v1774
    %v2657 = vpack.c.b16 %v1784, %v1775
    %v2658 = vpack.c.b16 %v1785, %v1776
    %v2659 = vpack.c.b16 %v1786, %v1777
    %v2660 = vpack.c.b16 %v1796, %v1787
    %v2661 = vpack.c.b16 %v1797, %v1788
    %v2662 = vpack.c.b16 %v1798, %v1789
    %v2663 = vpack.c.b16 %v1799, %v1790
    %v2664 = vpack.c.b16 %v1800, %v1791
    %v2665 = vpack.c.b16 %v1801, %v1792
    %v2666 = vpack.c.b16 %v1802, %v1793
    %v2667 = vpack.c.b16 %v1803, %v1794
    %v2668 = vpack.c.b16 %v1804, %v1795
    %v2669 = vpack.c.b16 %v1814, %v1805
    %v2670 = vpack.c.b16 %v1815, %v1806
    %v2671 = vpack.c.b16 %v1816, %v1807
    %v2672 = vpack.c.b16 %v1817, %v1808
    %v2673 = vpack.c.b16 %v1818, %v1809
    %v2674 = vpack.c.b16 %v1819, %v1810
    %v2675 = vpack.c.b16 %v1820, %v1811
    %v2676 = vpack.c.b16 %v1821, %v1812
    %v2677 = vpack.c.b16 %v1822, %v1813
    %v2678 = vpack.c.b16 %v1832, %v1823
    %v2679 = vpack.c.b16 %v1833, %v1824
    %v2680 = vpack.c.b16 %v1834, %v1825
    %v2681 = vpack.c.b16 %v1835, %v1826
    %v2682 = vpack.c.b16 %v1836, %v1827
    %v2683 = vpack.c.b16 %v1837, %v1828
    %v2684 = vpack.c.b16 %v1838, %v1829
    %v2685 = vpack.c.b16 %v1839, %v1830
    %v2686 = vpack.c.b16 %v1840, %v1831
    %v2687 = vpack.c.b16 %v1850, %v1841
    %v2688 = vpack.c.b16 %v1851, %v1842
    %v2689 = vpack.c.b16 %v1852, %v1843
    %v2690 = vpack.c.b16 %v1853, %v1844
    %v2691 = vpack.c.b16 %v1854, %v1845
    %v2692 = vpack.c.b16 %v1855, %v1846
    %v2693 = vpack.c.b16 %v1856, %v1847
    %v2694 = vpack.c.b16 %v1857, %v1848
    %v2695 = vpack.c.b16 %v1858, %v1849
    %v2696 = vpack.c.b16 %v1868, %v1859
    %v2697 = vpack.c.b16 %v1869, %v1860
    %v2698 = vpack.c.b16 %v1870, %v1861
    %v2699 = vpack.c.b16 %v1871, %v1862
    %v2700 = vpack.c.b16 %v1872, %v1863
    %v2701 = vpack.c.b16 %v1873, %v1864
    %v2702 = vpack.c.b16 %v1874, %v1865
    %v2703 = vpack.c.b16 %v1875, %v1866
    %v2704 = vpack.c.b16 %v1876, %v1867
    %v2705 = vpack.c.b16 %v1886, %v1877
    %v2706 = vpack.c.b16 %v1887, %v1878
    %v2707 = vpack.c.b16 %v1888, %v1879
    %v2708 = vpack.c.b16 %v1889, %v1880
    %v2709 = vpack.c.b16 %v1890, %v1881
    %v2710 = vpack.c.b16 %v1891, %v1882
    %v2711 = vpack.c.b16 %v1892, %v1883
    %v2712 = vpack.c.b16 %v1893, %v1884
    %v2713 = vpack.c.b16 %v1894, %v1885
    %v2714 = vpack.c.b16 %v1904, %v1895
    %v2715 = vpack.c.b16 %v1905, %v1896
    %v2716 = vpack.c.b16 %v1906, %v1897
    %v2717 = vpack.c.b16 %v1907, %v1898
    %v2718 = vpack.c.b16 %v1908, %v1899
    %v2719 = vpack.c.b16 %v1909, %v1900
    %v2720 = vpack.c.b16 %v1910, %v1901
    %v2721 = vpack.c.b16 %v1911, %v1902
    %v2722 = vpack.c.b16 %v1912, %v1903
    %v2723 = vpack.c.b16 %v1922, %v1913
    %v2724 = vpack.c.b16 %v1923, %v1914
    %v2725 = vpack.c.b16 %v1924, %v1915
    %v2726 = vpack.c.b16 %v1925, %v1916
    %v2727 = vpack.c.b16 %v1926, %v1917
    %v2728 = vpack.c.b16 %v1927, %v1918
    %v2729 = vpack.c.b16 %v1928, %v1919
    %v2730 = vpack.c.b16 %v1929, %v1920
    %v2731 = vpack.c.b16 %v1930, %v1921
    %v2732 = vpack.c.b16 %v1940, %v1931
    %v2733 = vpack.c.b16 %v1941, %v1932
    %v2734 = vpack.c.b16 %v1942, %v1933
    %v2735 = vpack.c.b16 %v1943, %v1934
    %v2736 = vpack.c.b16 %v1944, %v1935
    %v2737 = vpack.c.b16 %v1945, %v1936
    %v2738 = vpack.c.b16 %v1946, %v1937
    %v2739 = vpack.c.b16 %v1947, %v1938
    %v2740 = vpack.c.b16 %v1948, %v1939
    %v2741 = vpack.c.b16 %v1958, %v1949
    %v2742 = vpack.c.b16 %v1959, %v1950
    %v2743 = vpack.c.b16 %v1960, %v1951
    %v2744 = vpack.c.b16 %v1961, %v1952
    %v2745 = vpack.c.b16 %v1962, %v1953
    %v2746 = vpack.c.b16 %v1963, %v1954
    %v2747 = vpack.c.b16 %v1964, %v1955
    %v2748 = vpack.c.b16 %v1965, %v1956
    %v2749 = vpack.c.b16 %v1966, %v1957
    %v2750 = vpack.c.b16 %v1976, %v1967
    %v2751 = vpack.c.b16 %v1977, %v1968
    %v2752 = vpack.c.b16 %v1978, %v1969
    %v2753 = vpack.c.b16 %v1979, %v1970
    %v2754 = vpack.c.b16 %v1980, %v1971
    %v2755 = vpack.c.b16 %v1981, %v1972
    %v2756 = vpack.c.b16 %v1982, %v1973
    %v2757 = vpack.c.b16 %v1983, %v1974
    %v2758 = vpack.c.b16 %v1984, %v1975
    %v2759 = vpack.c.b16 %v1994, %v1985
    %v2760 = vpack.c.b16 %v1995, %v1986
    %v2761 = vpack.c.b16 %v1996, %v1987
    %v2762 = vpack.c.b16 %v1997, %v1988
    %v2763 = vpack.c.b16 %v1998, %v1989
    %v2764 = vpack.c.b16 %v1999, %v1990
    %v2765 = vpack.c.b16 %v2000, %v1991
    %v2766 = vpack.c.b16 %v2001, %v1992
    %v2767 = vpack.c.b16 %v2002, %v1993
    %v2768 = vpack.c.b16 %v2012, %v2003
    %v2769 = vpack.c.b16 %v2013, %v2004
    %v2770 = vpack.c.b16 %v2014, %v2005
    %v2771 = vpack.c.b16 %v2015, %v2006
    %v2772 = vpack.c.b16 %v2016, %v2007
    %v2773 = vpack.c.b16 %v2017, %v2008
    %v2774 = vpack.c.b16 %v2018, %v2009
    %v2775 = vpack.c.b16 %v2019, %v2010
    %v2776 = vpack.c.b16 %v2020, %v2011
    %v2777 = vpack.c.b16 %v2030, %v2021
    %v2778 = vpack.c.b16 %v2031, %v2022
    %v2779 = vpack.c.b16 %v2032, %v2023
    %v2780 = vpack.c.b16 %v2033, %v2024
    %v2781 = vpack.c.b16 %v2034, %v2025
    %v2782 = vpack.c.b16 %v2035, %v2026
    %v2783 = vpack.c.b16 %v2036, %v2027
    %v2784 = vpack.c.b16 %v2037, %v2028
    %v2785 = vpack.c.b16 %v2038, %v2029
    %v2786 = vpack.c.b16 %v2048, %v2039
    %v2787 = vpack.c.b16 %v2049, %v2040
    %v2788 = vpack.c.b16 %v2050, %v2041
    %v2789 = vpack.c.b16 %v2051, %v2042
    %v2790 = vpack.c.b16 %v2052, %v2043
    %v2791 = vpack.c.b16 %v2053, %v2044
    %v2792 = vpack.c.b16 %v2054, %v2045
    %v2793 = vpack.c.b16 %v2055, %v2046
    %v2794 = vpack.c.b16 %v2056, %v2047
    %v2795 = vpack.c.b16 %v2066, %v2057
    %v2796 = vpack.c.b16 %v2067, %v2058
    %v2797 = vpack.c.b16 %v2068, %v2059
    %v2798 = vpack.c.b16 %v2069, %v2060
    %v2799 = vpack.c.b16 %v2070, %v2061
    %v2800 = vpack.c.b16 %v2071, %v2062
    %v2801 = vpack.c.b16 %v2072, %v2063
    %v2802 = vpack.c.b16 %v2073, %v2064
    %v2803 = vpack.c.b16 %v2074, %v2065
    %v2804 = vpack.c.b16 %v2084, %v2075
    %v2805 = vpack.c.b16 %v2085, %v2076
    %v2806 = vpack.c.b16 %v2086, %v2077
    %v2807 = vpack.c.b16 %v2087, %v2078
    %v2808 = vpack.c.b16 %v2088, %v2079
    %v2809 = vpack.c.b16 %v2089, %v2080
    %v2810 = vpack.c.b16 %v2090, %v2081
    %v2811 = vpack.c.b16 %v2091, %v2082
    %v2812 = vpack.c.b16 %v2092, %v2083
    %v2813 = vpack.c.b16 %v2102, %v2093
    %v2814 = vpack.c.b16 %v2103, %v2094
    %v2815 = vpack.c.b16 %v2104, %v2095
    %v2816 = vpack.c.b16 %v2105, %v2096
    %v2817 = vpack.c.b16 %v2106, %v2097
    %v2818 = vpack.c.b16 %v2107, %v2098
    %v2819 = vpack.c.b16 %v2108, %v2099
    %v2820 = vpack.c.b16 %v2109, %v2100
    %v2821 = vpack.c.b16 %v2110, %v2101
    %v2822 = vpack.c.b16 %v2120, %v2111
    %v2823 = vpack.c.b16 %v2121, %v2112
    %v2824 = vpack.c.b16 %v2122, %v2113
    %v2825 = vpack.c.b16 %v2123, %v2114
    %v2826 = vpack.c.b16 %v2124, %v2115
    %v2827 = vpack.c.b16 %v2125, %v2116
    %v2828 = vpack.c.b16 %v2126, %v2117
    %v2829 = vpack.c.b16 %v2127, %v2118
    %v2830 = vpack.c.b16 %v2128, %v2119
    %v2831 = vpack.c.b16 %v2138, %v2129
    %v2832 = vpack.c.b16 %v2139, %v2130
    %v2833 = vpack.c.b16 %v2140, %v2131
    %v2834 = vpack.c.b16 %v2141, %v2132
    %v2835 = vpack.c.b16 %v2142, %v2133
    %v2836 = vpack.c.b16 %v2143, %v2134
    %v2837 = vpack.c.b16 %v2144, %v2135
    %v2838 = vpack.c.b16 %v2145, %v2136
    %v2839 = vpack.c.b16 %v2146, %v2137
    %v2840 = vpack.c.b16 %v2156, %v2147
    %v2841 = vpack.c.b16 %v2157, %v2148
    %v2842 = vpack.c.b16 %v2158, %v2149
    %v2843 = vpack.c.b16 %v2159, %v2150
    %v2844 = vpack.c.b16 %v2160, %v2151
    %v2845 = vpack.c.b16 %v2161, %v2152
    %v2846 = vpack.c.b16 %v2162, %v2153
    %v2847 = vpack.c.b16 %v2163, %v2154
    %v2848 = vpack.c.b16 %v2164, %v2155
    %v2849 = vpack.c.b16 %v2174, %v2165
    %v2850 = vpack.c.b16 %v2175, %v2166
    %v2851 = vpack.c.b16 %v2176, %v2167
    %v2852 = vpack.c.b16 %v2177, %v2168
    %v2853 = vpack.c.b16 %v2178, %v2169
    %v2854 = vpack.c.b16 %v2179, %v2170
    %v2855 = vpack.c.b16 %v2180, %v2171
    %v2856 = vpack.c.b16 %v2181, %v2172
    %v2857 = vpack.c.b16 %v2182, %v2173
    %v2858 = vpack.c.b16 %v2192, %v2183
    %v2859 = vpack.c.b16 %v2193, %v2184
    %v2860 = vpack.c.b16 %v2194, %v2185
    %v2861 = vpack.c.b16 %v2195, %v2186
    %v2862 = vpack.c.b16 %v2196, %v2187
    %v2863 = vpack.c.b16 %v2197, %v2188
    %v2864 = vpack.c.b16 %v2198, %v2189
    %v2865 = vpack.c.b16 %v2199, %v2190
    %v2866 = vpack.c.b16 %v2200, %v2191
    %v2867 = vpack.c.b16 %v2210, %v2201
    %v2868 = vpack.c.b16 %v2211, %v2202
    %v2869 = vpack.c.b16 %v2212, %v2203
    %v2870 = vpack.c.b16 %v2213, %v2204
    %v2871 = vpack.c.b16 %v2214, %v2205
    %v2872 = vpack.c.b16 %v2215, %v2206
    %v2873 = vpack.c.b16 %v2216, %v2207
    %v2874 = vpack.c.b16 %v2217, %v2208
    %v2875 = vpack.c.b16 %v2218, %v2209
    %v2876 = vpack.c.b16 %v2228, %v2219
    %v2877 = vpack.c.b16 %v2229, %v2220
    %v2878 = vpack.c.b16 %v2230, %v2221
    %v2879 = vpack.c.b16 %v2231, %v2222
    %v2880 = vpack.c.b16 %v2232, %v2223
    %v2881 = vpack.c.b16 %v2233, %v2224
    %v2882 = vpack.c.b16 %v2234, %v2225
    %v2883 = vpack.c.b16 %v2235, %v2226
    %v2884 = vpack.c.b16 %v2236, %v2227
    %v2885 = vpack.c.b16 %v2246, %v2237
    %v2886 = vpack.c.b16 %v2247, %v2238
    %v2887 = vpack.c.b16 %v2248, %v2239
    %v2888 = vpack.c.b16 %v2249, %v2240
    %v2889 = vpack.c.b16 %v2250, %v2241
    %v2890 = vpack.c.b16 %v2251, %v2242
    %v2891 = vpack.c.b16 %v2252, %v2243
    %v2892 = vpack.c.b16 %v2253, %v2244
    %v2893 = vpack.c.b16 %v2254, %v2245
    %v2894 = vpack.c.b16 %v2264, %v2255
    %v2895 = vpack.c.b16 %v2265, %v2256
    %v2896 = vpack.c.b16 %v2266, %v2257
    %v2897 = vpack.c.b16 %v2267, %v2258
    %v2898 = vpack.c.b16 %v2268, %v2259
    %v2899 = vpack.c.b16 %v2269, %v2260
    %v2900 = vpack.c.b16 %v2270, %v2261
    %v2901 = vpack.c.b16 %v2271, %v2262
    %v2902 = vpack.c.b16 %v2272, %v2263
    %v2903 = vpack.c.b16 %v2282, %v2273
    %v2904 = vpack.c.b16 %v2283, %v2274
    %v2905 = vpack.c.b16 %v2284, %v2275
    %v2906 = vpack.c.b16 %v2285, %v2276
    %v2907 = vpack.c.b16 %v2286, %v2277
    %v2908 = vpack.c.b16 %v2287, %v2278
    %v2909 = vpack.c.b16 %v2288, %v2279
    %v2910 = vpack.c.b16 %v2289, %v2280
    %v2911 = vpack.c.b16 %v2290, %v2281
    %v2912 = vpack.c.b16 %v2300, %v2291
    %v2913 = vpack.c.b16 %v2301, %v2292
    %v2914 = vpack.c.b16 %v2302, %v2293
    %v2915 = vpack.c.b16 %v2303, %v2294
    %v2916 = vpack.c.b16 %v2304, %v2295
    %v2917 = vpack.c.b16 %v2305, %v2296
    %v2918 = vpack.c.b16 %v2306, %v2297
    %v2919 = vpack.c.b16 %v2307, %v2298
    %v2920 = vpack.c.b16 %v2308, %v2299
    %v2921 = vpack.c.b16 %v2318, %v2309
    %v2922 = vpack.c.b16 %v2319, %v2310
    %v2923 = vpack.c.b16 %v2320, %v2311
    %v2924 = vpack.c.b16 %v2321, %v2312
    %v2925 = vpack.c.b16 %v2322, %v2313
    %v2926 = vpack.c.b16 %v2323, %v2314
    %v2927 = vpack.c.b16 %v2324, %v2315
    %v2928 = vpack.c.b16 %v2325, %v2316
    %v2929 = vpack.c.b16 %v2326, %v2317
    %v2930 = vpack.c.b16 %v2336, %v2327
    %v2931 = vpack.c.b16 %v2337, %v2328
    %v2932 = vpack.c.b16 %v2338, %v2329
    %v2933 = vpack.c.b16 %v2339, %v2330
    %v2934 = vpack.c.b16 %v2340, %v2331
    %v2935 = vpack.c.b16 %v2341, %v2332
    %v2936 = vpack.c.b16 %v2342, %v2333
    %v2937 = vpack.c.b16 %v2343, %v2334
    %v2938 = vpack.c.b16 %v2344, %v2335
    %v2939 = vpack.c.b16 %v2354, %v2345
    %v2940 = vpack.c.b16 %v2355, %v2346
    %v2941 = vpack.c.b16 %v2356, %v2347
    %v2942 = vpack.c.b16 %v2357, %v2348
    %v2943 = vpack.c.b16 %v2358, %v2349
    %v2944 = vpack.c.b16 %v2359, %v2350
    %v2945 = vpack.c.b16 %v2360, %v2351
    %v2946 = vpack.c.b16 %v2361, %v2352
    %v2947 = vpack.c.b16 %v2362, %v2353
    %v2948 = vpack.c.b16 %v2372, %v2363
    %v2949 = vpack.c.b16 %v2373, %v2364
    %v2950 = vpack.c.b16 %v2374, %v2365
    %v2951 = vpack.c.b16 %v2375, %v2366
    %v2952 = vpack.c.b16 %v2376, %v2367
    %v2953 = vpack.c.b16 %v2377, %v2368
    %v2954 = vpack.c.b16 %v2378, %v2369
    %v2955 = vpack.c.b16 %v2379, %v2370
    %v2956 = vpack.c.b16 %v2380, %v2371
    %v2957 = vpack.c.b16 %v2390, %v2381
    %v2958 = vpack.c.b16 %v2391, %v2382
    %v2959 = vpack.c.b16 %v2392, %v2383
    %v2960 = vpack.c.b16 %v2393, %v2384
    %v2961 = vpack.c.b16 %v2394, %v2385
    %v2962 = vpack.c.b16 %v2395, %v2386
    %v2963 = vpack.c.b16 %v2396, %v2387
    %v2964 = vpack.c.b16 %v2397, %v2388
    %v2965 = vpack.c.b16 %v2398, %v2389
    %v2966 = vpack.c.b16 %v2408, %v2399
    %v2967 = vpack.c.b16 %v2409, %v2400
    %v2968 = vpack.c.b16 %v2410, %v2401
    %v2969 = vpack.c.b16 %v2411, %v2402
    %v2970 = vpack.c.b16 %v2412, %v2403
    %v2971 = vpack.c.b16 %v2413, %v2404
    %v2972 = vpack.c.b16 %v2414, %v2405
    %v2973 = vpack.c.b16 %v2415, %v2406
    %v2974 = vpack.c.b16 %v2416, %v2407
    %v2975 = vpack.c.b16 %v2426, %v2417
    %v2976 = vpack.c.b16 %v2427, %v2418
    %v2977 = vpack.c.b16 %v2428, %v2419
    %v2978 = vpack.c.b16 %v2429, %v2420
    %v2979 = vpack.c.b16 %v2430, %v2421
    %v2980 = vpack.c.b16 %v2431, %v2422
    %v2981 = vpack.c.b16 %v2432, %v2423
    %v2982 = vpack.c.b16 %v2433, %v2424
    %v2983 = vpack.c.b16 %v2434, %v2425
    %v2984 = vpack.c.b16 %v2444, %v2435
    %v2985 = vpack.c.b16 %v2445, %v2436
    %v2986 = vpack.c.b16 %v2446, %v2437
    %v2987 = vpack.c.b16 %v2447, %v2438
    %v2988 = vpack.c.b16 %v2448, %v2439
    %v2989 = vpack.c.b16 %v2449, %v2440
    %v2990 = vpack.c.b16 %v2450, %v2441
    %v2991 = vpack.c.b16 %v2451, %v2442
    %v2992 = vpack.c.b16 %v2452, %v2443
    %v2993 = vpack.c.b16 %v2462, %v2453
    %v2994 = vpack.c.b16 %v2463, %v2454
    %v2995 = vpack.c.b16 %v2464, %v2455
    %v2996 = vpack.c.b16 %v2465, %v2456
    %v2997 = vpack.c.b16 %v2466, %v2457
    %v2998 = vpack.c.b16 %v2467, %v2458
    %v2999 = vpack.c.b16 %v2468, %v2459
    %v3000 = vpack.c.b16 %v2469, %v2460
    %v3001 = vpack.c.b16 %v2470, %v2461
    %v3002 = vpack.c.b16 %v2480, %v2471
    %v3003 = vpack.c.b16 %v2481, %v2472
    %v3004 = vpack.c.b16 %v2482, %v2473
    %v3005 = vpack.c.b16 %v2483, %v2474
    %v3006 = vpack.c.b16 %v2484, %v2475
    %v3007 = vpack.c.b16 %v2485, %v2476
    %v3008 = vpack.c.b16 %v2486, %v2477
    %v3009 = vpack.c.b16 %v2487, %v2478
    %v3010 = vpack.c.b16 %v2488, %v2479
    %v3011 = vpack.c.b16 %v2498, %v2489
    %v3012 = vpack.c.b16 %v2499, %v2490
    %v3013 = vpack.c.b16 %v2500, %v2491
    %v3014 = vpack.c.b16 %v2501, %v2492
    %v3015 = vpack.c.b16 %v2502, %v2493
    %v3016 = vpack.c.b16 %v2503, %v2494
    %v3017 = vpack.c.b16 %v2504, %v2495
    %v3018 = vpack.c.b16 %v2505, %v2496
    %v3019 = vpack.c.b16 %v2506, %v2497
    %v3020 = vpack.c.b16 %v2516, %v2507
    %v3021 = vpack.c.b16 %v2517, %v2508
    %v3022 = vpack.c.b16 %v2518, %v2509
    %v3023 = vpack.c.b16 %v2519, %v2510
    %v3024 = vpack.c.b16 %v2520, %v2511
    %v3025 = vpack.c.b16 %v2521, %v2512
    %v3026 = vpack.c.b16 %v2522, %v2513
    %v3027 = vpack.c.b16 %v2523, %v2514
    %v3028 = vpack.c.b16 %v2524, %v2515
    %v3029 = vpack.c.b16 %v2534, %v2525
    %v3030 = vpack.c.b16 %v2535, %v2526
    %v3031 = vpack.c.b16 %v2536, %v2527
    %v3032 = vpack.c.b16 %v2537, %v2528
    %v3033 = vpack.c.b16 %v2538, %v2529
    %v3034 = vpack.c.b16 %v2539, %v2530
    %v3035 = vpack.c.b16 %v2540, %v2531
    %v3036 = vpack.c.b16 %v2541, %v2532
    %v3037 = vpack.c.b16 %v2542, %v2533
    %v3038 = vpack.c.b16 %v2552, %v2543
    %v3039 = vpack.c.b16 %v2553, %v2544
    %v3040 = vpack.c.b16 %v2554, %v2545
    %v3041 = vpack.c.b16 %v2555, %v2546
    %v3042 = vpack.c.b16 %v2556, %v2547
    %v3043 = vpack.c.b16 %v2557, %v2548
    %v3044 = vpack.c.b16 %v2558, %v2549
    %v3045 = vpack.c.b16 %v2559, %v2550
    %v3046 = vpack.c.b16 %v2560, %v2551
    %v3047 = vpack.c.b16 %v2570, %v2561
    %v3048 = vpack.c.b16 %v2571, %v2562
    %v3049 = vpack.c.b16 %v2572, %v2563
    %v3050 = vpack.c.b16 %v2573, %v2564
    %v3051 = vpack.c.b16 %v2574, %v2565
    %v3052 = vpack.c.b16 %v2575, %v2566
    %v3053 = vpack.c.b16 %v2576, %v2567
    %v3054 = vpack.c.b16 %v2577, %v2568
    %v3055 = vpack.c.b16 %v2578, %v2569
    %v3056 = vpack.c.b16 %v2588, %v2579
    %v3057 = vpack.c.b16 %v2589, %v2580
    %v3058 = vpack.c.b16 %v2590, %v2581
    %v3059 = vpack.c.b16 %v2591, %v2582
    %v3060 = vpack.c.b16 %v2592, %v2583
    %v3061 = vpack.c.b16 %v2593, %v2584
    %v3062 = vpack.c.b16 %v2594, %v2585
    %v3063 = vpack.c.b16 %v2595, %v2586
    %v3064 = vpack.c.b16 %v2596, %v2587
    %v3065 = vpack.c.b16 %v2606, %v2597
    %v3066 = vpack.c.b16 %v2607, %v2598
    %v3067 = vpack.c.b16 %v2608, %v2599
    %v3068 = vpack.c.b16 %v2609, %v2600
    %v3069 = vpack.c.b16 %v2610, %v2601
    %v3070 = vpack.c.b16 %v2611, %v2602
    %v3071 = vpack.c.b16 %v2612, %v2603
    %v3072 = vpack.c.b16 %v2613, %v2604
    %v3073 = vpack.c.b16 %v2614, %v2605
    %v3074 = vpack.c.b16 %v2624, %v2615
    %v3075 = vpack.c.b16 %v2625, %v2616
    %v3076 = vpack.c.b16 %v2626, %v2617
    %v3077 = vpack.c.b16 %v2627, %v2618
    %v3078 = vpack.c.b16 %v2628, %v2619
    %v3079 = vpack.c.b16 %v2629, %v2620
    %v3080 = vpack.c.b16 %v2630, %v2621
    %v3081 = vpack.c.b16 %v2631, %v2622
    %v3082 = vpack.c.b16 %v2632, %v2623
    %vm3533 = vcmask 261120
    %v3535 = vsel %vm3533, %v710, 0
    %3537 = vmatpush.bf16.msra.mxu0 %v2696
    %3538 = vmatpush.bf16.msra.mxu0 %v2687
    %3539 = vmatpush.bf16.msra.mxu0 %v2678
    %3540 = vmatpush.bf16.msra.mxu0 %v2669
    %3541 = vmatpush.bf16.msra.mxu0 %v2660
    %3542 = vmatpush.bf16.msra.mxu0 %v2651
    %3543 = vmatpush.bf16.msra.mxu0 %v2642
    %3544 = vmatpush.bf16.msra.mxu0 %v2633
    %3545 = vmatmul.bf16.gmra.mxu0 %v704
    %v3546 = vpop.f32.mrf.mxu0
    %v3547 = vadd.f32 %v1215, %v3546
    %v3548 = vpop.f32.mrf.mxu0
    %3549 = vdwg.mxu0
    %3550 = vmatpush.bf16.msra.mxu0 %v2768
    %3551 = vmatpush.bf16.msra.mxu0 %v2759
    %3552 = vmatpush.bf16.msra.mxu0 %v2750
    %3553 = vmatpush.bf16.msra.mxu0 %v2741
    %3554 = vmatpush.bf16.msra.mxu0 %v2732
    %3555 = vmatpush.bf16.msra.mxu0 %v2723
    %3556 = vmatpush.bf16.msra.mxu0 %v2714
    %3557 = vmatpush.bf16.msra.mxu0 %v2705
    %3558 = vmatmul.bf16.gmra.mxu0 %v705
    %v3559 = vpop.f32.mrf.mxu0
    %v3560 = vadd.f32 %v3547, %v3559
    %v3561 = vpop.f32.mrf.mxu0
    %3562 = vdwg.mxu0
    %3563 = vmatpush.bf16.msra.mxu0 %v2840
    %3564 = vmatpush.bf16.msra.mxu0 %v2831
    %3565 = vmatpush.bf16.msra.mxu0 %v2822
    %3566 = vmatpush.bf16.msra.mxu0 %v2813
    %3567 = vmatpush.bf16.msra.mxu0 %v2804
    %3568 = vmatpush.bf16.msra.mxu0 %v2795
    %3569 = vmatpush.bf16.msra.mxu0 %v2786
    %3570 = vmatpush.bf16.msra.mxu0 %v2777
    %3571 = vmatmul.bf16.gmra.mxu0 %v706
    %v3572 = vpop.f32.mrf.mxu0
    %v3573 = vadd.f32 %v3560, %v3572
    %v3574 = vpop.f32.mrf.mxu0
    %3575 = vdwg.mxu0
    %3576 = vmatpush.bf16.msra.mxu0 %v2912
    %3577 = vmatpush.bf16.msra.mxu0 %v2903
    %3578 = vmatpush.bf16.msra.mxu0 %v2894
    %3579 = vmatpush.bf16.msra.mxu0 %v2885
    %3580 = vmatpush.bf16.msra.mxu0 %v2876
    %3581 = vmatpush.bf16.msra.mxu0 %v2867
    %3582 = vmatpush.bf16.msra.mxu0 %v2858
    %3583 = vmatpush.bf16.msra.mxu0 %v2849
    %3584 = vmatmul.bf16.gmra.mxu0 %v707
    %v3585 = vpop.f32.mrf.mxu0
    %v3586 = vadd.f32 %v3573, %v3585
    %v3587 = vpop.f32.mrf.mxu0
    %3588 = vdwg.mxu0
    %3589 = vmatpush.bf16.msra.mxu0 %v2984
    %3590 = vmatpush.bf16.msra.mxu0 %v2975
    %3591 = vmatpush.bf16.msra.mxu0 %v2966
    %3592 = vmatpush.bf16.msra.mxu0 %v2957
    %3593 = vmatpush.bf16.msra.mxu0 %v2948
    %3594 = vmatpush.bf16.msra.mxu0 %v2939
    %3595 = vmatpush.bf16.msra.mxu0 %v2930
    %3596 = vmatpush.bf16.msra.mxu0 %v2921
    %3597 = vmatmul.bf16.gmra.mxu0 %v708
    %v3598 = vpop.f32.mrf.mxu0
    %v3599 = vadd.f32 %v3586, %v3598
    %v3600 = vpop.f32.mrf.mxu0
    %3601 = vdwg.mxu0
    %3602 = vmatpush.bf16.msra.mxu0 %v3056
    %3603 = vmatpush.bf16.msra.mxu0 %v3047
    %3604 = vmatpush.bf16.msra.mxu0 %v3038
    %3605 = vmatpush.bf16.msra.mxu0 %v3029
    %3606 = vmatpush.bf16.msra.mxu0 %v3020
    %3607 = vmatpush.bf16.msra.mxu0 %v3011
    %3608 = vmatpush.bf16.msra.mxu0 %v3002
    %3609 = vmatpush.bf16.msra.mxu0 %v2993
    %3610 = vmatmul.bf16.gmra.mxu0 %v709
    %v3611 = vpop.f32.mrf.mxu0
    %v3612 = vadd.f32 %v3599, %v3611
    %v3613 = vpop.f32.mrf.mxu0
    %3614 = vdwg.mxu0
    %3615 = vmatpush.bf16.msra.mxu0 0
    %3616 = vmatpush.bf16.msra.mxu0 0
    %3617 = vmatpush.bf16.msra.mxu0 0
    %3618 = vmatpush.bf16.msra.mxu0 0
    %3619 = vmatpush.bf16.msra.mxu0 0
    %3620 = vmatpush.bf16.msra.mxu0 0
    %3621 = vmatpush.bf16.msra.mxu0 %v3074
    %3622 = vmatpush.bf16.msra.mxu0 %v3065
    %3623 = vmatmul.bf16.gmra.mxu0 %v3535
    %v3624 = vpop.f32.mrf.mxu0
    %v3625 = vadd.f32 %v3612, %v3624
    %v3626 = vpop.f32.mrf.mxu0
    %3627 = vdwg.mxu0
    %3628 = vmatpush.bf16.msra.mxu0 %v2697
    %3629 = vmatpush.bf16.msra.mxu0 %v2688
    %3630 = vmatpush.bf16.msra.mxu0 %v2679
    %3631 = vmatpush.bf16.msra.mxu0 %v2670
    %3632 = vmatpush.bf16.msra.mxu0 %v2661
    %3633 = vmatpush.bf16.msra.mxu0 %v2652
    %3634 = vmatpush.bf16.msra.mxu0 %v2643
    %3635 = vmatpush.bf16.msra.mxu0 %v2634
    %3636 = vmatmul.bf16.gmra.mxu0 %v704
    %v3637 = vpop.f32.mrf.mxu0
    %v3638 = vadd.f32 %v1216, %v3637
    %v3639 = vpop.f32.mrf.mxu0
    %3640 = vdwg.mxu0
    %3641 = vmatpush.bf16.msra.mxu0 %v2769
    %3642 = vmatpush.bf16.msra.mxu0 %v2760
    %3643 = vmatpush.bf16.msra.mxu0 %v2751
    %3644 = vmatpush.bf16.msra.mxu0 %v2742
    %3645 = vmatpush.bf16.msra.mxu0 %v2733
    %3646 = vmatpush.bf16.msra.mxu0 %v2724
    %3647 = vmatpush.bf16.msra.mxu0 %v2715
    %3648 = vmatpush.bf16.msra.mxu0 %v2706
    %3649 = vmatmul.bf16.gmra.mxu0 %v705
    %v3650 = vpop.f32.mrf.mxu0
    %v3651 = vadd.f32 %v3638, %v3650
    %v3652 = vpop.f32.mrf.mxu0
    %3653 = vdwg.mxu0
    %3654 = vmatpush.bf16.msra.mxu0 %v2841
    %3655 = vmatpush.bf16.msra.mxu0 %v2832
    %3656 = vmatpush.bf16.msra.mxu0 %v2823
    %3657 = vmatpush.bf16.msra.mxu0 %v2814
    %3658 = vmatpush.bf16.msra.mxu0 %v2805
    %3659 = vmatpush.bf16.msra.mxu0 %v2796
    %3660 = vmatpush.bf16.msra.mxu0 %v2787
    %3661 = vmatpush.bf16.msra.mxu0 %v2778
    %3662 = vmatmul.bf16.gmra.mxu0 %v706
    %v3663 = vpop.f32.mrf.mxu0
    %v3664 = vadd.f32 %v3651, %v3663
    %v3665 = vpop.f32.mrf.mxu0
    %3666 = vdwg.mxu0
    %3667 = vmatpush.bf16.msra.mxu0 %v2913
    %3668 = vmatpush.bf16.msra.mxu0 %v2904
    %3669 = vmatpush.bf16.msra.mxu0 %v2895
    %3670 = vmatpush.bf16.msra.mxu0 %v2886
    %3671 = vmatpush.bf16.msra.mxu0 %v2877
    %3672 = vmatpush.bf16.msra.mxu0 %v2868
    %3673 = vmatpush.bf16.msra.mxu0 %v2859
    %3674 = vmatpush.bf16.msra.mxu0 %v2850
    %3675 = vmatmul.bf16.gmra.mxu0 %v707
    %v3676 = vpop.f32.mrf.mxu0
    %v3677 = vadd.f32 %v3664, %v3676
    %v3678 = vpop.f32.mrf.mxu0
    %3679 = vdwg.mxu0
    %3680 = vmatpush.bf16.msra.mxu0 %v2985
    %3681 = vmatpush.bf16.msra.mxu0 %v2976
    %3682 = vmatpush.bf16.msra.mxu0 %v2967
    %3683 = vmatpush.bf16.msra.mxu0 %v2958
    %3684 = vmatpush.bf16.msra.mxu0 %v2949
    %3685 = vmatpush.bf16.msra.mxu0 %v2940
    %3686 = vmatpush.bf16.msra.mxu0 %v2931
    %3687 = vmatpush.bf16.msra.mxu0 %v2922
    %3688 = vmatmul.bf16.gmra.mxu0 %v708
    %v3689 = vpop.f32.mrf.mxu0
    %v3690 = vadd.f32 %v3677, %v3689
    %v3691 = vpop.f32.mrf.mxu0
    %3692 = vdwg.mxu0
    %3693 = vmatpush.bf16.msra.mxu0 %v3057
    %3694 = vmatpush.bf16.msra.mxu0 %v3048
    %3695 = vmatpush.bf16.msra.mxu0 %v3039
    %3696 = vmatpush.bf16.msra.mxu0 %v3030
    %3697 = vmatpush.bf16.msra.mxu0 %v3021
    %3698 = vmatpush.bf16.msra.mxu0 %v3012
    %3699 = vmatpush.bf16.msra.mxu0 %v3003
    %3700 = vmatpush.bf16.msra.mxu0 %v2994
    %3701 = vmatmul.bf16.gmra.mxu0 %v709
    %v3702 = vpop.f32.mrf.mxu0
    %v3703 = vadd.f32 %v3690, %v3702
    %v3704 = vpop.f32.mrf.mxu0
    %3705 = vdwg.mxu0
    %3706 = vmatpush.bf16.msra.mxu0 0
    %3707 = vmatpush.bf16.msra.mxu0 0
    %3708 = vmatpush.bf16.msra.mxu0 0
    %3709 = vmatpush.bf16.msra.mxu0 0
    %3710 = vmatpush.bf16.msra.mxu0 0
    %3711 = vmatpush.bf16.msra.mxu0 0
    %3712 = vmatpush.bf16.msra.mxu0 %v3075
    %3713 = vmatpush.bf16.msra.mxu0 %v3066
    %3714 = vmatmul.bf16.gmra.mxu0 %v3535
    %v3715 = vpop.f32.mrf.mxu0
    %v3716 = vadd.f32 %v3703, %v3715
    %v3717 = vpop.f32.mrf.mxu0
    %3718 = vdwg.mxu0
    %3719 = vmatpush.bf16.msra.mxu0 %v2698
    %3720 = vmatpush.bf16.msra.mxu0 %v2689
    %3721 = vmatpush.bf16.msra.mxu0 %v2680
    %3722 = vmatpush.bf16.msra.mxu0 %v2671
    %3723 = vmatpush.bf16.msra.mxu0 %v2662
    %3724 = vmatpush.bf16.msra.mxu0 %v2653
    %3725 = vmatpush.bf16.msra.mxu0 %v2644
    %3726 = vmatpush.bf16.msra.mxu0 %v2635
    %3727 = vmatmul.bf16.gmra.mxu0 %v704
    %v3728 = vpop.f32.mrf.mxu0
    %v3729 = vadd.f32 %v1217, %v3728
    %v3730 = vpop.f32.mrf.mxu0
    %3731 = vdwg.mxu0
    %3732 = vmatpush.bf16.msra.mxu0 %v2770
    %3733 = vmatpush.bf16.msra.mxu0 %v2761
    %3734 = vmatpush.bf16.msra.mxu0 %v2752
    %3735 = vmatpush.bf16.msra.mxu0 %v2743
    %3736 = vmatpush.bf16.msra.mxu0 %v2734
    %3737 = vmatpush.bf16.msra.mxu0 %v2725
    %3738 = vmatpush.bf16.msra.mxu0 %v2716
    %3739 = vmatpush.bf16.msra.mxu0 %v2707
    %3740 = vmatmul.bf16.gmra.mxu0 %v705
    %v3741 = vpop.f32.mrf.mxu0
    %v3742 = vadd.f32 %v3729, %v3741
    %v3743 = vpop.f32.mrf.mxu0
    %3744 = vdwg.mxu0
    %3745 = vmatpush.bf16.msra.mxu0 %v2842
    %3746 = vmatpush.bf16.msra.mxu0 %v2833
    %3747 = vmatpush.bf16.msra.mxu0 %v2824
    %3748 = vmatpush.bf16.msra.mxu0 %v2815
    %3749 = vmatpush.bf16.msra.mxu0 %v2806
    %3750 = vmatpush.bf16.msra.mxu0 %v2797
    %3751 = vmatpush.bf16.msra.mxu0 %v2788
    %3752 = vmatpush.bf16.msra.mxu0 %v2779
    %3753 = vmatmul.bf16.gmra.mxu0 %v706
    %v3754 = vpop.f32.mrf.mxu0
    %v3755 = vadd.f32 %v3742, %v3754
    %v3756 = vpop.f32.mrf.mxu0
    %3757 = vdwg.mxu0
    %3758 = vmatpush.bf16.msra.mxu0 %v2914
    %3759 = vmatpush.bf16.msra.mxu0 %v2905
    %3760 = vmatpush.bf16.msra.mxu0 %v2896
    %3761 = vmatpush.bf16.msra.mxu0 %v2887
    %3762 = vmatpush.bf16.msra.mxu0 %v2878
    %3763 = vmatpush.bf16.msra.mxu0 %v2869
    %3764 = vmatpush.bf16.msra.mxu0 %v2860
    %3765 = vmatpush.bf16.msra.mxu0 %v2851
    %3766 = vmatmul.bf16.gmra.mxu0 %v707
    %v3767 = vpop.f32.mrf.mxu0
    %v3768 = vadd.f32 %v3755, %v3767
    %v3769 = vpop.f32.mrf.mxu0
    %3770 = vdwg.mxu0
    %3771 = vmatpush.bf16.msra.mxu0 %v2986
    %3772 = vmatpush.bf16.msra.mxu0 %v2977
    %3773 = vmatpush.bf16.msra.mxu0 %v2968
    %3774 = vmatpush.bf16.msra.mxu0 %v2959
    %3775 = vmatpush.bf16.msra.mxu0 %v2950
    %3776 = vmatpush.bf16.msra.mxu0 %v2941
    %3777 = vmatpush.bf16.msra.mxu0 %v2932
    %3778 = vmatpush.bf16.msra.mxu0 %v2923
    %3779 = vmatmul.bf16.gmra.mxu0 %v708
    %v3780 = vpop.f32.mrf.mxu0
    %v3781 = vadd.f32 %v3768, %v3780
    %v3782 = vpop.f32.mrf.mxu0
    %3783 = vdwg.mxu0
    %3784 = vmatpush.bf16.msra.mxu0 %v3058
    %3785 = vmatpush.bf16.msra.mxu0 %v3049
    %3786 = vmatpush.bf16.msra.mxu0 %v3040
    %3787 = vmatpush.bf16.msra.mxu0 %v3031
    %3788 = vmatpush.bf16.msra.mxu0 %v3022
    %3789 = vmatpush.bf16.msra.mxu0 %v3013
    %3790 = vmatpush.bf16.msra.mxu0 %v3004
    %3791 = vmatpush.bf16.msra.mxu0 %v2995
    %3792 = vmatmul.bf16.gmra.mxu0 %v709
    %v3793 = vpop.f32.mrf.mxu0
    %v3794 = vadd.f32 %v3781, %v3793
    %v3795 = vpop.f32.mrf.mxu0
    %3796 = vdwg.mxu0
    %3797 = vmatpush.bf16.msra.mxu0 0
    %3798 = vmatpush.bf16.msra.mxu0 0
    %3799 = vmatpush.bf16.msra.mxu0 0
    %3800 = vmatpush.bf16.msra.mxu0 0
    %3801 = vmatpush.bf16.msra.mxu0 0
    %3802 = vmatpush.bf16.msra.mxu0 0
    %3803 = vmatpush.bf16.msra.mxu0 %v3076
    %3804 = vmatpush.bf16.msra.mxu0 %v3067
    %3805 = vmatmul.bf16.gmra.mxu0 %v3535
    %v3806 = vpop.f32.mrf.mxu0
    %v3807 = vadd.f32 %v3794, %v3806
    %v3808 = vpop.f32.mrf.mxu0
    %3809 = vdwg.mxu0
    %3810 = vmatpush.bf16.msra.mxu0 %v2699
    %3811 = vmatpush.bf16.msra.mxu0 %v2690
    %3812 = vmatpush.bf16.msra.mxu0 %v2681
    %3813 = vmatpush.bf16.msra.mxu0 %v2672
    %3814 = vmatpush.bf16.msra.mxu0 %v2663
    %3815 = vmatpush.bf16.msra.mxu0 %v2654
    %3816 = vmatpush.bf16.msra.mxu0 %v2645
    %3817 = vmatpush.bf16.msra.mxu0 %v2636
    %3818 = vmatmul.bf16.gmra.mxu0 %v704
    %v3819 = vpop.f32.mrf.mxu0
    %v3820 = vadd.f32 %v1218, %v3819
    %v3821 = vpop.f32.mrf.mxu0
    %3822 = vdwg.mxu0
    %3823 = vmatpush.bf16.msra.mxu0 %v2771
    %3824 = vmatpush.bf16.msra.mxu0 %v2762
    %3825 = vmatpush.bf16.msra.mxu0 %v2753
    %3826 = vmatpush.bf16.msra.mxu0 %v2744
    %3827 = vmatpush.bf16.msra.mxu0 %v2735
    %3828 = vmatpush.bf16.msra.mxu0 %v2726
    %3829 = vmatpush.bf16.msra.mxu0 %v2717
    %3830 = vmatpush.bf16.msra.mxu0 %v2708
    %3831 = vmatmul.bf16.gmra.mxu0 %v705
    %v3832 = vpop.f32.mrf.mxu0
    %v3833 = vadd.f32 %v3820, %v3832
    %v3834 = vpop.f32.mrf.mxu0
    %3835 = vdwg.mxu0
    %3836 = vmatpush.bf16.msra.mxu0 %v2843
    %3837 = vmatpush.bf16.msra.mxu0 %v2834
    %3838 = vmatpush.bf16.msra.mxu0 %v2825
    %3839 = vmatpush.bf16.msra.mxu0 %v2816
    %3840 = vmatpush.bf16.msra.mxu0 %v2807
    %3841 = vmatpush.bf16.msra.mxu0 %v2798
    %3842 = vmatpush.bf16.msra.mxu0 %v2789
    %3843 = vmatpush.bf16.msra.mxu0 %v2780
    %3844 = vmatmul.bf16.gmra.mxu0 %v706
    %v3845 = vpop.f32.mrf.mxu0
    %v3846 = vadd.f32 %v3833, %v3845
    %v3847 = vpop.f32.mrf.mxu0
    %3848 = vdwg.mxu0
    %3849 = vmatpush.bf16.msra.mxu0 %v2915
    %3850 = vmatpush.bf16.msra.mxu0 %v2906
    %3851 = vmatpush.bf16.msra.mxu0 %v2897
    %3852 = vmatpush.bf16.msra.mxu0 %v2888
    %3853 = vmatpush.bf16.msra.mxu0 %v2879
    %3854 = vmatpush.bf16.msra.mxu0 %v2870
    %3855 = vmatpush.bf16.msra.mxu0 %v2861
    %3856 = vmatpush.bf16.msra.mxu0 %v2852
    %3857 = vmatmul.bf16.gmra.mxu0 %v707
    %v3858 = vpop.f32.mrf.mxu0
    %v3859 = vadd.f32 %v3846, %v3858
    %v3860 = vpop.f32.mrf.mxu0
    %3861 = vdwg.mxu0
    %3862 = vmatpush.bf16.msra.mxu0 %v2987
    %3863 = vmatpush.bf16.msra.mxu0 %v2978
    %3864 = vmatpush.bf16.msra.mxu0 %v2969
    %3865 = vmatpush.bf16.msra.mxu0 %v2960
    %3866 = vmatpush.bf16.msra.mxu0 %v2951
    %3867 = vmatpush.bf16.msra.mxu0 %v2942
    %3868 = vmatpush.bf16.msra.mxu0 %v2933
    %3869 = vmatpush.bf16.msra.mxu0 %v2924
    %3870 = vmatmul.bf16.gmra.mxu0 %v708
    %v3871 = vpop.f32.mrf.mxu0
    %v3872 = vadd.f32 %v3859, %v3871
    %v3873 = vpop.f32.mrf.mxu0
    %3874 = vdwg.mxu0
    %3875 = vmatpush.bf16.msra.mxu0 %v3059
    %3876 = vmatpush.bf16.msra.mxu0 %v3050
    %3877 = vmatpush.bf16.msra.mxu0 %v3041
    %3878 = vmatpush.bf16.msra.mxu0 %v3032
    %3879 = vmatpush.bf16.msra.mxu0 %v3023
    %3880 = vmatpush.bf16.msra.mxu0 %v3014
    %3881 = vmatpush.bf16.msra.mxu0 %v3005
    %3882 = vmatpush.bf16.msra.mxu0 %v2996
    %3883 = vmatmul.bf16.gmra.mxu0 %v709
    %v3884 = vpop.f32.mrf.mxu0
    %v3885 = vadd.f32 %v3872, %v3884
    %v3886 = vpop.f32.mrf.mxu0
    %3887 = vdwg.mxu0
    %3888 = vmatpush.bf16.msra.mxu0 0
    %3889 = vmatpush.bf16.msra.mxu0 0
    %3890 = vmatpush.bf16.msra.mxu0 0
    %3891 = vmatpush.bf16.msra.mxu0 0
    %3892 = vmatpush.bf16.msra.mxu0 0
    %3893 = vmatpush.bf16.msra.mxu0 0
    %3894 = vmatpush.bf16.msra.mxu0 %v3077
    %3895 = vmatpush.bf16.msra.mxu0 %v3068
    %3896 = vmatmul.bf16.gmra.mxu0 %v3535
    %v3897 = vpop.f32.mrf.mxu0
    %v3898 = vadd.f32 %v3885, %v3897
    %v3899 = vpop.f32.mrf.mxu0
    %3900 = vdwg.mxu0
    %3901 = vmatpush.bf16.msra.mxu0 %v2700
    %3902 = vmatpush.bf16.msra.mxu0 %v2691
    %3903 = vmatpush.bf16.msra.mxu0 %v2682
    %3904 = vmatpush.bf16.msra.mxu0 %v2673
    %3905 = vmatpush.bf16.msra.mxu0 %v2664
    %3906 = vmatpush.bf16.msra.mxu0 %v2655
    %3907 = vmatpush.bf16.msra.mxu0 %v2646
    %3908 = vmatpush.bf16.msra.mxu0 %v2637
    %3909 = vmatmul.bf16.gmra.mxu0 %v704
    %v3910 = vpop.f32.mrf.mxu0
    %v3911 = vadd.f32 %v1219, %v3910
    %v3912 = vpop.f32.mrf.mxu0
    %3913 = vdwg.mxu0
    %3914 = vmatpush.bf16.msra.mxu0 %v2772
    %3915 = vmatpush.bf16.msra.mxu0 %v2763
    %3916 = vmatpush.bf16.msra.mxu0 %v2754
    %3917 = vmatpush.bf16.msra.mxu0 %v2745
    %3918 = vmatpush.bf16.msra.mxu0 %v2736
    %3919 = vmatpush.bf16.msra.mxu0 %v2727
    %3920 = vmatpush.bf16.msra.mxu0 %v2718
    %3921 = vmatpush.bf16.msra.mxu0 %v2709
    %3922 = vmatmul.bf16.gmra.mxu0 %v705
    %v3923 = vpop.f32.mrf.mxu0
    %v3924 = vadd.f32 %v3911, %v3923
    %v3925 = vpop.f32.mrf.mxu0
    %3926 = vdwg.mxu0
    %3927 = vmatpush.bf16.msra.mxu0 %v2844
    %3928 = vmatpush.bf16.msra.mxu0 %v2835
    %3929 = vmatpush.bf16.msra.mxu0 %v2826
    %3930 = vmatpush.bf16.msra.mxu0 %v2817
    %3931 = vmatpush.bf16.msra.mxu0 %v2808
    %3932 = vmatpush.bf16.msra.mxu0 %v2799
    %3933 = vmatpush.bf16.msra.mxu0 %v2790
    %3934 = vmatpush.bf16.msra.mxu0 %v2781
    %3935 = vmatmul.bf16.gmra.mxu0 %v706
    %v3936 = vpop.f32.mrf.mxu0
    %v3937 = vadd.f32 %v3924, %v3936
    %v3938 = vpop.f32.mrf.mxu0
    %3939 = vdwg.mxu0
    %3940 = vmatpush.bf16.msra.mxu0 %v2916
    %3941 = vmatpush.bf16.msra.mxu0 %v2907
    %3942 = vmatpush.bf16.msra.mxu0 %v2898
    %3943 = vmatpush.bf16.msra.mxu0 %v2889
    %3944 = vmatpush.bf16.msra.mxu0 %v2880
    %3945 = vmatpush.bf16.msra.mxu0 %v2871
    %3946 = vmatpush.bf16.msra.mxu0 %v2862
    %3947 = vmatpush.bf16.msra.mxu0 %v2853
    %3948 = vmatmul.bf16.gmra.mxu0 %v707
    %v3949 = vpop.f32.mrf.mxu0
    %v3950 = vadd.f32 %v3937, %v3949
    %v3951 = vpop.f32.mrf.mxu0
    %3952 = vdwg.mxu0
    %3953 = vmatpush.bf16.msra.mxu0 %v2988
    %3954 = vmatpush.bf16.msra.mxu0 %v2979
    %3955 = vmatpush.bf16.msra.mxu0 %v2970
    %3956 = vmatpush.bf16.msra.mxu0 %v2961
    %3957 = vmatpush.bf16.msra.mxu0 %v2952
    %3958 = vmatpush.bf16.msra.mxu0 %v2943
    %3959 = vmatpush.bf16.msra.mxu0 %v2934
    %3960 = vmatpush.bf16.msra.mxu0 %v2925
    %3961 = vmatmul.bf16.gmra.mxu0 %v708
    %v3962 = vpop.f32.mrf.mxu0
    %v3963 = vadd.f32 %v3950, %v3962
    %v3964 = vpop.f32.mrf.mxu0
    %3965 = vdwg.mxu0
    %3966 = vmatpush.bf16.msra.mxu0 %v3060
    %3967 = vmatpush.bf16.msra.mxu0 %v3051
    %3968 = vmatpush.bf16.msra.mxu0 %v3042
    %3969 = vmatpush.bf16.msra.mxu0 %v3033
    %3970 = vmatpush.bf16.msra.mxu0 %v3024
    %3971 = vmatpush.bf16.msra.mxu0 %v3015
    %3972 = vmatpush.bf16.msra.mxu0 %v3006
    %3973 = vmatpush.bf16.msra.mxu0 %v2997
    %3974 = vmatmul.bf16.gmra.mxu0 %v709
    %v3975 = vpop.f32.mrf.mxu0
    %v3976 = vadd.f32 %v3963, %v3975
    %v3977 = vpop.f32.mrf.mxu0
    %3978 = vdwg.mxu0
    %3979 = vmatpush.bf16.msra.mxu0 0
    %3980 = vmatpush.bf16.msra.mxu0 0
    %3981 = vmatpush.bf16.msra.mxu0 0
    %3982 = vmatpush.bf16.msra.mxu0 0
    %3983 = vmatpush.bf16.msra.mxu0 0
    %3984 = vmatpush.bf16.msra.mxu0 0
    %3985 = vmatpush.bf16.msra.mxu0 %v3078
    %3986 = vmatpush.bf16.msra.mxu0 %v3069
    %3987 = vmatmul.bf16.gmra.mxu0 %v3535
    %v3988 = vpop.f32.mrf.mxu0
    %v3989 = vadd.f32 %v3976, %v3988
    %v3990 = vpop.f32.mrf.mxu0
    %3991 = vdwg.mxu0
    %3992 = vmatpush.bf16.msra.mxu0 %v2701
    %3993 = vmatpush.bf16.msra.mxu0 %v2692
    %3994 = vmatpush.bf16.msra.mxu0 %v2683
    %3995 = vmatpush.bf16.msra.mxu0 %v2674
    %3996 = vmatpush.bf16.msra.mxu0 %v2665
    %3997 = vmatpush.bf16.msra.mxu0 %v2656
    %3998 = vmatpush.bf16.msra.mxu0 %v2647
    %3999 = vmatpush.bf16.msra.mxu0 %v2638
    %4000 = vmatmul.bf16.gmra.mxu0 %v704
    %v4001 = vpop.f32.mrf.mxu0
    %v4002 = vadd.f32 %v1220, %v4001
    %v4003 = vpop.f32.mrf.mxu0
    %4004 = vdwg.mxu0
    %4005 = vmatpush.bf16.msra.mxu0 %v2773
    %4006 = vmatpush.bf16.msra.mxu0 %v2764
    %4007 = vmatpush.bf16.msra.mxu0 %v2755
    %4008 = vmatpush.bf16.msra.mxu0 %v2746
    %4009 = vmatpush.bf16.msra.mxu0 %v2737
    %4010 = vmatpush.bf16.msra.mxu0 %v2728
    %4011 = vmatpush.bf16.msra.mxu0 %v2719
    %4012 = vmatpush.bf16.msra.mxu0 %v2710
    %4013 = vmatmul.bf16.gmra.mxu0 %v705
    %v4014 = vpop.f32.mrf.mxu0
    %v4015 = vadd.f32 %v4002, %v4014
    %v4016 = vpop.f32.mrf.mxu0
    %4017 = vdwg.mxu0
    %4018 = vmatpush.bf16.msra.mxu0 %v2845
    %4019 = vmatpush.bf16.msra.mxu0 %v2836
    %4020 = vmatpush.bf16.msra.mxu0 %v2827
    %4021 = vmatpush.bf16.msra.mxu0 %v2818
    %4022 = vmatpush.bf16.msra.mxu0 %v2809
    %4023 = vmatpush.bf16.msra.mxu0 %v2800
    %4024 = vmatpush.bf16.msra.mxu0 %v2791
    %4025 = vmatpush.bf16.msra.mxu0 %v2782
    %4026 = vmatmul.bf16.gmra.mxu0 %v706
    %v4027 = vpop.f32.mrf.mxu0
    %v4028 = vadd.f32 %v4015, %v4027
    %v4029 = vpop.f32.mrf.mxu0
    %4030 = vdwg.mxu0
    %4031 = vmatpush.bf16.msra.mxu0 %v2917
    %4032 = vmatpush.bf16.msra.mxu0 %v2908
    %4033 = vmatpush.bf16.msra.mxu0 %v2899
    %4034 = vmatpush.bf16.msra.mxu0 %v2890
    %4035 = vmatpush.bf16.msra.mxu0 %v2881
    %4036 = vmatpush.bf16.msra.mxu0 %v2872
    %4037 = vmatpush.bf16.msra.mxu0 %v2863
    %4038 = vmatpush.bf16.msra.mxu0 %v2854
    %4039 = vmatmul.bf16.gmra.mxu0 %v707
    %v4040 = vpop.f32.mrf.mxu0
    %v4041 = vadd.f32 %v4028, %v4040
    %v4042 = vpop.f32.mrf.mxu0
    %4043 = vdwg.mxu0
    %4044 = vmatpush.bf16.msra.mxu0 %v2989
    %4045 = vmatpush.bf16.msra.mxu0 %v2980
    %4046 = vmatpush.bf16.msra.mxu0 %v2971
    %4047 = vmatpush.bf16.msra.mxu0 %v2962
    %4048 = vmatpush.bf16.msra.mxu0 %v2953
    %4049 = vmatpush.bf16.msra.mxu0 %v2944
    %4050 = vmatpush.bf16.msra.mxu0 %v2935
    %4051 = vmatpush.bf16.msra.mxu0 %v2926
    %4052 = vmatmul.bf16.gmra.mxu0 %v708
    %v4053 = vpop.f32.mrf.mxu0
    %v4054 = vadd.f32 %v4041, %v4053
    %v4055 = vpop.f32.mrf.mxu0
    %4056 = vdwg.mxu0
    %4057 = vmatpush.bf16.msra.mxu0 %v3061
    %4058 = vmatpush.bf16.msra.mxu0 %v3052
    %4059 = vmatpush.bf16.msra.mxu0 %v3043
    %4060 = vmatpush.bf16.msra.mxu0 %v3034
    %4061 = vmatpush.bf16.msra.mxu0 %v3025
    %4062 = vmatpush.bf16.msra.mxu0 %v3016
    %4063 = vmatpush.bf16.msra.mxu0 %v3007
    %4064 = vmatpush.bf16.msra.mxu0 %v2998
    %4065 = vmatmul.bf16.gmra.mxu0 %v709
    %v4066 = vpop.f32.mrf.mxu0
    %v4067 = vadd.f32 %v4054, %v4066
    %v4068 = vpop.f32.mrf.mxu0
    %4069 = vdwg.mxu0
    %4070 = vmatpush.bf16.msra.mxu0 0
    %4071 = vmatpush.bf16.msra.mxu0 0
    %4072 = vmatpush.bf16.msra.mxu0 0
    %4073 = vmatpush.bf16.msra.mxu0 0
    %4074 = vmatpush.bf16.msra.mxu0 0
    %4075 = vmatpush.bf16.msra.mxu0 0
    %4076 = vmatpush.bf16.msra.mxu0 %v3079
    %4077 = vmatpush.bf16.msra.mxu0 %v3070
    %4078 = vmatmul.bf16.gmra.mxu0 %v3535
    %v4079 = vpop.f32.mrf.mxu0
    %v4080 = vadd.f32 %v4067, %v4079
    %v4081 = vpop.f32.mrf.mxu0
    %4082 = vdwg.mxu0
    %4083 = vmatpush.bf16.msra.mxu0 %v2702
    %4084 = vmatpush.bf16.msra.mxu0 %v2693
    %4085 = vmatpush.bf16.msra.mxu0 %v2684
    %4086 = vmatpush.bf16.msra.mxu0 %v2675
    %4087 = vmatpush.bf16.msra.mxu0 %v2666
    %4088 = vmatpush.bf16.msra.mxu0 %v2657
    %4089 = vmatpush.bf16.msra.mxu0 %v2648
    %4090 = vmatpush.bf16.msra.mxu0 %v2639
    %4091 = vmatmul.bf16.gmra.mxu0 %v704
    %v4092 = vpop.f32.mrf.mxu0
    %v4093 = vadd.f32 %v1221, %v4092
    %v4094 = vpop.f32.mrf.mxu0
    %4095 = vdwg.mxu0
    %4096 = vmatpush.bf16.msra.mxu0 %v2774
    %4097 = vmatpush.bf16.msra.mxu0 %v2765
    %4098 = vmatpush.bf16.msra.mxu0 %v2756
    %4099 = vmatpush.bf16.msra.mxu0 %v2747
    %4100 = vmatpush.bf16.msra.mxu0 %v2738
    %4101 = vmatpush.bf16.msra.mxu0 %v2729
    %4102 = vmatpush.bf16.msra.mxu0 %v2720
    %4103 = vmatpush.bf16.msra.mxu0 %v2711
    %4104 = vmatmul.bf16.gmra.mxu0 %v705
    %v4105 = vpop.f32.mrf.mxu0
    %v4106 = vadd.f32 %v4093, %v4105
    %v4107 = vpop.f32.mrf.mxu0
    %4108 = vdwg.mxu0
    %4109 = vmatpush.bf16.msra.mxu0 %v2846
    %4110 = vmatpush.bf16.msra.mxu0 %v2837
    %4111 = vmatpush.bf16.msra.mxu0 %v2828
    %4112 = vmatpush.bf16.msra.mxu0 %v2819
    %4113 = vmatpush.bf16.msra.mxu0 %v2810
    %4114 = vmatpush.bf16.msra.mxu0 %v2801
    %4115 = vmatpush.bf16.msra.mxu0 %v2792
    %4116 = vmatpush.bf16.msra.mxu0 %v2783
    %4117 = vmatmul.bf16.gmra.mxu0 %v706
    %v4118 = vpop.f32.mrf.mxu0
    %v4119 = vadd.f32 %v4106, %v4118
    %v4120 = vpop.f32.mrf.mxu0
    %4121 = vdwg.mxu0
    %4122 = vmatpush.bf16.msra.mxu0 %v2918
    %4123 = vmatpush.bf16.msra.mxu0 %v2909
    %4124 = vmatpush.bf16.msra.mxu0 %v2900
    %4125 = vmatpush.bf16.msra.mxu0 %v2891
    %4126 = vmatpush.bf16.msra.mxu0 %v2882
    %4127 = vmatpush.bf16.msra.mxu0 %v2873
    %4128 = vmatpush.bf16.msra.mxu0 %v2864
    %4129 = vmatpush.bf16.msra.mxu0 %v2855
    %4130 = vmatmul.bf16.gmra.mxu0 %v707
    %v4131 = vpop.f32.mrf.mxu0
    %v4132 = vadd.f32 %v4119, %v4131
    %v4133 = vpop.f32.mrf.mxu0
    %4134 = vdwg.mxu0
    %4135 = vmatpush.bf16.msra.mxu0 %v2990
    %4136 = vmatpush.bf16.msra.mxu0 %v2981
    %4137 = vmatpush.bf16.msra.mxu0 %v2972
    %4138 = vmatpush.bf16.msra.mxu0 %v2963
    %4139 = vmatpush.bf16.msra.mxu0 %v2954
    %4140 = vmatpush.bf16.msra.mxu0 %v2945
    %4141 = vmatpush.bf16.msra.mxu0 %v2936
    %4142 = vmatpush.bf16.msra.mxu0 %v2927
    %4143 = vmatmul.bf16.gmra.mxu0 %v708
    %v4144 = vpop.f32.mrf.mxu0
    %v4145 = vadd.f32 %v4132, %v4144
    %v4146 = vpop.f32.mrf.mxu0
    %4147 = vdwg.mxu0
    %4148 = vmatpush.bf16.msra.mxu0 %v3062
    %4149 = vmatpush.bf16.msra.mxu0 %v3053
    %4150 = vmatpush.bf16.msra.mxu0 %v3044
    %4151 = vmatpush.bf16.msra.mxu0 %v3035
    %4152 = vmatpush.bf16.msra.mxu0 %v3026
    %4153 = vmatpush.bf16.msra.mxu0 %v3017
    %4154 = vmatpush.bf16.msra.mxu0 %v3008
    %4155 = vmatpush.bf16.msra.mxu0 %v2999
    %4156 = vmatmul.bf16.gmra.mxu0 %v709
    %v4157 = vpop.f32.mrf.mxu0
    %v4158 = vadd.f32 %v4145, %v4157
    %v4159 = vpop.f32.mrf.mxu0
    %4160 = vdwg.mxu0
    %4161 = vmatpush.bf16.msra.mxu0 0
    %4162 = vmatpush.bf16.msra.mxu0 0
    %4163 = vmatpush.bf16.msra.mxu0 0
    %4164 = vmatpush.bf16.msra.mxu0 0
    %4165 = vmatpush.bf16.msra.mxu0 0
    %4166 = vmatpush.bf16.msra.mxu0 0
    %4167 = vmatpush.bf16.msra.mxu0 %v3080
    %4168 = vmatpush.bf16.msra.mxu0 %v3071
    %4169 = vmatmul.bf16.gmra.mxu0 %v3535
    %v4170 = vpop.f32.mrf.mxu0
    %v4171 = vadd.f32 %v4158, %v4170
    %v4172 = vpop.f32.mrf.mxu0
    %4173 = vdwg.mxu0
    %4174 = vmatpush.bf16.msra.mxu0 %v2703
    %4175 = vmatpush.bf16.msra.mxu0 %v2694
    %4176 = vmatpush.bf16.msra.mxu0 %v2685
    %4177 = vmatpush.bf16.msra.mxu0 %v2676
    %4178 = vmatpush.bf16.msra.mxu0 %v2667
    %4179 = vmatpush.bf16.msra.mxu0 %v2658
    %4180 = vmatpush.bf16.msra.mxu0 %v2649
    %4181 = vmatpush.bf16.msra.mxu0 %v2640
    %4182 = vmatmul.bf16.gmra.mxu0 %v704
    %v4183 = vpop.f32.mrf.mxu0
    %v4184 = vadd.f32 %v1222, %v4183
    %v4185 = vpop.f32.mrf.mxu0
    %4186 = vdwg.mxu0
    %4187 = vmatpush.bf16.msra.mxu0 %v2775
    %4188 = vmatpush.bf16.msra.mxu0 %v2766
    %4189 = vmatpush.bf16.msra.mxu0 %v2757
    %4190 = vmatpush.bf16.msra.mxu0 %v2748
    %4191 = vmatpush.bf16.msra.mxu0 %v2739
    %4192 = vmatpush.bf16.msra.mxu0 %v2730
    %4193 = vmatpush.bf16.msra.mxu0 %v2721
    %4194 = vmatpush.bf16.msra.mxu0 %v2712
    %4195 = vmatmul.bf16.gmra.mxu0 %v705
    %v4196 = vpop.f32.mrf.mxu0
    %v4197 = vadd.f32 %v4184, %v4196
    %v4198 = vpop.f32.mrf.mxu0
    %4199 = vdwg.mxu0
    %4200 = vmatpush.bf16.msra.mxu0 %v2847
    %4201 = vmatpush.bf16.msra.mxu0 %v2838
    %4202 = vmatpush.bf16.msra.mxu0 %v2829
    %4203 = vmatpush.bf16.msra.mxu0 %v2820
    %4204 = vmatpush.bf16.msra.mxu0 %v2811
    %4205 = vmatpush.bf16.msra.mxu0 %v2802
    %4206 = vmatpush.bf16.msra.mxu0 %v2793
    %4207 = vmatpush.bf16.msra.mxu0 %v2784
    %4208 = vmatmul.bf16.gmra.mxu0 %v706
    %v4209 = vpop.f32.mrf.mxu0
    %v4210 = vadd.f32 %v4197, %v4209
    %v4211 = vpop.f32.mrf.mxu0
    %4212 = vdwg.mxu0
    %4213 = vmatpush.bf16.msra.mxu0 %v2919
    %4214 = vmatpush.bf16.msra.mxu0 %v2910
    %4215 = vmatpush.bf16.msra.mxu0 %v2901
    %4216 = vmatpush.bf16.msra.mxu0 %v2892
    %4217 = vmatpush.bf16.msra.mxu0 %v2883
    %4218 = vmatpush.bf16.msra.mxu0 %v2874
    %4219 = vmatpush.bf16.msra.mxu0 %v2865
    %4220 = vmatpush.bf16.msra.mxu0 %v2856
    %4221 = vmatmul.bf16.gmra.mxu0 %v707
    %v4222 = vpop.f32.mrf.mxu0
    %v4223 = vadd.f32 %v4210, %v4222
    %v4224 = vpop.f32.mrf.mxu0
    %4225 = vdwg.mxu0
    %4226 = vmatpush.bf16.msra.mxu0 %v2991
    %4227 = vmatpush.bf16.msra.mxu0 %v2982
    %4228 = vmatpush.bf16.msra.mxu0 %v2973
    %4229 = vmatpush.bf16.msra.mxu0 %v2964
    %4230 = vmatpush.bf16.msra.mxu0 %v2955
    %4231 = vmatpush.bf16.msra.mxu0 %v2946
    %4232 = vmatpush.bf16.msra.mxu0 %v2937
    %4233 = vmatpush.bf16.msra.mxu0 %v2928
    %4234 = vmatmul.bf16.gmra.mxu0 %v708
    %v4235 = vpop.f32.mrf.mxu0
    %v4236 = vadd.f32 %v4223, %v4235
    %v4237 = vpop.f32.mrf.mxu0
    %4238 = vdwg.mxu0
    %4239 = vmatpush.bf16.msra.mxu0 %v3063
    %4240 = vmatpush.bf16.msra.mxu0 %v3054
    %4241 = vmatpush.bf16.msra.mxu0 %v3045
    %4242 = vmatpush.bf16.msra.mxu0 %v3036
    %4243 = vmatpush.bf16.msra.mxu0 %v3027
    %4244 = vmatpush.bf16.msra.mxu0 %v3018
    %4245 = vmatpush.bf16.msra.mxu0 %v3009
    %4246 = vmatpush.bf16.msra.mxu0 %v3000
    %4247 = vmatmul.bf16.gmra.mxu0 %v709
    %v4248 = vpop.f32.mrf.mxu0
    %v4249 = vadd.f32 %v4236, %v4248
    %v4250 = vpop.f32.mrf.mxu0
    %4251 = vdwg.mxu0
    %4252 = vmatpush.bf16.msra.mxu0 0
    %4253 = vmatpush.bf16.msra.mxu0 0
    %4254 = vmatpush.bf16.msra.mxu0 0
    %4255 = vmatpush.bf16.msra.mxu0 0
    %4256 = vmatpush.bf16.msra.mxu0 0
    %4257 = vmatpush.bf16.msra.mxu0 0
    %4258 = vmatpush.bf16.msra.mxu0 %v3081
    %4259 = vmatpush.bf16.msra.mxu0 %v3072
    %4260 = vmatmul.bf16.gmra.mxu0 %v3535
    %v4261 = vpop.f32.mrf.mxu0
    %v4262 = vadd.f32 %v4249, %v4261
    %v4263 = vpop.f32.mrf.mxu0
    %4264 = vdwg.mxu0
    %4265 = vmatpush.bf16.msra.mxu0 %v2704
    %4266 = vmatpush.bf16.msra.mxu0 %v2695
    %4267 = vmatpush.bf16.msra.mxu0 %v2686
    %4268 = vmatpush.bf16.msra.mxu0 %v2677
    %4269 = vmatpush.bf16.msra.mxu0 %v2668
    %4270 = vmatpush.bf16.msra.mxu0 %v2659
    %4271 = vmatpush.bf16.msra.mxu0 %v2650
    %4272 = vmatpush.bf16.msra.mxu0 %v2641
    %4273 = vmatmul.bf16.gmra.mxu0 %v704
    %v4274 = vpop.f32.mrf.mxu0
    %v4275 = vadd.f32 %v1223, %v4274
    %v4276 = vpop.f32.mrf.mxu0
    %4277 = vdwg.mxu0
    %4278 = vmatpush.bf16.msra.mxu0 %v2776
    %4279 = vmatpush.bf16.msra.mxu0 %v2767
    %4280 = vmatpush.bf16.msra.mxu0 %v2758
    %4281 = vmatpush.bf16.msra.mxu0 %v2749
    %4282 = vmatpush.bf16.msra.mxu0 %v2740
    %4283 = vmatpush.bf16.msra.mxu0 %v2731
    %4284 = vmatpush.bf16.msra.mxu0 %v2722
    %4285 = vmatpush.bf16.msra.mxu0 %v2713
    %4286 = vmatmul.bf16.gmra.mxu0 %v705
    %v4287 = vpop.f32.mrf.mxu0
    %v4288 = vadd.f32 %v4275, %v4287
    %v4289 = vpop.f32.mrf.mxu0
    %4290 = vdwg.mxu0
    %4291 = vmatpush.bf16.msra.mxu0 %v2848
    %4292 = vmatpush.bf16.msra.mxu0 %v2839
    %4293 = vmatpush.bf16.msra.mxu0 %v2830
    %4294 = vmatpush.bf16.msra.mxu0 %v2821
    %4295 = vmatpush.bf16.msra.mxu0 %v2812
    %4296 = vmatpush.bf16.msra.mxu0 %v2803
    %4297 = vmatpush.bf16.msra.mxu0 %v2794
    %4298 = vmatpush.bf16.msra.mxu0 %v2785
    %4299 = vmatmul.bf16.gmra.mxu0 %v706
    %v4300 = vpop.f32.mrf.mxu0
    %v4301 = vadd.f32 %v4288, %v4300
    %v4302 = vpop.f32.mrf.mxu0
    %4303 = vdwg.mxu0
    %4304 = vmatpush.bf16.msra.mxu0 %v2920
    %4305 = vmatpush.bf16.msra.mxu0 %v2911
    %4306 = vmatpush.bf16.msra.mxu0 %v2902
    %4307 = vmatpush.bf16.msra.mxu0 %v2893
    %4308 = vmatpush.bf16.msra.mxu0 %v2884
    %4309 = vmatpush.bf16.msra.mxu0 %v2875
    %4310 = vmatpush.bf16.msra.mxu0 %v2866
    %4311 = vmatpush.bf16.msra.mxu0 %v2857
    %4312 = vmatmul.bf16.gmra.mxu0 %v707
    %v4313 = vpop.f32.mrf.mxu0
    %v4314 = vadd.f32 %v4301, %v4313
    %v4315 = vpop.f32.mrf.mxu0
    %4316 = vdwg.mxu0
    %4317 = vmatpush.bf16.msra.mxu0 %v2992
    %4318 = vmatpush.bf16.msra.mxu0 %v2983
    %4319 = vmatpush.bf16.msra.mxu0 %v2974
    %4320 = vmatpush.bf16.msra.mxu0 %v2965
    %4321 = vmatpush.bf16.msra.mxu0 %v2956
    %4322 = vmatpush.bf16.msra.mxu0 %v2947
    %4323 = vmatpush.bf16.msra.mxu0 %v2938
    %4324 = vmatpush.bf16.msra.mxu0 %v2929
    %4325 = vmatmul.bf16.gmra.mxu0 %v708
    %v4326 = vpop.f32.mrf.mxu0
    %v4327 = vadd.f32 %v4314, %v4326
    %v4328 = vpop.f32.mrf.mxu0
    %4329 = vdwg.mxu0
    %4330 = vmatpush.bf16.msra.mxu0 %v3064
    %4331 = vmatpush.bf16.msra.mxu0 %v3055
    %4332 = vmatpush.bf16.msra.mxu0 %v3046
    %4333 = vmatpush.bf16.msra.mxu0 %v3037
    %4334 = vmatpush.bf16.msra.mxu0 %v3028
    %4335 = vmatpush.bf16.msra.mxu0 %v3019
    %4336 = vmatpush.bf16.msra.mxu0 %v3010
    %4337 = vmatpush.bf16.msra.mxu0 %v3001
    %4338 = vmatmul.bf16.gmra.mxu0 %v709
    %v4339 = vpop.f32.mrf.mxu0
    %v4340 = vadd.f32 %v4327, %v4339
    %v4341 = vpop.f32.mrf.mxu0
    %4342 = vdwg.mxu0
    %4343 = vmatpush.bf16.msra.mxu0 0
    %4344 = vmatpush.bf16.msra.mxu0 0
    %4345 = vmatpush.bf16.msra.mxu0 0
    %4346 = vmatpush.bf16.msra.mxu0 0
    %4347 = vmatpush.bf16.msra.mxu0 0
    %4348 = vmatpush.bf16.msra.mxu0 0
    %4349 = vmatpush.bf16.msra.mxu0 %v3082
    %4350 = vmatpush.bf16.msra.mxu0 %v3073
    %4351 = vmatmul.bf16.gmra.mxu0 %v3535
    %v4352 = vpop.f32.mrf.mxu0
    %v4353 = vadd.f32 %v4340, %v4352
    %v4354 = vpop.f32.mrf.mxu0
    %4355 = vdwg.mxu0
    %vm4356 = vcmp.gt.f32.partialorder %v3625, 0.0
    %vm4357 = vcmp.gt.f32.partialorder %v3716, 0.0
    %vm4358 = vcmp.gt.f32.partialorder %v3807, 0.0
    %vm4359 = vcmp.gt.f32.partialorder %v3898, 0.0
    %vm4360 = vcmp.gt.f32.partialorder %v3989, 0.0
    %vm4361 = vcmp.gt.f32.partialorder %v4080, 0.0
    %vm4362 = vcmp.gt.f32.partialorder %v4171, 0.0
    %vm4363 = vcmp.gt.f32.partialorder %v4262, 0.0
    %vm4364 = vcmp.gt.f32.partialorder %v4353, 0.0
    %v4365 = vmin.f32 %v3625, 0.0
    %v4366 = vmin.f32 %v3716, 0.0
    %v4367 = vmin.f32 %v3807, 0.0
    %v4368 = vmin.f32 %v3898, 0.0
    %v4369 = vmin.f32 %v3989, 0.0
    %v4370 = vmin.f32 %v4080, 0.0
    %v4371 = vmin.f32 %v4171, 0.0
    %v4372 = vmin.f32 %v4262, 0.0
    %v4373 = vmin.f32 %v4353, 0.0
    %v4374 = vmul.f32 %v4365, 1.442695
    %v4375 = vpow.pop %v4374
    %v4376 = vmul.f32 %v4366, 1.442695
    %v4377 = vpow.pop %v4376
    %v4378 = vmul.f32 %v4367, 1.442695
    %v4379 = vpow.pop %v4378
    %v4380 = vmul.f32 %v4368, 1.442695
    %v4381 = vpow.pop %v4380
    %v4382 = vmul.f32 %v4369, 1.442695
    %v4383 = vpow.pop %v4382
    %v4384 = vmul.f32 %v4370, 1.442695
    %v4385 = vpow.pop %v4384
    %v4386 = vmul.f32 %v4371, 1.442695
    %v4387 = vpow.pop %v4386
    %v4388 = vmul.f32 %v4372, 1.442695
    %v4389 = vpow.pop %v4388
    %v4390 = vmul.f32 %v4373, 1.442695
    %v4391 = vpow.pop %v4390
    %v4392 = vsub.f32 %v4375, 1.0
    %v4393 = vsub.f32 %v4377, 1.0
    %v4394 = vsub.f32 %v4379, 1.0
    %v4395 = vsub.f32 %v4381, 1.0
    %v4396 = vsub.f32 %v4383, 1.0
    %v4397 = vsub.f32 %v4385, 1.0
    %v4398 = vsub.f32 %v4387, 1.0
    %v4399 = vsub.f32 %v4389, 1.0
    %v4400 = vsub.f32 %v4391, 1.0
    %v4401 = vsel %vm4356, %v3625, %v4392
    %v4402 = vsel %vm4357, %v3716, %v4393
    %v4403 = vsel %vm4358, %v3807, %v4394
    %v4404 = vsel %vm4359, %v3898, %v4395
    %v4405 = vsel %vm4360, %v3989, %v4396
    %v4406 = vsel %vm4361, %v4080, %v4397
    %v4407 = vsel %vm4362, %v4171, %v4398
    %v4408 = vsel %vm4363, %v4262, %v4399
    %v4409 = vsel %vm4364, %v4353, %v4400
    %v4410 = vpack.c.bf16 %v4401, %v4401
    %v4411 = vpack.c.bf16 %v4402, %v4402
    %v4412 = vpack.c.bf16 %v4403, %v4403
    %v4413 = vpack.c.bf16 %v4404, %v4404
    %v4414 = vpack.c.bf16 %v4405, %v4405
    %v4415 = vpack.c.bf16 %v4406, %v4406
    %v4416 = vpack.c.bf16 %v4407, %v4407
    %v4417 = vpack.c.bf16 %v4408, %v4408
    %v4418 = vpack.c.bf16 %v4409, %v4409
    %v4419 = vld [vmem:[%s6] sm:$0xf]
    %v4420 = vld [vmem:[%s6 + $0x4] sm:$0xf]
    %v4421 = vld [vmem:[%s6 + $0x8] sm:$0xf]
    %v4422 = vld [vmem:[%s6 + $0xc] sm:$0xf]
    %v4423 = vld [vmem:[%s6 + $0x10] sm:$0xf]
    %v4424 = vld [vmem:[%s6 + $0x14] sm:$0xf]
    %v4425 = vld [vmem:[%s6 + $0x18] sm:$0xf]
    %v4426 = vld [vmem:[%s6 + $0x1c] sm:$0xf]
    %v4427 = vld [vmem:[%s6 + $0x20] sm:$0xf]
    %v4428 = vld [vmem:[%s6 + $0x24] sm:$0xf]
    %v4429 = vld [vmem:[%s6 + $0x28] sm:$0xf]
    %v4430 = vld [vmem:[%s6 + $0x2c] sm:$0xf]
    %v4431 = vld [vmem:[%s6 + $0x30] sm:$0xf]
    %v4432 = vld [vmem:[%s6 + $0x34] sm:$0xf]
    %v4433 = vld [vmem:[%s6 + $0x38] sm:$0xf]
    %v4434 = vld [vmem:[%s6 + $0x3c] sm:$0xf]
    %v4435 = vld [vmem:[%s6 + $0x40] sm:$0xf]
    %v4436 = vld [vmem:[%s6 + $0x44] sm:$0xf]
    %v4437 = vld [vmem:[%s6 + $0x48] sm:$0xf]
    %v4438 = vld [vmem:[%s6 + $0x4c] sm:$0xf]
    %v4439 = vld [vmem:[%s6 + $0x50] sm:$0xf]
    %v4440 = vld [vmem:[%s6 + $0x54] sm:$0xf]
    %v4441 = vld [vmem:[%s6 + $0x58] sm:$0xf]
    %v4442 = vld [vmem:[%s6 + $0x5c] sm:$0xf]
    %v4443 = vld [vmem:[%s6 + $0x60] sm:$0xf]
    %v4444 = vld [vmem:[%s6 + $0x64] sm:$0xf]
    %v4445 = vld [vmem:[%s6 + $0x68] sm:$0xf]
    %v4446 = vld [vmem:[%s6 + $0x6c] sm:$0xf]
    %v4447 = vld [vmem:[%s6 + $0x70] sm:$0xf]
    %v4448 = vld [vmem:[%s6 + $0x74] sm:$0xf]
    %v4449 = vld [vmem:[%s6 + $0x78] sm:$0xf]
    %v4450 = vld [vmem:[%s6 + $0x7c] sm:$0xf]
    %v4451 = vld [vmem:[%s6 + $0x80] sm:$0xf]
    %v4452 = vld [vmem:[%s6 + $0x84] sm:$0xf]
    %v4453 = vld [vmem:[%s6 + $0x88] sm:$0xf]
    %v4454 = vld [vmem:[%s6 + $0x8c] sm:$0xf]
    %v4455 = vld [vmem:[%s6 + $0x90] sm:$0xf]
    %v4456 = vld [vmem:[%s6 + $0x94] sm:$0xf]
    %v4457 = vld [vmem:[%s6 + $0x98] sm:$0xf]
    %v4458 = vld [vmem:[%s6 + $0x9c] sm:$0xf]
    %v4459 = vld [vmem:[%s6 + $0xa0] sm:$0xf]
    %v4460 = vld [vmem:[%s6 + $0xa4] sm:$0xf]
    %v4461 = vld [vmem:[%s6 + $0xa8] sm:$0xf]
    %v4462 = vld [vmem:[%s6 + $0xac] sm:$0xf]
    %v4463 = vld [vmem:[%s6 + $0xb0] sm:$0xf]
    %v4464 = vld [vmem:[%s6 + $0xb4] sm:$0xf]
    %v4465 = vld [vmem:[%s6 + $0xb8] sm:$0xf]
    %v4466 = vld [vmem:[%s6 + $0xbc] sm:$0xf]
    %v4467 = vld [vmem:[%s6 + $0xc0] sm:$0xf]
    %v4468 = vld [vmem:[%s6 + $0xc4] sm:$0xf]
    %v4469 = vld [vmem:[%s6 + $0xc8] sm:$0xf]
    %v4470 = vld [vmem:[%s6 + $0xcc] sm:$0xf]
    %v4471 = vld [vmem:[%s6 + $0xd0] sm:$0xf]
    %v4472 = vld [vmem:[%s6 + $0xd4] sm:$0xf]
    %v4473 = vld [vmem:[%s6 + $0xd8] sm:$0xf]
    %v4474 = vld [vmem:[%s6 + $0xdc] sm:$0xf]
    %v4475 = vld [vmem:[%s6 + $0xe0] sm:$0xf]
    %v4476 = vld [vmem:[%s6 + $0xe4] sm:$0xf]
    %v4477 = vld [vmem:[%s6 + $0xe8] sm:$0xf]
    %v4478 = vld [vmem:[%s6 + $0xec] sm:$0xf]
    %v4479 = vld [vmem:[%s6 + $0xf0] sm:$0xf]
    %v4480 = vld [vmem:[%s6 + $0xf4] sm:$0xf]
    %v4481 = vld [vmem:[%s6 + $0xf8] sm:$0xf]
    %v4482 = vld [vmem:[%s6 + $0xfc] sm:$0xf]
    %v4483 = vld [vmem:[%s6 + $0x100] sm:$0xf]
    %v4484 = vld [vmem:[%s6 + $0x104] sm:$0xf]
    %v4485 = vld [vmem:[%s6 + $0x108] sm:$0xf]
    %v4486 = vld [vmem:[%s6 + $0x10c] sm:$0xf]
    %v4487 = vld [vmem:[%s6 + $0x110] sm:$0xf]
    %v4488 = vld [vmem:[%s6 + $0x114] sm:$0xf]
    %v4489 = vld [vmem:[%s6 + $0x118] sm:$0xf]
    %v4490 = vld [vmem:[%s6 + $0x11c] sm:$0xf]
    %v4491 = vld [vmem:[%s6 + $0x120] sm:$0xf]
    %v4492 = vld [vmem:[%s6 + $0x124] sm:$0xf]
    %v4493 = vld [vmem:[%s6 + $0x128] sm:$0xf]
    %v4494 = vld [vmem:[%s6 + $0x12c] sm:$0xf]
    %v4495 = vld [vmem:[%s6 + $0x130] sm:$0xf]
    %v4496 = vld [vmem:[%s6 + $0x134] sm:$0xf]
    %v4497 = vld [vmem:[%s6 + $0x138] sm:$0xf]
    %v4498 = vld [vmem:[%s6 + $0x13c] sm:$0xf]
    %v4499 = vld [vmem:[%s6 + $0x140] sm:$0xf]
    %v4500 = vld [vmem:[%s6 + $0x144] sm:$0xf]
    %v4501 = vld [vmem:[%s6 + $0x148] sm:$0xf]
    %v4502 = vld [vmem:[%s6 + $0x14c] sm:$0xf]
    %v4503 = vld [vmem:[%s6 + $0x150] sm:$0xf]
    %v4504 = vld [vmem:[%s6 + $0x154] sm:$0xf]
    %v4505 = vld [vmem:[%s6 + $0x158] sm:$0xf]
    %v4506 = vld [vmem:[%s6 + $0x15c] sm:$0xf]
    %v4507 = vld [vmem:[%s6 + $0x160] sm:$0xf]
    %v4508 = vld [vmem:[%s6 + $0x164] sm:$0xf]
    %v4509 = vld [vmem:[%s6 + $0x168] sm:$0xf]
    %v4510 = vld [vmem:[%s6 + $0x16c] sm:$0xf]
    %v4511 = vld [vmem:[%s6 + $0x170] sm:$0xf]
    %v4512 = vld [vmem:[%s6 + $0x174] sm:$0xf]
    %v4513 = vld [vmem:[%s6 + $0x178] sm:$0xf]
    %v4514 = vld [vmem:[%s6 + $0x17c] sm:$0xf]
    %v4515 = vld [vmem:[%s6 + $0x180] sm:$0xf]
    %v4516 = vld [vmem:[%s6 + $0x184] sm:$0xf]
    %v4517 = vld [vmem:[%s6 + $0x188] sm:$0xf]
    %v4518 = vld [vmem:[%s6 + $0x18c] sm:$0xf]
    %v4519 = vld [vmem:[%s6 + $0x190] sm:$0xf]
    %v4520 = vld [vmem:[%s6 + $0x194] sm:$0xf]
    %v4521 = vld [vmem:[%s6 + $0x198] sm:$0xf]
    %v4522 = vld [vmem:[%s6 + $0x19c] sm:$0xf]
    %v4523 = vld [vmem:[%s6 + $0x1a0] sm:$0xf]
    %v4524 = vld [vmem:[%s6 + $0x1a4] sm:$0xf]
    %v4525 = vld [vmem:[%s6 + $0x1a8] sm:$0xf]
    %v4526 = vld [vmem:[%s6 + $0x1ac] sm:$0xf]
    %v4527 = vld [vmem:[%s6 + $0x1b0] sm:$0xf]
    %v4528 = vld [vmem:[%s6 + $0x1b4] sm:$0xf]
    %v4529 = vld [vmem:[%s6 + $0x1b8] sm:$0xf]
    %v4530 = vld [vmem:[%s6 + $0x1bc] sm:$0xf]
    %v4531 = vld [vmem:[%s6 + $0x1c0] sm:$0xf]
    %v4532 = vld [vmem:[%s6 + $0x1c4] sm:$0xf]
    %v4533 = vld [vmem:[%s6 + $0x1c8] sm:$0xf]
    %v4534 = vld [vmem:[%s6 + $0x1cc] sm:$0xf]
    %v4535 = vld [vmem:[%s6 + $0x1d0] sm:$0xf]
    %v4536 = vld [vmem:[%s6 + $0x1d4] sm:$0xf]
    %v4537 = vld [vmem:[%s6 + $0x1d8] sm:$0xf]
    %v4538 = vld [vmem:[%s6 + $0x1dc] sm:$0xf]
    %v4539 = vld [vmem:[%s6 + $0x1e0] sm:$0xf]
    %v4540 = vld [vmem:[%s6 + $0x1e4] sm:$0xf]
    %v4541 = vld [vmem:[%s6 + $0x1e8] sm:$0xf]
    %v4542 = vld [vmem:[%s6 + $0x1ec] sm:$0xf]
    %v4543 = vld [vmem:[%s6 + $0x1f0] sm:$0xf]
    %v4544 = vld [vmem:[%s6 + $0x1f4] sm:$0xf]
    %v4545 = vld [vmem:[%s6 + $0x1f8] sm:$0xf]
    %v4546 = vld [vmem:[%s6 + $0x1fc] sm:$0xf]
    %v4547 = vld [vmem:[%s6 + $0x200] sm:$0xf]
    %v4548 = vld [vmem:[%s6 + $0x204] sm:$0xf]
    %v4549 = vld [vmem:[%s6 + $0x208] sm:$0xf]
    %v4550 = vld [vmem:[%s6 + $0x20c] sm:$0xf]
    %v4551 = vld [vmem:[%s6 + $0x210] sm:$0xf]
    %v4552 = vld [vmem:[%s6 + $0x214] sm:$0xf]
    %v4553 = vld [vmem:[%s6 + $0x218] sm:$0xf]
    %v4554 = vld [vmem:[%s6 + $0x21c] sm:$0xf]
    %v4555 = vld [vmem:[%s6 + $0x220] sm:$0xf]
    %v4556 = vld [vmem:[%s6 + $0x224] sm:$0x3]
    %v4557 = vld [vmem:[%s7] sm:$0x1]
    %v4559 = vperm.slane %v4557, 0
    %v4699 = vunpack.c.l.b16 %v4419
    %v4700 = vunpack.c.l.b16 %v4420
    %v4701 = vunpack.c.l.b16 %v4421
    %v4702 = vunpack.c.l.b16 %v4422
    %v4703 = vunpack.c.l.b16 %v4423
    %v4704 = vunpack.c.l.b16 %v4424
    %v4705 = vunpack.c.l.b16 %v4425
    %v4706 = vunpack.c.l.b16 %v4426
    %v4707 = vunpack.c.l.b16 %v4427
    %v4708 = vunpack.c.l.b16 %v4428
    %v4709 = vunpack.c.l.b16 %v4429
    %v4710 = vunpack.c.l.b16 %v4430
    %v4711 = vunpack.c.l.b16 %v4431
    %v4712 = vunpack.c.l.b16 %v4432
    %v4713 = vunpack.c.l.b16 %v4433
    %v4714 = vunpack.c.l.b16 %v4434
    %v4715 = vunpack.c.l.b16 %v4435
    %v4716 = vunpack.c.l.b16 %v4436
    %v4717 = vunpack.c.l.b16 %v4437
    %v4718 = vunpack.c.l.b16 %v4438
    %v4719 = vunpack.c.l.b16 %v4439
    %v4720 = vunpack.c.l.b16 %v4440
    %v4721 = vunpack.c.l.b16 %v4441
    %v4722 = vunpack.c.l.b16 %v4442
    %v4723 = vunpack.c.l.b16 %v4443
    %v4724 = vunpack.c.l.b16 %v4444
    %v4725 = vunpack.c.l.b16 %v4445
    %v4726 = vunpack.c.l.b16 %v4446
    %v4727 = vunpack.c.l.b16 %v4447
    %v4728 = vunpack.c.l.b16 %v4448
    %v4729 = vunpack.c.l.b16 %v4449
    %v4730 = vunpack.c.l.b16 %v4450
    %v4731 = vunpack.c.l.b16 %v4451
    %v4732 = vunpack.c.l.b16 %v4452
    %v4733 = vunpack.c.l.b16 %v4453
    %v4734 = vunpack.c.l.b16 %v4454
    %v4735 = vunpack.c.l.b16 %v4455
    %v4736 = vunpack.c.l.b16 %v4456
    %v4737 = vunpack.c.l.b16 %v4457
    %v4738 = vunpack.c.l.b16 %v4458
    %v4739 = vunpack.c.l.b16 %v4459
    %v4740 = vunpack.c.l.b16 %v4460
    %v4741 = vunpack.c.l.b16 %v4461
    %v4742 = vunpack.c.l.b16 %v4462
    %v4743 = vunpack.c.l.b16 %v4463
    %v4744 = vunpack.c.l.b16 %v4464
    %v4745 = vunpack.c.l.b16 %v4465
    %v4746 = vunpack.c.l.b16 %v4466
    %v4747 = vunpack.c.l.b16 %v4467
    %v4748 = vunpack.c.l.b16 %v4468
    %v4749 = vunpack.c.l.b16 %v4469
    %v4750 = vunpack.c.l.b16 %v4470
    %v4751 = vunpack.c.l.b16 %v4471
    %v4752 = vunpack.c.l.b16 %v4472
    %v4753 = vunpack.c.l.b16 %v4473
    %v4754 = vunpack.c.l.b16 %v4474
    %v4755 = vunpack.c.l.b16 %v4475
    %v4756 = vunpack.c.l.b16 %v4476
    %v4757 = vunpack.c.l.b16 %v4477
    %v4758 = vunpack.c.l.b16 %v4478
    %v4759 = vunpack.c.l.b16 %v4479
    %v4760 = vunpack.c.l.b16 %v4480
    %v4761 = vunpack.c.l.b16 %v4481
    %v4762 = vunpack.c.l.b16 %v4482
    %v4763 = vunpack.c.l.b16 %v4483
    %v4764 = vunpack.c.l.b16 %v4484
    %v4765 = vunpack.c.l.b16 %v4485
    %v4766 = vunpack.c.l.b16 %v4486
    %v4767 = vunpack.c.l.b16 %v4487
    %v4768 = vunpack.c.l.b16 %v4488
    %v4769 = vunpack.c.l.b16 %v4489
    %v4770 = vunpack.c.l.b16 %v4490
    %v4771 = vunpack.c.l.b16 %v4491
    %v4772 = vunpack.c.l.b16 %v4492
    %v4773 = vunpack.c.l.b16 %v4493
    %v4774 = vunpack.c.l.b16 %v4494
    %v4775 = vunpack.c.l.b16 %v4495
    %v4776 = vunpack.c.l.b16 %v4496
    %v4777 = vunpack.c.l.b16 %v4497
    %v4778 = vunpack.c.l.b16 %v4498
    %v4779 = vunpack.c.l.b16 %v4499
    %v4780 = vunpack.c.l.b16 %v4500
    %v4781 = vunpack.c.l.b16 %v4501
    %v4782 = vunpack.c.l.b16 %v4502
    %v4783 = vunpack.c.l.b16 %v4503
    %v4784 = vunpack.c.l.b16 %v4504
    %v4785 = vunpack.c.l.b16 %v4505
    %v4786 = vunpack.c.l.b16 %v4506
    %v4787 = vunpack.c.l.b16 %v4507
    %v4788 = vunpack.c.l.b16 %v4508
    %v4789 = vunpack.c.l.b16 %v4509
    %v4790 = vunpack.c.l.b16 %v4510
    %v4791 = vunpack.c.l.b16 %v4511
    %v4792 = vunpack.c.l.b16 %v4512
    %v4793 = vunpack.c.l.b16 %v4513
    %v4794 = vunpack.c.l.b16 %v4514
    %v4795 = vunpack.c.l.b16 %v4515
    %v4796 = vunpack.c.l.b16 %v4516
    %v4797 = vunpack.c.l.b16 %v4517
    %v4798 = vunpack.c.l.b16 %v4518
    %v4799 = vunpack.c.l.b16 %v4519
    %v4800 = vunpack.c.l.b16 %v4520
    %v4801 = vunpack.c.l.b16 %v4521
    %v4802 = vunpack.c.l.b16 %v4522
    %v4803 = vunpack.c.l.b16 %v4523
    %v4804 = vunpack.c.l.b16 %v4524
    %v4805 = vunpack.c.l.b16 %v4525
    %v4806 = vunpack.c.l.b16 %v4526
    %v4807 = vunpack.c.l.b16 %v4527
    %v4808 = vunpack.c.l.b16 %v4528
    %v4809 = vunpack.c.l.b16 %v4529
    %v4810 = vunpack.c.l.b16 %v4530
    %v4811 = vunpack.c.l.b16 %v4531
    %v4812 = vunpack.c.l.b16 %v4532
    %v4813 = vunpack.c.l.b16 %v4533
    %v4814 = vunpack.c.l.b16 %v4534
    %v4815 = vunpack.c.l.b16 %v4535
    %v4816 = vunpack.c.l.b16 %v4536
    %v4817 = vunpack.c.l.b16 %v4537
    %v4818 = vunpack.c.l.b16 %v4538
    %v4819 = vunpack.c.l.b16 %v4539
    %v4820 = vunpack.c.l.b16 %v4540
    %v4821 = vunpack.c.l.b16 %v4541
    %v4822 = vunpack.c.l.b16 %v4542
    %v4823 = vunpack.c.l.b16 %v4543
    %v4824 = vunpack.c.l.b16 %v4544
    %v4825 = vunpack.c.l.b16 %v4545
    %v4826 = vunpack.c.l.b16 %v4546
    %v4827 = vunpack.c.l.b16 %v4547
    %v4828 = vunpack.c.l.b16 %v4548
    %v4829 = vunpack.c.l.b16 %v4549
    %v4830 = vunpack.c.l.b16 %v4550
    %v4831 = vunpack.c.l.b16 %v4551
    %v4832 = vunpack.c.l.b16 %v4552
    %v4833 = vunpack.c.l.b16 %v4553
    %v4834 = vunpack.c.l.b16 %v4554
    %v4835 = vunpack.c.l.b16 %v4555
    %v4836 = vunpack.c.l.b16 %v4556
    %v4837 = vpack.c.b16 %v4700, %v4699
    %v4838 = vpack.c.b16 %v4702, %v4701
    %v4839 = vpack.c.b16 %v4704, %v4703
    %v4840 = vpack.c.b16 %v4706, %v4705
    %v4841 = vpack.c.b16 %v4708, %v4707
    %v4842 = vpack.c.b16 %v4710, %v4709
    %v4843 = vpack.c.b16 %v4712, %v4711
    %v4844 = vpack.c.b16 %v4714, %v4713
    %v4845 = vpack.c.b16 %v4716, %v4715
    %v4846 = vpack.c.b16 %v4718, %v4717
    %v4847 = vpack.c.b16 %v4720, %v4719
    %v4848 = vpack.c.b16 %v4722, %v4721
    %v4849 = vpack.c.b16 %v4724, %v4723
    %v4850 = vpack.c.b16 %v4726, %v4725
    %v4851 = vpack.c.b16 %v4728, %v4727
    %v4852 = vpack.c.b16 %v4730, %v4729
    %v4853 = vpack.c.b16 %v4732, %v4731
    %v4854 = vpack.c.b16 %v4734, %v4733
    %v4855 = vpack.c.b16 %v4736, %v4735
    %v4856 = vpack.c.b16 %v4738, %v4737
    %v4857 = vpack.c.b16 %v4740, %v4739
    %v4858 = vpack.c.b16 %v4742, %v4741
    %v4859 = vpack.c.b16 %v4744, %v4743
    %v4860 = vpack.c.b16 %v4746, %v4745
    %v4861 = vpack.c.b16 %v4748, %v4747
    %v4862 = vpack.c.b16 %v4750, %v4749
    %v4863 = vpack.c.b16 %v4752, %v4751
    %v4864 = vpack.c.b16 %v4754, %v4753
    %v4865 = vpack.c.b16 %v4756, %v4755
    %v4866 = vpack.c.b16 %v4758, %v4757
    %v4867 = vpack.c.b16 %v4760, %v4759
    %v4868 = vpack.c.b16 %v4762, %v4761
    %v4869 = vpack.c.b16 %v4764, %v4763
    %v4870 = vpack.c.b16 %v4766, %v4765
    %v4871 = vpack.c.b16 %v4768, %v4767
    %v4872 = vpack.c.b16 %v4770, %v4769
    %v4873 = vpack.c.b16 %v4772, %v4771
    %v4874 = vpack.c.b16 %v4774, %v4773
    %v4875 = vpack.c.b16 %v4776, %v4775
    %v4876 = vpack.c.b16 %v4778, %v4777
    %v4877 = vpack.c.b16 %v4780, %v4779
    %v4878 = vpack.c.b16 %v4782, %v4781
    %v4879 = vpack.c.b16 %v4784, %v4783
    %v4880 = vpack.c.b16 %v4786, %v4785
    %v4881 = vpack.c.b16 %v4788, %v4787
    %v4882 = vpack.c.b16 %v4790, %v4789
    %v4883 = vpack.c.b16 %v4792, %v4791
    %v4884 = vpack.c.b16 %v4794, %v4793
    %v4885 = vpack.c.b16 %v4796, %v4795
    %v4886 = vpack.c.b16 %v4798, %v4797
    %v4887 = vpack.c.b16 %v4800, %v4799
    %v4888 = vpack.c.b16 %v4802, %v4801
    %v4889 = vpack.c.b16 %v4804, %v4803
    %v4890 = vpack.c.b16 %v4806, %v4805
    %v4891 = vpack.c.b16 %v4808, %v4807
    %v4892 = vpack.c.b16 %v4810, %v4809
    %v4893 = vpack.c.b16 %v4812, %v4811
    %v4894 = vpack.c.b16 %v4814, %v4813
    %v4895 = vpack.c.b16 %v4816, %v4815
    %v4896 = vpack.c.b16 %v4818, %v4817
    %v4897 = vpack.c.b16 %v4820, %v4819
    %v4898 = vpack.c.b16 %v4822, %v4821
    %v4899 = vpack.c.b16 %v4824, %v4823
    %v4900 = vpack.c.b16 %v4826, %v4825
    %v4901 = vpack.c.b16 %v4828, %v4827
    %v4902 = vpack.c.b16 %v4830, %v4829
    %v4903 = vpack.c.b16 %v4832, %v4831
    %v4904 = vpack.c.b16 %v4834, %v4833
    %v4905 = vpack.c.b16 %v4836, %v4835
    %vm4974 = vcmask 621568
    %v4976 = vsel %vm4974, %v4418, 0
    %vm4978 = vcmask 1045504
    %v4980 = vsel %vm4978, %v4905, 0
    %4982 = vmatpush.bf16.msra.mxu0 %v4844
    %4983 = vmatpush.bf16.msra.mxu0 %v4843
    %4984 = vmatpush.bf16.msra.mxu0 %v4842
    %4985 = vmatpush.bf16.msra.mxu0 %v4841
    %4986 = vmatpush.bf16.msra.mxu0 %v4840
    %4987 = vmatpush.bf16.msra.mxu0 %v4839
    %4988 = vmatpush.bf16.msra.mxu0 %v4838
    %4989 = vmatpush.bf16.msra.mxu0 %v4837
    %4990 = vmatmul.bf16.gmra.mxu0 %v4410
    %v4991 = vpop.f32.mrf.mxu0
    %v4992 = vadd.f32 %v4559, %v4991
    %v4993 = vpop.f32.mrf.mxu0
    %4994 = vdwg.mxu0
    %4995 = vmatpush.bf16.msra.mxu0 %v4852
    %4996 = vmatpush.bf16.msra.mxu0 %v4851
    %4997 = vmatpush.bf16.msra.mxu0 %v4850
    %4998 = vmatpush.bf16.msra.mxu0 %v4849
    %4999 = vmatpush.bf16.msra.mxu0 %v4848
    %5000 = vmatpush.bf16.msra.mxu0 %v4847
    %5001 = vmatpush.bf16.msra.mxu0 %v4846
    %5002 = vmatpush.bf16.msra.mxu0 %v4845
    %5003 = vmatmul.bf16.gmra.mxu0 %v4411
    %v5004 = vpop.f32.mrf.mxu0
    %v5005 = vadd.f32 %v4992, %v5004
    %v5006 = vpop.f32.mrf.mxu0
    %5007 = vdwg.mxu0
    %5008 = vmatpush.bf16.msra.mxu0 %v4860
    %5009 = vmatpush.bf16.msra.mxu0 %v4859
    %5010 = vmatpush.bf16.msra.mxu0 %v4858
    %5011 = vmatpush.bf16.msra.mxu0 %v4857
    %5012 = vmatpush.bf16.msra.mxu0 %v4856
    %5013 = vmatpush.bf16.msra.mxu0 %v4855
    %5014 = vmatpush.bf16.msra.mxu0 %v4854
    %5015 = vmatpush.bf16.msra.mxu0 %v4853
    %5016 = vmatmul.bf16.gmra.mxu0 %v4412
    %v5017 = vpop.f32.mrf.mxu0
    %v5018 = vadd.f32 %v5005, %v5017
    %v5019 = vpop.f32.mrf.mxu0
    %5020 = vdwg.mxu0
    %5021 = vmatpush.bf16.msra.mxu0 %v4868
    %5022 = vmatpush.bf16.msra.mxu0 %v4867
    %5023 = vmatpush.bf16.msra.mxu0 %v4866
    %5024 = vmatpush.bf16.msra.mxu0 %v4865
    %5025 = vmatpush.bf16.msra.mxu0 %v4864
    %5026 = vmatpush.bf16.msra.mxu0 %v4863
    %5027 = vmatpush.bf16.msra.mxu0 %v4862
    %5028 = vmatpush.bf16.msra.mxu0 %v4861
    %5029 = vmatmul.bf16.gmra.mxu0 %v4413
    %v5030 = vpop.f32.mrf.mxu0
    %v5031 = vadd.f32 %v5018, %v5030
    %v5032 = vpop.f32.mrf.mxu0
    %5033 = vdwg.mxu0
    %5034 = vmatpush.bf16.msra.mxu0 %v4876
    %5035 = vmatpush.bf16.msra.mxu0 %v4875
    %5036 = vmatpush.bf16.msra.mxu0 %v4874
    %5037 = vmatpush.bf16.msra.mxu0 %v4873
    %5038 = vmatpush.bf16.msra.mxu0 %v4872
    %5039 = vmatpush.bf16.msra.mxu0 %v4871
    %5040 = vmatpush.bf16.msra.mxu0 %v4870
    %5041 = vmatpush.bf16.msra.mxu0 %v4869
    %5042 = vmatmul.bf16.gmra.mxu0 %v4414
    %v5043 = vpop.f32.mrf.mxu0
    %v5044 = vadd.f32 %v5031, %v5043
    %v5045 = vpop.f32.mrf.mxu0
    %5046 = vdwg.mxu0
    %5047 = vmatpush.bf16.msra.mxu0 %v4884
    %5048 = vmatpush.bf16.msra.mxu0 %v4883
    %5049 = vmatpush.bf16.msra.mxu0 %v4882
    %5050 = vmatpush.bf16.msra.mxu0 %v4881
    %5051 = vmatpush.bf16.msra.mxu0 %v4880
    %5052 = vmatpush.bf16.msra.mxu0 %v4879
    %5053 = vmatpush.bf16.msra.mxu0 %v4878
    %5054 = vmatpush.bf16.msra.mxu0 %v4877
    %5055 = vmatmul.bf16.gmra.mxu0 %v4415
    %v5056 = vpop.f32.mrf.mxu0
    %v5057 = vadd.f32 %v5044, %v5056
    %v5058 = vpop.f32.mrf.mxu0
    %5059 = vdwg.mxu0
    %5060 = vmatpush.bf16.msra.mxu0 %v4892
    %5061 = vmatpush.bf16.msra.mxu0 %v4891
    %5062 = vmatpush.bf16.msra.mxu0 %v4890
    %5063 = vmatpush.bf16.msra.mxu0 %v4889
    %5064 = vmatpush.bf16.msra.mxu0 %v4888
    %5065 = vmatpush.bf16.msra.mxu0 %v4887
    %5066 = vmatpush.bf16.msra.mxu0 %v4886
    %5067 = vmatpush.bf16.msra.mxu0 %v4885
    %5068 = vmatmul.bf16.gmra.mxu0 %v4416
    %v5069 = vpop.f32.mrf.mxu0
    %v5070 = vadd.f32 %v5057, %v5069
    %v5071 = vpop.f32.mrf.mxu0
    %5072 = vdwg.mxu0
    %5073 = vmatpush.bf16.msra.mxu0 %v4900
    %5074 = vmatpush.bf16.msra.mxu0 %v4899
    %5075 = vmatpush.bf16.msra.mxu0 %v4898
    %5076 = vmatpush.bf16.msra.mxu0 %v4897
    %5077 = vmatpush.bf16.msra.mxu0 %v4896
    %5078 = vmatpush.bf16.msra.mxu0 %v4895
    %5079 = vmatpush.bf16.msra.mxu0 %v4894
    %5080 = vmatpush.bf16.msra.mxu0 %v4893
    %5081 = vmatmul.bf16.gmra.mxu0 %v4417
    %v5082 = vpop.f32.mrf.mxu0
    %v5083 = vadd.f32 %v5070, %v5082
    %v5084 = vpop.f32.mrf.mxu0
    %5085 = vdwg.mxu0
    %5086 = vmatpush.bf16.msra.mxu0 0
    %5087 = vmatpush.bf16.msra.mxu0 0
    %5088 = vmatpush.bf16.msra.mxu0 0
    %5089 = vmatpush.bf16.msra.mxu0 %v4980
    %5090 = vmatpush.bf16.msra.mxu0 %v4904
    %5091 = vmatpush.bf16.msra.mxu0 %v4903
    %5092 = vmatpush.bf16.msra.mxu0 %v4902
    %5093 = vmatpush.bf16.msra.mxu0 %v4901
    %5094 = vmatmul.bf16.gmra.mxu0 %v4976
    %v5095 = vpop.f32.mrf.mxu0
    %v5096 = vadd.f32 %v5083, %v5095
    %v5097 = vpop.f32.mrf.mxu0
    %5098 = vdwg.mxu0
    %v5099 = vld [vmem:[%s8] sm:$0xf]
    %v5100 = vld [vmem:[%s8 + $0x4] sm:$0xf]
    %v5101 = vld [vmem:[%s8 + $0x8] sm:$0xf]
    %v5102 = vld [vmem:[%s8 + $0xc] sm:$0xf]
    %v5103 = vld [vmem:[%s8 + $0x10] sm:$0xf]
    %v5104 = vld [vmem:[%s8 + $0x14] sm:$0xf]
    %v5105 = vld [vmem:[%s8 + $0x18] sm:$0xf]
    %v5106 = vld [vmem:[%s8 + $0x1c] sm:$0xf]
    %v5107 = vld [vmem:[%s8 + $0x20] sm:$0xf]
    %v5108 = vld [vmem:[%s8 + $0x24] sm:$0xf]
    %v5109 = vld [vmem:[%s8 + $0x28] sm:$0xf]
    %v5110 = vld [vmem:[%s8 + $0x2c] sm:$0xf]
    %v5111 = vld [vmem:[%s8 + $0x30] sm:$0xf]
    %v5112 = vld [vmem:[%s8 + $0x34] sm:$0xf]
    %v5113 = vld [vmem:[%s8 + $0x38] sm:$0xf]
    %v5114 = vld [vmem:[%s8 + $0x3c] sm:$0xf]
    %v5115 = vld [vmem:[%s8 + $0x40] sm:$0xf]
    %v5116 = vld [vmem:[%s8 + $0x44] sm:$0xf]
    %v5117 = vld [vmem:[%s8 + $0x48] sm:$0xf]
    %v5118 = vld [vmem:[%s8 + $0x4c] sm:$0xf]
    %v5119 = vld [vmem:[%s8 + $0x50] sm:$0xf]
    %v5120 = vld [vmem:[%s8 + $0x54] sm:$0xf]
    %v5121 = vld [vmem:[%s8 + $0x58] sm:$0xf]
    %v5122 = vld [vmem:[%s8 + $0x5c] sm:$0xf]
    %v5123 = vld [vmem:[%s8 + $0x60] sm:$0xf]
    %v5124 = vld [vmem:[%s8 + $0x64] sm:$0xf]
    %v5125 = vld [vmem:[%s8 + $0x68] sm:$0xf]
    %v5126 = vld [vmem:[%s8 + $0x6c] sm:$0xf]
    %v5127 = vld [vmem:[%s8 + $0x70] sm:$0xf]
    %v5128 = vld [vmem:[%s8 + $0x74] sm:$0xf]
    %v5129 = vld [vmem:[%s8 + $0x78] sm:$0xf]
    %v5130 = vld [vmem:[%s8 + $0x7c] sm:$0xf]
    %v5131 = vld [vmem:[%s8 + $0x80] sm:$0xf]
    %v5132 = vld [vmem:[%s8 + $0x84] sm:$0xf]
    %v5133 = vld [vmem:[%s8 + $0x88] sm:$0xf]
    %v5134 = vld [vmem:[%s8 + $0x8c] sm:$0xf]
    %v5135 = vld [vmem:[%s8 + $0x90] sm:$0xf]
    %v5136 = vld [vmem:[%s8 + $0x94] sm:$0xf]
    %v5137 = vld [vmem:[%s8 + $0x98] sm:$0xf]
    %v5138 = vld [vmem:[%s8 + $0x9c] sm:$0xf]
    %v5139 = vld [vmem:[%s8 + $0xa0] sm:$0xf]
    %v5140 = vld [vmem:[%s8 + $0xa4] sm:$0xf]
    %v5141 = vld [vmem:[%s8 + $0xa8] sm:$0xf]
    %v5142 = vld [vmem:[%s8 + $0xac] sm:$0xf]
    %v5143 = vld [vmem:[%s8 + $0xb0] sm:$0xf]
    %v5144 = vld [vmem:[%s8 + $0xb4] sm:$0xf]
    %v5145 = vld [vmem:[%s8 + $0xb8] sm:$0xf]
    %v5146 = vld [vmem:[%s8 + $0xbc] sm:$0xf]
    %v5147 = vld [vmem:[%s8 + $0xc0] sm:$0xf]
    %v5148 = vld [vmem:[%s8 + $0xc4] sm:$0xf]
    %v5149 = vld [vmem:[%s8 + $0xc8] sm:$0xf]
    %v5150 = vld [vmem:[%s8 + $0xcc] sm:$0xf]
    %v5151 = vld [vmem:[%s8 + $0xd0] sm:$0xf]
    %v5152 = vld [vmem:[%s8 + $0xd4] sm:$0xf]
    %v5153 = vld [vmem:[%s8 + $0xd8] sm:$0xf]
    %v5154 = vld [vmem:[%s8 + $0xdc] sm:$0xf]
    %v5155 = vld [vmem:[%s8 + $0xe0] sm:$0xf]
    %v5156 = vld [vmem:[%s8 + $0xe4] sm:$0xf]
    %v5157 = vld [vmem:[%s8 + $0xe8] sm:$0xf]
    %v5158 = vld [vmem:[%s8 + $0xec] sm:$0xf]
    %v5159 = vld [vmem:[%s8 + $0xf0] sm:$0xf]
    %v5160 = vld [vmem:[%s8 + $0xf4] sm:$0xf]
    %v5161 = vld [vmem:[%s8 + $0xf8] sm:$0xf]
    %v5162 = vld [vmem:[%s8 + $0xfc] sm:$0xf]
    %v5163 = vld [vmem:[%s8 + $0x100] sm:$0xf]
    %v5164 = vld [vmem:[%s8 + $0x104] sm:$0xf]
    %v5165 = vld [vmem:[%s8 + $0x108] sm:$0xf]
    %v5166 = vld [vmem:[%s8 + $0x10c] sm:$0xf]
    %v5167 = vld [vmem:[%s8 + $0x110] sm:$0xf]
    %v5168 = vld [vmem:[%s8 + $0x114] sm:$0xf]
    %v5169 = vld [vmem:[%s8 + $0x118] sm:$0xf]
    %v5170 = vld [vmem:[%s8 + $0x11c] sm:$0xf]
    %v5171 = vld [vmem:[%s8 + $0x120] sm:$0xf]
    %v5172 = vld [vmem:[%s8 + $0x124] sm:$0xf]
    %v5173 = vld [vmem:[%s8 + $0x128] sm:$0xf]
    %v5174 = vld [vmem:[%s8 + $0x12c] sm:$0xf]
    %v5175 = vld [vmem:[%s8 + $0x130] sm:$0xf]
    %v5176 = vld [vmem:[%s8 + $0x134] sm:$0xf]
    %v5177 = vld [vmem:[%s8 + $0x138] sm:$0xf]
    %v5178 = vld [vmem:[%s8 + $0x13c] sm:$0xf]
    %v5179 = vld [vmem:[%s8 + $0x140] sm:$0xf]
    %v5180 = vld [vmem:[%s8 + $0x144] sm:$0xf]
    %v5181 = vld [vmem:[%s8 + $0x148] sm:$0xf]
    %v5182 = vld [vmem:[%s8 + $0x14c] sm:$0xf]
    %v5183 = vld [vmem:[%s8 + $0x150] sm:$0xf]
    %v5184 = vld [vmem:[%s8 + $0x154] sm:$0xf]
    %v5185 = vld [vmem:[%s8 + $0x158] sm:$0xf]
    %v5186 = vld [vmem:[%s8 + $0x15c] sm:$0xf]
    %v5187 = vld [vmem:[%s8 + $0x160] sm:$0xf]
    %v5188 = vld [vmem:[%s8 + $0x164] sm:$0xf]
    %v5189 = vld [vmem:[%s8 + $0x168] sm:$0xf]
    %v5190 = vld [vmem:[%s8 + $0x16c] sm:$0xf]
    %v5191 = vld [vmem:[%s8 + $0x170] sm:$0xf]
    %v5192 = vld [vmem:[%s8 + $0x174] sm:$0xf]
    %v5193 = vld [vmem:[%s8 + $0x178] sm:$0xf]
    %v5194 = vld [vmem:[%s8 + $0x17c] sm:$0xf]
    %v5195 = vld [vmem:[%s8 + $0x180] sm:$0xf]
    %v5196 = vld [vmem:[%s8 + $0x184] sm:$0xf]
    %v5197 = vld [vmem:[%s8 + $0x188] sm:$0xf]
    %v5198 = vld [vmem:[%s8 + $0x18c] sm:$0xf]
    %v5199 = vld [vmem:[%s8 + $0x190] sm:$0xf]
    %v5200 = vld [vmem:[%s8 + $0x194] sm:$0xf]
    %v5201 = vld [vmem:[%s8 + $0x198] sm:$0xf]
    %v5202 = vld [vmem:[%s8 + $0x19c] sm:$0xf]
    %v5203 = vld [vmem:[%s8 + $0x1a0] sm:$0xf]
    %v5204 = vld [vmem:[%s8 + $0x1a4] sm:$0xf]
    %v5205 = vld [vmem:[%s8 + $0x1a8] sm:$0xf]
    %v5206 = vld [vmem:[%s8 + $0x1ac] sm:$0xf]
    %v5207 = vld [vmem:[%s8 + $0x1b0] sm:$0xf]
    %v5208 = vld [vmem:[%s8 + $0x1b4] sm:$0xf]
    %v5209 = vld [vmem:[%s8 + $0x1b8] sm:$0xf]
    %v5210 = vld [vmem:[%s8 + $0x1bc] sm:$0xf]
    %v5211 = vld [vmem:[%s8 + $0x1c0] sm:$0xf]
    %v5212 = vld [vmem:[%s8 + $0x1c4] sm:$0xf]
    %v5213 = vld [vmem:[%s8 + $0x1c8] sm:$0xf]
    %v5214 = vld [vmem:[%s8 + $0x1cc] sm:$0xf]
    %v5215 = vld [vmem:[%s8 + $0x1d0] sm:$0xf]
    %v5216 = vld [vmem:[%s8 + $0x1d4] sm:$0xf]
    %v5217 = vld [vmem:[%s8 + $0x1d8] sm:$0xf]
    %v5218 = vld [vmem:[%s8 + $0x1dc] sm:$0xf]
    %v5219 = vld [vmem:[%s8 + $0x1e0] sm:$0xf]
    %v5220 = vld [vmem:[%s8 + $0x1e4] sm:$0xf]
    %v5221 = vld [vmem:[%s8 + $0x1e8] sm:$0xf]
    %v5222 = vld [vmem:[%s8 + $0x1ec] sm:$0xf]
    %v5223 = vld [vmem:[%s8 + $0x1f0] sm:$0xf]
    %v5224 = vld [vmem:[%s8 + $0x1f4] sm:$0xf]
    %v5225 = vld [vmem:[%s8 + $0x1f8] sm:$0xf]
    %v5226 = vld [vmem:[%s8 + $0x1fc] sm:$0xf]
    %v5227 = vld [vmem:[%s8 + $0x200] sm:$0xf]
    %v5228 = vld [vmem:[%s8 + $0x204] sm:$0xf]
    %v5229 = vld [vmem:[%s8 + $0x208] sm:$0xf]
    %v5230 = vld [vmem:[%s8 + $0x20c] sm:$0xf]
    %v5231 = vld [vmem:[%s8 + $0x210] sm:$0xf]
    %v5232 = vld [vmem:[%s8 + $0x214] sm:$0xf]
    %v5233 = vld [vmem:[%s8 + $0x218] sm:$0xf]
    %v5234 = vld [vmem:[%s8 + $0x21c] sm:$0xf]
    %v5235 = vld [vmem:[%s8 + $0x220] sm:$0xf]
    %v5236 = vld [vmem:[%s8 + $0x224] sm:$0x3]
    %v5237 = vld [vmem:[%s9] sm:$0x1]
    %v5239 = vperm.slane %v5237, 0
    %v5379 = vunpack.c.l.b16 %v5099
    %v5380 = vunpack.c.l.b16 %v5100
    %v5381 = vunpack.c.l.b16 %v5101
    %v5382 = vunpack.c.l.b16 %v5102
    %v5383 = vunpack.c.l.b16 %v5103
    %v5384 = vunpack.c.l.b16 %v5104
    %v5385 = vunpack.c.l.b16 %v5105
    %v5386 = vunpack.c.l.b16 %v5106
    %v5387 = vunpack.c.l.b16 %v5107
    %v5388 = vunpack.c.l.b16 %v5108
    %v5389 = vunpack.c.l.b16 %v5109
    %v5390 = vunpack.c.l.b16 %v5110
    %v5391 = vunpack.c.l.b16 %v5111
    %v5392 = vunpack.c.l.b16 %v5112
    %v5393 = vunpack.c.l.b16 %v5113
    %v5394 = vunpack.c.l.b16 %v5114
    %v5395 = vunpack.c.l.b16 %v5115
    %v5396 = vunpack.c.l.b16 %v5116
    %v5397 = vunpack.c.l.b16 %v5117
    %v5398 = vunpack.c.l.b16 %v5118
    %v5399 = vunpack.c.l.b16 %v5119
    %v5400 = vunpack.c.l.b16 %v5120
    %v5401 = vunpack.c.l.b16 %v5121
    %v5402 = vunpack.c.l.b16 %v5122
    %v5403 = vunpack.c.l.b16 %v5123
    %v5404 = vunpack.c.l.b16 %v5124
    %v5405 = vunpack.c.l.b16 %v5125
    %v5406 = vunpack.c.l.b16 %v5126
    %v5407 = vunpack.c.l.b16 %v5127
    %v5408 = vunpack.c.l.b16 %v5128
    %v5409 = vunpack.c.l.b16 %v5129
    %v5410 = vunpack.c.l.b16 %v5130
    %v5411 = vunpack.c.l.b16 %v5131
    %v5412 = vunpack.c.l.b16 %v5132
    %v5413 = vunpack.c.l.b16 %v5133
    %v5414 = vunpack.c.l.b16 %v5134
    %v5415 = vunpack.c.l.b16 %v5135
    %v5416 = vunpack.c.l.b16 %v5136
    %v5417 = vunpack.c.l.b16 %v5137
    %v5418 = vunpack.c.l.b16 %v5138
    %v5419 = vunpack.c.l.b16 %v5139
    %v5420 = vunpack.c.l.b16 %v5140
    %v5421 = vunpack.c.l.b16 %v5141
    %v5422 = vunpack.c.l.b16 %v5142
    %v5423 = vunpack.c.l.b16 %v5143
    %v5424 = vunpack.c.l.b16 %v5144
    %v5425 = vunpack.c.l.b16 %v5145
    %v5426 = vunpack.c.l.b16 %v5146
    %v5427 = vunpack.c.l.b16 %v5147
    %v5428 = vunpack.c.l.b16 %v5148
    %v5429 = vunpack.c.l.b16 %v5149
    %v5430 = vunpack.c.l.b16 %v5150
    %v5431 = vunpack.c.l.b16 %v5151
    %v5432 = vunpack.c.l.b16 %v5152
    %v5433 = vunpack.c.l.b16 %v5153
    %v5434 = vunpack.c.l.b16 %v5154
    %v5435 = vunpack.c.l.b16 %v5155
    %v5436 = vunpack.c.l.b16 %v5156
    %v5437 = vunpack.c.l.b16 %v5157
    %v5438 = vunpack.c.l.b16 %v5158
    %v5439 = vunpack.c.l.b16 %v5159
    %v5440 = vunpack.c.l.b16 %v5160
    %v5441 = vunpack.c.l.b16 %v5161
    %v5442 = vunpack.c.l.b16 %v5162
    %v5443 = vunpack.c.l.b16 %v5163
    %v5444 = vunpack.c.l.b16 %v5164
    %v5445 = vunpack.c.l.b16 %v5165
    %v5446 = vunpack.c.l.b16 %v5166
    %v5447 = vunpack.c.l.b16 %v5167
    %v5448 = vunpack.c.l.b16 %v5168
    %v5449 = vunpack.c.l.b16 %v5169
    %v5450 = vunpack.c.l.b16 %v5170
    %v5451 = vunpack.c.l.b16 %v5171
    %v5452 = vunpack.c.l.b16 %v5172
    %v5453 = vunpack.c.l.b16 %v5173
    %v5454 = vunpack.c.l.b16 %v5174
    %v5455 = vunpack.c.l.b16 %v5175
    %v5456 = vunpack.c.l.b16 %v5176
    %v5457 = vunpack.c.l.b16 %v5177
    %v5458 = vunpack.c.l.b16 %v5178
    %v5459 = vunpack.c.l.b16 %v5179
    %v5460 = vunpack.c.l.b16 %v5180
    %v5461 = vunpack.c.l.b16 %v5181
    %v5462 = vunpack.c.l.b16 %v5182
    %v5463 = vunpack.c.l.b16 %v5183
    %v5464 = vunpack.c.l.b16 %v5184
    %v5465 = vunpack.c.l.b16 %v5185
    %v5466 = vunpack.c.l.b16 %v5186
    %v5467 = vunpack.c.l.b16 %v5187
    %v5468 = vunpack.c.l.b16 %v5188
    %v5469 = vunpack.c.l.b16 %v5189
    %v5470 = vunpack.c.l.b16 %v5190
    %v5471 = vunpack.c.l.b16 %v5191
    %v5472 = vunpack.c.l.b16 %v5192
    %v5473 = vunpack.c.l.b16 %v5193
    %v5474 = vunpack.c.l.b16 %v5194
    %v5475 = vunpack.c.l.b16 %v5195
    %v5476 = vunpack.c.l.b16 %v5196
    %v5477 = vunpack.c.l.b16 %v5197
    %v5478 = vunpack.c.l.b16 %v5198
    %v5479 = vunpack.c.l.b16 %v5199
    %v5480 = vunpack.c.l.b16 %v5200
    %v5481 = vunpack.c.l.b16 %v5201
    %v5482 = vunpack.c.l.b16 %v5202
    %v5483 = vunpack.c.l.b16 %v5203
    %v5484 = vunpack.c.l.b16 %v5204
    %v5485 = vunpack.c.l.b16 %v5205
    %v5486 = vunpack.c.l.b16 %v5206
    %v5487 = vunpack.c.l.b16 %v5207
    %v5488 = vunpack.c.l.b16 %v5208
    %v5489 = vunpack.c.l.b16 %v5209
    %v5490 = vunpack.c.l.b16 %v5210
    %v5491 = vunpack.c.l.b16 %v5211
    %v5492 = vunpack.c.l.b16 %v5212
    %v5493 = vunpack.c.l.b16 %v5213
    %v5494 = vunpack.c.l.b16 %v5214
    %v5495 = vunpack.c.l.b16 %v5215
    %v5496 = vunpack.c.l.b16 %v5216
    %v5497 = vunpack.c.l.b16 %v5217
    %v5498 = vunpack.c.l.b16 %v5218
    %v5499 = vunpack.c.l.b16 %v5219
    %v5500 = vunpack.c.l.b16 %v5220
    %v5501 = vunpack.c.l.b16 %v5221
    %v5502 = vunpack.c.l.b16 %v5222
    %v5503 = vunpack.c.l.b16 %v5223
    %v5504 = vunpack.c.l.b16 %v5224
    %v5505 = vunpack.c.l.b16 %v5225
    %v5506 = vunpack.c.l.b16 %v5226
    %v5507 = vunpack.c.l.b16 %v5227
    %v5508 = vunpack.c.l.b16 %v5228
    %v5509 = vunpack.c.l.b16 %v5229
    %v5510 = vunpack.c.l.b16 %v5230
    %v5511 = vunpack.c.l.b16 %v5231
    %v5512 = vunpack.c.l.b16 %v5232
    %v5513 = vunpack.c.l.b16 %v5233
    %v5514 = vunpack.c.l.b16 %v5234
    %v5515 = vunpack.c.l.b16 %v5235
    %v5516 = vunpack.c.l.b16 %v5236
    %v5517 = vpack.c.b16 %v5380, %v5379
    %v5518 = vpack.c.b16 %v5382, %v5381
    %v5519 = vpack.c.b16 %v5384, %v5383
    %v5520 = vpack.c.b16 %v5386, %v5385
    %v5521 = vpack.c.b16 %v5388, %v5387
    %v5522 = vpack.c.b16 %v5390, %v5389
    %v5523 = vpack.c.b16 %v5392, %v5391
    %v5524 = vpack.c.b16 %v5394, %v5393
    %v5525 = vpack.c.b16 %v5396, %v5395
    %v5526 = vpack.c.b16 %v5398, %v5397
    %v5527 = vpack.c.b16 %v5400, %v5399
    %v5528 = vpack.c.b16 %v5402, %v5401
    %v5529 = vpack.c.b16 %v5404, %v5403
    %v5530 = vpack.c.b16 %v5406, %v5405
    %v5531 = vpack.c.b16 %v5408, %v5407
    %v5532 = vpack.c.b16 %v5410, %v5409
    %v5533 = vpack.c.b16 %v5412, %v5411
    %v5534 = vpack.c.b16 %v5414, %v5413
    %v5535 = vpack.c.b16 %v5416, %v5415
    %v5536 = vpack.c.b16 %v5418, %v5417
    %v5537 = vpack.c.b16 %v5420, %v5419
    %v5538 = vpack.c.b16 %v5422, %v5421
    %v5539 = vpack.c.b16 %v5424, %v5423
    %v5540 = vpack.c.b16 %v5426, %v5425
    %v5541 = vpack.c.b16 %v5428, %v5427
    %v5542 = vpack.c.b16 %v5430, %v5429
    %v5543 = vpack.c.b16 %v5432, %v5431
    %v5544 = vpack.c.b16 %v5434, %v5433
    %v5545 = vpack.c.b16 %v5436, %v5435
    %v5546 = vpack.c.b16 %v5438, %v5437
    %v5547 = vpack.c.b16 %v5440, %v5439
    %v5548 = vpack.c.b16 %v5442, %v5441
    %v5549 = vpack.c.b16 %v5444, %v5443
    %v5550 = vpack.c.b16 %v5446, %v5445
    %v5551 = vpack.c.b16 %v5448, %v5447
    %v5552 = vpack.c.b16 %v5450, %v5449
    %v5553 = vpack.c.b16 %v5452, %v5451
    %v5554 = vpack.c.b16 %v5454, %v5453
    %v5555 = vpack.c.b16 %v5456, %v5455
    %v5556 = vpack.c.b16 %v5458, %v5457
    %v5557 = vpack.c.b16 %v5460, %v5459
    %v5558 = vpack.c.b16 %v5462, %v5461
    %v5559 = vpack.c.b16 %v5464, %v5463
    %v5560 = vpack.c.b16 %v5466, %v5465
    %v5561 = vpack.c.b16 %v5468, %v5467
    %v5562 = vpack.c.b16 %v5470, %v5469
    %v5563 = vpack.c.b16 %v5472, %v5471
    %v5564 = vpack.c.b16 %v5474, %v5473
    %v5565 = vpack.c.b16 %v5476, %v5475
    %v5566 = vpack.c.b16 %v5478, %v5477
    %v5567 = vpack.c.b16 %v5480, %v5479
    %v5568 = vpack.c.b16 %v5482, %v5481
    %v5569 = vpack.c.b16 %v5484, %v5483
    %v5570 = vpack.c.b16 %v5486, %v5485
    %v5571 = vpack.c.b16 %v5488, %v5487
    %v5572 = vpack.c.b16 %v5490, %v5489
    %v5573 = vpack.c.b16 %v5492, %v5491
    %v5574 = vpack.c.b16 %v5494, %v5493
    %v5575 = vpack.c.b16 %v5496, %v5495
    %v5576 = vpack.c.b16 %v5498, %v5497
    %v5577 = vpack.c.b16 %v5500, %v5499
    %v5578 = vpack.c.b16 %v5502, %v5501
    %v5579 = vpack.c.b16 %v5504, %v5503
    %v5580 = vpack.c.b16 %v5506, %v5505
    %v5581 = vpack.c.b16 %v5508, %v5507
    %v5582 = vpack.c.b16 %v5510, %v5509
    %v5583 = vpack.c.b16 %v5512, %v5511
    %v5584 = vpack.c.b16 %v5514, %v5513
    %v5585 = vpack.c.b16 %v5516, %v5515
    %v5655 = vsel %vm4978, %v5585, 0
    %5657 = vmatpush.bf16.msra.mxu0 %v5524
    %5658 = vmatpush.bf16.msra.mxu0 %v5523
    %5659 = vmatpush.bf16.msra.mxu0 %v5522
    %5660 = vmatpush.bf16.msra.mxu0 %v5521
    %5661 = vmatpush.bf16.msra.mxu0 %v5520
    %5662 = vmatpush.bf16.msra.mxu0 %v5519
    %5663 = vmatpush.bf16.msra.mxu0 %v5518
    %5664 = vmatpush.bf16.msra.mxu0 %v5517
    %5665 = vmatmul.bf16.gmra.mxu0 %v4410
    %v5666 = vpop.f32.mrf.mxu0
    %v5667 = vadd.f32 %v5239, %v5666
    %v5668 = vpop.f32.mrf.mxu0
    %5669 = vdwg.mxu0
    %5670 = vmatpush.bf16.msra.mxu0 %v5532
    %5671 = vmatpush.bf16.msra.mxu0 %v5531
    %5672 = vmatpush.bf16.msra.mxu0 %v5530
    %5673 = vmatpush.bf16.msra.mxu0 %v5529
    %5674 = vmatpush.bf16.msra.mxu0 %v5528
    %5675 = vmatpush.bf16.msra.mxu0 %v5527
    %5676 = vmatpush.bf16.msra.mxu0 %v5526
    %5677 = vmatpush.bf16.msra.mxu0 %v5525
    %5678 = vmatmul.bf16.gmra.mxu0 %v4411
    %v5679 = vpop.f32.mrf.mxu0
    %v5680 = vadd.f32 %v5667, %v5679
    %v5681 = vpop.f32.mrf.mxu0
    %5682 = vdwg.mxu0
    %5683 = vmatpush.bf16.msra.mxu0 %v5540
    %5684 = vmatpush.bf16.msra.mxu0 %v5539
    %5685 = vmatpush.bf16.msra.mxu0 %v5538
    %5686 = vmatpush.bf16.msra.mxu0 %v5537
    %5687 = vmatpush.bf16.msra.mxu0 %v5536
    %5688 = vmatpush.bf16.msra.mxu0 %v5535
    %5689 = vmatpush.bf16.msra.mxu0 %v5534
    %5690 = vmatpush.bf16.msra.mxu0 %v5533
    %5691 = vmatmul.bf16.gmra.mxu0 %v4412
    %v5692 = vpop.f32.mrf.mxu0
    %v5693 = vadd.f32 %v5680, %v5692
    %v5694 = vpop.f32.mrf.mxu0
    %5695 = vdwg.mxu0
    %5696 = vmatpush.bf16.msra.mxu0 %v5548
    %5697 = vmatpush.bf16.msra.mxu0 %v5547
    %5698 = vmatpush.bf16.msra.mxu0 %v5546
    %5699 = vmatpush.bf16.msra.mxu0 %v5545
    %5700 = vmatpush.bf16.msra.mxu0 %v5544
    %5701 = vmatpush.bf16.msra.mxu0 %v5543
    %5702 = vmatpush.bf16.msra.mxu0 %v5542
    %5703 = vmatpush.bf16.msra.mxu0 %v5541
    %5704 = vmatmul.bf16.gmra.mxu0 %v4413
    %v5705 = vpop.f32.mrf.mxu0
    %v5706 = vadd.f32 %v5693, %v5705
    %v5707 = vpop.f32.mrf.mxu0
    %5708 = vdwg.mxu0
    %5709 = vmatpush.bf16.msra.mxu0 %v5556
    %5710 = vmatpush.bf16.msra.mxu0 %v5555
    %5711 = vmatpush.bf16.msra.mxu0 %v5554
    %5712 = vmatpush.bf16.msra.mxu0 %v5553
    %5713 = vmatpush.bf16.msra.mxu0 %v5552
    %5714 = vmatpush.bf16.msra.mxu0 %v5551
    %5715 = vmatpush.bf16.msra.mxu0 %v5550
    %5716 = vmatpush.bf16.msra.mxu0 %v5549
    %5717 = vmatmul.bf16.gmra.mxu0 %v4414
    %v5718 = vpop.f32.mrf.mxu0
    %v5719 = vadd.f32 %v5706, %v5718
    %v5720 = vpop.f32.mrf.mxu0
    %5721 = vdwg.mxu0
    %5722 = vmatpush.bf16.msra.mxu0 %v5564
    %5723 = vmatpush.bf16.msra.mxu0 %v5563
    %5724 = vmatpush.bf16.msra.mxu0 %v5562
    %5725 = vmatpush.bf16.msra.mxu0 %v5561
    %5726 = vmatpush.bf16.msra.mxu0 %v5560
    %5727 = vmatpush.bf16.msra.mxu0 %v5559
    %5728 = vmatpush.bf16.msra.mxu0 %v5558
    %5729 = vmatpush.bf16.msra.mxu0 %v5557
    %5730 = vmatmul.bf16.gmra.mxu0 %v4415
    %v5731 = vpop.f32.mrf.mxu0
    %v5732 = vadd.f32 %v5719, %v5731
    %v5733 = vpop.f32.mrf.mxu0
    %5734 = vdwg.mxu0
    %5735 = vmatpush.bf16.msra.mxu0 %v5572
    %5736 = vmatpush.bf16.msra.mxu0 %v5571
    %5737 = vmatpush.bf16.msra.mxu0 %v5570
    %5738 = vmatpush.bf16.msra.mxu0 %v5569
    %5739 = vmatpush.bf16.msra.mxu0 %v5568
    %5740 = vmatpush.bf16.msra.mxu0 %v5567
    %5741 = vmatpush.bf16.msra.mxu0 %v5566
    %5742 = vmatpush.bf16.msra.mxu0 %v5565
    %5743 = vmatmul.bf16.gmra.mxu0 %v4416
    %v5744 = vpop.f32.mrf.mxu0
    %v5745 = vadd.f32 %v5732, %v5744
    %v5746 = vpop.f32.mrf.mxu0
    %5747 = vdwg.mxu0
    %5748 = vmatpush.bf16.msra.mxu0 %v5580
    %5749 = vmatpush.bf16.msra.mxu0 %v5579
    %5750 = vmatpush.bf16.msra.mxu0 %v5578
    %5751 = vmatpush.bf16.msra.mxu0 %v5577
    %5752 = vmatpush.bf16.msra.mxu0 %v5576
    %5753 = vmatpush.bf16.msra.mxu0 %v5575
    %5754 = vmatpush.bf16.msra.mxu0 %v5574
    %5755 = vmatpush.bf16.msra.mxu0 %v5573
    %5756 = vmatmul.bf16.gmra.mxu0 %v4417
    %v5757 = vpop.f32.mrf.mxu0
    %v5758 = vadd.f32 %v5745, %v5757
    %v5759 = vpop.f32.mrf.mxu0
    %5760 = vdwg.mxu0
    %5761 = vmatpush.bf16.msra.mxu0 0
    %5762 = vmatpush.bf16.msra.mxu0 0
    %5763 = vmatpush.bf16.msra.mxu0 0
    %5764 = vmatpush.bf16.msra.mxu0 %v5655
    %5765 = vmatpush.bf16.msra.mxu0 %v5584
    %5766 = vmatpush.bf16.msra.mxu0 %v5583
    %5767 = vmatpush.bf16.msra.mxu0 %v5582
    %5768 = vmatpush.bf16.msra.mxu0 %v5581
    %5769 = vmatmul.bf16.gmra.mxu0 %v4976
    %v5770 = vpop.f32.mrf.mxu0
    %v5771 = vadd.f32 %v5758, %v5770
    %v5772 = vpop.f32.mrf.mxu0
    %5773 = vdwg.mxu0
    %vm5774 = vcmask 238592
    %5775 = vst.msk [vmem:[#allocation4] sm:$0x3] %vm5774, %v5096
    %5776 = vst.msk [vmem:[#allocation6] sm:$0x3] %vm5774, %v5771
    %v5777 = vld [vmem:[%s1] sm:$0x3]
    %v5778 = vmul.f32 %v5771, 0.5
    %v5779 = vmul.f32 %v5778, 1.442695
    %v5780 = vpow.pop %v5779
    %v5781 = vmul.f32 %v5777, %v5780
    %v5782 = vadd.f32 %v5096, %v5781
    %v5783 = vpack.c.bf16 %v5782, %v5782
    %v5784 = vld [vmem:[%s10] sm:$0xff]
    %v5785 = vld [vmem:[%s10 + $0x8] sm:$0xff]
    %v5786 = vld [vmem:[%s10 + $0x10] sm:$0xff]
    %v5787 = vld [vmem:[%s10 + $0x18] sm:$0xff]
    %v5788 = vld [vmem:[%s10 + $0x20] sm:$0xf]
    %v5789 = vld [vmem:[%s10 + $0x24] sm:$0xff]
    %v5790 = vld [vmem:[%s10 + $0x2c] sm:$0xff]
    %v5791 = vld [vmem:[%s10 + $0x34] sm:$0xff]
    %v5792 = vld [vmem:[%s10 + $0x3c] sm:$0xff]
    %v5793 = vld [vmem:[%s10 + $0x44] sm:$0xf]
    %v5794 = vld [vmem:[%s10 + $0x48] sm:$0xff]
    %v5795 = vld [vmem:[%s10 + $0x50] sm:$0xff]
    %v5796 = vld [vmem:[%s10 + $0x58] sm:$0xff]
    %v5797 = vld [vmem:[%s10 + $0x60] sm:$0xff]
    %v5798 = vld [vmem:[%s10 + $0x68] sm:$0xf]
    %v5799 = vld [vmem:[%s10 + $0x6c] sm:$0x77]
    %v5800 = vld [vmem:[%s10 + $0x74] sm:$0x77]
    %v5801 = vld [vmem:[%s10 + $0x7c] sm:$0x77]
    %v5802 = vld [vmem:[%s10 + $0x84] sm:$0x77]
    %v5803 = vld [vmem:[%s10 + $0x8c] sm:$0x7]
    %v5804 = vld [vmem:[%s11] sm:$0xff]
    %v5805 = vld [vmem:[%s11 + $0x8] sm:$0x1]
    %v5808 = vperm.slane %v5804, 0
    %v5809 = vperm.slane %v5804, 1
    %v5810 = vperm.slane %v5804, 2
    %v5811 = vperm.slane %v5804, 3
    %v5812 = vperm.slane %v5804, 4
    %v5813 = vperm.slane %v5804, 5
    %v5814 = vperm.slane %v5804, 6
    %v5815 = vperm.slane %v5804, 7
    %v5816 = vperm.slane %v5805, 0
    %v5846 = vunpack.c.l.b16 %v5784
    %v5847 = vunpack.c.h.b16 %v5784
    %v5848 = vunpack.c.l.b16 %v5785
    %v5849 = vunpack.c.h.b16 %v5785
    %v5850 = vunpack.c.l.b16 %v5786
    %v5851 = vunpack.c.h.b16 %v5786
    %v5852 = vunpack.c.l.b16 %v5787
    %v5853 = vunpack.c.h.b16 %v5787
    %v5854 = vunpack.c.l.b16 %v5788
    %v5855 = vunpack.c.l.b16 %v5789
    %v5856 = vunpack.c.h.b16 %v5789
    %v5857 = vunpack.c.l.b16 %v5790
    %v5858 = vunpack.c.h.b16 %v5790
    %v5859 = vunpack.c.l.b16 %v5791
    %v5860 = vunpack.c.h.b16 %v5791
    %v5861 = vunpack.c.l.b16 %v5792
    %v5862 = vunpack.c.h.b16 %v5792
    %v5863 = vunpack.c.l.b16 %v5793
    %v5864 = vunpack.c.l.b16 %v5794
    %v5865 = vunpack.c.h.b16 %v5794
    %v5866 = vunpack.c.l.b16 %v5795
    %v5867 = vunpack.c.h.b16 %v5795
    %v5868 = vunpack.c.l.b16 %v5796
    %v5869 = vunpack.c.h.b16 %v5796
    %v5870 = vunpack.c.l.b16 %v5797
    %v5871 = vunpack.c.h.b16 %v5797
    %v5872 = vunpack.c.l.b16 %v5798
    %v5873 = vunpack.c.l.b16 %v5799
    %v5874 = vunpack.c.h.b16 %v5799
    %v5875 = vunpack.c.l.b16 %v5800
    %v5876 = vunpack.c.h.b16 %v5800
    %v5877 = vunpack.c.l.b16 %v5801
    %v5878 = vunpack.c.h.b16 %v5801
    %v5879 = vunpack.c.l.b16 %v5802
    %v5880 = vunpack.c.h.b16 %v5802
    %v5881 = vunpack.c.l.b16 %v5803
    %v5882 = vpack.c.b16 %v5855, %v5846
    %v5883 = vpack.c.b16 %v5856, %v5847
    %v5884 = vpack.c.b16 %v5857, %v5848
    %v5885 = vpack.c.b16 %v5858, %v5849
    %v5886 = vpack.c.b16 %v5859, %v5850
    %v5887 = vpack.c.b16 %v5860, %v5851
    %v5888 = vpack.c.b16 %v5861, %v5852
    %v5889 = vpack.c.b16 %v5862, %v5853
    %v5890 = vpack.c.b16 %v5863, %v5854
    %v5891 = vpack.c.b16 %v5873, %v5864
    %v5892 = vpack.c.b16 %v5874, %v5865
    %v5893 = vpack.c.b16 %v5875, %v5866
    %v5894 = vpack.c.b16 %v5876, %v5867
    %v5895 = vpack.c.b16 %v5877, %v5868
    %v5896 = vpack.c.b16 %v5878, %v5869
    %v5897 = vpack.c.b16 %v5879, %v5870
    %v5898 = vpack.c.b16 %v5880, %v5871
    %v5899 = vpack.c.b16 %v5881, %v5872
    %vm5909 = vcmask 244736
    %v5911 = vsel %vm5909, %v5783, 0
    %vm5913 = vcmask 1046528
    %v5915 = vsel %vm5913, %v5891, 0
    %v5918 = vsel %vm5913, %v5892, 0
    %v5921 = vsel %vm5913, %v5893, 0
    %v5924 = vsel %vm5913, %v5894, 0
    %v5927 = vsel %vm5913, %v5895, 0
    %v5930 = vsel %vm5913, %v5896, 0
    %v5933 = vsel %vm5913, %v5897, 0
    %v5936 = vsel %vm5913, %v5898, 0
    %v5939 = vsel %vm5913, %v5899, 0
    %5941 = vmatpush.bf16.msra.mxu0 0
    %5942 = vmatpush.bf16.msra.mxu0 0
    %5943 = vmatpush.bf16.msra.mxu0 0
    %5944 = vmatpush.bf16.msra.mxu0 0
    %5945 = vmatpush.bf16.msra.mxu0 0
    %5946 = vmatpush.bf16.msra.mxu0 0
    %5947 = vmatpush.bf16.msra.mxu0 %v5915
    %5948 = vmatpush.bf16.msra.mxu0 %v5882
    %5949 = vmatmul.bf16.gmra.mxu0 %v5911
    %v5950 = vpop.f32.mrf.mxu0
    %v5951 = vadd.f32 %v5808, %v5950
    %v5952 = vpop.f32.mrf.mxu0
    %5953 = vdwg.mxu0
    %5954 = vmatpush.bf16.msra.mxu0 0
    %5955 = vmatpush.bf16.msra.mxu0 0
    %5956 = vmatpush.bf16.msra.mxu0 0
    %5957 = vmatpush.bf16.msra.mxu0 0
    %5958 = vmatpush.bf16.msra.mxu0 0
    %5959 = vmatpush.bf16.msra.mxu0 0
    %5960 = vmatpush.bf16.msra.mxu0 %v5918
    %5961 = vmatpush.bf16.msra.mxu0 %v5883
    %5962 = vmatmul.bf16.gmra.mxu0 %v5911
    %v5963 = vpop.f32.mrf.mxu0
    %v5964 = vadd.f32 %v5809, %v5963
    %v5965 = vpop.f32.mrf.mxu0
    %5966 = vdwg.mxu0
    %5967 = vmatpush.bf16.msra.mxu0 0
    %5968 = vmatpush.bf16.msra.mxu0 0
    %5969 = vmatpush.bf16.msra.mxu0 0
    %5970 = vmatpush.bf16.msra.mxu0 0
    %5971 = vmatpush.bf16.msra.mxu0 0
    %5972 = vmatpush.bf16.msra.mxu0 0
    %5973 = vmatpush.bf16.msra.mxu0 %v5921
    %5974 = vmatpush.bf16.msra.mxu0 %v5884
    %5975 = vmatmul.bf16.gmra.mxu0 %v5911
    %v5976 = vpop.f32.mrf.mxu0
    %v5977 = vadd.f32 %v5810, %v5976
    %v5978 = vpop.f32.mrf.mxu0
    %5979 = vdwg.mxu0
    %5980 = vmatpush.bf16.msra.mxu0 0
    %5981 = vmatpush.bf16.msra.mxu0 0
    %5982 = vmatpush.bf16.msra.mxu0 0
    %5983 = vmatpush.bf16.msra.mxu0 0
    %5984 = vmatpush.bf16.msra.mxu0 0
    %5985 = vmatpush.bf16.msra.mxu0 0
    %5986 = vmatpush.bf16.msra.mxu0 %v5924
    %5987 = vmatpush.bf16.msra.mxu0 %v5885
    %5988 = vmatmul.bf16.gmra.mxu0 %v5911
    %v5989 = vpop.f32.mrf.mxu0
    %v5990 = vadd.f32 %v5811, %v5989
    %v5991 = vpop.f32.mrf.mxu0
    %5992 = vdwg.mxu0
    %5993 = vmatpush.bf16.msra.mxu0 0
    %5994 = vmatpush.bf16.msra.mxu0 0
    %5995 = vmatpush.bf16.msra.mxu0 0
    %5996 = vmatpush.bf16.msra.mxu0 0
    %5997 = vmatpush.bf16.msra.mxu0 0
    %5998 = vmatpush.bf16.msra.mxu0 0
    %5999 = vmatpush.bf16.msra.mxu0 %v5927
    %6000 = vmatpush.bf16.msra.mxu0 %v5886
    %6001 = vmatmul.bf16.gmra.mxu0 %v5911
    %v6002 = vpop.f32.mrf.mxu0
    %v6003 = vadd.f32 %v5812, %v6002
    %v6004 = vpop.f32.mrf.mxu0
    %6005 = vdwg.mxu0
    %6006 = vmatpush.bf16.msra.mxu0 0
    %6007 = vmatpush.bf16.msra.mxu0 0
    %6008 = vmatpush.bf16.msra.mxu0 0
    %6009 = vmatpush.bf16.msra.mxu0 0
    %6010 = vmatpush.bf16.msra.mxu0 0
    %6011 = vmatpush.bf16.msra.mxu0 0
    %6012 = vmatpush.bf16.msra.mxu0 %v5930
    %6013 = vmatpush.bf16.msra.mxu0 %v5887
    %6014 = vmatmul.bf16.gmra.mxu0 %v5911
    %v6015 = vpop.f32.mrf.mxu0
    %v6016 = vadd.f32 %v5813, %v6015
    %v6017 = vpop.f32.mrf.mxu0
    %6018 = vdwg.mxu0
    %6019 = vmatpush.bf16.msra.mxu0 0
    %6020 = vmatpush.bf16.msra.mxu0 0
    %6021 = vmatpush.bf16.msra.mxu0 0
    %6022 = vmatpush.bf16.msra.mxu0 0
    %6023 = vmatpush.bf16.msra.mxu0 0
    %6024 = vmatpush.bf16.msra.mxu0 0
    %6025 = vmatpush.bf16.msra.mxu0 %v5933
    %6026 = vmatpush.bf16.msra.mxu0 %v5888
    %6027 = vmatmul.bf16.gmra.mxu0 %v5911
    %v6028 = vpop.f32.mrf.mxu0
    %v6029 = vadd.f32 %v5814, %v6028
    %v6030 = vpop.f32.mrf.mxu0
    %6031 = vdwg.mxu0
    %6032 = vmatpush.bf16.msra.mxu0 0
    %6033 = vmatpush.bf16.msra.mxu0 0
    %6034 = vmatpush.bf16.msra.mxu0 0
    %6035 = vmatpush.bf16.msra.mxu0 0
    %6036 = vmatpush.bf16.msra.mxu0 0
    %6037 = vmatpush.bf16.msra.mxu0 0
    %6038 = vmatpush.bf16.msra.mxu0 %v5936
    %6039 = vmatpush.bf16.msra.mxu0 %v5889
    %6040 = vmatmul.bf16.gmra.mxu0 %v5911
    %v6041 = vpop.f32.mrf.mxu0
    %v6042 = vadd.f32 %v5815, %v6041
    %v6043 = vpop.f32.mrf.mxu0
    %6044 = vdwg.mxu0
    %6045 = vmatpush.bf16.msra.mxu0 0
    %6046 = vmatpush.bf16.msra.mxu0 0
    %6047 = vmatpush.bf16.msra.mxu0 0
    %6048 = vmatpush.bf16.msra.mxu0 0
    %6049 = vmatpush.bf16.msra.mxu0 0
    %6050 = vmatpush.bf16.msra.mxu0 0
    %6051 = vmatpush.bf16.msra.mxu0 %v5939
    %6052 = vmatpush.bf16.msra.mxu0 %v5890
    %6053 = vmatmul.bf16.gmra.mxu0 %v5911
    %v6054 = vpop.f32.mrf.mxu0
    %v6055 = vadd.f32 %v5816, %v6054
    %v6056 = vpop.f32.mrf.mxu0
    %6057 = vdwg.mxu0
    %vm6058 = vcmp.gt.f32.partialorder %v5951, 0.0
    %vm6059 = vcmp.gt.f32.partialorder %v5964, 0.0
    %vm6060 = vcmp.gt.f32.partialorder %v5977, 0.0
    %vm6061 = vcmp.gt.f32.partialorder %v5990, 0.0
    %vm6062 = vcmp.gt.f32.partialorder %v6003, 0.0
    %vm6063 = vcmp.gt.f32.partialorder %v6016, 0.0
    %vm6064 = vcmp.gt.f32.partialorder %v6029, 0.0
    %vm6065 = vcmp.gt.f32.partialorder %v6042, 0.0
    %vm6066 = vcmp.gt.f32.partialorder %v6055, 0.0
    %v6067 = vmin.f32 %v5951, 0.0
    %v6068 = vmin.f32 %v5964, 0.0
    %v6069 = vmin.f32 %v5977, 0.0
    %v6070 = vmin.f32 %v5990, 0.0
    %v6071 = vmin.f32 %v6003, 0.0
    %v6072 = vmin.f32 %v6016, 0.0
    %v6073 = vmin.f32 %v6029, 0.0
    %v6074 = vmin.f32 %v6042, 0.0
    %v6075 = vmin.f32 %v6055, 0.0
    %v6076 = vmul.f32 %v6067, 1.442695
    %v6077 = vpow.pop %v6076
    %v6078 = vmul.f32 %v6068, 1.442695
    %v6079 = vpow.pop %v6078
    %v6080 = vmul.f32 %v6069, 1.442695
    %v6081 = vpow.pop %v6080
    %v6082 = vmul.f32 %v6070, 1.442695
    %v6083 = vpow.pop %v6082
    %v6084 = vmul.f32 %v6071, 1.442695
    %v6085 = vpow.pop %v6084
    %v6086 = vmul.f32 %v6072, 1.442695
    %v6087 = vpow.pop %v6086
    %v6088 = vmul.f32 %v6073, 1.442695
    %v6089 = vpow.pop %v6088
    %v6090 = vmul.f32 %v6074, 1.442695
    %v6091 = vpow.pop %v6090
    %v6092 = vmul.f32 %v6075, 1.442695
    %v6093 = vpow.pop %v6092
    %v6094 = vsub.f32 %v6077, 1.0
    %v6095 = vsub.f32 %v6079, 1.0
    %v6096 = vsub.f32 %v6081, 1.0
    %v6097 = vsub.f32 %v6083, 1.0
    %v6098 = vsub.f32 %v6085, 1.0
    %v6099 = vsub.f32 %v6087, 1.0
    %v6100 = vsub.f32 %v6089, 1.0
    %v6101 = vsub.f32 %v6091, 1.0
    %v6102 = vsub.f32 %v6093, 1.0
    %v6103 = vsel %vm6058, %v5951, %v6094
    %v6104 = vsel %vm6059, %v5964, %v6095
    %v6105 = vsel %vm6060, %v5977, %v6096
    %v6106 = vsel %vm6061, %v5990, %v6097
    %v6107 = vsel %vm6062, %v6003, %v6098
    %v6108 = vsel %vm6063, %v6016, %v6099
    %v6109 = vsel %vm6064, %v6029, %v6100
    %v6110 = vsel %vm6065, %v6042, %v6101
    %v6111 = vsel %vm6066, %v6055, %v6102
    %v6112 = vpack.c.bf16 %v6103, %v6103
    %v6113 = vpack.c.bf16 %v6104, %v6104
    %v6114 = vpack.c.bf16 %v6105, %v6105
    %v6115 = vpack.c.bf16 %v6106, %v6106
    %v6116 = vpack.c.bf16 %v6107, %v6107
    %v6117 = vpack.c.bf16 %v6108, %v6108
    %v6118 = vpack.c.bf16 %v6109, %v6109
    %v6119 = vpack.c.bf16 %v6110, %v6110
    %v6120 = vpack.c.bf16 %v6111, %v6111
    %v6121 = vld [vmem:[%s12] sm:$0xff]
    %v6122 = vld [vmem:[%s12 + $0x8] sm:$0xff]
    %v6123 = vld [vmem:[%s12 + $0x10] sm:$0xff]
    %v6124 = vld [vmem:[%s12 + $0x18] sm:$0xf]
    %v6125 = vld [vmem:[%s12 + $0x1c] sm:$0xff]
    %v6126 = vld [vmem:[%s12 + $0x24] sm:$0xff]
    %v6127 = vld [vmem:[%s12 + $0x2c] sm:$0xff]
    %v6128 = vld [vmem:[%s12 + $0x34] sm:$0xf]
    %v6129 = vld [vmem:[%s12 + $0x38] sm:$0xff]
    %v6130 = vld [vmem:[%s12 + $0x40] sm:$0xff]
    %v6131 = vld [vmem:[%s12 + $0x48] sm:$0xff]
    %v6132 = vld [vmem:[%s12 + $0x50] sm:$0xf]
    %v6133 = vld [vmem:[%s12 + $0x54] sm:$0xff]
    %v6134 = vld [vmem:[%s12 + $0x5c] sm:$0xff]
    %v6135 = vld [vmem:[%s12 + $0x64] sm:$0xff]
    %v6136 = vld [vmem:[%s12 + $0x6c] sm:$0xf]
    %v6137 = vld [vmem:[%s12 + $0x70] sm:$0xff]
    %v6138 = vld [vmem:[%s12 + $0x78] sm:$0xff]
    %v6139 = vld [vmem:[%s12 + $0x80] sm:$0xff]
    %v6140 = vld [vmem:[%s12 + $0x88] sm:$0xf]
    %v6141 = vld [vmem:[%s12 + $0x8c] sm:$0xff]
    %v6142 = vld [vmem:[%s12 + $0x94] sm:$0xff]
    %v6143 = vld [vmem:[%s12 + $0x9c] sm:$0xff]
    %v6144 = vld [vmem:[%s12 + $0xa4] sm:$0xf]
    %v6145 = vld [vmem:[%s12 + $0xa8] sm:$0xff]
    %v6146 = vld [vmem:[%s12 + $0xb0] sm:$0xff]
    %v6147 = vld [vmem:[%s12 + $0xb8] sm:$0xff]
    %v6148 = vld [vmem:[%s12 + $0xc0] sm:$0xf]
    %v6149 = vld [vmem:[%s12 + $0xc4] sm:$0xff]
    %v6150 = vld [vmem:[%s12 + $0xcc] sm:$0xff]
    %v6151 = vld [vmem:[%s12 + $0xd4] sm:$0xff]
    %v6152 = vld [vmem:[%s12 + $0xdc] sm:$0xf]
    %v6153 = vld [vmem:[%s12 + $0xe0] sm:$0xff]
    %v6154 = vld [vmem:[%s12 + $0xe8] sm:$0xff]
    %v6155 = vld [vmem:[%s12 + $0xf0] sm:$0xff]
    %v6156 = vld [vmem:[%s12 + $0xf8] sm:$0xf]
    %v6157 = vld [vmem:[%s12 + $0xfc] sm:$0xff]
    %v6158 = vld [vmem:[%s12 + $0x104] sm:$0xff]
    %v6159 = vld [vmem:[%s12 + $0x10c] sm:$0xff]
    %v6160 = vld [vmem:[%s12 + $0x114] sm:$0xf]
    %v6161 = vld [vmem:[%s12 + $0x118] sm:$0xff]
    %v6162 = vld [vmem:[%s12 + $0x120] sm:$0xff]
    %v6163 = vld [vmem:[%s12 + $0x128] sm:$0xff]
    %v6164 = vld [vmem:[%s12 + $0x130] sm:$0xf]
    %v6165 = vld [vmem:[%s12 + $0x134] sm:$0xff]
    %v6166 = vld [vmem:[%s12 + $0x13c] sm:$0xff]
    %v6167 = vld [vmem:[%s12 + $0x144] sm:$0xff]
    %v6168 = vld [vmem:[%s12 + $0x14c] sm:$0xf]
    %v6169 = vld [vmem:[%s12 + $0x150] sm:$0xff]
    %v6170 = vld [vmem:[%s12 + $0x158] sm:$0xff]
    %v6171 = vld [vmem:[%s12 + $0x160] sm:$0xff]
    %v6172 = vld [vmem:[%s12 + $0x168] sm:$0xf]
    %v6173 = vld [vmem:[%s12 + $0x16c] sm:$0xff]
    %v6174 = vld [vmem:[%s12 + $0x174] sm:$0xff]
    %v6175 = vld [vmem:[%s12 + $0x17c] sm:$0xff]
    %v6176 = vld [vmem:[%s12 + $0x184] sm:$0xf]
    %v6177 = vld [vmem:[%s12 + $0x188] sm:$0xff]
    %v6178 = vld [vmem:[%s12 + $0x190] sm:$0xff]
    %v6179 = vld [vmem:[%s12 + $0x198] sm:$0xff]
    %v6180 = vld [vmem:[%s12 + $0x1a0] sm:$0xf]
    %v6181 = vld [vmem:[%s12 + $0x1a4] sm:$0xff]
    %v6182 = vld [vmem:[%s12 + $0x1ac] sm:$0xff]
    %v6183 = vld [vmem:[%s12 + $0x1b4] sm:$0xff]
    %v6184 = vld [vmem:[%s12 + $0x1bc] sm:$0xf]
    %v6185 = vld [vmem:[%s12 + $0x1c0] sm:$0xff]
    %v6186 = vld [vmem:[%s12 + $0x1c8] sm:$0xff]
    %v6187 = vld [vmem:[%s12 + $0x1d0] sm:$0xff]
    %v6188 = vld [vmem:[%s12 + $0x1d8] sm:$0xf]
    %v6189 = vld [vmem:[%s12 + $0x1dc] sm:$0xff]
    %v6190 = vld [vmem:[%s12 + $0x1e4] sm:$0xff]
    %v6191 = vld [vmem:[%s12 + $0x1ec] sm:$0xff]
    %v6192 = vld [vmem:[%s12 + $0x1f4] sm:$0xf]
    %v6193 = vld [vmem:[%s12 + $0x1f8] sm:$0xff]
    %v6194 = vld [vmem:[%s12 + $0x200] sm:$0xff]
    %v6195 = vld [vmem:[%s12 + $0x208] sm:$0xff]
    %v6196 = vld [vmem:[%s12 + $0x210] sm:$0xf]
    %v6197 = vld [vmem:[%s12 + $0x214] sm:$0xff]
    %v6198 = vld [vmem:[%s12 + $0x21c] sm:$0xff]
    %v6199 = vld [vmem:[%s12 + $0x224] sm:$0xff]
    %v6200 = vld [vmem:[%s12 + $0x22c] sm:$0xf]
    %v6201 = vld [vmem:[%s12 + $0x230] sm:$0xff]
    %v6202 = vld [vmem:[%s12 + $0x238] sm:$0xff]
    %v6203 = vld [vmem:[%s12 + $0x240] sm:$0xff]
    %v6204 = vld [vmem:[%s12 + $0x248] sm:$0xf]
    %v6205 = vld [vmem:[%s12 + $0x24c] sm:$0xff]
    %v6206 = vld [vmem:[%s12 + $0x254] sm:$0xff]
    %v6207 = vld [vmem:[%s12 + $0x25c] sm:$0xff]
    %v6208 = vld [vmem:[%s12 + $0x264] sm:$0xf]
    %v6209 = vld [vmem:[%s12 + $0x268] sm:$0xff]
    %v6210 = vld [vmem:[%s12 + $0x270] sm:$0xff]
    %v6211 = vld [vmem:[%s12 + $0x278] sm:$0xff]
    %v6212 = vld [vmem:[%s12 + $0x280] sm:$0xf]
    %v6213 = vld [vmem:[%s12 + $0x284] sm:$0xff]
    %v6214 = vld [vmem:[%s12 + $0x28c] sm:$0xff]
    %v6215 = vld [vmem:[%s12 + $0x294] sm:$0xff]
    %v6216 = vld [vmem:[%s12 + $0x29c] sm:$0xf]
    %v6217 = vld [vmem:[%s12 + $0x2a0] sm:$0xff]
    %v6218 = vld [vmem:[%s12 + $0x2a8] sm:$0xff]
    %v6219 = vld [vmem:[%s12 + $0x2b0] sm:$0xff]
    %v6220 = vld [vmem:[%s12 + $0x2b8] sm:$0xf]
    %v6221 = vld [vmem:[%s12 + $0x2bc] sm:$0xff]
    %v6222 = vld [vmem:[%s12 + $0x2c4] sm:$0xff]
    %v6223 = vld [vmem:[%s12 + $0x2cc] sm:$0xff]
    %v6224 = vld [vmem:[%s12 + $0x2d4] sm:$0xf]
    %v6225 = vld [vmem:[%s12 + $0x2d8] sm:$0xff]
    %v6226 = vld [vmem:[%s12 + $0x2e0] sm:$0xff]
    %v6227 = vld [vmem:[%s12 + $0x2e8] sm:$0xff]
    %v6228 = vld [vmem:[%s12 + $0x2f0] sm:$0xf]
    %v6229 = vld [vmem:[%s12 + $0x2f4] sm:$0xff]
    %v6230 = vld [vmem:[%s12 + $0x2fc] sm:$0xff]
    %v6231 = vld [vmem:[%s12 + $0x304] sm:$0xff]
    %v6232 = vld [vmem:[%s12 + $0x30c] sm:$0xf]
    %v6233 = vld [vmem:[%s12 + $0x310] sm:$0xff]
    %v6234 = vld [vmem:[%s12 + $0x318] sm:$0xff]
    %v6235 = vld [vmem:[%s12 + $0x320] sm:$0xff]
    %v6236 = vld [vmem:[%s12 + $0x328] sm:$0xf]
    %v6237 = vld [vmem:[%s12 + $0x32c] sm:$0xff]
    %v6238 = vld [vmem:[%s12 + $0x334] sm:$0xff]
    %v6239 = vld [vmem:[%s12 + $0x33c] sm:$0xff]
    %v6240 = vld [vmem:[%s12 + $0x344] sm:$0xf]
    %v6241 = vld [vmem:[%s12 + $0x348] sm:$0xff]
    %v6242 = vld [vmem:[%s12 + $0x350] sm:$0xff]
    %v6243 = vld [vmem:[%s12 + $0x358] sm:$0xff]
    %v6244 = vld [vmem:[%s12 + $0x360] sm:$0xf]
    %v6245 = vld [vmem:[%s12 + $0x364] sm:$0xff]
    %v6246 = vld [vmem:[%s12 + $0x36c] sm:$0xff]
    %v6247 = vld [vmem:[%s12 + $0x374] sm:$0xff]
    %v6248 = vld [vmem:[%s12 + $0x37c] sm:$0xf]
    %v6249 = vld [vmem:[%s12 + $0x380] sm:$0xff]
    %v6250 = vld [vmem:[%s12 + $0x388] sm:$0xff]
    %v6251 = vld [vmem:[%s12 + $0x390] sm:$0xff]
    %v6252 = vld [vmem:[%s12 + $0x398] sm:$0xf]
    %v6253 = vld [vmem:[%s12 + $0x39c] sm:$0xff]
    %v6254 = vld [vmem:[%s12 + $0x3a4] sm:$0xff]
    %v6255 = vld [vmem:[%s12 + $0x3ac] sm:$0xff]
    %v6256 = vld [vmem:[%s12 + $0x3b4] sm:$0xf]
    %v6257 = vld [vmem:[%s12 + $0x3b8] sm:$0xff]
    %v6258 = vld [vmem:[%s12 + $0x3c0] sm:$0xff]
    %v6259 = vld [vmem:[%s12 + $0x3c8] sm:$0xff]
    %v6260 = vld [vmem:[%s12 + $0x3d0] sm:$0xf]
    %v6261 = vld [vmem:[%s12 + $0x3d4] sm:$0xff]
    %v6262 = vld [vmem:[%s12 + $0x3dc] sm:$0xff]
    %v6263 = vld [vmem:[%s12 + $0x3e4] sm:$0xff]
    %v6264 = vld [vmem:[%s12 + $0x3ec] sm:$0xf]
    %v6265 = vld [vmem:[%s12 + $0x3f0] sm:$0xff]
    %v6266 = vld [vmem:[%s12 + $0x3f8] sm:$0xff]
    %v6267 = vld [vmem:[%s12 + $0x400] sm:$0xff]
    %v6268 = vld [vmem:[%s12 + $0x408] sm:$0xf]
    %v6269 = vld [vmem:[%s12 + $0x40c] sm:$0xff]
    %v6270 = vld [vmem:[%s12 + $0x414] sm:$0xff]
    %v6271 = vld [vmem:[%s12 + $0x41c] sm:$0xff]
    %v6272 = vld [vmem:[%s12 + $0x424] sm:$0xf]
    %v6273 = vld [vmem:[%s12 + $0x428] sm:$0xff]
    %v6274 = vld [vmem:[%s12 + $0x430] sm:$0xff]
    %v6275 = vld [vmem:[%s12 + $0x438] sm:$0xff]
    %v6276 = vld [vmem:[%s12 + $0x440] sm:$0xf]
    %v6277 = vld [vmem:[%s12 + $0x444] sm:$0xff]
    %v6278 = vld [vmem:[%s12 + $0x44c] sm:$0xff]
    %v6279 = vld [vmem:[%s12 + $0x454] sm:$0xff]
    %v6280 = vld [vmem:[%s12 + $0x45c] sm:$0xf]
    %v6281 = vld [vmem:[%s12 + $0x460] sm:$0xff]
    %v6282 = vld [vmem:[%s12 + $0x468] sm:$0xff]
    %v6283 = vld [vmem:[%s12 + $0x470] sm:$0xff]
    %v6284 = vld [vmem:[%s12 + $0x478] sm:$0xf]
    %v6285 = vld [vmem:[%s12 + $0x47c] sm:$0xff]
    %v6286 = vld [vmem:[%s12 + $0x484] sm:$0xff]
    %v6287 = vld [vmem:[%s12 + $0x48c] sm:$0xff]
    %v6288 = vld [vmem:[%s12 + $0x494] sm:$0xf]
    %v6289 = vld [vmem:[%s12 + $0x498] sm:$0xff]
    %v6290 = vld [vmem:[%s12 + $0x4a0] sm:$0xff]
    %v6291 = vld [vmem:[%s12 + $0x4a8] sm:$0xff]
    %v6292 = vld [vmem:[%s12 + $0x4b0] sm:$0xf]
    %v6293 = vld [vmem:[%s12 + $0x4b4] sm:$0xff]
    %v6294 = vld [vmem:[%s12 + $0x4bc] sm:$0xff]
    %v6295 = vld [vmem:[%s12 + $0x4c4] sm:$0xff]
    %v6296 = vld [vmem:[%s12 + $0x4cc] sm:$0xf]
    %v6297 = vld [vmem:[%s12 + $0x4d0] sm:$0xff]
    %v6298 = vld [vmem:[%s12 + $0x4d8] sm:$0xff]
    %v6299 = vld [vmem:[%s12 + $0x4e0] sm:$0xff]
    %v6300 = vld [vmem:[%s12 + $0x4e8] sm:$0xf]
    %v6301 = vld [vmem:[%s12 + $0x4ec] sm:$0xff]
    %v6302 = vld [vmem:[%s12 + $0x4f4] sm:$0xff]
    %v6303 = vld [vmem:[%s12 + $0x4fc] sm:$0xff]
    %v6304 = vld [vmem:[%s12 + $0x504] sm:$0xf]
    %v6305 = vld [vmem:[%s12 + $0x508] sm:$0xff]
    %v6306 = vld [vmem:[%s12 + $0x510] sm:$0xff]
    %v6307 = vld [vmem:[%s12 + $0x518] sm:$0xff]
    %v6308 = vld [vmem:[%s12 + $0x520] sm:$0xf]
    %v6309 = vld [vmem:[%s12 + $0x524] sm:$0xff]
    %v6310 = vld [vmem:[%s12 + $0x52c] sm:$0xff]
    %v6311 = vld [vmem:[%s12 + $0x534] sm:$0xff]
    %v6312 = vld [vmem:[%s12 + $0x53c] sm:$0xf]
    %v6313 = vld [vmem:[%s12 + $0x540] sm:$0xff]
    %v6314 = vld [vmem:[%s12 + $0x548] sm:$0xff]
    %v6315 = vld [vmem:[%s12 + $0x550] sm:$0xff]
    %v6316 = vld [vmem:[%s12 + $0x558] sm:$0xf]
    %v6317 = vld [vmem:[%s12 + $0x55c] sm:$0xff]
    %v6318 = vld [vmem:[%s12 + $0x564] sm:$0xff]
    %v6319 = vld [vmem:[%s12 + $0x56c] sm:$0xff]
    %v6320 = vld [vmem:[%s12 + $0x574] sm:$0xf]
    %v6321 = vld [vmem:[%s12 + $0x578] sm:$0xff]
    %v6322 = vld [vmem:[%s12 + $0x580] sm:$0xff]
    %v6323 = vld [vmem:[%s12 + $0x588] sm:$0xff]
    %v6324 = vld [vmem:[%s12 + $0x590] sm:$0xf]
    %v6325 = vld [vmem:[%s12 + $0x594] sm:$0xff]
    %v6326 = vld [vmem:[%s12 + $0x59c] sm:$0xff]
    %v6327 = vld [vmem:[%s12 + $0x5a4] sm:$0xff]
    %v6328 = vld [vmem:[%s12 + $0x5ac] sm:$0xf]
    %v6329 = vld [vmem:[%s12 + $0x5b0] sm:$0xff]
    %v6330 = vld [vmem:[%s12 + $0x5b8] sm:$0xff]
    %v6331 = vld [vmem:[%s12 + $0x5c0] sm:$0xff]
    %v6332 = vld [vmem:[%s12 + $0x5c8] sm:$0xf]
    %v6333 = vld [vmem:[%s12 + $0x5cc] sm:$0xff]
    %v6334 = vld [vmem:[%s12 + $0x5d4] sm:$0xff]
    %v6335 = vld [vmem:[%s12 + $0x5dc] sm:$0xff]
    %v6336 = vld [vmem:[%s12 + $0x5e4] sm:$0xf]
    %v6337 = vld [vmem:[%s12 + $0x5e8] sm:$0xff]
    %v6338 = vld [vmem:[%s12 + $0x5f0] sm:$0xff]
    %v6339 = vld [vmem:[%s12 + $0x5f8] sm:$0xff]
    %v6340 = vld [vmem:[%s12 + $0x600] sm:$0xf]
    %v6341 = vld [vmem:[%s12 + $0x604] sm:$0xff]
    %v6342 = vld [vmem:[%s12 + $0x60c] sm:$0xff]
    %v6343 = vld [vmem:[%s12 + $0x614] sm:$0xff]
    %v6344 = vld [vmem:[%s12 + $0x61c] sm:$0xf]
    %v6345 = vld [vmem:[%s12 + $0x620] sm:$0xff]
    %v6346 = vld [vmem:[%s12 + $0x628] sm:$0xff]
    %v6347 = vld [vmem:[%s12 + $0x630] sm:$0xff]
    %v6348 = vld [vmem:[%s12 + $0x638] sm:$0xf]
    %v6349 = vld [vmem:[%s12 + $0x63c] sm:$0xff]
    %v6350 = vld [vmem:[%s12 + $0x644] sm:$0xff]
    %v6351 = vld [vmem:[%s12 + $0x64c] sm:$0xff]
    %v6352 = vld [vmem:[%s12 + $0x654] sm:$0xf]
    %v6353 = vld [vmem:[%s12 + $0x658] sm:$0xff]
    %v6354 = vld [vmem:[%s12 + $0x660] sm:$0xff]
    %v6355 = vld [vmem:[%s12 + $0x668] sm:$0xff]
    %v6356 = vld [vmem:[%s12 + $0x670] sm:$0xf]
    %v6357 = vld [vmem:[%s12 + $0x674] sm:$0xff]
    %v6358 = vld [vmem:[%s12 + $0x67c] sm:$0xff]
    %v6359 = vld [vmem:[%s12 + $0x684] sm:$0xff]
    %v6360 = vld [vmem:[%s12 + $0x68c] sm:$0xf]
    %v6361 = vld [vmem:[%s12 + $0x690] sm:$0xff]
    %v6362 = vld [vmem:[%s12 + $0x698] sm:$0xff]
    %v6363 = vld [vmem:[%s12 + $0x6a0] sm:$0xff]
    %v6364 = vld [vmem:[%s12 + $0x6a8] sm:$0xf]
    %v6365 = vld [vmem:[%s12 + $0x6ac] sm:$0xff]
    %v6366 = vld [vmem:[%s12 + $0x6b4] sm:$0xff]
    %v6367 = vld [vmem:[%s12 + $0x6bc] sm:$0xff]
    %v6368 = vld [vmem:[%s12 + $0x6c4] sm:$0xf]
    %v6369 = vld [vmem:[%s12 + $0x6c8] sm:$0xff]
    %v6370 = vld [vmem:[%s12 + $0x6d0] sm:$0xff]
    %v6371 = vld [vmem:[%s12 + $0x6d8] sm:$0xff]
    %v6372 = vld [vmem:[%s12 + $0x6e0] sm:$0xf]
    %v6373 = vld [vmem:[%s12 + $0x6e4] sm:$0xff]
    %v6374 = vld [vmem:[%s12 + $0x6ec] sm:$0xff]
    %v6375 = vld [vmem:[%s12 + $0x6f4] sm:$0xff]
    %v6376 = vld [vmem:[%s12 + $0x6fc] sm:$0xf]
    %v6377 = vld [vmem:[%s12 + $0x700] sm:$0xff]
    %v6378 = vld [vmem:[%s12 + $0x708] sm:$0xff]
    %v6379 = vld [vmem:[%s12 + $0x710] sm:$0xff]
    %v6380 = vld [vmem:[%s12 + $0x718] sm:$0xf]
    %v6381 = vld [vmem:[%s12 + $0x71c] sm:$0xff]
    %v6382 = vld [vmem:[%s12 + $0x724] sm:$0xff]
    %v6383 = vld [vmem:[%s12 + $0x72c] sm:$0xff]
    %v6384 = vld [vmem:[%s12 + $0x734] sm:$0xf]
    %v6385 = vld [vmem:[%s12 + $0x738] sm:$0xff]
    %v6386 = vld [vmem:[%s12 + $0x740] sm:$0xff]
    %v6387 = vld [vmem:[%s12 + $0x748] sm:$0xff]
    %v6388 = vld [vmem:[%s12 + $0x750] sm:$0xf]
    %v6389 = vld [vmem:[%s12 + $0x754] sm:$0xff]
    %v6390 = vld [vmem:[%s12 + $0x75c] sm:$0xff]
    %v6391 = vld [vmem:[%s12 + $0x764] sm:$0xff]
    %v6392 = vld [vmem:[%s12 + $0x76c] sm:$0xf]
    %v6393 = vld [vmem:[%s12 + $0x770] sm:$0xff]
    %v6394 = vld [vmem:[%s12 + $0x778] sm:$0xff]
    %v6395 = vld [vmem:[%s12 + $0x780] sm:$0xff]
    %v6396 = vld [vmem:[%s12 + $0x788] sm:$0xf]
    %v6397 = vld [vmem:[%s12 + $0x78c] sm:$0xff]
    %v6398 = vld [vmem:[%s12 + $0x794] sm:$0xff]
    %v6399 = vld [vmem:[%s12 + $0x79c] sm:$0xff]
    %v6400 = vld [vmem:[%s12 + $0x7a4] sm:$0xf]
    %v6401 = vld [vmem:[%s12 + $0x7a8] sm:$0xff]
    %v6402 = vld [vmem:[%s12 + $0x7b0] sm:$0xff]
    %v6403 = vld [vmem:[%s12 + $0x7b8] sm:$0xff]
    %v6404 = vld [vmem:[%s12 + $0x7c0] sm:$0xf]
    %v6405 = vld [vmem:[%s12 + $0x7c4] sm:$0xff]
    %v6406 = vld [vmem:[%s12 + $0x7cc] sm:$0xff]
    %v6407 = vld [vmem:[%s12 + $0x7d4] sm:$0xff]
    %v6408 = vld [vmem:[%s12 + $0x7dc] sm:$0xf]
    %v6409 = vld [vmem:[%s12 + $0x7e0] sm:$0xff]
    %v6410 = vld [vmem:[%s12 + $0x7e8] sm:$0xff]
    %v6411 = vld [vmem:[%s12 + $0x7f0] sm:$0xff]
    %v6412 = vld [vmem:[%s12 + $0x7f8] sm:$0xf]
    %v6413 = vld [vmem:[%s12 + $0x7fc] sm:$0xff]
    %v6414 = vld [vmem:[%s12 + $0x804] sm:$0xff]
    %v6415 = vld [vmem:[%s12 + $0x80c] sm:$0xff]
    %v6416 = vld [vmem:[%s12 + $0x814] sm:$0xf]
    %v6417 = vld [vmem:[%s12 + $0x818] sm:$0xff]
    %v6418 = vld [vmem:[%s12 + $0x820] sm:$0xff]
    %v6419 = vld [vmem:[%s12 + $0x828] sm:$0xff]
    %v6420 = vld [vmem:[%s12 + $0x830] sm:$0xf]
    %v6421 = vld [vmem:[%s12 + $0x834] sm:$0xff]
    %v6422 = vld [vmem:[%s12 + $0x83c] sm:$0xff]
    %v6423 = vld [vmem:[%s12 + $0x844] sm:$0xff]
    %v6424 = vld [vmem:[%s12 + $0x84c] sm:$0xf]
    %v6425 = vld [vmem:[%s12 + $0x850] sm:$0xff]
    %v6426 = vld [vmem:[%s12 + $0x858] sm:$0xff]
    %v6427 = vld [vmem:[%s12 + $0x860] sm:$0xff]
    %v6428 = vld [vmem:[%s12 + $0x868] sm:$0xf]
    %v6429 = vld [vmem:[%s12 + $0x86c] sm:$0xff]
    %v6430 = vld [vmem:[%s12 + $0x874] sm:$0xff]
    %v6431 = vld [vmem:[%s12 + $0x87c] sm:$0xff]
    %v6432 = vld [vmem:[%s12 + $0x884] sm:$0xf]
    %v6433 = vld [vmem:[%s12 + $0x888] sm:$0xff]
    %v6434 = vld [vmem:[%s12 + $0x890] sm:$0xff]
    %v6435 = vld [vmem:[%s12 + $0x898] sm:$0xff]
    %v6436 = vld [vmem:[%s12 + $0x8a0] sm:$0xf]
    %v6437 = vld [vmem:[%s12 + $0x8a4] sm:$0xff]
    %v6438 = vld [vmem:[%s12 + $0x8ac] sm:$0xff]
    %v6439 = vld [vmem:[%s12 + $0x8b4] sm:$0xff]
    %v6440 = vld [vmem:[%s12 + $0x8bc] sm:$0xf]
    %v6441 = vld [vmem:[%s12 + $0x8c0] sm:$0xff]
    %v6442 = vld [vmem:[%s12 + $0x8c8] sm:$0xff]
    %v6443 = vld [vmem:[%s12 + $0x8d0] sm:$0xff]
    %v6444 = vld [vmem:[%s12 + $0x8d8] sm:$0xf]
    %v6445 = vld [vmem:[%s12 + $0x8dc] sm:$0xff]
    %v6446 = vld [vmem:[%s12 + $0x8e4] sm:$0xff]
    %v6447 = vld [vmem:[%s12 + $0x8ec] sm:$0xff]
    %v6448 = vld [vmem:[%s12 + $0x8f4] sm:$0xf]
    %v6449 = vld [vmem:[%s12 + $0x8f8] sm:$0xff]
    %v6450 = vld [vmem:[%s12 + $0x900] sm:$0xff]
    %v6451 = vld [vmem:[%s12 + $0x908] sm:$0xff]
    %v6452 = vld [vmem:[%s12 + $0x910] sm:$0xf]
    %v6453 = vld [vmem:[%s12 + $0x914] sm:$0xff]
    %v6454 = vld [vmem:[%s12 + $0x91c] sm:$0xff]
    %v6455 = vld [vmem:[%s12 + $0x924] sm:$0xff]
    %v6456 = vld [vmem:[%s12 + $0x92c] sm:$0xf]
    %v6457 = vld [vmem:[%s12 + $0x930] sm:$0xff]
    %v6458 = vld [vmem:[%s12 + $0x938] sm:$0xff]
    %v6459 = vld [vmem:[%s12 + $0x940] sm:$0xff]
    %v6460 = vld [vmem:[%s12 + $0x948] sm:$0xf]
    %v6461 = vld [vmem:[%s12 + $0x94c] sm:$0xff]
    %v6462 = vld [vmem:[%s12 + $0x954] sm:$0xff]
    %v6463 = vld [vmem:[%s12 + $0x95c] sm:$0xff]
    %v6464 = vld [vmem:[%s12 + $0x964] sm:$0xf]
    %v6465 = vld [vmem:[%s12 + $0x968] sm:$0xff]
    %v6466 = vld [vmem:[%s12 + $0x970] sm:$0xff]
    %v6467 = vld [vmem:[%s12 + $0x978] sm:$0xff]
    %v6468 = vld [vmem:[%s12 + $0x980] sm:$0xf]
    %v6469 = vld [vmem:[%s12 + $0x984] sm:$0xff]
    %v6470 = vld [vmem:[%s12 + $0x98c] sm:$0xff]
    %v6471 = vld [vmem:[%s12 + $0x994] sm:$0xff]
    %v6472 = vld [vmem:[%s12 + $0x99c] sm:$0xf]
    %v6473 = vld [vmem:[%s12 + $0x9a0] sm:$0xff]
    %v6474 = vld [vmem:[%s12 + $0x9a8] sm:$0xff]
    %v6475 = vld [vmem:[%s12 + $0x9b0] sm:$0xff]
    %v6476 = vld [vmem:[%s12 + $0x9b8] sm:$0xf]
    %v6477 = vld [vmem:[%s12 + $0x9bc] sm:$0xff]
    %v6478 = vld [vmem:[%s12 + $0x9c4] sm:$0xff]
    %v6479 = vld [vmem:[%s12 + $0x9cc] sm:$0xff]
    %v6480 = vld [vmem:[%s12 + $0x9d4] sm:$0xf]
    %v6481 = vld [vmem:[%s12 + $0x9d8] sm:$0xff]
    %v6482 = vld [vmem:[%s12 + $0x9e0] sm:$0xff]
    %v6483 = vld [vmem:[%s12 + $0x9e8] sm:$0xff]
    %v6484 = vld [vmem:[%s12 + $0x9f0] sm:$0xf]
    %v6485 = vld [vmem:[%s12 + $0x9f4] sm:$0xff]
    %v6486 = vld [vmem:[%s12 + $0x9fc] sm:$0xff]
    %v6487 = vld [vmem:[%s12 + $0xa04] sm:$0xff]
    %v6488 = vld [vmem:[%s12 + $0xa0c] sm:$0xf]
    %v6489 = vld [vmem:[%s12 + $0xa10] sm:$0xff]
    %v6490 = vld [vmem:[%s12 + $0xa18] sm:$0xff]
    %v6491 = vld [vmem:[%s12 + $0xa20] sm:$0xff]
    %v6492 = vld [vmem:[%s12 + $0xa28] sm:$0xf]
    %v6493 = vld [vmem:[%s12 + $0xa2c] sm:$0xff]
    %v6494 = vld [vmem:[%s12 + $0xa34] sm:$0xff]
    %v6495 = vld [vmem:[%s12 + $0xa3c] sm:$0xff]
    %v6496 = vld [vmem:[%s12 + $0xa44] sm:$0xf]
    %v6497 = vld [vmem:[%s12 + $0xa48] sm:$0xff]
    %v6498 = vld [vmem:[%s12 + $0xa50] sm:$0xff]
    %v6499 = vld [vmem:[%s12 + $0xa58] sm:$0xff]
    %v6500 = vld [vmem:[%s12 + $0xa60] sm:$0xf]
    %v6501 = vld [vmem:[%s12 + $0xa64] sm:$0xff]
    %v6502 = vld [vmem:[%s12 + $0xa6c] sm:$0xff]
    %v6503 = vld [vmem:[%s12 + $0xa74] sm:$0xff]
    %v6504 = vld [vmem:[%s12 + $0xa7c] sm:$0xf]
    %v6505 = vld [vmem:[%s12 + $0xa80] sm:$0xff]
    %v6506 = vld [vmem:[%s12 + $0xa88] sm:$0xff]
    %v6507 = vld [vmem:[%s12 + $0xa90] sm:$0xff]
    %v6508 = vld [vmem:[%s12 + $0xa98] sm:$0xf]
    %v6509 = vld [vmem:[%s12 + $0xa9c] sm:$0xff]
    %v6510 = vld [vmem:[%s12 + $0xaa4] sm:$0xff]
    %v6511 = vld [vmem:[%s12 + $0xaac] sm:$0xff]
    %v6512 = vld [vmem:[%s12 + $0xab4] sm:$0xf]
    %v6513 = vld [vmem:[%s12 + $0xab8] sm:$0xff]
    %v6514 = vld [vmem:[%s12 + $0xac0] sm:$0xff]
    %v6515 = vld [vmem:[%s12 + $0xac8] sm:$0xff]
    %v6516 = vld [vmem:[%s12 + $0xad0] sm:$0xf]
    %v6517 = vld [vmem:[%s12 + $0xad4] sm:$0xff]
    %v6518 = vld [vmem:[%s12 + $0xadc] sm:$0xff]
    %v6519 = vld [vmem:[%s12 + $0xae4] sm:$0xff]
    %v6520 = vld [vmem:[%s12 + $0xaec] sm:$0xf]
    %v6521 = vld [vmem:[%s12 + $0xaf0] sm:$0xff]
    %v6522 = vld [vmem:[%s12 + $0xaf8] sm:$0xff]
    %v6523 = vld [vmem:[%s12 + $0xb00] sm:$0xff]
    %v6524 = vld [vmem:[%s12 + $0xb08] sm:$0xf]
    %v6525 = vld [vmem:[%s12 + $0xb0c] sm:$0xff]
    %v6526 = vld [vmem:[%s12 + $0xb14] sm:$0xff]
    %v6527 = vld [vmem:[%s12 + $0xb1c] sm:$0xff]
    %v6528 = vld [vmem:[%s12 + $0xb24] sm:$0xf]
    %v6529 = vld [vmem:[%s12 + $0xb28] sm:$0xff]
    %v6530 = vld [vmem:[%s12 + $0xb30] sm:$0xff]
    %v6531 = vld [vmem:[%s12 + $0xb38] sm:$0xff]
    %v6532 = vld [vmem:[%s12 + $0xb40] sm:$0xf]
    %v6533 = vld [vmem:[%s12 + $0xb44] sm:$0xff]
    %v6534 = vld [vmem:[%s12 + $0xb4c] sm:$0xff]
    %v6535 = vld [vmem:[%s12 + $0xb54] sm:$0xff]
    %v6536 = vld [vmem:[%s12 + $0xb5c] sm:$0xf]
    %v6537 = vld [vmem:[%s12 + $0xb60] sm:$0xff]
    %v6538 = vld [vmem:[%s12 + $0xb68] sm:$0xff]
    %v6539 = vld [vmem:[%s12 + $0xb70] sm:$0xff]
    %v6540 = vld [vmem:[%s12 + $0xb78] sm:$0xf]
    %v6541 = vld [vmem:[%s12 + $0xb7c] sm:$0xff]
    %v6542 = vld [vmem:[%s12 + $0xb84] sm:$0xff]
    %v6543 = vld [vmem:[%s12 + $0xb8c] sm:$0xff]
    %v6544 = vld [vmem:[%s12 + $0xb94] sm:$0xf]
    %v6545 = vld [vmem:[%s12 + $0xb98] sm:$0xff]
    %v6546 = vld [vmem:[%s12 + $0xba0] sm:$0xff]
    %v6547 = vld [vmem:[%s12 + $0xba8] sm:$0xff]
    %v6548 = vld [vmem:[%s12 + $0xbb0] sm:$0xf]
    %v6549 = vld [vmem:[%s12 + $0xbb4] sm:$0xff]
    %v6550 = vld [vmem:[%s12 + $0xbbc] sm:$0xff]
    %v6551 = vld [vmem:[%s12 + $0xbc4] sm:$0xff]
    %v6552 = vld [vmem:[%s12 + $0xbcc] sm:$0xf]
    %v6553 = vld [vmem:[%s12 + $0xbd0] sm:$0xff]
    %v6554 = vld [vmem:[%s12 + $0xbd8] sm:$0xff]
    %v6555 = vld [vmem:[%s12 + $0xbe0] sm:$0xff]
    %v6556 = vld [vmem:[%s12 + $0xbe8] sm:$0xf]
    %v6557 = vld [vmem:[%s12 + $0xbec] sm:$0xff]
    %v6558 = vld [vmem:[%s12 + $0xbf4] sm:$0xff]
    %v6559 = vld [vmem:[%s12 + $0xbfc] sm:$0xff]
    %v6560 = vld [vmem:[%s12 + $0xc04] sm:$0xf]
    %v6561 = vld [vmem:[%s12 + $0xc08] sm:$0xff]
    %v6562 = vld [vmem:[%s12 + $0xc10] sm:$0xff]
    %v6563 = vld [vmem:[%s12 + $0xc18] sm:$0xff]
    %v6564 = vld [vmem:[%s12 + $0xc20] sm:$0xf]
    %v6565 = vld [vmem:[%s12 + $0xc24] sm:$0xff]
    %v6566 = vld [vmem:[%s12 + $0xc2c] sm:$0xff]
    %v6567 = vld [vmem:[%s12 + $0xc34] sm:$0xff]
    %v6568 = vld [vmem:[%s12 + $0xc3c] sm:$0xf]
    %v6569 = vld [vmem:[%s12 + $0xc40] sm:$0xff]
    %v6570 = vld [vmem:[%s12 + $0xc48] sm:$0xff]
    %v6571 = vld [vmem:[%s12 + $0xc50] sm:$0xff]
    %v6572 = vld [vmem:[%s12 + $0xc58] sm:$0xf]
    %v6573 = vld [vmem:[%s12 + $0xc5c] sm:$0xff]
    %v6574 = vld [vmem:[%s12 + $0xc64] sm:$0xff]
    %v6575 = vld [vmem:[%s12 + $0xc6c] sm:$0xff]
    %v6576 = vld [vmem:[%s12 + $0xc74] sm:$0xf]
    %v6577 = vld [vmem:[%s12 + $0xc78] sm:$0xff]
    %v6578 = vld [vmem:[%s12 + $0xc80] sm:$0xff]
    %v6579 = vld [vmem:[%s12 + $0xc88] sm:$0xff]
    %v6580 = vld [vmem:[%s12 + $0xc90] sm:$0xf]
    %v6581 = vld [vmem:[%s12 + $0xc94] sm:$0xff]
    %v6582 = vld [vmem:[%s12 + $0xc9c] sm:$0xff]
    %v6583 = vld [vmem:[%s12 + $0xca4] sm:$0xff]
    %v6584 = vld [vmem:[%s12 + $0xcac] sm:$0xf]
    %v6585 = vld [vmem:[%s12 + $0xcb0] sm:$0xff]
    %v6586 = vld [vmem:[%s12 + $0xcb8] sm:$0xff]
    %v6587 = vld [vmem:[%s12 + $0xcc0] sm:$0xff]
    %v6588 = vld [vmem:[%s12 + $0xcc8] sm:$0xf]
    %v6589 = vld [vmem:[%s12 + $0xccc] sm:$0xff]
    %v6590 = vld [vmem:[%s12 + $0xcd4] sm:$0xff]
    %v6591 = vld [vmem:[%s12 + $0xcdc] sm:$0xff]
    %v6592 = vld [vmem:[%s12 + $0xce4] sm:$0xf]
    %v6593 = vld [vmem:[%s12 + $0xce8] sm:$0xff]
    %v6594 = vld [vmem:[%s12 + $0xcf0] sm:$0xff]
    %v6595 = vld [vmem:[%s12 + $0xcf8] sm:$0xff]
    %v6596 = vld [vmem:[%s12 + $0xd00] sm:$0xf]
    %v6597 = vld [vmem:[%s12 + $0xd04] sm:$0xff]
    %v6598 = vld [vmem:[%s12 + $0xd0c] sm:$0xff]
    %v6599 = vld [vmem:[%s12 + $0xd14] sm:$0xff]
    %v6600 = vld [vmem:[%s12 + $0xd1c] sm:$0xf]
    %v6601 = vld [vmem:[%s12 + $0xd20] sm:$0xff]
    %v6602 = vld [vmem:[%s12 + $0xd28] sm:$0xff]
    %v6603 = vld [vmem:[%s12 + $0xd30] sm:$0xff]
    %v6604 = vld [vmem:[%s12 + $0xd38] sm:$0xf]
    %v6605 = vld [vmem:[%s12 + $0xd3c] sm:$0xff]
    %v6606 = vld [vmem:[%s12 + $0xd44] sm:$0xff]
    %v6607 = vld [vmem:[%s12 + $0xd4c] sm:$0xff]
    %v6608 = vld [vmem:[%s12 + $0xd54] sm:$0xf]
    %v6609 = vld [vmem:[%s12 + $0xd58] sm:$0xff]
    %v6610 = vld [vmem:[%s12 + $0xd60] sm:$0xff]
    %v6611 = vld [vmem:[%s12 + $0xd68] sm:$0xff]
    %v6612 = vld [vmem:[%s12 + $0xd70] sm:$0xf]
    %v6613 = vld [vmem:[%s12 + $0xd74] sm:$0xff]
    %v6614 = vld [vmem:[%s12 + $0xd7c] sm:$0xff]
    %v6615 = vld [vmem:[%s12 + $0xd84] sm:$0xff]
    %v6616 = vld [vmem:[%s12 + $0xd8c] sm:$0xf]
    %v6617 = vld [vmem:[%s12 + $0xd90] sm:$0xff]
    %v6618 = vld [vmem:[%s12 + $0xd98] sm:$0xff]
    %v6619 = vld [vmem:[%s12 + $0xda0] sm:$0xff]
    %v6620 = vld [vmem:[%s12 + $0xda8] sm:$0xf]
    %v6621 = vld [vmem:[%s12 + $0xdac] sm:$0xff]
    %v6622 = vld [vmem:[%s12 + $0xdb4] sm:$0xff]
    %v6623 = vld [vmem:[%s12 + $0xdbc] sm:$0xff]
    %v6624 = vld [vmem:[%s12 + $0xdc4] sm:$0xf]
    %v6625 = vld [vmem:[%s12 + $0xdc8] sm:$0xff]
    %v6626 = vld [vmem:[%s12 + $0xdd0] sm:$0xff]
    %v6627 = vld [vmem:[%s12 + $0xdd8] sm:$0xff]
    %v6628 = vld [vmem:[%s12 + $0xde0] sm:$0xf]
    %v6629 = vld [vmem:[%s12 + $0xde4] sm:$0xff]
    %v6630 = vld [vmem:[%s12 + $0xdec] sm:$0xff]
    %v6631 = vld [vmem:[%s12 + $0xdf4] sm:$0xff]
    %v6632 = vld [vmem:[%s12 + $0xdfc] sm:$0xf]
    %v6633 = vld [vmem:[%s12 + $0xe00] sm:$0xff]
    %v6634 = vld [vmem:[%s12 + $0xe08] sm:$0xff]
    %v6635 = vld [vmem:[%s12 + $0xe10] sm:$0xff]
    %v6636 = vld [vmem:[%s12 + $0xe18] sm:$0xf]
    %v6637 = vld [vmem:[%s12 + $0xe1c] sm:$0xff]
    %v6638 = vld [vmem:[%s12 + $0xe24] sm:$0xff]
    %v6639 = vld [vmem:[%s12 + $0xe2c] sm:$0xff]
    %v6640 = vld [vmem:[%s12 + $0xe34] sm:$0xf]
    %v6641 = vld [vmem:[%s12 + $0xe38] sm:$0xff]
    %v6642 = vld [vmem:[%s12 + $0xe40] sm:$0xff]
    %v6643 = vld [vmem:[%s12 + $0xe48] sm:$0xff]
    %v6644 = vld [vmem:[%s12 + $0xe50] sm:$0xf]
    %v6645 = vld [vmem:[%s12 + $0xe54] sm:$0xff]
    %v6646 = vld [vmem:[%s12 + $0xe5c] sm:$0xff]
    %v6647 = vld [vmem:[%s12 + $0xe64] sm:$0xff]
    %v6648 = vld [vmem:[%s12 + $0xe6c] sm:$0xf]
    %v6649 = vld [vmem:[%s12 + $0xe70] sm:$0xff]
    %v6650 = vld [vmem:[%s12 + $0xe78] sm:$0xff]
    %v6651 = vld [vmem:[%s12 + $0xe80] sm:$0xff]
    %v6652 = vld [vmem:[%s12 + $0xe88] sm:$0xf]
    %v6653 = vld [vmem:[%s12 + $0xe8c] sm:$0xff]
    %v6654 = vld [vmem:[%s12 + $0xe94] sm:$0xff]
    %v6655 = vld [vmem:[%s12 + $0xe9c] sm:$0xff]
    %v6656 = vld [vmem:[%s12 + $0xea4] sm:$0xf]
    %v6657 = vld [vmem:[%s12 + $0xea8] sm:$0xff]
    %v6658 = vld [vmem:[%s12 + $0xeb0] sm:$0xff]
    %v6659 = vld [vmem:[%s12 + $0xeb8] sm:$0xff]
    %v6660 = vld [vmem:[%s12 + $0xec0] sm:$0xf]
    %v6661 = vld [vmem:[%s12 + $0xec4] sm:$0xff]
    %v6662 = vld [vmem:[%s12 + $0xecc] sm:$0xff]
    %v6663 = vld [vmem:[%s12 + $0xed4] sm:$0xff]
    %v6664 = vld [vmem:[%s12 + $0xedc] sm:$0xf]
    %v6665 = vld [vmem:[%s12 + $0xee0] sm:$0xff]
    %v6666 = vld [vmem:[%s12 + $0xee8] sm:$0xff]
    %v6667 = vld [vmem:[%s12 + $0xef0] sm:$0xff]
    %v6668 = vld [vmem:[%s12 + $0xef8] sm:$0xf]
    %v6669 = vld [vmem:[%s12 + $0xefc] sm:$0x33]
    %v6670 = vld [vmem:[%s12 + $0xf04] sm:$0x33]
    %v6671 = vld [vmem:[%s12 + $0xf0c] sm:$0x33]
    %v6672 = vld [vmem:[%s12 + $0xf14] sm:$0x3]
    %v6673 = vld [vmem:[%s13] sm:$0x7f]
    %v6675 = vperm.slane %v6673, 0
    %v6676 = vperm.slane %v6673, 1
    %v6677 = vperm.slane %v6673, 2
    %v6678 = vperm.slane %v6673, 3
    %v6679 = vperm.slane %v6673, 4
    %v6680 = vperm.slane %v6673, 5
    %v6681 = vperm.slane %v6673, 6
    %v7241 = vunpack.c.l.b16 %v6121
    %v7242 = vunpack.c.h.b16 %v6121
    %v7243 = vunpack.c.l.b16 %v6122
    %v7244 = vunpack.c.h.b16 %v6122
    %v7245 = vunpack.c.l.b16 %v6123
    %v7246 = vunpack.c.h.b16 %v6123
    %v7247 = vunpack.c.l.b16 %v6124
    %v7248 = vunpack.c.l.b16 %v6125
    %v7249 = vunpack.c.h.b16 %v6125
    %v7250 = vunpack.c.l.b16 %v6126
    %v7251 = vunpack.c.h.b16 %v6126
    %v7252 = vunpack.c.l.b16 %v6127
    %v7253 = vunpack.c.h.b16 %v6127
    %v7254 = vunpack.c.l.b16 %v6128
    %v7255 = vunpack.c.l.b16 %v6129
    %v7256 = vunpack.c.h.b16 %v6129
    %v7257 = vunpack.c.l.b16 %v6130
    %v7258 = vunpack.c.h.b16 %v6130
    %v7259 = vunpack.c.l.b16 %v6131
    %v7260 = vunpack.c.h.b16 %v6131
    %v7261 = vunpack.c.l.b16 %v6132
    %v7262 = vunpack.c.l.b16 %v6133
    %v7263 = vunpack.c.h.b16 %v6133
    %v7264 = vunpack.c.l.b16 %v6134
    %v7265 = vunpack.c.h.b16 %v6134
    %v7266 = vunpack.c.l.b16 %v6135
    %v7267 = vunpack.c.h.b16 %v6135
    %v7268 = vunpack.c.l.b16 %v6136
    %v7269 = vunpack.c.l.b16 %v6137
    %v7270 = vunpack.c.h.b16 %v6137
    %v7271 = vunpack.c.l.b16 %v6138
    %v7272 = vunpack.c.h.b16 %v6138
    %v7273 = vunpack.c.l.b16 %v6139
    %v7274 = vunpack.c.h.b16 %v6139
    %v7275 = vunpack.c.l.b16 %v6140
    %v7276 = vunpack.c.l.b16 %v6141
    %v7277 = vunpack.c.h.b16 %v6141
    %v7278 = vunpack.c.l.b16 %v6142
    %v7279 = vunpack.c.h.b16 %v6142
    %v7280 = vunpack.c.l.b16 %v6143
    %v7281 = vunpack.c.h.b16 %v6143
    %v7282 = vunpack.c.l.b16 %v6144
    %v7283 = vunpack.c.l.b16 %v6145
    %v7284 = vunpack.c.h.b16 %v6145
    %v7285 = vunpack.c.l.b16 %v6146
    %v7286 = vunpack.c.h.b16 %v6146
    %v7287 = vunpack.c.l.b16 %v6147
    %v7288 = vunpack.c.h.b16 %v6147
    %v7289 = vunpack.c.l.b16 %v6148
    %v7290 = vunpack.c.l.b16 %v6149
    %v7291 = vunpack.c.h.b16 %v6149
    %v7292 = vunpack.c.l.b16 %v6150
    %v7293 = vunpack.c.h.b16 %v6150
    %v7294 = vunpack.c.l.b16 %v6151
    %v7295 = vunpack.c.h.b16 %v6151
    %v7296 = vunpack.c.l.b16 %v6152
    %v7297 = vunpack.c.l.b16 %v6153
    %v7298 = vunpack.c.h.b16 %v6153
    %v7299 = vunpack.c.l.b16 %v6154
    %v7300 = vunpack.c.h.b16 %v6154
    %v7301 = vunpack.c.l.b16 %v6155
    %v7302 = vunpack.c.h.b16 %v6155
    %v7303 = vunpack.c.l.b16 %v6156
    %v7304 = vunpack.c.l.b16 %v6157
    %v7305 = vunpack.c.h.b16 %v6157
    %v7306 = vunpack.c.l.b16 %v6158
    %v7307 = vunpack.c.h.b16 %v6158
    %v7308 = vunpack.c.l.b16 %v6159
    %v7309 = vunpack.c.h.b16 %v6159
    %v7310 = vunpack.c.l.b16 %v6160
    %v7311 = vunpack.c.l.b16 %v6161
    %v7312 = vunpack.c.h.b16 %v6161
    %v7313 = vunpack.c.l.b16 %v6162
    %v7314 = vunpack.c.h.b16 %v6162
    %v7315 = vunpack.c.l.b16 %v6163
    %v7316 = vunpack.c.h.b16 %v6163
    %v7317 = vunpack.c.l.b16 %v6164
    %v7318 = vunpack.c.l.b16 %v6165
    %v7319 = vunpack.c.h.b16 %v6165
    %v7320 = vunpack.c.l.b16 %v6166
    %v7321 = vunpack.c.h.b16 %v6166
    %v7322 = vunpack.c.l.b16 %v6167
    %v7323 = vunpack.c.h.b16 %v6167
    %v7324 = vunpack.c.l.b16 %v6168
    %v7325 = vunpack.c.l.b16 %v6169
    %v7326 = vunpack.c.h.b16 %v6169
    %v7327 = vunpack.c.l.b16 %v6170
    %v7328 = vunpack.c.h.b16 %v6170
    %v7329 = vunpack.c.l.b16 %v6171
    %v7330 = vunpack.c.h.b16 %v6171
    %v7331 = vunpack.c.l.b16 %v6172
    %v7332 = vunpack.c.l.b16 %v6173
    %v7333 = vunpack.c.h.b16 %v6173
    %v7334 = vunpack.c.l.b16 %v6174
    %v7335 = vunpack.c.h.b16 %v6174
    %v7336 = vunpack.c.l.b16 %v6175
    %v7337 = vunpack.c.h.b16 %v6175
    %v7338 = vunpack.c.l.b16 %v6176
    %v7339 = vunpack.c.l.b16 %v6177
    %v7340 = vunpack.c.h.b16 %v6177
    %v7341 = vunpack.c.l.b16 %v6178
    %v7342 = vunpack.c.h.b16 %v6178
    %v7343 = vunpack.c.l.b16 %v6179
    %v7344 = vunpack.c.h.b16 %v6179
    %v7345 = vunpack.c.l.b16 %v6180
    %v7346 = vunpack.c.l.b16 %v6181
    %v7347 = vunpack.c.h.b16 %v6181
    %v7348 = vunpack.c.l.b16 %v6182
    %v7349 = vunpack.c.h.b16 %v6182
    %v7350 = vunpack.c.l.b16 %v6183
    %v7351 = vunpack.c.h.b16 %v6183
    %v7352 = vunpack.c.l.b16 %v6184
    %v7353 = vunpack.c.l.b16 %v6185
    %v7354 = vunpack.c.h.b16 %v6185
    %v7355 = vunpack.c.l.b16 %v6186
    %v7356 = vunpack.c.h.b16 %v6186
    %v7357 = vunpack.c.l.b16 %v6187
    %v7358 = vunpack.c.h.b16 %v6187
    %v7359 = vunpack.c.l.b16 %v6188
    %v7360 = vunpack.c.l.b16 %v6189
    %v7361 = vunpack.c.h.b16 %v6189
    %v7362 = vunpack.c.l.b16 %v6190
    %v7363 = vunpack.c.h.b16 %v6190
    %v7364 = vunpack.c.l.b16 %v6191
    %v7365 = vunpack.c.h.b16 %v6191
    %v7366 = vunpack.c.l.b16 %v6192
    %v7367 = vunpack.c.l.b16 %v6193
    %v7368 = vunpack.c.h.b16 %v6193
    %v7369 = vunpack.c.l.b16 %v6194
    %v7370 = vunpack.c.h.b16 %v6194
    %v7371 = vunpack.c.l.b16 %v6195
    %v7372 = vunpack.c.h.b16 %v6195
    %v7373 = vunpack.c.l.b16 %v6196
    %v7374 = vunpack.c.l.b16 %v6197
    %v7375 = vunpack.c.h.b16 %v6197
    %v7376 = vunpack.c.l.b16 %v6198
    %v7377 = vunpack.c.h.b16 %v6198
    %v7378 = vunpack.c.l.b16 %v6199
    %v7379 = vunpack.c.h.b16 %v6199
    %v7380 = vunpack.c.l.b16 %v6200
    %v7381 = vunpack.c.l.b16 %v6201
    %v7382 = vunpack.c.h.b16 %v6201
    %v7383 = vunpack.c.l.b16 %v6202
    %v7384 = vunpack.c.h.b16 %v6202
    %v7385 = vunpack.c.l.b16 %v6203
    %v7386 = vunpack.c.h.b16 %v6203
    %v7387 = vunpack.c.l.b16 %v6204
    %v7388 = vunpack.c.l.b16 %v6205
    %v7389 = vunpack.c.h.b16 %v6205
    %v7390 = vunpack.c.l.b16 %v6206
    %v7391 = vunpack.c.h.b16 %v6206
    %v7392 = vunpack.c.l.b16 %v6207
    %v7393 = vunpack.c.h.b16 %v6207
    %v7394 = vunpack.c.l.b16 %v6208
    %v7395 = vunpack.c.l.b16 %v6209
    %v7396 = vunpack.c.h.b16 %v6209
    %v7397 = vunpack.c.l.b16 %v6210
    %v7398 = vunpack.c.h.b16 %v6210
    %v7399 = vunpack.c.l.b16 %v6211
    %v7400 = vunpack.c.h.b16 %v6211
    %v7401 = vunpack.c.l.b16 %v6212
    %v7402 = vunpack.c.l.b16 %v6213
    %v7403 = vunpack.c.h.b16 %v6213
    %v7404 = vunpack.c.l.b16 %v6214
    %v7405 = vunpack.c.h.b16 %v6214
    %v7406 = vunpack.c.l.b16 %v6215
    %v7407 = vunpack.c.h.b16 %v6215
    %v7408 = vunpack.c.l.b16 %v6216
    %v7409 = vunpack.c.l.b16 %v6217
    %v7410 = vunpack.c.h.b16 %v6217
    %v7411 = vunpack.c.l.b16 %v6218
    %v7412 = vunpack.c.h.b16 %v6218
    %v7413 = vunpack.c.l.b16 %v6219
    %v7414 = vunpack.c.h.b16 %v6219
    %v7415 = vunpack.c.l.b16 %v6220
    %v7416 = vunpack.c.l.b16 %v6221
    %v7417 = vunpack.c.h.b16 %v6221
    %v7418 = vunpack.c.l.b16 %v6222
    %v7419 = vunpack.c.h.b16 %v6222
    %v7420 = vunpack.c.l.b16 %v6223
    %v7421 = vunpack.c.h.b16 %v6223
    %v7422 = vunpack.c.l.b16 %v6224
    %v7423 = vunpack.c.l.b16 %v6225
    %v7424 = vunpack.c.h.b16 %v6225
    %v7425 = vunpack.c.l.b16 %v6226
    %v7426 = vunpack.c.h.b16 %v6226
    %v7427 = vunpack.c.l.b16 %v6227
    %v7428 = vunpack.c.h.b16 %v6227
    %v7429 = vunpack.c.l.b16 %v6228
    %v7430 = vunpack.c.l.b16 %v6229
    %v7431 = vunpack.c.h.b16 %v6229
    %v7432 = vunpack.c.l.b16 %v6230
    %v7433 = vunpack.c.h.b16 %v6230
    %v7434 = vunpack.c.l.b16 %v6231
    %v7435 = vunpack.c.h.b16 %v6231
    %v7436 = vunpack.c.l.b16 %v6232
    %v7437 = vunpack.c.l.b16 %v6233
    %v7438 = vunpack.c.h.b16 %v6233
    %v7439 = vunpack.c.l.b16 %v6234
    %v7440 = vunpack.c.h.b16 %v6234
    %v7441 = vunpack.c.l.b16 %v6235
    %v7442 = vunpack.c.h.b16 %v6235
    %v7443 = vunpack.c.l.b16 %v6236
    %v7444 = vunpack.c.l.b16 %v6237
    %v7445 = vunpack.c.h.b16 %v6237
    %v7446 = vunpack.c.l.b16 %v6238
    %v7447 = vunpack.c.h.b16 %v6238
    %v7448 = vunpack.c.l.b16 %v6239
    %v7449 = vunpack.c.h.b16 %v6239
    %v7450 = vunpack.c.l.b16 %v6240
    %v7451 = vunpack.c.l.b16 %v6241
    %v7452 = vunpack.c.h.b16 %v6241
    %v7453 = vunpack.c.l.b16 %v6242
    %v7454 = vunpack.c.h.b16 %v6242
    %v7455 = vunpack.c.l.b16 %v6243
    %v7456 = vunpack.c.h.b16 %v6243
    %v7457 = vunpack.c.l.b16 %v6244
    %v7458 = vunpack.c.l.b16 %v6245
    %v7459 = vunpack.c.h.b16 %v6245
    %v7460 = vunpack.c.l.b16 %v6246
    %v7461 = vunpack.c.h.b16 %v6246
    %v7462 = vunpack.c.l.b16 %v6247
    %v7463 = vunpack.c.h.b16 %v6247
    %v7464 = vunpack.c.l.b16 %v6248
    %v7465 = vunpack.c.l.b16 %v6249
    %v7466 = vunpack.c.h.b16 %v6249
    %v7467 = vunpack.c.l.b16 %v6250
    %v7468 = vunpack.c.h.b16 %v6250
    %v7469 = vunpack.c.l.b16 %v6251
    %v7470 = vunpack.c.h.b16 %v6251
    %v7471 = vunpack.c.l.b16 %v6252
    %v7472 = vunpack.c.l.b16 %v6253
    %v7473 = vunpack.c.h.b16 %v6253
    %v7474 = vunpack.c.l.b16 %v6254
    %v7475 = vunpack.c.h.b16 %v6254
    %v7476 = vunpack.c.l.b16 %v6255
    %v7477 = vunpack.c.h.b16 %v6255
    %v7478 = vunpack.c.l.b16 %v6256
    %v7479 = vunpack.c.l.b16 %v6257
    %v7480 = vunpack.c.h.b16 %v6257
    %v7481 = vunpack.c.l.b16 %v6258
    %v7482 = vunpack.c.h.b16 %v6258
    %v7483 = vunpack.c.l.b16 %v6259
    %v7484 = vunpack.c.h.b16 %v6259
    %v7485 = vunpack.c.l.b16 %v6260
    %v7486 = vunpack.c.l.b16 %v6261
    %v7487 = vunpack.c.h.b16 %v6261
    %v7488 = vunpack.c.l.b16 %v6262
    %v7489 = vunpack.c.h.b16 %v6262
    %v7490 = vunpack.c.l.b16 %v6263
    %v7491 = vunpack.c.h.b16 %v6263
    %v7492 = vunpack.c.l.b16 %v6264
    %v7493 = vunpack.c.l.b16 %v6265
    %v7494 = vunpack.c.h.b16 %v6265
    %v7495 = vunpack.c.l.b16 %v6266
    %v7496 = vunpack.c.h.b16 %v6266
    %v7497 = vunpack.c.l.b16 %v6267
    %v7498 = vunpack.c.h.b16 %v6267
    %v7499 = vunpack.c.l.b16 %v6268
    %v7500 = vunpack.c.l.b16 %v6269
    %v7501 = vunpack.c.h.b16 %v6269
    %v7502 = vunpack.c.l.b16 %v6270
    %v7503 = vunpack.c.h.b16 %v6270
    %v7504 = vunpack.c.l.b16 %v6271
    %v7505 = vunpack.c.h.b16 %v6271
    %v7506 = vunpack.c.l.b16 %v6272
    %v7507 = vunpack.c.l.b16 %v6273
    %v7508 = vunpack.c.h.b16 %v6273
    %v7509 = vunpack.c.l.b16 %v6274
    %v7510 = vunpack.c.h.b16 %v6274
    %v7511 = vunpack.c.l.b16 %v6275
    %v7512 = vunpack.c.h.b16 %v6275
    %v7513 = vunpack.c.l.b16 %v6276
    %v7514 = vunpack.c.l.b16 %v6277
    %v7515 = vunpack.c.h.b16 %v6277
    %v7516 = vunpack.c.l.b16 %v6278
    %v7517 = vunpack.c.h.b16 %v6278
    %v7518 = vunpack.c.l.b16 %v6279
    %v7519 = vunpack.c.h.b16 %v6279
    %v7520 = vunpack.c.l.b16 %v6280
    %v7521 = vunpack.c.l.b16 %v6281
    %v7522 = vunpack.c.h.b16 %v6281
    %v7523 = vunpack.c.l.b16 %v6282
    %v7524 = vunpack.c.h.b16 %v6282
    %v7525 = vunpack.c.l.b16 %v6283
    %v7526 = vunpack.c.h.b16 %v6283
    %v7527 = vunpack.c.l.b16 %v6284
    %v7528 = vunpack.c.l.b16 %v6285
    %v7529 = vunpack.c.h.b16 %v6285
    %v7530 = vunpack.c.l.b16 %v6286
    %v7531 = vunpack.c.h.b16 %v6286
    %v7532 = vunpack.c.l.b16 %v6287
    %v7533 = vunpack.c.h.b16 %v6287
    %v7534 = vunpack.c.l.b16 %v6288
    %v7535 = vunpack.c.l.b16 %v6289
    %v7536 = vunpack.c.h.b16 %v6289
    %v7537 = vunpack.c.l.b16 %v6290
    %v7538 = vunpack.c.h.b16 %v6290
    %v7539 = vunpack.c.l.b16 %v6291
    %v7540 = vunpack.c.h.b16 %v6291
    %v7541 = vunpack.c.l.b16 %v6292
    %v7542 = vunpack.c.l.b16 %v6293
    %v7543 = vunpack.c.h.b16 %v6293
    %v7544 = vunpack.c.l.b16 %v6294
    %v7545 = vunpack.c.h.b16 %v6294
    %v7546 = vunpack.c.l.b16 %v6295
    %v7547 = vunpack.c.h.b16 %v6295
    %v7548 = vunpack.c.l.b16 %v6296
    %v7549 = vunpack.c.l.b16 %v6297
    %v7550 = vunpack.c.h.b16 %v6297
    %v7551 = vunpack.c.l.b16 %v6298
    %v7552 = vunpack.c.h.b16 %v6298
    %v7553 = vunpack.c.l.b16 %v6299
    %v7554 = vunpack.c.h.b16 %v6299
    %v7555 = vunpack.c.l.b16 %v6300
    %v7556 = vunpack.c.l.b16 %v6301
    %v7557 = vunpack.c.h.b16 %v6301
    %v7558 = vunpack.c.l.b16 %v6302
    %v7559 = vunpack.c.h.b16 %v6302
    %v7560 = vunpack.c.l.b16 %v6303
    %v7561 = vunpack.c.h.b16 %v6303
    %v7562 = vunpack.c.l.b16 %v6304
    %v7563 = vunpack.c.l.b16 %v6305
    %v7564 = vunpack.c.h.b16 %v6305
    %v7565 = vunpack.c.l.b16 %v6306
    %v7566 = vunpack.c.h.b16 %v6306
    %v7567 = vunpack.c.l.b16 %v6307
    %v7568 = vunpack.c.h.b16 %v6307
    %v7569 = vunpack.c.l.b16 %v6308
    %v7570 = vunpack.c.l.b16 %v6309
    %v7571 = vunpack.c.h.b16 %v6309
    %v7572 = vunpack.c.l.b16 %v6310
    %v7573 = vunpack.c.h.b16 %v6310
    %v7574 = vunpack.c.l.b16 %v6311
    %v7575 = vunpack.c.h.b16 %v6311
    %v7576 = vunpack.c.l.b16 %v6312
    %v7577 = vunpack.c.l.b16 %v6313
    %v7578 = vunpack.c.h.b16 %v6313
    %v7579 = vunpack.c.l.b16 %v6314
    %v7580 = vunpack.c.h.b16 %v6314
    %v7581 = vunpack.c.l.b16 %v6315
    %v7582 = vunpack.c.h.b16 %v6315
    %v7583 = vunpack.c.l.b16 %v6316
    %v7584 = vunpack.c.l.b16 %v6317
    %v7585 = vunpack.c.h.b16 %v6317
    %v7586 = vunpack.c.l.b16 %v6318
    %v7587 = vunpack.c.h.b16 %v6318
    %v7588 = vunpack.c.l.b16 %v6319
    %v7589 = vunpack.c.h.b16 %v6319
    %v7590 = vunpack.c.l.b16 %v6320
    %v7591 = vunpack.c.l.b16 %v6321
    %v7592 = vunpack.c.h.b16 %v6321
    %v7593 = vunpack.c.l.b16 %v6322
    %v7594 = vunpack.c.h.b16 %v6322
    %v7595 = vunpack.c.l.b16 %v6323
    %v7596 = vunpack.c.h.b16 %v6323
    %v7597 = vunpack.c.l.b16 %v6324
    %v7598 = vunpack.c.l.b16 %v6325
    %v7599 = vunpack.c.h.b16 %v6325
    %v7600 = vunpack.c.l.b16 %v6326
    %v7601 = vunpack.c.h.b16 %v6326
    %v7602 = vunpack.c.l.b16 %v6327
    %v7603 = vunpack.c.h.b16 %v6327
    %v7604 = vunpack.c.l.b16 %v6328
    %v7605 = vunpack.c.l.b16 %v6329
    %v7606 = vunpack.c.h.b16 %v6329
    %v7607 = vunpack.c.l.b16 %v6330
    %v7608 = vunpack.c.h.b16 %v6330
    %v7609 = vunpack.c.l.b16 %v6331
    %v7610 = vunpack.c.h.b16 %v6331
    %v7611 = vunpack.c.l.b16 %v6332
    %v7612 = vunpack.c.l.b16 %v6333
    %v7613 = vunpack.c.h.b16 %v6333
    %v7614 = vunpack.c.l.b16 %v6334
    %v7615 = vunpack.c.h.b16 %v6334
    %v7616 = vunpack.c.l.b16 %v6335
    %v7617 = vunpack.c.h.b16 %v6335
    %v7618 = vunpack.c.l.b16 %v6336
    %v7619 = vunpack.c.l.b16 %v6337
    %v7620 = vunpack.c.h.b16 %v6337
    %v7621 = vunpack.c.l.b16 %v6338
    %v7622 = vunpack.c.h.b16 %v6338
    %v7623 = vunpack.c.l.b16 %v6339
    %v7624 = vunpack.c.h.b16 %v6339
    %v7625 = vunpack.c.l.b16 %v6340
    %v7626 = vunpack.c.l.b16 %v6341
    %v7627 = vunpack.c.h.b16 %v6341
    %v7628 = vunpack.c.l.b16 %v6342
    %v7629 = vunpack.c.h.b16 %v6342
    %v7630 = vunpack.c.l.b16 %v6343
    %v7631 = vunpack.c.h.b16 %v6343
    %v7632 = vunpack.c.l.b16 %v6344
    %v7633 = vunpack.c.l.b16 %v6345
    %v7634 = vunpack.c.h.b16 %v6345
    %v7635 = vunpack.c.l.b16 %v6346
    %v7636 = vunpack.c.h.b16 %v6346
    %v7637 = vunpack.c.l.b16 %v6347
    %v7638 = vunpack.c.h.b16 %v6347
    %v7639 = vunpack.c.l.b16 %v6348
    %v7640 = vunpack.c.l.b16 %v6349
    %v7641 = vunpack.c.h.b16 %v6349
    %v7642 = vunpack.c.l.b16 %v6350
    %v7643 = vunpack.c.h.b16 %v6350
    %v7644 = vunpack.c.l.b16 %v6351
    %v7645 = vunpack.c.h.b16 %v6351
    %v7646 = vunpack.c.l.b16 %v6352
    %v7647 = vunpack.c.l.b16 %v6353
    %v7648 = vunpack.c.h.b16 %v6353
    %v7649 = vunpack.c.l.b16 %v6354
    %v7650 = vunpack.c.h.b16 %v6354
    %v7651 = vunpack.c.l.b16 %v6355
    %v7652 = vunpack.c.h.b16 %v6355
    %v7653 = vunpack.c.l.b16 %v6356
    %v7654 = vunpack.c.l.b16 %v6357
    %v7655 = vunpack.c.h.b16 %v6357
    %v7656 = vunpack.c.l.b16 %v6358
    %v7657 = vunpack.c.h.b16 %v6358
    %v7658 = vunpack.c.l.b16 %v6359
    %v7659 = vunpack.c.h.b16 %v6359
    %v7660 = vunpack.c.l.b16 %v6360
    %v7661 = vunpack.c.l.b16 %v6361
    %v7662 = vunpack.c.h.b16 %v6361
    %v7663 = vunpack.c.l.b16 %v6362
    %v7664 = vunpack.c.h.b16 %v6362
    %v7665 = vunpack.c.l.b16 %v6363
    %v7666 = vunpack.c.h.b16 %v6363
    %v7667 = vunpack.c.l.b16 %v6364
    %v7668 = vunpack.c.l.b16 %v6365
    %v7669 = vunpack.c.h.b16 %v6365
    %v7670 = vunpack.c.l.b16 %v6366
    %v7671 = vunpack.c.h.b16 %v6366
    %v7672 = vunpack.c.l.b16 %v6367
    %v7673 = vunpack.c.h.b16 %v6367
    %v7674 = vunpack.c.l.b16 %v6368
    %v7675 = vunpack.c.l.b16 %v6369
    %v7676 = vunpack.c.h.b16 %v6369
    %v7677 = vunpack.c.l.b16 %v6370
    %v7678 = vunpack.c.h.b16 %v6370
    %v7679 = vunpack.c.l.b16 %v6371
    %v7680 = vunpack.c.h.b16 %v6371
    %v7681 = vunpack.c.l.b16 %v6372
    %v7682 = vunpack.c.l.b16 %v6373
    %v7683 = vunpack.c.h.b16 %v6373
    %v7684 = vunpack.c.l.b16 %v6374
    %v7685 = vunpack.c.h.b16 %v6374
    %v7686 = vunpack.c.l.b16 %v6375
    %v7687 = vunpack.c.h.b16 %v6375
    %v7688 = vunpack.c.l.b16 %v6376
    %v7689 = vunpack.c.l.b16 %v6377
    %v7690 = vunpack.c.h.b16 %v6377
    %v7691 = vunpack.c.l.b16 %v6378
    %v7692 = vunpack.c.h.b16 %v6378
    %v7693 = vunpack.c.l.b16 %v6379
    %v7694 = vunpack.c.h.b16 %v6379
    %v7695 = vunpack.c.l.b16 %v6380
    %v7696 = vunpack.c.l.b16 %v6381
    %v7697 = vunpack.c.h.b16 %v6381
    %v7698 = vunpack.c.l.b16 %v6382
    %v7699 = vunpack.c.h.b16 %v6382
    %v7700 = vunpack.c.l.b16 %v6383
    %v7701 = vunpack.c.h.b16 %v6383
    %v7702 = vunpack.c.l.b16 %v6384
    %v7703 = vunpack.c.l.b16 %v6385
    %v7704 = vunpack.c.h.b16 %v6385
    %v7705 = vunpack.c.l.b16 %v6386
    %v7706 = vunpack.c.h.b16 %v6386
    %v7707 = vunpack.c.l.b16 %v6387
    %v7708 = vunpack.c.h.b16 %v6387
    %v7709 = vunpack.c.l.b16 %v6388
    %v7710 = vunpack.c.l.b16 %v6389
    %v7711 = vunpack.c.h.b16 %v6389
    %v7712 = vunpack.c.l.b16 %v6390
    %v7713 = vunpack.c.h.b16 %v6390
    %v7714 = vunpack.c.l.b16 %v6391
    %v7715 = vunpack.c.h.b16 %v6391
    %v7716 = vunpack.c.l.b16 %v6392
    %v7717 = vunpack.c.l.b16 %v6393
    %v7718 = vunpack.c.h.b16 %v6393
    %v7719 = vunpack.c.l.b16 %v6394
    %v7720 = vunpack.c.h.b16 %v6394
    %v7721 = vunpack.c.l.b16 %v6395
    %v7722 = vunpack.c.h.b16 %v6395
    %v7723 = vunpack.c.l.b16 %v6396
    %v7724 = vunpack.c.l.b16 %v6397
    %v7725 = vunpack.c.h.b16 %v6397
    %v7726 = vunpack.c.l.b16 %v6398
    %v7727 = vunpack.c.h.b16 %v6398
    %v7728 = vunpack.c.l.b16 %v6399
    %v7729 = vunpack.c.h.b16 %v6399
    %v7730 = vunpack.c.l.b16 %v6400
    %v7731 = vunpack.c.l.b16 %v6401
    %v7732 = vunpack.c.h.b16 %v6401
    %v7733 = vunpack.c.l.b16 %v6402
    %v7734 = vunpack.c.h.b16 %v6402
    %v7735 = vunpack.c.l.b16 %v6403
    %v7736 = vunpack.c.h.b16 %v6403
    %v7737 = vunpack.c.l.b16 %v6404
    %v7738 = vunpack.c.l.b16 %v6405
    %v7739 = vunpack.c.h.b16 %v6405
    %v7740 = vunpack.c.l.b16 %v6406
    %v7741 = vunpack.c.h.b16 %v6406
    %v7742 = vunpack.c.l.b16 %v6407
    %v7743 = vunpack.c.h.b16 %v6407
    %v7744 = vunpack.c.l.b16 %v6408
    %v7745 = vunpack.c.l.b16 %v6409
    %v7746 = vunpack.c.h.b16 %v6409
    %v7747 = vunpack.c.l.b16 %v6410
    %v7748 = vunpack.c.h.b16 %v6410
    %v7749 = vunpack.c.l.b16 %v6411
    %v7750 = vunpack.c.h.b16 %v6411
    %v7751 = vunpack.c.l.b16 %v6412
    %v7752 = vunpack.c.l.b16 %v6413
    %v7753 = vunpack.c.h.b16 %v6413
    %v7754 = vunpack.c.l.b16 %v6414
    %v7755 = vunpack.c.h.b16 %v6414
    %v7756 = vunpack.c.l.b16 %v6415
    %v7757 = vunpack.c.h.b16 %v6415
    %v7758 = vunpack.c.l.b16 %v6416
    %v7759 = vunpack.c.l.b16 %v6417
    %v7760 = vunpack.c.h.b16 %v6417
    %v7761 = vunpack.c.l.b16 %v6418
    %v7762 = vunpack.c.h.b16 %v6418
    %v7763 = vunpack.c.l.b16 %v6419
    %v7764 = vunpack.c.h.b16 %v6419
    %v7765 = vunpack.c.l.b16 %v6420
    %v7766 = vunpack.c.l.b16 %v6421
    %v7767 = vunpack.c.h.b16 %v6421
    %v7768 = vunpack.c.l.b16 %v6422
    %v7769 = vunpack.c.h.b16 %v6422
    %v7770 = vunpack.c.l.b16 %v6423
    %v7771 = vunpack.c.h.b16 %v6423
    %v7772 = vunpack.c.l.b16 %v6424
    %v7773 = vunpack.c.l.b16 %v6425
    %v7774 = vunpack.c.h.b16 %v6425
    %v7775 = vunpack.c.l.b16 %v6426
    %v7776 = vunpack.c.h.b16 %v6426
    %v7777 = vunpack.c.l.b16 %v6427
    %v7778 = vunpack.c.h.b16 %v6427
    %v7779 = vunpack.c.l.b16 %v6428
    %v7780 = vunpack.c.l.b16 %v6429
    %v7781 = vunpack.c.h.b16 %v6429
    %v7782 = vunpack.c.l.b16 %v6430
    %v7783 = vunpack.c.h.b16 %v6430
    %v7784 = vunpack.c.l.b16 %v6431
    %v7785 = vunpack.c.h.b16 %v6431
    %v7786 = vunpack.c.l.b16 %v6432
    %v7787 = vunpack.c.l.b16 %v6433
    %v7788 = vunpack.c.h.b16 %v6433
    %v7789 = vunpack.c.l.b16 %v6434
    %v7790 = vunpack.c.h.b16 %v6434
    %v7791 = vunpack.c.l.b16 %v6435
    %v7792 = vunpack.c.h.b16 %v6435
    %v7793 = vunpack.c.l.b16 %v6436
    %v7794 = vunpack.c.l.b16 %v6437
    %v7795 = vunpack.c.h.b16 %v6437
    %v7796 = vunpack.c.l.b16 %v6438
    %v7797 = vunpack.c.h.b16 %v6438
    %v7798 = vunpack.c.l.b16 %v6439
    %v7799 = vunpack.c.h.b16 %v6439
    %v7800 = vunpack.c.l.b16 %v6440
    %v7801 = vunpack.c.l.b16 %v6441
    %v7802 = vunpack.c.h.b16 %v6441
    %v7803 = vunpack.c.l.b16 %v6442
    %v7804 = vunpack.c.h.b16 %v6442
    %v7805 = vunpack.c.l.b16 %v6443
    %v7806 = vunpack.c.h.b16 %v6443
    %v7807 = vunpack.c.l.b16 %v6444
    %v7808 = vunpack.c.l.b16 %v6445
    %v7809 = vunpack.c.h.b16 %v6445
    %v7810 = vunpack.c.l.b16 %v6446
    %v7811 = vunpack.c.h.b16 %v6446
    %v7812 = vunpack.c.l.b16 %v6447
    %v7813 = vunpack.c.h.b16 %v6447
    %v7814 = vunpack.c.l.b16 %v6448
    %v7815 = vunpack.c.l.b16 %v6449
    %v7816 = vunpack.c.h.b16 %v6449
    %v7817 = vunpack.c.l.b16 %v6450
    %v7818 = vunpack.c.h.b16 %v6450
    %v7819 = vunpack.c.l.b16 %v6451
    %v7820 = vunpack.c.h.b16 %v6451
    %v7821 = vunpack.c.l.b16 %v6452
    %v7822 = vunpack.c.l.b16 %v6453
    %v7823 = vunpack.c.h.b16 %v6453
    %v7824 = vunpack.c.l.b16 %v6454
    %v7825 = vunpack.c.h.b16 %v6454
    %v7826 = vunpack.c.l.b16 %v6455
    %v7827 = vunpack.c.h.b16 %v6455
    %v7828 = vunpack.c.l.b16 %v6456
    %v7829 = vunpack.c.l.b16 %v6457
    %v7830 = vunpack.c.h.b16 %v6457
    %v7831 = vunpack.c.l.b16 %v6458
    %v7832 = vunpack.c.h.b16 %v6458
    %v7833 = vunpack.c.l.b16 %v6459
    %v7834 = vunpack.c.h.b16 %v6459
    %v7835 = vunpack.c.l.b16 %v6460
    %v7836 = vunpack.c.l.b16 %v6461
    %v7837 = vunpack.c.h.b16 %v6461
    %v7838 = vunpack.c.l.b16 %v6462
    %v7839 = vunpack.c.h.b16 %v6462
    %v7840 = vunpack.c.l.b16 %v6463
    %v7841 = vunpack.c.h.b16 %v6463
    %v7842 = vunpack.c.l.b16 %v6464
    %v7843 = vunpack.c.l.b16 %v6465
    %v7844 = vunpack.c.h.b16 %v6465
    %v7845 = vunpack.c.l.b16 %v6466
    %v7846 = vunpack.c.h.b16 %v6466
    %v7847 = vunpack.c.l.b16 %v6467
    %v7848 = vunpack.c.h.b16 %v6467
    %v7849 = vunpack.c.l.b16 %v6468
    %v7850 = vunpack.c.l.b16 %v6469
    %v7851 = vunpack.c.h.b16 %v6469
    %v7852 = vunpack.c.l.b16 %v6470
    %v7853 = vunpack.c.h.b16 %v6470
    %v7854 = vunpack.c.l.b16 %v6471
    %v7855 = vunpack.c.h.b16 %v6471
    %v7856 = vunpack.c.l.b16 %v6472
    %v7857 = vunpack.c.l.b16 %v6473
    %v7858 = vunpack.c.h.b16 %v6473
    %v7859 = vunpack.c.l.b16 %v6474
    %v7860 = vunpack.c.h.b16 %v6474
    %v7861 = vunpack.c.l.b16 %v6475
    %v7862 = vunpack.c.h.b16 %v6475
    %v7863 = vunpack.c.l.b16 %v6476
    %v7864 = vunpack.c.l.b16 %v6477
    %v7865 = vunpack.c.h.b16 %v6477
    %v7866 = vunpack.c.l.b16 %v6478
    %v7867 = vunpack.c.h.b16 %v6478
    %v7868 = vunpack.c.l.b16 %v6479
    %v7869 = vunpack.c.h.b16 %v6479
    %v7870 = vunpack.c.l.b16 %v6480
    %v7871 = vunpack.c.l.b16 %v6481
    %v7872 = vunpack.c.h.b16 %v6481
    %v7873 = vunpack.c.l.b16 %v6482
    %v7874 = vunpack.c.h.b16 %v6482
    %v7875 = vunpack.c.l.b16 %v6483
    %v7876 = vunpack.c.h.b16 %v6483
    %v7877 = vunpack.c.l.b16 %v6484
    %v7878 = vunpack.c.l.b16 %v6485
    %v7879 = vunpack.c.h.b16 %v6485
    %v7880 = vunpack.c.l.b16 %v6486
    %v7881 = vunpack.c.h.b16 %v6486
    %v7882 = vunpack.c.l.b16 %v6487
    %v7883 = vunpack.c.h.b16 %v6487
    %v7884 = vunpack.c.l.b16 %v6488
    %v7885 = vunpack.c.l.b16 %v6489
    %v7886 = vunpack.c.h.b16 %v6489
    %v7887 = vunpack.c.l.b16 %v6490
    %v7888 = vunpack.c.h.b16 %v6490
    %v7889 = vunpack.c.l.b16 %v6491
    %v7890 = vunpack.c.h.b16 %v6491
    %v7891 = vunpack.c.l.b16 %v6492
    %v7892 = vunpack.c.l.b16 %v6493
    %v7893 = vunpack.c.h.b16 %v6493
    %v7894 = vunpack.c.l.b16 %v6494
    %v7895 = vunpack.c.h.b16 %v6494
    %v7896 = vunpack.c.l.b16 %v6495
    %v7897 = vunpack.c.h.b16 %v6495
    %v7898 = vunpack.c.l.b16 %v6496
    %v7899 = vunpack.c.l.b16 %v6497
    %v7900 = vunpack.c.h.b16 %v6497
    %v7901 = vunpack.c.l.b16 %v6498
    %v7902 = vunpack.c.h.b16 %v6498
    %v7903 = vunpack.c.l.b16 %v6499
    %v7904 = vunpack.c.h.b16 %v6499
    %v7905 = vunpack.c.l.b16 %v6500
    %v7906 = vunpack.c.l.b16 %v6501
    %v7907 = vunpack.c.h.b16 %v6501
    %v7908 = vunpack.c.l.b16 %v6502
    %v7909 = vunpack.c.h.b16 %v6502
    %v7910 = vunpack.c.l.b16 %v6503
    %v7911 = vunpack.c.h.b16 %v6503
    %v7912 = vunpack.c.l.b16 %v6504
    %v7913 = vunpack.c.l.b16 %v6505
    %v7914 = vunpack.c.h.b16 %v6505
    %v7915 = vunpack.c.l.b16 %v6506
    %v7916 = vunpack.c.h.b16 %v6506
    %v7917 = vunpack.c.l.b16 %v6507
    %v7918 = vunpack.c.h.b16 %v6507
    %v7919 = vunpack.c.l.b16 %v6508
    %v7920 = vunpack.c.l.b16 %v6509
    %v7921 = vunpack.c.h.b16 %v6509
    %v7922 = vunpack.c.l.b16 %v6510
    %v7923 = vunpack.c.h.b16 %v6510
    %v7924 = vunpack.c.l.b16 %v6511
    %v7925 = vunpack.c.h.b16 %v6511
    %v7926 = vunpack.c.l.b16 %v6512
    %v7927 = vunpack.c.l.b16 %v6513
    %v7928 = vunpack.c.h.b16 %v6513
    %v7929 = vunpack.c.l.b16 %v6514
    %v7930 = vunpack.c.h.b16 %v6514
    %v7931 = vunpack.c.l.b16 %v6515
    %v7932 = vunpack.c.h.b16 %v6515
    %v7933 = vunpack.c.l.b16 %v6516
    %v7934 = vunpack.c.l.b16 %v6517
    %v7935 = vunpack.c.h.b16 %v6517
    %v7936 = vunpack.c.l.b16 %v6518
    %v7937 = vunpack.c.h.b16 %v6518
    %v7938 = vunpack.c.l.b16 %v6519
    %v7939 = vunpack.c.h.b16 %v6519
    %v7940 = vunpack.c.l.b16 %v6520
    %v7941 = vunpack.c.l.b16 %v6521
    %v7942 = vunpack.c.h.b16 %v6521
    %v7943 = vunpack.c.l.b16 %v6522
    %v7944 = vunpack.c.h.b16 %v6522
    %v7945 = vunpack.c.l.b16 %v6523
    %v7946 = vunpack.c.h.b16 %v6523
    %v7947 = vunpack.c.l.b16 %v6524
    %v7948 = vunpack.c.l.b16 %v6525
    %v7949 = vunpack.c.h.b16 %v6525
    %v7950 = vunpack.c.l.b16 %v6526
    %v7951 = vunpack.c.h.b16 %v6526
    %v7952 = vunpack.c.l.b16 %v6527
    %v7953 = vunpack.c.h.b16 %v6527
    %v7954 = vunpack.c.l.b16 %v6528
    %v7955 = vunpack.c.l.b16 %v6529
    %v7956 = vunpack.c.h.b16 %v6529
    %v7957 = vunpack.c.l.b16 %v6530
    %v7958 = vunpack.c.h.b16 %v6530
    %v7959 = vunpack.c.l.b16 %v6531
    %v7960 = vunpack.c.h.b16 %v6531
    %v7961 = vunpack.c.l.b16 %v6532
    %v7962 = vunpack.c.l.b16 %v6533
    %v7963 = vunpack.c.h.b16 %v6533
    %v7964 = vunpack.c.l.b16 %v6534
    %v7965 = vunpack.c.h.b16 %v6534
    %v7966 = vunpack.c.l.b16 %v6535
    %v7967 = vunpack.c.h.b16 %v6535
    %v7968 = vunpack.c.l.b16 %v6536
    %v7969 = vunpack.c.l.b16 %v6537
    %v7970 = vunpack.c.h.b16 %v6537
    %v7971 = vunpack.c.l.b16 %v6538
    %v7972 = vunpack.c.h.b16 %v6538
    %v7973 = vunpack.c.l.b16 %v6539
    %v7974 = vunpack.c.h.b16 %v6539
    %v7975 = vunpack.c.l.b16 %v6540
    %v7976 = vunpack.c.l.b16 %v6541
    %v7977 = vunpack.c.h.b16 %v6541
    %v7978 = vunpack.c.l.b16 %v6542
    %v7979 = vunpack.c.h.b16 %v6542
    %v7980 = vunpack.c.l.b16 %v6543
    %v7981 = vunpack.c.h.b16 %v6543
    %v7982 = vunpack.c.l.b16 %v6544
    %v7983 = vunpack.c.l.b16 %v6545
    %v7984 = vunpack.c.h.b16 %v6545
    %v7985 = vunpack.c.l.b16 %v6546
    %v7986 = vunpack.c.h.b16 %v6546
    %v7987 = vunpack.c.l.b16 %v6547
    %v7988 = vunpack.c.h.b16 %v6547
    %v7989 = vunpack.c.l.b16 %v6548
    %v7990 = vunpack.c.l.b16 %v6549
    %v7991 = vunpack.c.h.b16 %v6549
    %v7992 = vunpack.c.l.b16 %v6550
    %v7993 = vunpack.c.h.b16 %v6550
    %v7994 = vunpack.c.l.b16 %v6551
    %v7995 = vunpack.c.h.b16 %v6551
    %v7996 = vunpack.c.l.b16 %v6552
    %v7997 = vunpack.c.l.b16 %v6553
    %v7998 = vunpack.c.h.b16 %v6553
    %v7999 = vunpack.c.l.b16 %v6554
    %v8000 = vunpack.c.h.b16 %v6554
    %v8001 = vunpack.c.l.b16 %v6555
    %v8002 = vunpack.c.h.b16 %v6555
    %v8003 = vunpack.c.l.b16 %v6556
    %v8004 = vunpack.c.l.b16 %v6557
    %v8005 = vunpack.c.h.b16 %v6557
    %v8006 = vunpack.c.l.b16 %v6558
    %v8007 = vunpack.c.h.b16 %v6558
    %v8008 = vunpack.c.l.b16 %v6559
    %v8009 = vunpack.c.h.b16 %v6559
    %v8010 = vunpack.c.l.b16 %v6560
    %v8011 = vunpack.c.l.b16 %v6561
    %v8012 = vunpack.c.h.b16 %v6561
    %v8013 = vunpack.c.l.b16 %v6562
    %v8014 = vunpack.c.h.b16 %v6562
    %v8015 = vunpack.c.l.b16 %v6563
    %v8016 = vunpack.c.h.b16 %v6563
    %v8017 = vunpack.c.l.b16 %v6564
    %v8018 = vunpack.c.l.b16 %v6565
    %v8019 = vunpack.c.h.b16 %v6565
    %v8020 = vunpack.c.l.b16 %v6566
    %v8021 = vunpack.c.h.b16 %v6566
    %v8022 = vunpack.c.l.b16 %v6567
    %v8023 = vunpack.c.h.b16 %v6567
    %v8024 = vunpack.c.l.b16 %v6568
    %v8025 = vunpack.c.l.b16 %v6569
    %v8026 = vunpack.c.h.b16 %v6569
    %v8027 = vunpack.c.l.b16 %v6570
    %v8028 = vunpack.c.h.b16 %v6570
    %v8029 = vunpack.c.l.b16 %v6571
    %v8030 = vunpack.c.h.b16 %v6571
    %v8031 = vunpack.c.l.b16 %v6572
    %v8032 = vunpack.c.l.b16 %v6573
    %v8033 = vunpack.c.h.b16 %v6573
    %v8034 = vunpack.c.l.b16 %v6574
    %v8035 = vunpack.c.h.b16 %v6574
    %v8036 = vunpack.c.l.b16 %v6575
    %v8037 = vunpack.c.h.b16 %v6575
    %v8038 = vunpack.c.l.b16 %v6576
    %v8039 = vunpack.c.l.b16 %v6577
    %v8040 = vunpack.c.h.b16 %v6577
    %v8041 = vunpack.c.l.b16 %v6578
    %v8042 = vunpack.c.h.b16 %v6578
    %v8043 = vunpack.c.l.b16 %v6579
    %v8044 = vunpack.c.h.b16 %v6579
    %v8045 = vunpack.c.l.b16 %v6580
    %v8046 = vunpack.c.l.b16 %v6581
    %v8047 = vunpack.c.h.b16 %v6581
    %v8048 = vunpack.c.l.b16 %v6582
    %v8049 = vunpack.c.h.b16 %v6582
    %v8050 = vunpack.c.l.b16 %v6583
    %v8051 = vunpack.c.h.b16 %v6583
    %v8052 = vunpack.c.l.b16 %v6584
    %v8053 = vunpack.c.l.b16 %v6585
    %v8054 = vunpack.c.h.b16 %v6585
    %v8055 = vunpack.c.l.b16 %v6586
    %v8056 = vunpack.c.h.b16 %v6586
    %v8057 = vunpack.c.l.b16 %v6587
    %v8058 = vunpack.c.h.b16 %v6587
    %v8059 = vunpack.c.l.b16 %v6588
    %v8060 = vunpack.c.l.b16 %v6589
    %v8061 = vunpack.c.h.b16 %v6589
    %v8062 = vunpack.c.l.b16 %v6590
    %v8063 = vunpack.c.h.b16 %v6590
    %v8064 = vunpack.c.l.b16 %v6591
    %v8065 = vunpack.c.h.b16 %v6591
    %v8066 = vunpack.c.l.b16 %v6592
    %v8067 = vunpack.c.l.b16 %v6593
    %v8068 = vunpack.c.h.b16 %v6593
    %v8069 = vunpack.c.l.b16 %v6594
    %v8070 = vunpack.c.h.b16 %v6594
    %v8071 = vunpack.c.l.b16 %v6595
    %v8072 = vunpack.c.h.b16 %v6595
    %v8073 = vunpack.c.l.b16 %v6596
    %v8074 = vunpack.c.l.b16 %v6597
    %v8075 = vunpack.c.h.b16 %v6597
    %v8076 = vunpack.c.l.b16 %v6598
    %v8077 = vunpack.c.h.b16 %v6598
    %v8078 = vunpack.c.l.b16 %v6599
    %v8079 = vunpack.c.h.b16 %v6599
    %v8080 = vunpack.c.l.b16 %v6600
    %v8081 = vunpack.c.l.b16 %v6601
    %v8082 = vunpack.c.h.b16 %v6601
    %v8083 = vunpack.c.l.b16 %v6602
    %v8084 = vunpack.c.h.b16 %v6602
    %v8085 = vunpack.c.l.b16 %v6603
    %v8086 = vunpack.c.h.b16 %v6603
    %v8087 = vunpack.c.l.b16 %v6604
    %v8088 = vunpack.c.l.b16 %v6605
    %v8089 = vunpack.c.h.b16 %v6605
    %v8090 = vunpack.c.l.b16 %v6606
    %v8091 = vunpack.c.h.b16 %v6606
    %v8092 = vunpack.c.l.b16 %v6607
    %v8093 = vunpack.c.h.b16 %v6607
    %v8094 = vunpack.c.l.b16 %v6608
    %v8095 = vunpack.c.l.b16 %v6609
    %v8096 = vunpack.c.h.b16 %v6609
    %v8097 = vunpack.c.l.b16 %v6610
    %v8098 = vunpack.c.h.b16 %v6610
    %v8099 = vunpack.c.l.b16 %v6611
    %v8100 = vunpack.c.h.b16 %v6611
    %v8101 = vunpack.c.l.b16 %v6612
    %v8102 = vunpack.c.l.b16 %v6613
    %v8103 = vunpack.c.h.b16 %v6613
    %v8104 = vunpack.c.l.b16 %v6614
    %v8105 = vunpack.c.h.b16 %v6614
    %v8106 = vunpack.c.l.b16 %v6615
    %v8107 = vunpack.c.h.b16 %v6615
    %v8108 = vunpack.c.l.b16 %v6616
    %v8109 = vunpack.c.l.b16 %v6617
    %v8110 = vunpack.c.h.b16 %v6617
    %v8111 = vunpack.c.l.b16 %v6618
    %v8112 = vunpack.c.h.b16 %v6618
    %v8113 = vunpack.c.l.b16 %v6619
    %v8114 = vunpack.c.h.b16 %v6619
    %v8115 = vunpack.c.l.b16 %v6620
    %v8116 = vunpack.c.l.b16 %v6621
    %v8117 = vunpack.c.h.b16 %v6621
    %v8118 = vunpack.c.l.b16 %v6622
    %v8119 = vunpack.c.h.b16 %v6622
    %v8120 = vunpack.c.l.b16 %v6623
    %v8121 = vunpack.c.h.b16 %v6623
    %v8122 = vunpack.c.l.b16 %v6624
    %v8123 = vunpack.c.l.b16 %v6625
    %v8124 = vunpack.c.h.b16 %v6625
    %v8125 = vunpack.c.l.b16 %v6626
    %v8126 = vunpack.c.h.b16 %v6626
    %v8127 = vunpack.c.l.b16 %v6627
    %v8128 = vunpack.c.h.b16 %v6627
    %v8129 = vunpack.c.l.b16 %v6628
    %v8130 = vunpack.c.l.b16 %v6629
    %v8131 = vunpack.c.h.b16 %v6629
    %v8132 = vunpack.c.l.b16 %v6630
    %v8133 = vunpack.c.h.b16 %v6630
    %v8134 = vunpack.c.l.b16 %v6631
    %v8135 = vunpack.c.h.b16 %v6631
    %v8136 = vunpack.c.l.b16 %v6632
    %v8137 = vunpack.c.l.b16 %v6633
    %v8138 = vunpack.c.h.b16 %v6633
    %v8139 = vunpack.c.l.b16 %v6634
    %v8140 = vunpack.c.h.b16 %v6634
    %v8141 = vunpack.c.l.b16 %v6635
    %v8142 = vunpack.c.h.b16 %v6635
    %v8143 = vunpack.c.l.b16 %v6636
    %v8144 = vunpack.c.l.b16 %v6637
    %v8145 = vunpack.c.h.b16 %v6637
    %v8146 = vunpack.c.l.b16 %v6638
    %v8147 = vunpack.c.h.b16 %v6638
    %v8148 = vunpack.c.l.b16 %v6639
    %v8149 = vunpack.c.h.b16 %v6639
    %v8150 = vunpack.c.l.b16 %v6640
    %v8151 = vunpack.c.l.b16 %v6641
    %v8152 = vunpack.c.h.b16 %v6641
    %v8153 = vunpack.c.l.b16 %v6642
    %v8154 = vunpack.c.h.b16 %v6642
    %v8155 = vunpack.c.l.b16 %v6643
    %v8156 = vunpack.c.h.b16 %v6643
    %v8157 = vunpack.c.l.b16 %v6644
    %v8158 = vunpack.c.l.b16 %v6645
    %v8159 = vunpack.c.h.b16 %v6645
    %v8160 = vunpack.c.l.b16 %v6646
    %v8161 = vunpack.c.h.b16 %v6646
    %v8162 = vunpack.c.l.b16 %v6647
    %v8163 = vunpack.c.h.b16 %v6647
    %v8164 = vunpack.c.l.b16 %v6648
    %v8165 = vunpack.c.l.b16 %v6649
    %v8166 = vunpack.c.h.b16 %v6649
    %v8167 = vunpack.c.l.b16 %v6650
    %v8168 = vunpack.c.h.b16 %v6650
    %v8169 = vunpack.c.l.b16 %v6651
    %v8170 = vunpack.c.h.b16 %v6651
    %v8171 = vunpack.c.l.b16 %v6652
    %v8172 = vunpack.c.l.b16 %v6653
    %v8173 = vunpack.c.h.b16 %v6653
    %v8174 = vunpack.c.l.b16 %v6654
    %v8175 = vunpack.c.h.b16 %v6654
    %v8176 = vunpack.c.l.b16 %v6655
    %v8177 = vunpack.c.h.b16 %v6655
    %v8178 = vunpack.c.l.b16 %v6656
    %v8179 = vunpack.c.l.b16 %v6657
    %v8180 = vunpack.c.h.b16 %v6657
    %v8181 = vunpack.c.l.b16 %v6658
    %v8182 = vunpack.c.h.b16 %v6658
    %v8183 = vunpack.c.l.b16 %v6659
    %v8184 = vunpack.c.h.b16 %v6659
    %v8185 = vunpack.c.l.b16 %v6660
    %v8186 = vunpack.c.l.b16 %v6661
    %v8187 = vunpack.c.h.b16 %v6661
    %v8188 = vunpack.c.l.b16 %v6662
    %v8189 = vunpack.c.h.b16 %v6662
    %v8190 = vunpack.c.l.b16 %v6663
    %v8191 = vunpack.c.h.b16 %v6663
    %v8192 = vunpack.c.l.b16 %v6664
    %v8193 = vunpack.c.l.b16 %v6665
    %v8194 = vunpack.c.h.b16 %v6665
    %v8195 = vunpack.c.l.b16 %v6666
    %v8196 = vunpack.c.h.b16 %v6666
    %v8197 = vunpack.c.l.b16 %v6667
    %v8198 = vunpack.c.h.b16 %v6667
    %v8199 = vunpack.c.l.b16 %v6668
    %v8200 = vunpack.c.l.b16 %v6669
    %v8201 = vunpack.c.h.b16 %v6669
    %v8202 = vunpack.c.l.b16 %v6670
    %v8203 = vunpack.c.h.b16 %v6670
    %v8204 = vunpack.c.l.b16 %v6671
    %v8205 = vunpack.c.h.b16 %v6671
    %v8206 = vunpack.c.l.b16 %v6672
    %v8207 = vpack.c.b16 %v7248, %v7241
    %v8208 = vpack.c.b16 %v7249, %v7242
    %v8209 = vpack.c.b16 %v7250, %v7243
    %v8210 = vpack.c.b16 %v7251, %v7244
    %v8211 = vpack.c.b16 %v7252, %v7245
    %v8212 = vpack.c.b16 %v7253, %v7246
    %v8213 = vpack.c.b16 %v7254, %v7247
    %v8214 = vpack.c.b16 %v7262, %v7255
    %v8215 = vpack.c.b16 %v7263, %v7256
    %v8216 = vpack.c.b16 %v7264, %v7257
    %v8217 = vpack.c.b16 %v7265, %v7258
    %v8218 = vpack.c.b16 %v7266, %v7259
    %v8219 = vpack.c.b16 %v7267, %v7260
    %v8220 = vpack.c.b16 %v7268, %v7261
    %v8221 = vpack.c.b16 %v7276, %v7269
    %v8222 = vpack.c.b16 %v7277, %v7270
    %v8223 = vpack.c.b16 %v7278, %v7271
    %v8224 = vpack.c.b16 %v7279, %v7272
    %v8225 = vpack.c.b16 %v7280, %v7273
    %v8226 = vpack.c.b16 %v7281, %v7274
    %v8227 = vpack.c.b16 %v7282, %v7275
    %v8228 = vpack.c.b16 %v7290, %v7283
    %v8229 = vpack.c.b16 %v7291, %v7284
    %v8230 = vpack.c.b16 %v7292, %v7285
    %v8231 = vpack.c.b16 %v7293, %v7286
    %v8232 = vpack.c.b16 %v7294, %v7287
    %v8233 = vpack.c.b16 %v7295, %v7288
    %v8234 = vpack.c.b16 %v7296, %v7289
    %v8235 = vpack.c.b16 %v7304, %v7297
    %v8236 = vpack.c.b16 %v7305, %v7298
    %v8237 = vpack.c.b16 %v7306, %v7299
    %v8238 = vpack.c.b16 %v7307, %v7300
    %v8239 = vpack.c.b16 %v7308, %v7301
    %v8240 = vpack.c.b16 %v7309, %v7302
    %v8241 = vpack.c.b16 %v7310, %v7303
    %v8242 = vpack.c.b16 %v7318, %v7311
    %v8243 = vpack.c.b16 %v7319, %v7312
    %v8244 = vpack.c.b16 %v7320, %v7313
    %v8245 = vpack.c.b16 %v7321, %v7314
    %v8246 = vpack.c.b16 %v7322, %v7315
    %v8247 = vpack.c.b16 %v7323, %v7316
    %v8248 = vpack.c.b16 %v7324, %v7317
    %v8249 = vpack.c.b16 %v7332, %v7325
    %v8250 = vpack.c.b16 %v7333, %v7326
    %v8251 = vpack.c.b16 %v7334, %v7327
    %v8252 = vpack.c.b16 %v7335, %v7328
    %v8253 = vpack.c.b16 %v7336, %v7329
    %v8254 = vpack.c.b16 %v7337, %v7330
    %v8255 = vpack.c.b16 %v7338, %v7331
    %v8256 = vpack.c.b16 %v7346, %v7339
    %v8257 = vpack.c.b16 %v7347, %v7340
    %v8258 = vpack.c.b16 %v7348, %v7341
    %v8259 = vpack.c.b16 %v7349, %v7342
    %v8260 = vpack.c.b16 %v7350, %v7343
    %v8261 = vpack.c.b16 %v7351, %v7344
    %v8262 = vpack.c.b16 %v7352, %v7345
    %v8263 = vpack.c.b16 %v7360, %v7353
    %v8264 = vpack.c.b16 %v7361, %v7354
    %v8265 = vpack.c.b16 %v7362, %v7355
    %v8266 = vpack.c.b16 %v7363, %v7356
    %v8267 = vpack.c.b16 %v7364, %v7357
    %v8268 = vpack.c.b16 %v7365, %v7358
    %v8269 = vpack.c.b16 %v7366, %v7359
    %v8270 = vpack.c.b16 %v7374, %v7367
    %v8271 = vpack.c.b16 %v7375, %v7368
    %v8272 = vpack.c.b16 %v7376, %v7369
    %v8273 = vpack.c.b16 %v7377, %v7370
    %v8274 = vpack.c.b16 %v7378, %v7371
    %v8275 = vpack.c.b16 %v7379, %v7372
    %v8276 = vpack.c.b16 %v7380, %v7373
    %v8277 = vpack.c.b16 %v7388, %v7381
    %v8278 = vpack.c.b16 %v7389, %v7382
    %v8279 = vpack.c.b16 %v7390, %v7383
    %v8280 = vpack.c.b16 %v7391, %v7384
    %v8281 = vpack.c.b16 %v7392, %v7385
    %v8282 = vpack.c.b16 %v7393, %v7386
    %v8283 = vpack.c.b16 %v7394, %v7387
    %v8284 = vpack.c.b16 %v7402, %v7395
    %v8285 = vpack.c.b16 %v7403, %v7396
    %v8286 = vpack.c.b16 %v7404, %v7397
    %v8287 = vpack.c.b16 %v7405, %v7398
    %v8288 = vpack.c.b16 %v7406, %v7399
    %v8289 = vpack.c.b16 %v7407, %v7400
    %v8290 = vpack.c.b16 %v7408, %v7401
    %v8291 = vpack.c.b16 %v7416, %v7409
    %v8292 = vpack.c.b16 %v7417, %v7410
    %v8293 = vpack.c.b16 %v7418, %v7411
    %v8294 = vpack.c.b16 %v7419, %v7412
    %v8295 = vpack.c.b16 %v7420, %v7413
    %v8296 = vpack.c.b16 %v7421, %v7414
    %v8297 = vpack.c.b16 %v7422, %v7415
    %v8298 = vpack.c.b16 %v7430, %v7423
    %v8299 = vpack.c.b16 %v7431, %v7424
    %v8300 = vpack.c.b16 %v7432, %v7425
    %v8301 = vpack.c.b16 %v7433, %v7426
    %v8302 = vpack.c.b16 %v7434, %v7427
    %v8303 = vpack.c.b16 %v7435, %v7428
    %v8304 = vpack.c.b16 %v7436, %v7429
    %v8305 = vpack.c.b16 %v7444, %v7437
    %v8306 = vpack.c.b16 %v7445, %v7438
    %v8307 = vpack.c.b16 %v7446, %v7439
    %v8308 = vpack.c.b16 %v7447, %v7440
    %v8309 = vpack.c.b16 %v7448, %v7441
    %v8310 = vpack.c.b16 %v7449, %v7442
    %v8311 = vpack.c.b16 %v7450, %v7443
    %v8312 = vpack.c.b16 %v7458, %v7451
    %v8313 = vpack.c.b16 %v7459, %v7452
    %v8314 = vpack.c.b16 %v7460, %v7453
    %v8315 = vpack.c.b16 %v7461, %v7454
    %v8316 = vpack.c.b16 %v7462, %v7455
    %v8317 = vpack.c.b16 %v7463, %v7456
    %v8318 = vpack.c.b16 %v7464, %v7457
    %v8319 = vpack.c.b16 %v7472, %v7465
    %v8320 = vpack.c.b16 %v7473, %v7466
    %v8321 = vpack.c.b16 %v7474, %v7467
    %v8322 = vpack.c.b16 %v7475, %v7468
    %v8323 = vpack.c.b16 %v7476, %v7469
    %v8324 = vpack.c.b16 %v7477, %v7470
    %v8325 = vpack.c.b16 %v7478, %v7471
    %v8326 = vpack.c.b16 %v7486, %v7479
    %v8327 = vpack.c.b16 %v7487, %v7480
    %v8328 = vpack.c.b16 %v7488, %v7481
    %v8329 = vpack.c.b16 %v7489, %v7482
    %v8330 = vpack.c.b16 %v7490, %v7483
    %v8331 = vpack.c.b16 %v7491, %v7484
    %v8332 = vpack.c.b16 %v7492, %v7485
    %v8333 = vpack.c.b16 %v7500, %v7493
    %v8334 = vpack.c.b16 %v7501, %v7494
    %v8335 = vpack.c.b16 %v7502, %v7495
    %v8336 = vpack.c.b16 %v7503, %v7496
    %v8337 = vpack.c.b16 %v7504, %v7497
    %v8338 = vpack.c.b16 %v7505, %v7498
    %v8339 = vpack.c.b16 %v7506, %v7499
    %v8340 = vpack.c.b16 %v7514, %v7507
    %v8341 = vpack.c.b16 %v7515, %v7508
    %v8342 = vpack.c.b16 %v7516, %v7509
    %v8343 = vpack.c.b16 %v7517, %v7510
    %v8344 = vpack.c.b16 %v7518, %v7511
    %v8345 = vpack.c.b16 %v7519, %v7512
    %v8346 = vpack.c.b16 %v7520, %v7513
    %v8347 = vpack.c.b16 %v7528, %v7521
    %v8348 = vpack.c.b16 %v7529, %v7522
    %v8349 = vpack.c.b16 %v7530, %v7523
    %v8350 = vpack.c.b16 %v7531, %v7524
    %v8351 = vpack.c.b16 %v7532, %v7525
    %v8352 = vpack.c.b16 %v7533, %v7526
    %v8353 = vpack.c.b16 %v7534, %v7527
    %v8354 = vpack.c.b16 %v7542, %v7535
    %v8355 = vpack.c.b16 %v7543, %v7536
    %v8356 = vpack.c.b16 %v7544, %v7537
    %v8357 = vpack.c.b16 %v7545, %v7538
    %v8358 = vpack.c.b16 %v7546, %v7539
    %v8359 = vpack.c.b16 %v7547, %v7540
    %v8360 = vpack.c.b16 %v7548, %v7541
    %v8361 = vpack.c.b16 %v7556, %v7549
    %v8362 = vpack.c.b16 %v7557, %v7550
    %v8363 = vpack.c.b16 %v7558, %v7551
    %v8364 = vpack.c.b16 %v7559, %v7552
    %v8365 = vpack.c.b16 %v7560, %v7553
    %v8366 = vpack.c.b16 %v7561, %v7554
    %v8367 = vpack.c.b16 %v7562, %v7555
    %v8368 = vpack.c.b16 %v7570, %v7563
    %v8369 = vpack.c.b16 %v7571, %v7564
    %v8370 = vpack.c.b16 %v7572, %v7565
    %v8371 = vpack.c.b16 %v7573, %v7566
    %v8372 = vpack.c.b16 %v7574, %v7567
    %v8373 = vpack.c.b16 %v7575, %v7568
    %v8374 = vpack.c.b16 %v7576, %v7569
    %v8375 = vpack.c.b16 %v7584, %v7577
    %v8376 = vpack.c.b16 %v7585, %v7578
    %v8377 = vpack.c.b16 %v7586, %v7579
    %v8378 = vpack.c.b16 %v7587, %v7580
    %v8379 = vpack.c.b16 %v7588, %v7581
    %v8380 = vpack.c.b16 %v7589, %v7582
    %v8381 = vpack.c.b16 %v7590, %v7583
    %v8382 = vpack.c.b16 %v7598, %v7591
    %v8383 = vpack.c.b16 %v7599, %v7592
    %v8384 = vpack.c.b16 %v7600, %v7593
    %v8385 = vpack.c.b16 %v7601, %v7594
    %v8386 = vpack.c.b16 %v7602, %v7595
    %v8387 = vpack.c.b16 %v7603, %v7596
    %v8388 = vpack.c.b16 %v7604, %v7597
    %v8389 = vpack.c.b16 %v7612, %v7605
    %v8390 = vpack.c.b16 %v7613, %v7606
    %v8391 = vpack.c.b16 %v7614, %v7607
    %v8392 = vpack.c.b16 %v7615, %v7608
    %v8393 = vpack.c.b16 %v7616, %v7609
    %v8394 = vpack.c.b16 %v7617, %v7610
    %v8395 = vpack.c.b16 %v7618, %v7611
    %v8396 = vpack.c.b16 %v7626, %v7619
    %v8397 = vpack.c.b16 %v7627, %v7620
    %v8398 = vpack.c.b16 %v7628, %v7621
    %v8399 = vpack.c.b16 %v7629, %v7622
    %v8400 = vpack.c.b16 %v7630, %v7623
    %v8401 = vpack.c.b16 %v7631, %v7624
    %v8402 = vpack.c.b16 %v7632, %v7625
    %v8403 = vpack.c.b16 %v7640, %v7633
    %v8404 = vpack.c.b16 %v7641, %v7634
    %v8405 = vpack.c.b16 %v7642, %v7635
    %v8406 = vpack.c.b16 %v7643, %v7636
    %v8407 = vpack.c.b16 %v7644, %v7637
    %v8408 = vpack.c.b16 %v7645, %v7638
    %v8409 = vpack.c.b16 %v7646, %v7639
    %v8410 = vpack.c.b16 %v7654, %v7647
    %v8411 = vpack.c.b16 %v7655, %v7648
    %v8412 = vpack.c.b16 %v7656, %v7649
    %v8413 = vpack.c.b16 %v7657, %v7650
    %v8414 = vpack.c.b16 %v7658, %v7651
    %v8415 = vpack.c.b16 %v7659, %v7652
    %v8416 = vpack.c.b16 %v7660, %v7653
    %v8417 = vpack.c.b16 %v7668, %v7661
    %v8418 = vpack.c.b16 %v7669, %v7662
    %v8419 = vpack.c.b16 %v7670, %v7663
    %v8420 = vpack.c.b16 %v7671, %v7664
    %v8421 = vpack.c.b16 %v7672, %v7665
    %v8422 = vpack.c.b16 %v7673, %v7666
    %v8423 = vpack.c.b16 %v7674, %v7667
    %v8424 = vpack.c.b16 %v7682, %v7675
    %v8425 = vpack.c.b16 %v7683, %v7676
    %v8426 = vpack.c.b16 %v7684, %v7677
    %v8427 = vpack.c.b16 %v7685, %v7678
    %v8428 = vpack.c.b16 %v7686, %v7679
    %v8429 = vpack.c.b16 %v7687, %v7680
    %v8430 = vpack.c.b16 %v7688, %v7681
    %v8431 = vpack.c.b16 %v7696, %v7689
    %v8432 = vpack.c.b16 %v7697, %v7690
    %v8433 = vpack.c.b16 %v7698, %v7691
    %v8434 = vpack.c.b16 %v7699, %v7692
    %v8435 = vpack.c.b16 %v7700, %v7693
    %v8436 = vpack.c.b16 %v7701, %v7694
    %v8437 = vpack.c.b16 %v7702, %v7695
    %v8438 = vpack.c.b16 %v7710, %v7703
    %v8439 = vpack.c.b16 %v7711, %v7704
    %v8440 = vpack.c.b16 %v7712, %v7705
    %v8441 = vpack.c.b16 %v7713, %v7706
    %v8442 = vpack.c.b16 %v7714, %v7707
    %v8443 = vpack.c.b16 %v7715, %v7708
    %v8444 = vpack.c.b16 %v7716, %v7709
    %v8445 = vpack.c.b16 %v7724, %v7717
    %v8446 = vpack.c.b16 %v7725, %v7718
    %v8447 = vpack.c.b16 %v7726, %v7719
    %v8448 = vpack.c.b16 %v7727, %v7720
    %v8449 = vpack.c.b16 %v7728, %v7721
    %v8450 = vpack.c.b16 %v7729, %v7722
    %v8451 = vpack.c.b16 %v7730, %v7723
    %v8452 = vpack.c.b16 %v7738, %v7731
    %v8453 = vpack.c.b16 %v7739, %v7732
    %v8454 = vpack.c.b16 %v7740, %v7733
    %v8455 = vpack.c.b16 %v7741, %v7734
    %v8456 = vpack.c.b16 %v7742, %v7735
    %v8457 = vpack.c.b16 %v7743, %v7736
    %v8458 = vpack.c.b16 %v7744, %v7737
    %v8459 = vpack.c.b16 %v7752, %v7745
    %v8460 = vpack.c.b16 %v7753, %v7746
    %v8461 = vpack.c.b16 %v7754, %v7747
    %v8462 = vpack.c.b16 %v7755, %v7748
    %v8463 = vpack.c.b16 %v7756, %v7749
    %v8464 = vpack.c.b16 %v7757, %v7750
    %v8465 = vpack.c.b16 %v7758, %v7751
    %v8466 = vpack.c.b16 %v7766, %v7759
    %v8467 = vpack.c.b16 %v7767, %v7760
    %v8468 = vpack.c.b16 %v7768, %v7761
    %v8469 = vpack.c.b16 %v7769, %v7762
    %v8470 = vpack.c.b16 %v7770, %v7763
    %v8471 = vpack.c.b16 %v7771, %v7764
    %v8472 = vpack.c.b16 %v7772, %v7765
    %v8473 = vpack.c.b16 %v7780, %v7773
    %v8474 = vpack.c.b16 %v7781, %v7774
    %v8475 = vpack.c.b16 %v7782, %v7775
    %v8476 = vpack.c.b16 %v7783, %v7776
    %v8477 = vpack.c.b16 %v7784, %v7777
    %v8478 = vpack.c.b16 %v7785, %v7778
    %v8479 = vpack.c.b16 %v7786, %v7779
    %v8480 = vpack.c.b16 %v7794, %v7787
    %v8481 = vpack.c.b16 %v7795, %v7788
    %v8482 = vpack.c.b16 %v7796, %v7789
    %v8483 = vpack.c.b16 %v7797, %v7790
    %v8484 = vpack.c.b16 %v7798, %v7791
    %v8485 = vpack.c.b16 %v7799, %v7792
    %v8486 = vpack.c.b16 %v7800, %v7793
    %v8487 = vpack.c.b16 %v7808, %v7801
    %v8488 = vpack.c.b16 %v7809, %v7802
    %v8489 = vpack.c.b16 %v7810, %v7803
    %v8490 = vpack.c.b16 %v7811, %v7804
    %v8491 = vpack.c.b16 %v7812, %v7805
    %v8492 = vpack.c.b16 %v7813, %v7806
    %v8493 = vpack.c.b16 %v7814, %v7807
    %v8494 = vpack.c.b16 %v7822, %v7815
    %v8495 = vpack.c.b16 %v7823, %v7816
    %v8496 = vpack.c.b16 %v7824, %v7817
    %v8497 = vpack.c.b16 %v7825, %v7818
    %v8498 = vpack.c.b16 %v7826, %v7819
    %v8499 = vpack.c.b16 %v7827, %v7820
    %v8500 = vpack.c.b16 %v7828, %v7821
    %v8501 = vpack.c.b16 %v7836, %v7829
    %v8502 = vpack.c.b16 %v7837, %v7830
    %v8503 = vpack.c.b16 %v7838, %v7831
    %v8504 = vpack.c.b16 %v7839, %v7832
    %v8505 = vpack.c.b16 %v7840, %v7833
    %v8506 = vpack.c.b16 %v7841, %v7834
    %v8507 = vpack.c.b16 %v7842, %v7835
    %v8508 = vpack.c.b16 %v7850, %v7843
    %v8509 = vpack.c.b16 %v7851, %v7844
    %v8510 = vpack.c.b16 %v7852, %v7845
    %v8511 = vpack.c.b16 %v7853, %v7846
    %v8512 = vpack.c.b16 %v7854, %v7847
    %v8513 = vpack.c.b16 %v7855, %v7848
    %v8514 = vpack.c.b16 %v7856, %v7849
    %v8515 = vpack.c.b16 %v7864, %v7857
    %v8516 = vpack.c.b16 %v7865, %v7858
    %v8517 = vpack.c.b16 %v7866, %v7859
    %v8518 = vpack.c.b16 %v7867, %v7860
    %v8519 = vpack.c.b16 %v7868, %v7861
    %v8520 = vpack.c.b16 %v7869, %v7862
    %v8521 = vpack.c.b16 %v7870, %v7863
    %v8522 = vpack.c.b16 %v7878, %v7871
    %v8523 = vpack.c.b16 %v7879, %v7872
    %v8524 = vpack.c.b16 %v7880, %v7873
    %v8525 = vpack.c.b16 %v7881, %v7874
    %v8526 = vpack.c.b16 %v7882, %v7875
    %v8527 = vpack.c.b16 %v7883, %v7876
    %v8528 = vpack.c.b16 %v7884, %v7877
    %v8529 = vpack.c.b16 %v7892, %v7885
    %v8530 = vpack.c.b16 %v7893, %v7886
    %v8531 = vpack.c.b16 %v7894, %v7887
    %v8532 = vpack.c.b16 %v7895, %v7888
    %v8533 = vpack.c.b16 %v7896, %v7889
    %v8534 = vpack.c.b16 %v7897, %v7890
    %v8535 = vpack.c.b16 %v7898, %v7891
    %v8536 = vpack.c.b16 %v7906, %v7899
    %v8537 = vpack.c.b16 %v7907, %v7900
    %v8538 = vpack.c.b16 %v7908, %v7901
    %v8539 = vpack.c.b16 %v7909, %v7902
    %v8540 = vpack.c.b16 %v7910, %v7903
    %v8541 = vpack.c.b16 %v7911, %v7904
    %v8542 = vpack.c.b16 %v7912, %v7905
    %v8543 = vpack.c.b16 %v7920, %v7913
    %v8544 = vpack.c.b16 %v7921, %v7914
    %v8545 = vpack.c.b16 %v7922, %v7915
    %v8546 = vpack.c.b16 %v7923, %v7916
    %v8547 = vpack.c.b16 %v7924, %v7917
    %v8548 = vpack.c.b16 %v7925, %v7918
    %v8549 = vpack.c.b16 %v7926, %v7919
    %v8550 = vpack.c.b16 %v7934, %v7927
    %v8551 = vpack.c.b16 %v7935, %v7928
    %v8552 = vpack.c.b16 %v7936, %v7929
    %v8553 = vpack.c.b16 %v7937, %v7930
    %v8554 = vpack.c.b16 %v7938, %v7931
    %v8555 = vpack.c.b16 %v7939, %v7932
    %v8556 = vpack.c.b16 %v7940, %v7933
    %v8557 = vpack.c.b16 %v7948, %v7941
    %v8558 = vpack.c.b16 %v7949, %v7942
    %v8559 = vpack.c.b16 %v7950, %v7943
    %v8560 = vpack.c.b16 %v7951, %v7944
    %v8561 = vpack.c.b16 %v7952, %v7945
    %v8562 = vpack.c.b16 %v7953, %v7946
    %v8563 = vpack.c.b16 %v7954, %v7947
    %v8564 = vpack.c.b16 %v7962, %v7955
    %v8565 = vpack.c.b16 %v7963, %v7956
    %v8566 = vpack.c.b16 %v7964, %v7957
    %v8567 = vpack.c.b16 %v7965, %v7958
    %v8568 = vpack.c.b16 %v7966, %v7959
    %v8569 = vpack.c.b16 %v7967, %v7960
    %v8570 = vpack.c.b16 %v7968, %v7961
    %v8571 = vpack.c.b16 %v7976, %v7969
    %v8572 = vpack.c.b16 %v7977, %v7970
    %v8573 = vpack.c.b16 %v7978, %v7971
    %v8574 = vpack.c.b16 %v7979, %v7972
    %v8575 = vpack.c.b16 %v7980, %v7973
    %v8576 = vpack.c.b16 %v7981, %v7974
    %v8577 = vpack.c.b16 %v7982, %v7975
    %v8578 = vpack.c.b16 %v7990, %v7983
    %v8579 = vpack.c.b16 %v7991, %v7984
    %v8580 = vpack.c.b16 %v7992, %v7985
    %v8581 = vpack.c.b16 %v7993, %v7986
    %v8582 = vpack.c.b16 %v7994, %v7987
    %v8583 = vpack.c.b16 %v7995, %v7988
    %v8584 = vpack.c.b16 %v7996, %v7989
    %v8585 = vpack.c.b16 %v8004, %v7997
    %v8586 = vpack.c.b16 %v8005, %v7998
    %v8587 = vpack.c.b16 %v8006, %v7999
    %v8588 = vpack.c.b16 %v8007, %v8000
    %v8589 = vpack.c.b16 %v8008, %v8001
    %v8590 = vpack.c.b16 %v8009, %v8002
    %v8591 = vpack.c.b16 %v8010, %v8003
    %v8592 = vpack.c.b16 %v8018, %v8011
    %v8593 = vpack.c.b16 %v8019, %v8012
    %v8594 = vpack.c.b16 %v8020, %v8013
    %v8595 = vpack.c.b16 %v8021, %v8014
    %v8596 = vpack.c.b16 %v8022, %v8015
    %v8597 = vpack.c.b16 %v8023, %v8016
    %v8598 = vpack.c.b16 %v8024, %v8017
    %v8599 = vpack.c.b16 %v8032, %v8025
    %v8600 = vpack.c.b16 %v8033, %v8026
    %v8601 = vpack.c.b16 %v8034, %v8027
    %v8602 = vpack.c.b16 %v8035, %v8028
    %v8603 = vpack.c.b16 %v8036, %v8029
    %v8604 = vpack.c.b16 %v8037, %v8030
    %v8605 = vpack.c.b16 %v8038, %v8031
    %v8606 = vpack.c.b16 %v8046, %v8039
    %v8607 = vpack.c.b16 %v8047, %v8040
    %v8608 = vpack.c.b16 %v8048, %v8041
    %v8609 = vpack.c.b16 %v8049, %v8042
    %v8610 = vpack.c.b16 %v8050, %v8043
    %v8611 = vpack.c.b16 %v8051, %v8044
    %v8612 = vpack.c.b16 %v8052, %v8045
    %v8613 = vpack.c.b16 %v8060, %v8053
    %v8614 = vpack.c.b16 %v8061, %v8054
    %v8615 = vpack.c.b16 %v8062, %v8055
    %v8616 = vpack.c.b16 %v8063, %v8056
    %v8617 = vpack.c.b16 %v8064, %v8057
    %v8618 = vpack.c.b16 %v8065, %v8058
    %v8619 = vpack.c.b16 %v8066, %v8059
    %v8620 = vpack.c.b16 %v8074, %v8067
    %v8621 = vpack.c.b16 %v8075, %v8068
    %v8622 = vpack.c.b16 %v8076, %v8069
    %v8623 = vpack.c.b16 %v8077, %v8070
    %v8624 = vpack.c.b16 %v8078, %v8071
    %v8625 = vpack.c.b16 %v8079, %v8072
    %v8626 = vpack.c.b16 %v8080, %v8073
    %v8627 = vpack.c.b16 %v8088, %v8081
    %v8628 = vpack.c.b16 %v8089, %v8082
    %v8629 = vpack.c.b16 %v8090, %v8083
    %v8630 = vpack.c.b16 %v8091, %v8084
    %v8631 = vpack.c.b16 %v8092, %v8085
    %v8632 = vpack.c.b16 %v8093, %v8086
    %v8633 = vpack.c.b16 %v8094, %v8087
    %v8634 = vpack.c.b16 %v8102, %v8095
    %v8635 = vpack.c.b16 %v8103, %v8096
    %v8636 = vpack.c.b16 %v8104, %v8097
    %v8637 = vpack.c.b16 %v8105, %v8098
    %v8638 = vpack.c.b16 %v8106, %v8099
    %v8639 = vpack.c.b16 %v8107, %v8100
    %v8640 = vpack.c.b16 %v8108, %v8101
    %v8641 = vpack.c.b16 %v8116, %v8109
    %v8642 = vpack.c.b16 %v8117, %v8110
    %v8643 = vpack.c.b16 %v8118, %v8111
    %v8644 = vpack.c.b16 %v8119, %v8112
    %v8645 = vpack.c.b16 %v8120, %v8113
    %v8646 = vpack.c.b16 %v8121, %v8114
    %v8647 = vpack.c.b16 %v8122, %v8115
    %v8648 = vpack.c.b16 %v8130, %v8123
    %v8649 = vpack.c.b16 %v8131, %v8124
    %v8650 = vpack.c.b16 %v8132, %v8125
    %v8651 = vpack.c.b16 %v8133, %v8126
    %v8652 = vpack.c.b16 %v8134, %v8127
    %v8653 = vpack.c.b16 %v8135, %v8128
    %v8654 = vpack.c.b16 %v8136, %v8129
    %v8655 = vpack.c.b16 %v8144, %v8137
    %v8656 = vpack.c.b16 %v8145, %v8138
    %v8657 = vpack.c.b16 %v8146, %v8139
    %v8658 = vpack.c.b16 %v8147, %v8140
    %v8659 = vpack.c.b16 %v8148, %v8141
    %v8660 = vpack.c.b16 %v8149, %v8142
    %v8661 = vpack.c.b16 %v8150, %v8143
    %v8662 = vpack.c.b16 %v8158, %v8151
    %v8663 = vpack.c.b16 %v8159, %v8152
    %v8664 = vpack.c.b16 %v8160, %v8153
    %v8665 = vpack.c.b16 %v8161, %v8154
    %v8666 = vpack.c.b16 %v8162, %v8155
    %v8667 = vpack.c.b16 %v8163, %v8156
    %v8668 = vpack.c.b16 %v8164, %v8157
    %v8669 = vpack.c.b16 %v8172, %v8165
    %v8670 = vpack.c.b16 %v8173, %v8166
    %v8671 = vpack.c.b16 %v8174, %v8167
    %v8672 = vpack.c.b16 %v8175, %v8168
    %v8673 = vpack.c.b16 %v8176, %v8169
    %v8674 = vpack.c.b16 %v8177, %v8170
    %v8675 = vpack.c.b16 %v8178, %v8171
    %v8676 = vpack.c.b16 %v8186, %v8179
    %v8677 = vpack.c.b16 %v8187, %v8180
    %v8678 = vpack.c.b16 %v8188, %v8181
    %v8679 = vpack.c.b16 %v8189, %v8182
    %v8680 = vpack.c.b16 %v8190, %v8183
    %v8681 = vpack.c.b16 %v8191, %v8184
    %v8682 = vpack.c.b16 %v8192, %v8185
    %v8683 = vpack.c.b16 %v8200, %v8193
    %v8684 = vpack.c.b16 %v8201, %v8194
    %v8685 = vpack.c.b16 %v8202, %v8195
    %v8686 = vpack.c.b16 %v8203, %v8196
    %v8687 = vpack.c.b16 %v8204, %v8197
    %v8688 = vpack.c.b16 %v8205, %v8198
    %v8689 = vpack.c.b16 %v8206, %v8199
    %v9167 = vsel %vm4974, %v6120, 0
    %v9170 = vsel %vm4978, %v8683, 0
    %v9173 = vsel %vm4978, %v8684, 0
    %v9176 = vsel %vm4978, %v8685, 0
    %v9179 = vsel %vm4978, %v8686, 0
    %v9182 = vsel %vm4978, %v8687, 0
    %v9185 = vsel %vm4978, %v8688, 0
    %v9188 = vsel %vm4978, %v8689, 0
    %9190 = vmatpush.bf16.msra.mxu0 %v8256
    %9191 = vmatpush.bf16.msra.mxu0 %v8249
    %9192 = vmatpush.bf16.msra.mxu0 %v8242
    %9193 = vmatpush.bf16.msra.mxu0 %v8235
    %9194 = vmatpush.bf16.msra.mxu0 %v8228
    %9195 = vmatpush.bf16.msra.mxu0 %v8221
    %9196 = vmatpush.bf16.msra.mxu0 %v8214
    %9197 = vmatpush.bf16.msra.mxu0 %v8207
    %9198 = vmatmul.bf16.gmra.mxu0 %v6112
    %v9199 = vpop.f32.mrf.mxu0
    %v9200 = vadd.f32 %v6675, %v9199
    %v9201 = vpop.f32.mrf.mxu0
    %9202 = vdwg.mxu0
    %9203 = vmatpush.bf16.msra.mxu0 %v8312
    %9204 = vmatpush.bf16.msra.mxu0 %v8305
    %9205 = vmatpush.bf16.msra.mxu0 %v8298
    %9206 = vmatpush.bf16.msra.mxu0 %v8291
    %9207 = vmatpush.bf16.msra.mxu0 %v8284
    %9208 = vmatpush.bf16.msra.mxu0 %v8277
    %9209 = vmatpush.bf16.msra.mxu0 %v8270
    %9210 = vmatpush.bf16.msra.mxu0 %v8263
    %9211 = vmatmul.bf16.gmra.mxu0 %v6113
    %v9212 = vpop.f32.mrf.mxu0
    %v9213 = vadd.f32 %v9200, %v9212
    %v9214 = vpop.f32.mrf.mxu0
    %9215 = vdwg.mxu0
    %9216 = vmatpush.bf16.msra.mxu0 %v8368
    %9217 = vmatpush.bf16.msra.mxu0 %v8361
    %9218 = vmatpush.bf16.msra.mxu0 %v8354
    %9219 = vmatpush.bf16.msra.mxu0 %v8347
    %9220 = vmatpush.bf16.msra.mxu0 %v8340
    %9221 = vmatpush.bf16.msra.mxu0 %v8333
    %9222 = vmatpush.bf16.msra.mxu0 %v8326
    %9223 = vmatpush.bf16.msra.mxu0 %v8319
    %9224 = vmatmul.bf16.gmra.mxu0 %v6114
    %v9225 = vpop.f32.mrf.mxu0
    %v9226 = vadd.f32 %v9213, %v9225
    %v9227 = vpop.f32.mrf.mxu0
    %9228 = vdwg.mxu0
    %9229 = vmatpush.bf16.msra.mxu0 %v8424
    %9230 = vmatpush.bf16.msra.mxu0 %v8417
    %9231 = vmatpush.bf16.msra.mxu0 %v8410
    %9232 = vmatpush.bf16.msra.mxu0 %v8403
    %9233 = vmatpush.bf16.msra.mxu0 %v8396
    %9234 = vmatpush.bf16.msra.mxu0 %v8389
    %9235 = vmatpush.bf16.msra.mxu0 %v8382
    %9236 = vmatpush.bf16.msra.mxu0 %v8375
    %9237 = vmatmul.bf16.gmra.mxu0 %v6115
    %v9238 = vpop.f32.mrf.mxu0
    %v9239 = vadd.f32 %v9226, %v9238
    %v9240 = vpop.f32.mrf.mxu0
    %9241 = vdwg.mxu0
    %9242 = vmatpush.bf16.msra.mxu0 %v8480
    %9243 = vmatpush.bf16.msra.mxu0 %v8473
    %9244 = vmatpush.bf16.msra.mxu0 %v8466
    %9245 = vmatpush.bf16.msra.mxu0 %v8459
    %9246 = vmatpush.bf16.msra.mxu0 %v8452
    %9247 = vmatpush.bf16.msra.mxu0 %v8445
    %9248 = vmatpush.bf16.msra.mxu0 %v8438
    %9249 = vmatpush.bf16.msra.mxu0 %v8431
    %9250 = vmatmul.bf16.gmra.mxu0 %v6116
    %v9251 = vpop.f32.mrf.mxu0
    %v9252 = vadd.f32 %v9239, %v9251
    %v9253 = vpop.f32.mrf.mxu0
    %9254 = vdwg.mxu0
    %9255 = vmatpush.bf16.msra.mxu0 %v8536
    %9256 = vmatpush.bf16.msra.mxu0 %v8529
    %9257 = vmatpush.bf16.msra.mxu0 %v8522
    %9258 = vmatpush.bf16.msra.mxu0 %v8515
    %9259 = vmatpush.bf16.msra.mxu0 %v8508
    %9260 = vmatpush.bf16.msra.mxu0 %v8501
    %9261 = vmatpush.bf16.msra.mxu0 %v8494
    %9262 = vmatpush.bf16.msra.mxu0 %v8487
    %9263 = vmatmul.bf16.gmra.mxu0 %v6117
    %v9264 = vpop.f32.mrf.mxu0
    %v9265 = vadd.f32 %v9252, %v9264
    %v9266 = vpop.f32.mrf.mxu0
    %9267 = vdwg.mxu0
    %9268 = vmatpush.bf16.msra.mxu0 %v8592
    %9269 = vmatpush.bf16.msra.mxu0 %v8585
    %9270 = vmatpush.bf16.msra.mxu0 %v8578
    %9271 = vmatpush.bf16.msra.mxu0 %v8571
    %9272 = vmatpush.bf16.msra.mxu0 %v8564
    %9273 = vmatpush.bf16.msra.mxu0 %v8557
    %9274 = vmatpush.bf16.msra.mxu0 %v8550
    %9275 = vmatpush.bf16.msra.mxu0 %v8543
    %9276 = vmatmul.bf16.gmra.mxu0 %v6118
    %v9277 = vpop.f32.mrf.mxu0
    %v9278 = vadd.f32 %v9265, %v9277
    %v9279 = vpop.f32.mrf.mxu0
    %9280 = vdwg.mxu0
    %9281 = vmatpush.bf16.msra.mxu0 %v8648
    %9282 = vmatpush.bf16.msra.mxu0 %v8641
    %9283 = vmatpush.bf16.msra.mxu0 %v8634
    %9284 = vmatpush.bf16.msra.mxu0 %v8627
    %9285 = vmatpush.bf16.msra.mxu0 %v8620
    %9286 = vmatpush.bf16.msra.mxu0 %v8613
    %9287 = vmatpush.bf16.msra.mxu0 %v8606
    %9288 = vmatpush.bf16.msra.mxu0 %v8599
    %9289 = vmatmul.bf16.gmra.mxu0 %v6119
    %v9290 = vpop.f32.mrf.mxu0
    %v9291 = vadd.f32 %v9278, %v9290
    %v9292 = vpop.f32.mrf.mxu0
    %9293 = vdwg.mxu0
    %9294 = vmatpush.bf16.msra.mxu0 0
    %9295 = vmatpush.bf16.msra.mxu0 0
    %9296 = vmatpush.bf16.msra.mxu0 0
    %9297 = vmatpush.bf16.msra.mxu0 %v9170
    %9298 = vmatpush.bf16.msra.mxu0 %v8676
    %9299 = vmatpush.bf16.msra.mxu0 %v8669
    %9300 = vmatpush.bf16.msra.mxu0 %v8662
    %9301 = vmatpush.bf16.msra.mxu0 %v8655
    %9302 = vmatmul.bf16.gmra.mxu0 %v9167
    %v9303 = vpop.f32.mrf.mxu0
    %v9304 = vadd.f32 %v9291, %v9303
    %v9305 = vpop.f32.mrf.mxu0
    %9306 = vdwg.mxu0
    %9307 = vmatpush.bf16.msra.mxu0 %v8257
    %9308 = vmatpush.bf16.msra.mxu0 %v8250
    %9309 = vmatpush.bf16.msra.mxu0 %v8243
    %9310 = vmatpush.bf16.msra.mxu0 %v8236
    %9311 = vmatpush.bf16.msra.mxu0 %v8229
    %9312 = vmatpush.bf16.msra.mxu0 %v8222
    %9313 = vmatpush.bf16.msra.mxu0 %v8215
    %9314 = vmatpush.bf16.msra.mxu0 %v8208
    %9315 = vmatmul.bf16.gmra.mxu0 %v6112
    %v9316 = vpop.f32.mrf.mxu0
    %v9317 = vadd.f32 %v6676, %v9316
    %v9318 = vpop.f32.mrf.mxu0
    %9319 = vdwg.mxu0
    %9320 = vmatpush.bf16.msra.mxu0 %v8313
    %9321 = vmatpush.bf16.msra.mxu0 %v8306
    %9322 = vmatpush.bf16.msra.mxu0 %v8299
    %9323 = vmatpush.bf16.msra.mxu0 %v8292
    %9324 = vmatpush.bf16.msra.mxu0 %v8285
    %9325 = vmatpush.bf16.msra.mxu0 %v8278
    %9326 = vmatpush.bf16.msra.mxu0 %v8271
    %9327 = vmatpush.bf16.msra.mxu0 %v8264
    %9328 = vmatmul.bf16.gmra.mxu0 %v6113
    %v9329 = vpop.f32.mrf.mxu0
    %v9330 = vadd.f32 %v9317, %v9329
    %v9331 = vpop.f32.mrf.mxu0
    %9332 = vdwg.mxu0
    %9333 = vmatpush.bf16.msra.mxu0 %v8369
    %9334 = vmatpush.bf16.msra.mxu0 %v8362
    %9335 = vmatpush.bf16.msra.mxu0 %v8355
    %9336 = vmatpush.bf16.msra.mxu0 %v8348
    %9337 = vmatpush.bf16.msra.mxu0 %v8341
    %9338 = vmatpush.bf16.msra.mxu0 %v8334
    %9339 = vmatpush.bf16.msra.mxu0 %v8327
    %9340 = vmatpush.bf16.msra.mxu0 %v8320
    %9341 = vmatmul.bf16.gmra.mxu0 %v6114
    %v9342 = vpop.f32.mrf.mxu0
    %v9343 = vadd.f32 %v9330, %v9342
    %v9344 = vpop.f32.mrf.mxu0
    %9345 = vdwg.mxu0
    %9346 = vmatpush.bf16.msra.mxu0 %v8425
    %9347 = vmatpush.bf16.msra.mxu0 %v8418
    %9348 = vmatpush.bf16.msra.mxu0 %v8411
    %9349 = vmatpush.bf16.msra.mxu0 %v8404
    %9350 = vmatpush.bf16.msra.mxu0 %v8397
    %9351 = vmatpush.bf16.msra.mxu0 %v8390
    %9352 = vmatpush.bf16.msra.mxu0 %v8383
    %9353 = vmatpush.bf16.msra.mxu0 %v8376
    %9354 = vmatmul.bf16.gmra.mxu0 %v6115
    %v9355 = vpop.f32.mrf.mxu0
    %v9356 = vadd.f32 %v9343, %v9355
    %v9357 = vpop.f32.mrf.mxu0
    %9358 = vdwg.mxu0
    %9359 = vmatpush.bf16.msra.mxu0 %v8481
    %9360 = vmatpush.bf16.msra.mxu0 %v8474
    %9361 = vmatpush.bf16.msra.mxu0 %v8467
    %9362 = vmatpush.bf16.msra.mxu0 %v8460
    %9363 = vmatpush.bf16.msra.mxu0 %v8453
    %9364 = vmatpush.bf16.msra.mxu0 %v8446
    %9365 = vmatpush.bf16.msra.mxu0 %v8439
    %9366 = vmatpush.bf16.msra.mxu0 %v8432
    %9367 = vmatmul.bf16.gmra.mxu0 %v6116
    %v9368 = vpop.f32.mrf.mxu0
    %v9369 = vadd.f32 %v9356, %v9368
    %v9370 = vpop.f32.mrf.mxu0
    %9371 = vdwg.mxu0
    %9372 = vmatpush.bf16.msra.mxu0 %v8537
    %9373 = vmatpush.bf16.msra.mxu0 %v8530
    %9374 = vmatpush.bf16.msra.mxu0 %v8523
    %9375 = vmatpush.bf16.msra.mxu0 %v8516
    %9376 = vmatpush.bf16.msra.mxu0 %v8509
    %9377 = vmatpush.bf16.msra.mxu0 %v8502
    %9378 = vmatpush.bf16.msra.mxu0 %v8495
    %9379 = vmatpush.bf16.msra.mxu0 %v8488
    %9380 = vmatmul.bf16.gmra.mxu0 %v6117
    %v9381 = vpop.f32.mrf.mxu0
    %v9382 = vadd.f32 %v9369, %v9381
    %v9383 = vpop.f32.mrf.mxu0
    %9384 = vdwg.mxu0
    %9385 = vmatpush.bf16.msra.mxu0 %v8593
    %9386 = vmatpush.bf16.msra.mxu0 %v8586
    %9387 = vmatpush.bf16.msra.mxu0 %v8579
    %9388 = vmatpush.bf16.msra.mxu0 %v8572
    %9389 = vmatpush.bf16.msra.mxu0 %v8565
    %9390 = vmatpush.bf16.msra.mxu0 %v8558
    %9391 = vmatpush.bf16.msra.mxu0 %v8551
    %9392 = vmatpush.bf16.msra.mxu0 %v8544
    %9393 = vmatmul.bf16.gmra.mxu0 %v6118
    %v9394 = vpop.f32.mrf.mxu0
    %v9395 = vadd.f32 %v9382, %v9394
    %v9396 = vpop.f32.mrf.mxu0
    %9397 = vdwg.mxu0
    %9398 = vmatpush.bf16.msra.mxu0 %v8649
    %9399 = vmatpush.bf16.msra.mxu0 %v8642
    %9400 = vmatpush.bf16.msra.mxu0 %v8635
    %9401 = vmatpush.bf16.msra.mxu0 %v8628
    %9402 = vmatpush.bf16.msra.mxu0 %v8621
    %9403 = vmatpush.bf16.msra.mxu0 %v8614
    %9404 = vmatpush.bf16.msra.mxu0 %v8607
    %9405 = vmatpush.bf16.msra.mxu0 %v8600
    %9406 = vmatmul.bf16.gmra.mxu0 %v6119
    %v9407 = vpop.f32.mrf.mxu0
    %v9408 = vadd.f32 %v9395, %v9407
    %v9409 = vpop.f32.mrf.mxu0
    %9410 = vdwg.mxu0
    %9411 = vmatpush.bf16.msra.mxu0 0
    %9412 = vmatpush.bf16.msra.mxu0 0
    %9413 = vmatpush.bf16.msra.mxu0 0
    %9414 = vmatpush.bf16.msra.mxu0 %v9173
    %9415 = vmatpush.bf16.msra.mxu0 %v8677
    %9416 = vmatpush.bf16.msra.mxu0 %v8670
    %9417 = vmatpush.bf16.msra.mxu0 %v8663
    %9418 = vmatpush.bf16.msra.mxu0 %v8656
    %9419 = vmatmul.bf16.gmra.mxu0 %v9167
    %v9420 = vpop.f32.mrf.mxu0
    %v9421 = vadd.f32 %v9408, %v9420
    %v9422 = vpop.f32.mrf.mxu0
    %9423 = vdwg.mxu0
    %9424 = vmatpush.bf16.msra.mxu0 %v8258
    %9425 = vmatpush.bf16.msra.mxu0 %v8251
    %9426 = vmatpush.bf16.msra.mxu0 %v8244
    %9427 = vmatpush.bf16.msra.mxu0 %v8237
    %9428 = vmatpush.bf16.msra.mxu0 %v8230
    %9429 = vmatpush.bf16.msra.mxu0 %v8223
    %9430 = vmatpush.bf16.msra.mxu0 %v8216
    %9431 = vmatpush.bf16.msra.mxu0 %v8209
    %9432 = vmatmul.bf16.gmra.mxu0 %v6112
    %v9433 = vpop.f32.mrf.mxu0
    %v9434 = vadd.f32 %v6677, %v9433
    %v9435 = vpop.f32.mrf.mxu0
    %9436 = vdwg.mxu0
    %9437 = vmatpush.bf16.msra.mxu0 %v8314
    %9438 = vmatpush.bf16.msra.mxu0 %v8307
    %9439 = vmatpush.bf16.msra.mxu0 %v8300
    %9440 = vmatpush.bf16.msra.mxu0 %v8293
    %9441 = vmatpush.bf16.msra.mxu0 %v8286
    %9442 = vmatpush.bf16.msra.mxu0 %v8279
    %9443 = vmatpush.bf16.msra.mxu0 %v8272
    %9444 = vmatpush.bf16.msra.mxu0 %v8265
    %9445 = vmatmul.bf16.gmra.mxu0 %v6113
    %v9446 = vpop.f32.mrf.mxu0
    %v9447 = vadd.f32 %v9434, %v9446
    %v9448 = vpop.f32.mrf.mxu0
    %9449 = vdwg.mxu0
    %9450 = vmatpush.bf16.msra.mxu0 %v8370
    %9451 = vmatpush.bf16.msra.mxu0 %v8363
    %9452 = vmatpush.bf16.msra.mxu0 %v8356
    %9453 = vmatpush.bf16.msra.mxu0 %v8349
    %9454 = vmatpush.bf16.msra.mxu0 %v8342
    %9455 = vmatpush.bf16.msra.mxu0 %v8335
    %9456 = vmatpush.bf16.msra.mxu0 %v8328
    %9457 = vmatpush.bf16.msra.mxu0 %v8321
    %9458 = vmatmul.bf16.gmra.mxu0 %v6114
    %v9459 = vpop.f32.mrf.mxu0
    %v9460 = vadd.f32 %v9447, %v9459
    %v9461 = vpop.f32.mrf.mxu0
    %9462 = vdwg.mxu0
    %9463 = vmatpush.bf16.msra.mxu0 %v8426
    %9464 = vmatpush.bf16.msra.mxu0 %v8419
    %9465 = vmatpush.bf16.msra.mxu0 %v8412
    %9466 = vmatpush.bf16.msra.mxu0 %v8405
    %9467 = vmatpush.bf16.msra.mxu0 %v8398
    %9468 = vmatpush.bf16.msra.mxu0 %v8391
    %9469 = vmatpush.bf16.msra.mxu0 %v8384
    %9470 = vmatpush.bf16.msra.mxu0 %v8377
    %9471 = vmatmul.bf16.gmra.mxu0 %v6115
    %v9472 = vpop.f32.mrf.mxu0
    %v9473 = vadd.f32 %v9460, %v9472
    %v9474 = vpop.f32.mrf.mxu0
    %9475 = vdwg.mxu0
    %9476 = vmatpush.bf16.msra.mxu0 %v8482
    %9477 = vmatpush.bf16.msra.mxu0 %v8475
    %9478 = vmatpush.bf16.msra.mxu0 %v8468
    %9479 = vmatpush.bf16.msra.mxu0 %v8461
    %9480 = vmatpush.bf16.msra.mxu0 %v8454
    %9481 = vmatpush.bf16.msra.mxu0 %v8447
    %9482 = vmatpush.bf16.msra.mxu0 %v8440
    %9483 = vmatpush.bf16.msra.mxu0 %v8433
    %9484 = vmatmul.bf16.gmra.mxu0 %v6116
    %v9485 = vpop.f32.mrf.mxu0
    %v9486 = vadd.f32 %v9473, %v9485
    %v9487 = vpop.f32.mrf.mxu0
    %9488 = vdwg.mxu0
    %9489 = vmatpush.bf16.msra.mxu0 %v8538
    %9490 = vmatpush.bf16.msra.mxu0 %v8531
    %9491 = vmatpush.bf16.msra.mxu0 %v8524
    %9492 = vmatpush.bf16.msra.mxu0 %v8517
    %9493 = vmatpush.bf16.msra.mxu0 %v8510
    %9494 = vmatpush.bf16.msra.mxu0 %v8503
    %9495 = vmatpush.bf16.msra.mxu0 %v8496
    %9496 = vmatpush.bf16.msra.mxu0 %v8489
    %9497 = vmatmul.bf16.gmra.mxu0 %v6117
    %v9498 = vpop.f32.mrf.mxu0
    %v9499 = vadd.f32 %v9486, %v9498
    %v9500 = vpop.f32.mrf.mxu0
    %9501 = vdwg.mxu0
    %9502 = vmatpush.bf16.msra.mxu0 %v8594
    %9503 = vmatpush.bf16.msra.mxu0 %v8587
    %9504 = vmatpush.bf16.msra.mxu0 %v8580
    %9505 = vmatpush.bf16.msra.mxu0 %v8573
    %9506 = vmatpush.bf16.msra.mxu0 %v8566
    %9507 = vmatpush.bf16.msra.mxu0 %v8559
    %9508 = vmatpush.bf16.msra.mxu0 %v8552
    %9509 = vmatpush.bf16.msra.mxu0 %v8545
    %9510 = vmatmul.bf16.gmra.mxu0 %v6118
    %v9511 = vpop.f32.mrf.mxu0
    %v9512 = vadd.f32 %v9499, %v9511
    %v9513 = vpop.f32.mrf.mxu0
    %9514 = vdwg.mxu0
    %9515 = vmatpush.bf16.msra.mxu0 %v8650
    %9516 = vmatpush.bf16.msra.mxu0 %v8643
    %9517 = vmatpush.bf16.msra.mxu0 %v8636
    %9518 = vmatpush.bf16.msra.mxu0 %v8629
    %9519 = vmatpush.bf16.msra.mxu0 %v8622
    %9520 = vmatpush.bf16.msra.mxu0 %v8615
    %9521 = vmatpush.bf16.msra.mxu0 %v8608
    %9522 = vmatpush.bf16.msra.mxu0 %v8601
    %9523 = vmatmul.bf16.gmra.mxu0 %v6119
    %v9524 = vpop.f32.mrf.mxu0
    %v9525 = vadd.f32 %v9512, %v9524
    %v9526 = vpop.f32.mrf.mxu0
    %9527 = vdwg.mxu0
    %9528 = vmatpush.bf16.msra.mxu0 0
    %9529 = vmatpush.bf16.msra.mxu0 0
    %9530 = vmatpush.bf16.msra.mxu0 0
    %9531 = vmatpush.bf16.msra.mxu0 %v9176
    %9532 = vmatpush.bf16.msra.mxu0 %v8678
    %9533 = vmatpush.bf16.msra.mxu0 %v8671
    %9534 = vmatpush.bf16.msra.mxu0 %v8664
    %9535 = vmatpush.bf16.msra.mxu0 %v8657
    %9536 = vmatmul.bf16.gmra.mxu0 %v9167
    %v9537 = vpop.f32.mrf.mxu0
    %v9538 = vadd.f32 %v9525, %v9537
    %v9539 = vpop.f32.mrf.mxu0
    %9540 = vdwg.mxu0
    %9541 = vmatpush.bf16.msra.mxu0 %v8259
    %9542 = vmatpush.bf16.msra.mxu0 %v8252
    %9543 = vmatpush.bf16.msra.mxu0 %v8245
    %9544 = vmatpush.bf16.msra.mxu0 %v8238
    %9545 = vmatpush.bf16.msra.mxu0 %v8231
    %9546 = vmatpush.bf16.msra.mxu0 %v8224
    %9547 = vmatpush.bf16.msra.mxu0 %v8217
    %9548 = vmatpush.bf16.msra.mxu0 %v8210
    %9549 = vmatmul.bf16.gmra.mxu0 %v6112
    %v9550 = vpop.f32.mrf.mxu0
    %v9551 = vadd.f32 %v6678, %v9550
    %v9552 = vpop.f32.mrf.mxu0
    %9553 = vdwg.mxu0
    %9554 = vmatpush.bf16.msra.mxu0 %v8315
    %9555 = vmatpush.bf16.msra.mxu0 %v8308
    %9556 = vmatpush.bf16.msra.mxu0 %v8301
    %9557 = vmatpush.bf16.msra.mxu0 %v8294
    %9558 = vmatpush.bf16.msra.mxu0 %v8287
    %9559 = vmatpush.bf16.msra.mxu0 %v8280
    %9560 = vmatpush.bf16.msra.mxu0 %v8273
    %9561 = vmatpush.bf16.msra.mxu0 %v8266
    %9562 = vmatmul.bf16.gmra.mxu0 %v6113
    %v9563 = vpop.f32.mrf.mxu0
    %v9564 = vadd.f32 %v9551, %v9563
    %v9565 = vpop.f32.mrf.mxu0
    %9566 = vdwg.mxu0
    %9567 = vmatpush.bf16.msra.mxu0 %v8371
    %9568 = vmatpush.bf16.msra.mxu0 %v8364
    %9569 = vmatpush.bf16.msra.mxu0 %v8357
    %9570 = vmatpush.bf16.msra.mxu0 %v8350
    %9571 = vmatpush.bf16.msra.mxu0 %v8343
    %9572 = vmatpush.bf16.msra.mxu0 %v8336
    %9573 = vmatpush.bf16.msra.mxu0 %v8329
    %9574 = vmatpush.bf16.msra.mxu0 %v8322
    %9575 = vmatmul.bf16.gmra.mxu0 %v6114
    %v9576 = vpop.f32.mrf.mxu0
    %v9577 = vadd.f32 %v9564, %v9576
    %v9578 = vpop.f32.mrf.mxu0
    %9579 = vdwg.mxu0
    %9580 = vmatpush.bf16.msra.mxu0 %v8427
    %9581 = vmatpush.bf16.msra.mxu0 %v8420
    %9582 = vmatpush.bf16.msra.mxu0 %v8413
    %9583 = vmatpush.bf16.msra.mxu0 %v8406
    %9584 = vmatpush.bf16.msra.mxu0 %v8399
    %9585 = vmatpush.bf16.msra.mxu0 %v8392
    %9586 = vmatpush.bf16.msra.mxu0 %v8385
    %9587 = vmatpush.bf16.msra.mxu0 %v8378
    %9588 = vmatmul.bf16.gmra.mxu0 %v6115
    %v9589 = vpop.f32.mrf.mxu0
    %v9590 = vadd.f32 %v9577, %v9589
    %v9591 = vpop.f32.mrf.mxu0
    %9592 = vdwg.mxu0
    %9593 = vmatpush.bf16.msra.mxu0 %v8483
    %9594 = vmatpush.bf16.msra.mxu0 %v8476
    %9595 = vmatpush.bf16.msra.mxu0 %v8469
    %9596 = vmatpush.bf16.msra.mxu0 %v8462
    %9597 = vmatpush.bf16.msra.mxu0 %v8455
    %9598 = vmatpush.bf16.msra.mxu0 %v8448
    %9599 = vmatpush.bf16.msra.mxu0 %v8441
    %9600 = vmatpush.bf16.msra.mxu0 %v8434
    %9601 = vmatmul.bf16.gmra.mxu0 %v6116
    %v9602 = vpop.f32.mrf.mxu0
    %v9603 = vadd.f32 %v9590, %v9602
    %v9604 = vpop.f32.mrf.mxu0
    %9605 = vdwg.mxu0
    %9606 = vmatpush.bf16.msra.mxu0 %v8539
    %9607 = vmatpush.bf16.msra.mxu0 %v8532
    %9608 = vmatpush.bf16.msra.mxu0 %v8525
    %9609 = vmatpush.bf16.msra.mxu0 %v8518
    %9610 = vmatpush.bf16.msra.mxu0 %v8511
    %9611 = vmatpush.bf16.msra.mxu0 %v8504
    %9612 = vmatpush.bf16.msra.mxu0 %v8497
    %9613 = vmatpush.bf16.msra.mxu0 %v8490
    %9614 = vmatmul.bf16.gmra.mxu0 %v6117
    %v9615 = vpop.f32.mrf.mxu0
    %v9616 = vadd.f32 %v9603, %v9615
    %v9617 = vpop.f32.mrf.mxu0
    %9618 = vdwg.mxu0
    %9619 = vmatpush.bf16.msra.mxu0 %v8595
    %9620 = vmatpush.bf16.msra.mxu0 %v8588
    %9621 = vmatpush.bf16.msra.mxu0 %v8581
    %9622 = vmatpush.bf16.msra.mxu0 %v8574
    %9623 = vmatpush.bf16.msra.mxu0 %v8567
    %9624 = vmatpush.bf16.msra.mxu0 %v8560
    %9625 = vmatpush.bf16.msra.mxu0 %v8553
    %9626 = vmatpush.bf16.msra.mxu0 %v8546
    %9627 = vmatmul.bf16.gmra.mxu0 %v6118
    %v9628 = vpop.f32.mrf.mxu0
    %v9629 = vadd.f32 %v9616, %v9628
    %v9630 = vpop.f32.mrf.mxu0
    %9631 = vdwg.mxu0
    %9632 = vmatpush.bf16.msra.mxu0 %v8651
    %9633 = vmatpush.bf16.msra.mxu0 %v8644
    %9634 = vmatpush.bf16.msra.mxu0 %v8637
    %9635 = vmatpush.bf16.msra.mxu0 %v8630
    %9636 = vmatpush.bf16.msra.mxu0 %v8623
    %9637 = vmatpush.bf16.msra.mxu0 %v8616
    %9638 = vmatpush.bf16.msra.mxu0 %v8609
    %9639 = vmatpush.bf16.msra.mxu0 %v8602
    %9640 = vmatmul.bf16.gmra.mxu0 %v6119
    %v9641 = vpop.f32.mrf.mxu0
    %v9642 = vadd.f32 %v9629, %v9641
    %v9643 = vpop.f32.mrf.mxu0
    %9644 = vdwg.mxu0
    %9645 = vmatpush.bf16.msra.mxu0 0
    %9646 = vmatpush.bf16.msra.mxu0 0
    %9647 = vmatpush.bf16.msra.mxu0 0
    %9648 = vmatpush.bf16.msra.mxu0 %v9179
    %9649 = vmatpush.bf16.msra.mxu0 %v8679
    %9650 = vmatpush.bf16.msra.mxu0 %v8672
    %9651 = vmatpush.bf16.msra.mxu0 %v8665
    %9652 = vmatpush.bf16.msra.mxu0 %v8658
    %9653 = vmatmul.bf16.gmra.mxu0 %v9167
    %v9654 = vpop.f32.mrf.mxu0
    %v9655 = vadd.f32 %v9642, %v9654
    %v9656 = vpop.f32.mrf.mxu0
    %9657 = vdwg.mxu0
    %9658 = vmatpush.bf16.msra.mxu0 %v8260
    %9659 = vmatpush.bf16.msra.mxu0 %v8253
    %9660 = vmatpush.bf16.msra.mxu0 %v8246
    %9661 = vmatpush.bf16.msra.mxu0 %v8239
    %9662 = vmatpush.bf16.msra.mxu0 %v8232
    %9663 = vmatpush.bf16.msra.mxu0 %v8225
    %9664 = vmatpush.bf16.msra.mxu0 %v8218
    %9665 = vmatpush.bf16.msra.mxu0 %v8211
    %9666 = vmatmul.bf16.gmra.mxu0 %v6112
    %v9667 = vpop.f32.mrf.mxu0
    %v9668 = vadd.f32 %v6679, %v9667
    %v9669 = vpop.f32.mrf.mxu0
    %9670 = vdwg.mxu0
    %9671 = vmatpush.bf16.msra.mxu0 %v8316
    %9672 = vmatpush.bf16.msra.mxu0 %v8309
    %9673 = vmatpush.bf16.msra.mxu0 %v8302
    %9674 = vmatpush.bf16.msra.mxu0 %v8295
    %9675 = vmatpush.bf16.msra.mxu0 %v8288
    %9676 = vmatpush.bf16.msra.mxu0 %v8281
    %9677 = vmatpush.bf16.msra.mxu0 %v8274
    %9678 = vmatpush.bf16.msra.mxu0 %v8267
    %9679 = vmatmul.bf16.gmra.mxu0 %v6113
    %v9680 = vpop.f32.mrf.mxu0
    %v9681 = vadd.f32 %v9668, %v9680
    %v9682 = vpop.f32.mrf.mxu0
    %9683 = vdwg.mxu0
    %9684 = vmatpush.bf16.msra.mxu0 %v8372
    %9685 = vmatpush.bf16.msra.mxu0 %v8365
    %9686 = vmatpush.bf16.msra.mxu0 %v8358
    %9687 = vmatpush.bf16.msra.mxu0 %v8351
    %9688 = vmatpush.bf16.msra.mxu0 %v8344
    %9689 = vmatpush.bf16.msra.mxu0 %v8337
    %9690 = vmatpush.bf16.msra.mxu0 %v8330
    %9691 = vmatpush.bf16.msra.mxu0 %v8323
    %9692 = vmatmul.bf16.gmra.mxu0 %v6114
    %v9693 = vpop.f32.mrf.mxu0
    %v9694 = vadd.f32 %v9681, %v9693
    %v9695 = vpop.f32.mrf.mxu0
    %9696 = vdwg.mxu0
    %9697 = vmatpush.bf16.msra.mxu0 %v8428
    %9698 = vmatpush.bf16.msra.mxu0 %v8421
    %9699 = vmatpush.bf16.msra.mxu0 %v8414
    %9700 = vmatpush.bf16.msra.mxu0 %v8407
    %9701 = vmatpush.bf16.msra.mxu0 %v8400
    %9702 = vmatpush.bf16.msra.mxu0 %v8393
    %9703 = vmatpush.bf16.msra.mxu0 %v8386
    %9704 = vmatpush.bf16.msra.mxu0 %v8379
    %9705 = vmatmul.bf16.gmra.mxu0 %v6115
    %v9706 = vpop.f32.mrf.mxu0
    %v9707 = vadd.f32 %v9694, %v9706
    %v9708 = vpop.f32.mrf.mxu0
    %9709 = vdwg.mxu0
    %9710 = vmatpush.bf16.msra.mxu0 %v8484
    %9711 = vmatpush.bf16.msra.mxu0 %v8477
    %9712 = vmatpush.bf16.msra.mxu0 %v8470
    %9713 = vmatpush.bf16.msra.mxu0 %v8463
    %9714 = vmatpush.bf16.msra.mxu0 %v8456
    %9715 = vmatpush.bf16.msra.mxu0 %v8449
    %9716 = vmatpush.bf16.msra.mxu0 %v8442
    %9717 = vmatpush.bf16.msra.mxu0 %v8435
    %9718 = vmatmul.bf16.gmra.mxu0 %v6116
    %v9719 = vpop.f32.mrf.mxu0
    %v9720 = vadd.f32 %v9707, %v9719
    %v9721 = vpop.f32.mrf.mxu0
    %9722 = vdwg.mxu0
    %9723 = vmatpush.bf16.msra.mxu0 %v8540
    %9724 = vmatpush.bf16.msra.mxu0 %v8533
    %9725 = vmatpush.bf16.msra.mxu0 %v8526
    %9726 = vmatpush.bf16.msra.mxu0 %v8519
    %9727 = vmatpush.bf16.msra.mxu0 %v8512
    %9728 = vmatpush.bf16.msra.mxu0 %v8505
    %9729 = vmatpush.bf16.msra.mxu0 %v8498
    %9730 = vmatpush.bf16.msra.mxu0 %v8491
    %9731 = vmatmul.bf16.gmra.mxu0 %v6117
    %v9732 = vpop.f32.mrf.mxu0
    %v9733 = vadd.f32 %v9720, %v9732
    %v9734 = vpop.f32.mrf.mxu0
    %9735 = vdwg.mxu0
    %9736 = vmatpush.bf16.msra.mxu0 %v8596
    %9737 = vmatpush.bf16.msra.mxu0 %v8589
    %9738 = vmatpush.bf16.msra.mxu0 %v8582
    %9739 = vmatpush.bf16.msra.mxu0 %v8575
    %9740 = vmatpush.bf16.msra.mxu0 %v8568
    %9741 = vmatpush.bf16.msra.mxu0 %v8561
    %9742 = vmatpush.bf16.msra.mxu0 %v8554
    %9743 = vmatpush.bf16.msra.mxu0 %v8547
    %9744 = vmatmul.bf16.gmra.mxu0 %v6118
    %v9745 = vpop.f32.mrf.mxu0
    %v9746 = vadd.f32 %v9733, %v9745
    %v9747 = vpop.f32.mrf.mxu0
    %9748 = vdwg.mxu0
    %9749 = vmatpush.bf16.msra.mxu0 %v8652
    %9750 = vmatpush.bf16.msra.mxu0 %v8645
    %9751 = vmatpush.bf16.msra.mxu0 %v8638
    %9752 = vmatpush.bf16.msra.mxu0 %v8631
    %9753 = vmatpush.bf16.msra.mxu0 %v8624
    %9754 = vmatpush.bf16.msra.mxu0 %v8617
    %9755 = vmatpush.bf16.msra.mxu0 %v8610
    %9756 = vmatpush.bf16.msra.mxu0 %v8603
    %9757 = vmatmul.bf16.gmra.mxu0 %v6119
    %v9758 = vpop.f32.mrf.mxu0
    %v9759 = vadd.f32 %v9746, %v9758
    %v9760 = vpop.f32.mrf.mxu0
    %9761 = vdwg.mxu0
    %9762 = vmatpush.bf16.msra.mxu0 0
    %9763 = vmatpush.bf16.msra.mxu0 0
    %9764 = vmatpush.bf16.msra.mxu0 0
    %9765 = vmatpush.bf16.msra.mxu0 %v9182
    %9766 = vmatpush.bf16.msra.mxu0 %v8680
    %9767 = vmatpush.bf16.msra.mxu0 %v8673
    %9768 = vmatpush.bf16.msra.mxu0 %v8666
    %9769 = vmatpush.bf16.msra.mxu0 %v8659
    %9770 = vmatmul.bf16.gmra.mxu0 %v9167
    %v9771 = vpop.f32.mrf.mxu0
    %v9772 = vadd.f32 %v9759, %v9771
    %v9773 = vpop.f32.mrf.mxu0
    %9774 = vdwg.mxu0
    %9775 = vmatpush.bf16.msra.mxu0 %v8261
    %9776 = vmatpush.bf16.msra.mxu0 %v8254
    %9777 = vmatpush.bf16.msra.mxu0 %v8247
    %9778 = vmatpush.bf16.msra.mxu0 %v8240
    %9779 = vmatpush.bf16.msra.mxu0 %v8233
    %9780 = vmatpush.bf16.msra.mxu0 %v8226
    %9781 = vmatpush.bf16.msra.mxu0 %v8219
    %9782 = vmatpush.bf16.msra.mxu0 %v8212
    %9783 = vmatmul.bf16.gmra.mxu0 %v6112
    %v9784 = vpop.f32.mrf.mxu0
    %v9785 = vadd.f32 %v6680, %v9784
    %v9786 = vpop.f32.mrf.mxu0
    %9787 = vdwg.mxu0
    %9788 = vmatpush.bf16.msra.mxu0 %v8317
    %9789 = vmatpush.bf16.msra.mxu0 %v8310
    %9790 = vmatpush.bf16.msra.mxu0 %v8303
    %9791 = vmatpush.bf16.msra.mxu0 %v8296
    %9792 = vmatpush.bf16.msra.mxu0 %v8289
    %9793 = vmatpush.bf16.msra.mxu0 %v8282
    %9794 = vmatpush.bf16.msra.mxu0 %v8275
    %9795 = vmatpush.bf16.msra.mxu0 %v8268
    %9796 = vmatmul.bf16.gmra.mxu0 %v6113
    %v9797 = vpop.f32.mrf.mxu0
    %v9798 = vadd.f32 %v9785, %v9797
    %v9799 = vpop.f32.mrf.mxu0
    %9800 = vdwg.mxu0
    %9801 = vmatpush.bf16.msra.mxu0 %v8373
    %9802 = vmatpush.bf16.msra.mxu0 %v8366
    %9803 = vmatpush.bf16.msra.mxu0 %v8359
    %9804 = vmatpush.bf16.msra.mxu0 %v8352
    %9805 = vmatpush.bf16.msra.mxu0 %v8345
    %9806 = vmatpush.bf16.msra.mxu0 %v8338
    %9807 = vmatpush.bf16.msra.mxu0 %v8331
    %9808 = vmatpush.bf16.msra.mxu0 %v8324
    %9809 = vmatmul.bf16.gmra.mxu0 %v6114
    %v9810 = vpop.f32.mrf.mxu0
    %v9811 = vadd.f32 %v9798, %v9810
    %v9812 = vpop.f32.mrf.mxu0
    %9813 = vdwg.mxu0
    %9814 = vmatpush.bf16.msra.mxu0 %v8429
    %9815 = vmatpush.bf16.msra.mxu0 %v8422
    %9816 = vmatpush.bf16.msra.mxu0 %v8415
    %9817 = vmatpush.bf16.msra.mxu0 %v8408
    %9818 = vmatpush.bf16.msra.mxu0 %v8401
    %9819 = vmatpush.bf16.msra.mxu0 %v8394
    %9820 = vmatpush.bf16.msra.mxu0 %v8387
    %9821 = vmatpush.bf16.msra.mxu0 %v8380
    %9822 = vmatmul.bf16.gmra.mxu0 %v6115
    %v9823 = vpop.f32.mrf.mxu0
    %v9824 = vadd.f32 %v9811, %v9823
    %v9825 = vpop.f32.mrf.mxu0
    %9826 = vdwg.mxu0
    %9827 = vmatpush.bf16.msra.mxu0 %v8485
    %9828 = vmatpush.bf16.msra.mxu0 %v8478
    %9829 = vmatpush.bf16.msra.mxu0 %v8471
    %9830 = vmatpush.bf16.msra.mxu0 %v8464
    %9831 = vmatpush.bf16.msra.mxu0 %v8457
    %9832 = vmatpush.bf16.msra.mxu0 %v8450
    %9833 = vmatpush.bf16.msra.mxu0 %v8443
    %9834 = vmatpush.bf16.msra.mxu0 %v8436
    %9835 = vmatmul.bf16.gmra.mxu0 %v6116
    %v9836 = vpop.f32.mrf.mxu0
    %v9837 = vadd.f32 %v9824, %v9836
    %v9838 = vpop.f32.mrf.mxu0
    %9839 = vdwg.mxu0
    %9840 = vmatpush.bf16.msra.mxu0 %v8541
    %9841 = vmatpush.bf16.msra.mxu0 %v8534
    %9842 = vmatpush.bf16.msra.mxu0 %v8527
    %9843 = vmatpush.bf16.msra.mxu0 %v8520
    %9844 = vmatpush.bf16.msra.mxu0 %v8513
    %9845 = vmatpush.bf16.msra.mxu0 %v8506
    %9846 = vmatpush.bf16.msra.mxu0 %v8499
    %9847 = vmatpush.bf16.msra.mxu0 %v8492
    %9848 = vmatmul.bf16.gmra.mxu0 %v6117
    %v9849 = vpop.f32.mrf.mxu0
    %v9850 = vadd.f32 %v9837, %v9849
    %v9851 = vpop.f32.mrf.mxu0
    %9852 = vdwg.mxu0
    %9853 = vmatpush.bf16.msra.mxu0 %v8597
    %9854 = vmatpush.bf16.msra.mxu0 %v8590
    %9855 = vmatpush.bf16.msra.mxu0 %v8583
    %9856 = vmatpush.bf16.msra.mxu0 %v8576
    %9857 = vmatpush.bf16.msra.mxu0 %v8569
    %9858 = vmatpush.bf16.msra.mxu0 %v8562
    %9859 = vmatpush.bf16.msra.mxu0 %v8555
    %9860 = vmatpush.bf16.msra.mxu0 %v8548
    %9861 = vmatmul.bf16.gmra.mxu0 %v6118
    %v9862 = vpop.f32.mrf.mxu0
    %v9863 = vadd.f32 %v9850, %v9862
    %v9864 = vpop.f32.mrf.mxu0
    %9865 = vdwg.mxu0
    %9866 = vmatpush.bf16.msra.mxu0 %v8653
    %9867 = vmatpush.bf16.msra.mxu0 %v8646
    %9868 = vmatpush.bf16.msra.mxu0 %v8639
    %9869 = vmatpush.bf16.msra.mxu0 %v8632
    %9870 = vmatpush.bf16.msra.mxu0 %v8625
    %9871 = vmatpush.bf16.msra.mxu0 %v8618
    %9872 = vmatpush.bf16.msra.mxu0 %v8611
    %9873 = vmatpush.bf16.msra.mxu0 %v8604
    %9874 = vmatmul.bf16.gmra.mxu0 %v6119
    %v9875 = vpop.f32.mrf.mxu0
    %v9876 = vadd.f32 %v9863, %v9875
    %v9877 = vpop.f32.mrf.mxu0
    %9878 = vdwg.mxu0
    %9879 = vmatpush.bf16.msra.mxu0 0
    %9880 = vmatpush.bf16.msra.mxu0 0
    %9881 = vmatpush.bf16.msra.mxu0 0
    %9882 = vmatpush.bf16.msra.mxu0 %v9185
    %9883 = vmatpush.bf16.msra.mxu0 %v8681
    %9884 = vmatpush.bf16.msra.mxu0 %v8674
    %9885 = vmatpush.bf16.msra.mxu0 %v8667
    %9886 = vmatpush.bf16.msra.mxu0 %v8660
    %9887 = vmatmul.bf16.gmra.mxu0 %v9167
    %v9888 = vpop.f32.mrf.mxu0
    %v9889 = vadd.f32 %v9876, %v9888
    %v9890 = vpop.f32.mrf.mxu0
    %9891 = vdwg.mxu0
    %9892 = vmatpush.bf16.msra.mxu0 %v8262
    %9893 = vmatpush.bf16.msra.mxu0 %v8255
    %9894 = vmatpush.bf16.msra.mxu0 %v8248
    %9895 = vmatpush.bf16.msra.mxu0 %v8241
    %9896 = vmatpush.bf16.msra.mxu0 %v8234
    %9897 = vmatpush.bf16.msra.mxu0 %v8227
    %9898 = vmatpush.bf16.msra.mxu0 %v8220
    %9899 = vmatpush.bf16.msra.mxu0 %v8213
    %9900 = vmatmul.bf16.gmra.mxu0 %v6112
    %v9901 = vpop.f32.mrf.mxu0
    %v9902 = vadd.f32 %v6681, %v9901
    %v9903 = vpop.f32.mrf.mxu0
    %9904 = vdwg.mxu0
    %9905 = vmatpush.bf16.msra.mxu0 %v8318
    %9906 = vmatpush.bf16.msra.mxu0 %v8311
    %9907 = vmatpush.bf16.msra.mxu0 %v8304
    %9908 = vmatpush.bf16.msra.mxu0 %v8297
    %9909 = vmatpush.bf16.msra.mxu0 %v8290
    %9910 = vmatpush.bf16.msra.mxu0 %v8283
    %9911 = vmatpush.bf16.msra.mxu0 %v8276
    %9912 = vmatpush.bf16.msra.mxu0 %v8269
    %9913 = vmatmul.bf16.gmra.mxu0 %v6113
    %v9914 = vpop.f32.mrf.mxu0
    %v9915 = vadd.f32 %v9902, %v9914
    %v9916 = vpop.f32.mrf.mxu0
    %9917 = vdwg.mxu0
    %9918 = vmatpush.bf16.msra.mxu0 %v8374
    %9919 = vmatpush.bf16.msra.mxu0 %v8367
    %9920 = vmatpush.bf16.msra.mxu0 %v8360
    %9921 = vmatpush.bf16.msra.mxu0 %v8353
    %9922 = vmatpush.bf16.msra.mxu0 %v8346
    %9923 = vmatpush.bf16.msra.mxu0 %v8339
    %9924 = vmatpush.bf16.msra.mxu0 %v8332
    %9925 = vmatpush.bf16.msra.mxu0 %v8325
    %9926 = vmatmul.bf16.gmra.mxu0 %v6114
    %v9927 = vpop.f32.mrf.mxu0
    %v9928 = vadd.f32 %v9915, %v9927
    %v9929 = vpop.f32.mrf.mxu0
    %9930 = vdwg.mxu0
    %9931 = vmatpush.bf16.msra.mxu0 %v8430
    %9932 = vmatpush.bf16.msra.mxu0 %v8423
    %9933 = vmatpush.bf16.msra.mxu0 %v8416
    %9934 = vmatpush.bf16.msra.mxu0 %v8409
    %9935 = vmatpush.bf16.msra.mxu0 %v8402
    %9936 = vmatpush.bf16.msra.mxu0 %v8395
    %9937 = vmatpush.bf16.msra.mxu0 %v8388
    %9938 = vmatpush.bf16.msra.mxu0 %v8381
    %9939 = vmatmul.bf16.gmra.mxu0 %v6115
    %v9940 = vpop.f32.mrf.mxu0
    %v9941 = vadd.f32 %v9928, %v9940
    %v9942 = vpop.f32.mrf.mxu0
    %9943 = vdwg.mxu0
    %9944 = vmatpush.bf16.msra.mxu0 %v8486
    %9945 = vmatpush.bf16.msra.mxu0 %v8479
    %9946 = vmatpush.bf16.msra.mxu0 %v8472
    %9947 = vmatpush.bf16.msra.mxu0 %v8465
    %9948 = vmatpush.bf16.msra.mxu0 %v8458
    %9949 = vmatpush.bf16.msra.mxu0 %v8451
    %9950 = vmatpush.bf16.msra.mxu0 %v8444
    %9951 = vmatpush.bf16.msra.mxu0 %v8437
    %9952 = vmatmul.bf16.gmra.mxu0 %v6116
    %v9953 = vpop.f32.mrf.mxu0
    %v9954 = vadd.f32 %v9941, %v9953
    %v9955 = vpop.f32.mrf.mxu0
    %9956 = vdwg.mxu0
    %9957 = vmatpush.bf16.msra.mxu0 %v8542
    %9958 = vmatpush.bf16.msra.mxu0 %v8535
    %9959 = vmatpush.bf16.msra.mxu0 %v8528
    %9960 = vmatpush.bf16.msra.mxu0 %v8521
    %9961 = vmatpush.bf16.msra.mxu0 %v8514
    %9962 = vmatpush.bf16.msra.mxu0 %v8507
    %9963 = vmatpush.bf16.msra.mxu0 %v8500
    %9964 = vmatpush.bf16.msra.mxu0 %v8493
    %9965 = vmatmul.bf16.gmra.mxu0 %v6117
    %v9966 = vpop.f32.mrf.mxu0
    %v9967 = vadd.f32 %v9954, %v9966
    %v9968 = vpop.f32.mrf.mxu0
    %9969 = vdwg.mxu0
    %9970 = vmatpush.bf16.msra.mxu0 %v8598
    %9971 = vmatpush.bf16.msra.mxu0 %v8591
    %9972 = vmatpush.bf16.msra.mxu0 %v8584
    %9973 = vmatpush.bf16.msra.mxu0 %v8577
    %9974 = vmatpush.bf16.msra.mxu0 %v8570
    %9975 = vmatpush.bf16.msra.mxu0 %v8563
    %9976 = vmatpush.bf16.msra.mxu0 %v8556
    %9977 = vmatpush.bf16.msra.mxu0 %v8549
    %9978 = vmatmul.bf16.gmra.mxu0 %v6118
    %v9979 = vpop.f32.mrf.mxu0
    %v9980 = vadd.f32 %v9967, %v9979
    %v9981 = vpop.f32.mrf.mxu0
    %9982 = vdwg.mxu0
    %9983 = vmatpush.bf16.msra.mxu0 %v8654
    %9984 = vmatpush.bf16.msra.mxu0 %v8647
    %9985 = vmatpush.bf16.msra.mxu0 %v8640
    %9986 = vmatpush.bf16.msra.mxu0 %v8633
    %9987 = vmatpush.bf16.msra.mxu0 %v8626
    %9988 = vmatpush.bf16.msra.mxu0 %v8619
    %9989 = vmatpush.bf16.msra.mxu0 %v8612
    %9990 = vmatpush.bf16.msra.mxu0 %v8605
    %9991 = vmatmul.bf16.gmra.mxu0 %v6119
    %v9992 = vpop.f32.mrf.mxu0
    %v9993 = vadd.f32 %v9980, %v9992
    %v9994 = vpop.f32.mrf.mxu0
    %9995 = vdwg.mxu0
    %9996 = vmatpush.bf16.msra.mxu0 0
    %9997 = vmatpush.bf16.msra.mxu0 0
    %9998 = vmatpush.bf16.msra.mxu0 0
    %9999 = vmatpush.bf16.msra.mxu0 %v9188
    %10000 = vmatpush.bf16.msra.mxu0 %v8682
    %10001 = vmatpush.bf16.msra.mxu0 %v8675
    %10002 = vmatpush.bf16.msra.mxu0 %v8668
    %10003 = vmatpush.bf16.msra.mxu0 %v8661
    %10004 = vmatmul.bf16.gmra.mxu0 %v9167
    %v10005 = vpop.f32.mrf.mxu0
    %v10006 = vadd.f32 %v9993, %v10005
    %v10007 = vpop.f32.mrf.mxu0
    %10008 = vdwg.mxu0
    %vm10009 = vcmp.gt.f32.partialorder %v9304, 0.0
    %vm10010 = vcmp.gt.f32.partialorder %v9421, 0.0
    %vm10011 = vcmp.gt.f32.partialorder %v9538, 0.0
    %vm10012 = vcmp.gt.f32.partialorder %v9655, 0.0
    %vm10013 = vcmp.gt.f32.partialorder %v9772, 0.0
    %vm10014 = vcmp.gt.f32.partialorder %v9889, 0.0
    %vm10015 = vcmp.gt.f32.partialorder %v10006, 0.0
    %v10016 = vmin.f32 %v9304, 0.0
    %v10017 = vmin.f32 %v9421, 0.0
    %v10018 = vmin.f32 %v9538, 0.0
    %v10019 = vmin.f32 %v9655, 0.0
    %v10020 = vmin.f32 %v9772, 0.0
    %v10021 = vmin.f32 %v9889, 0.0
    %v10022 = vmin.f32 %v10006, 0.0
    %v10023 = vmul.f32 %v10016, 1.442695
    %v10024 = vpow.pop %v10023
    %v10025 = vmul.f32 %v10017, 1.442695
    %v10026 = vpow.pop %v10025
    %v10027 = vmul.f32 %v10018, 1.442695
    %v10028 = vpow.pop %v10027
    %v10029 = vmul.f32 %v10019, 1.442695
    %v10030 = vpow.pop %v10029
    %v10031 = vmul.f32 %v10020, 1.442695
    %v10032 = vpow.pop %v10031
    %v10033 = vmul.f32 %v10021, 1.442695
    %v10034 = vpow.pop %v10033
    %v10035 = vmul.f32 %v10022, 1.442695
    %v10036 = vpow.pop %v10035
    %v10037 = vsub.f32 %v10024, 1.0
    %v10038 = vsub.f32 %v10026, 1.0
    %v10039 = vsub.f32 %v10028, 1.0
    %v10040 = vsub.f32 %v10030, 1.0
    %v10041 = vsub.f32 %v10032, 1.0
    %v10042 = vsub.f32 %v10034, 1.0
    %v10043 = vsub.f32 %v10036, 1.0
    %v10044 = vsel %vm10009, %v9304, %v10037
    %v10045 = vsel %vm10010, %v9421, %v10038
    %v10046 = vsel %vm10011, %v9538, %v10039
    %v10047 = vsel %vm10012, %v9655, %v10040
    %v10048 = vsel %vm10013, %v9772, %v10041
    %v10049 = vsel %vm10014, %v9889, %v10042
    %v10050 = vsel %vm10015, %v10006, %v10043
    %v10051 = vpack.c.bf16 %v10044, %v10044
    %v10052 = vpack.c.bf16 %v10045, %v10045
    %v10053 = vpack.c.bf16 %v10046, %v10046
    %v10054 = vpack.c.bf16 %v10047, %v10047
    %v10055 = vpack.c.bf16 %v10048, %v10048
    %v10056 = vpack.c.bf16 %v10049, %v10049
    %v10057 = vpack.c.bf16 %v10050, %v10050
    %v10058 = vld [vmem:[%s14] sm:$0xff]
    %v10059 = vld [vmem:[%s14 + $0x8] sm:$0xff]
    %v10060 = vld [vmem:[%s14 + $0x10] sm:$0xff]
    %v10061 = vld [vmem:[%s14 + $0x18] sm:$0xff]
    %v10062 = vld [vmem:[%s14 + $0x20] sm:$0xff]
    %v10063 = vld [vmem:[%s14 + $0x28] sm:$0xff]
    %v10064 = vld [vmem:[%s14 + $0x30] sm:$0xff]
    %v10065 = vld [vmem:[%s14 + $0x38] sm:$0xff]
    %v10066 = vld [vmem:[%s14 + $0x40] sm:$0xff]
    %v10067 = vld [vmem:[%s14 + $0x48] sm:$0xff]
    %v10068 = vld [vmem:[%s14 + $0x50] sm:$0xff]
    %v10069 = vld [vmem:[%s14 + $0x58] sm:$0xff]
    %v10070 = vld [vmem:[%s14 + $0x60] sm:$0xff]
    %v10071 = vld [vmem:[%s14 + $0x68] sm:$0xff]
    %v10072 = vld [vmem:[%s14 + $0x70] sm:$0xff]
    %v10073 = vld [vmem:[%s14 + $0x78] sm:$0xff]
    %v10074 = vld [vmem:[%s14 + $0x80] sm:$0xff]
    %v10075 = vld [vmem:[%s14 + $0x88] sm:$0xff]
    %v10076 = vld [vmem:[%s14 + $0x90] sm:$0xff]
    %v10077 = vld [vmem:[%s14 + $0x98] sm:$0xff]
    %v10078 = vld [vmem:[%s14 + $0xa0] sm:$0xff]
    %v10079 = vld [vmem:[%s14 + $0xa8] sm:$0xff]
    %v10080 = vld [vmem:[%s14 + $0xb0] sm:$0xff]
    %v10081 = vld [vmem:[%s14 + $0xb8] sm:$0xff]
    %v10082 = vld [vmem:[%s14 + $0xc0] sm:$0xff]
    %v10083 = vld [vmem:[%s14 + $0xc8] sm:$0xff]
    %v10084 = vld [vmem:[%s14 + $0xd0] sm:$0xff]
    %v10085 = vld [vmem:[%s14 + $0xd8] sm:$0xff]
    %v10086 = vld [vmem:[%s14 + $0xe0] sm:$0xff]
    %v10087 = vld [vmem:[%s14 + $0xe8] sm:$0xff]
    %v10088 = vld [vmem:[%s14 + $0xf0] sm:$0xff]
    %v10089 = vld [vmem:[%s14 + $0xf8] sm:$0xff]
    %v10090 = vld [vmem:[%s14 + $0x100] sm:$0xff]
    %v10091 = vld [vmem:[%s14 + $0x108] sm:$0xff]
    %v10092 = vld [vmem:[%s14 + $0x110] sm:$0xff]
    %v10093 = vld [vmem:[%s14 + $0x118] sm:$0xff]
    %v10094 = vld [vmem:[%s14 + $0x120] sm:$0xff]
    %v10095 = vld [vmem:[%s14 + $0x128] sm:$0xff]
    %v10096 = vld [vmem:[%s14 + $0x130] sm:$0xff]
    %v10097 = vld [vmem:[%s14 + $0x138] sm:$0xff]
    %v10098 = vld [vmem:[%s14 + $0x140] sm:$0xff]
    %v10099 = vld [vmem:[%s14 + $0x148] sm:$0xff]
    %v10100 = vld [vmem:[%s14 + $0x150] sm:$0xff]
    %v10101 = vld [vmem:[%s14 + $0x158] sm:$0xff]
    %v10102 = vld [vmem:[%s14 + $0x160] sm:$0xff]
    %v10103 = vld [vmem:[%s14 + $0x168] sm:$0xff]
    %v10104 = vld [vmem:[%s14 + $0x170] sm:$0xff]
    %v10105 = vld [vmem:[%s14 + $0x178] sm:$0xff]
    %v10106 = vld [vmem:[%s14 + $0x180] sm:$0xff]
    %v10107 = vld [vmem:[%s14 + $0x188] sm:$0xff]
    %v10108 = vld [vmem:[%s14 + $0x190] sm:$0xff]
    %v10109 = vld [vmem:[%s14 + $0x198] sm:$0xff]
    %v10110 = vld [vmem:[%s14 + $0x1a0] sm:$0xff]
    %v10111 = vld [vmem:[%s14 + $0x1a8] sm:$0xff]
    %v10112 = vld [vmem:[%s14 + $0x1b0] sm:$0xff]
    %v10113 = vld [vmem:[%s14 + $0x1b8] sm:$0xff]
    %v10114 = vld [vmem:[%s14 + $0x1c0] sm:$0xff]
    %v10115 = vld [vmem:[%s14 + $0x1c8] sm:$0xff]
    %v10116 = vld [vmem:[%s14 + $0x1d0] sm:$0xff]
    %v10117 = vld [vmem:[%s14 + $0x1d8] sm:$0xff]
    %v10118 = vld [vmem:[%s14 + $0x1e0] sm:$0xff]
    %v10119 = vld [vmem:[%s14 + $0x1e8] sm:$0xff]
    %v10120 = vld [vmem:[%s14 + $0x1f0] sm:$0xff]
    %v10121 = vld [vmem:[%s14 + $0x1f8] sm:$0xff]
    %v10122 = vld [vmem:[%s14 + $0x200] sm:$0xff]
    %v10123 = vld [vmem:[%s14 + $0x208] sm:$0xff]
    %v10124 = vld [vmem:[%s14 + $0x210] sm:$0xff]
    %v10125 = vld [vmem:[%s14 + $0x218] sm:$0xff]
    %v10126 = vld [vmem:[%s14 + $0x220] sm:$0xff]
    %v10127 = vld [vmem:[%s14 + $0x228] sm:$0xff]
    %v10128 = vld [vmem:[%s14 + $0x230] sm:$0xff]
    %v10129 = vld [vmem:[%s14 + $0x238] sm:$0xff]
    %v10130 = vld [vmem:[%s14 + $0x240] sm:$0xff]
    %v10131 = vld [vmem:[%s14 + $0x248] sm:$0xff]
    %v10132 = vld [vmem:[%s14 + $0x250] sm:$0xff]
    %v10133 = vld [vmem:[%s14 + $0x258] sm:$0xff]
    %v10134 = vld [vmem:[%s14 + $0x260] sm:$0xff]
    %v10135 = vld [vmem:[%s14 + $0x268] sm:$0xff]
    %v10136 = vld [vmem:[%s14 + $0x270] sm:$0xff]
    %v10137 = vld [vmem:[%s14 + $0x278] sm:$0xff]
    %v10138 = vld [vmem:[%s14 + $0x280] sm:$0xff]
    %v10139 = vld [vmem:[%s14 + $0x288] sm:$0xff]
    %v10140 = vld [vmem:[%s14 + $0x290] sm:$0xff]
    %v10141 = vld [vmem:[%s14 + $0x298] sm:$0xff]
    %v10142 = vld [vmem:[%s14 + $0x2a0] sm:$0xff]
    %v10143 = vld [vmem:[%s14 + $0x2a8] sm:$0xff]
    %v10144 = vld [vmem:[%s14 + $0x2b0] sm:$0xff]
    %v10145 = vld [vmem:[%s14 + $0x2b8] sm:$0xff]
    %v10146 = vld [vmem:[%s14 + $0x2c0] sm:$0xff]
    %v10147 = vld [vmem:[%s14 + $0x2c8] sm:$0xff]
    %v10148 = vld [vmem:[%s14 + $0x2d0] sm:$0xff]
    %v10149 = vld [vmem:[%s14 + $0x2d8] sm:$0xff]
    %v10150 = vld [vmem:[%s14 + $0x2e0] sm:$0xff]
    %v10151 = vld [vmem:[%s14 + $0x2e8] sm:$0xff]
    %v10152 = vld [vmem:[%s14 + $0x2f0] sm:$0xff]
    %v10153 = vld [vmem:[%s14 + $0x2f8] sm:$0xff]
    %v10154 = vld [vmem:[%s14 + $0x300] sm:$0xff]
    %v10155 = vld [vmem:[%s14 + $0x308] sm:$0xff]
    %v10156 = vld [vmem:[%s14 + $0x310] sm:$0xff]
    %v10157 = vld [vmem:[%s14 + $0x318] sm:$0xff]
    %v10158 = vld [vmem:[%s15] sm:$0x3]
    %v10160 = vperm.slane %v10158, 0
    %v10161 = vperm.slane %v10158, 1
    %v10264 = vunpack.c.l.b16 %v10058
    %v10265 = vunpack.c.h.b16 %v10058
    %v10266 = vunpack.c.l.b16 %v10059
    %v10267 = vunpack.c.h.b16 %v10059
    %v10268 = vunpack.c.l.b16 %v10060
    %v10269 = vunpack.c.h.b16 %v10060
    %v10270 = vunpack.c.l.b16 %v10061
    %v10271 = vunpack.c.h.b16 %v10061
    %v10272 = vunpack.c.l.b16 %v10062
    %v10273 = vunpack.c.h.b16 %v10062
    %v10274 = vunpack.c.l.b16 %v10063
    %v10275 = vunpack.c.h.b16 %v10063
    %v10276 = vunpack.c.l.b16 %v10064
    %v10277 = vunpack.c.h.b16 %v10064
    %v10278 = vunpack.c.l.b16 %v10065
    %v10279 = vunpack.c.h.b16 %v10065
    %v10280 = vunpack.c.l.b16 %v10066
    %v10281 = vunpack.c.h.b16 %v10066
    %v10282 = vunpack.c.l.b16 %v10067
    %v10283 = vunpack.c.h.b16 %v10067
    %v10284 = vunpack.c.l.b16 %v10068
    %v10285 = vunpack.c.h.b16 %v10068
    %v10286 = vunpack.c.l.b16 %v10069
    %v10287 = vunpack.c.h.b16 %v10069
    %v10288 = vunpack.c.l.b16 %v10070
    %v10289 = vunpack.c.h.b16 %v10070
    %v10290 = vunpack.c.l.b16 %v10071
    %v10291 = vunpack.c.h.b16 %v10071
    %v10292 = vunpack.c.l.b16 %v10072
    %v10293 = vunpack.c.h.b16 %v10072
    %v10294 = vunpack.c.l.b16 %v10073
    %v10295 = vunpack.c.h.b16 %v10073
    %v10296 = vunpack.c.l.b16 %v10074
    %v10297 = vunpack.c.h.b16 %v10074
    %v10298 = vunpack.c.l.b16 %v10075
    %v10299 = vunpack.c.h.b16 %v10075
    %v10300 = vunpack.c.l.b16 %v10076
    %v10301 = vunpack.c.h.b16 %v10076
    %v10302 = vunpack.c.l.b16 %v10077
    %v10303 = vunpack.c.h.b16 %v10077
    %v10304 = vunpack.c.l.b16 %v10078
    %v10305 = vunpack.c.h.b16 %v10078
    %v10306 = vunpack.c.l.b16 %v10079
    %v10307 = vunpack.c.h.b16 %v10079
    %v10308 = vunpack.c.l.b16 %v10080
    %v10309 = vunpack.c.h.b16 %v10080
    %v10310 = vunpack.c.l.b16 %v10081
    %v10311 = vunpack.c.h.b16 %v10081
    %v10312 = vunpack.c.l.b16 %v10082
    %v10313 = vunpack.c.h.b16 %v10082
    %v10314 = vunpack.c.l.b16 %v10083
    %v10315 = vunpack.c.h.b16 %v10083
    %v10316 = vunpack.c.l.b16 %v10084
    %v10317 = vunpack.c.h.b16 %v10084
    %v10318 = vunpack.c.l.b16 %v10085
    %v10319 = vunpack.c.h.b16 %v10085
    %v10320 = vunpack.c.l.b16 %v10086
    %v10321 = vunpack.c.h.b16 %v10086
    %v10322 = vunpack.c.l.b16 %v10087
    %v10323 = vunpack.c.h.b16 %v10087
    %v10324 = vunpack.c.l.b16 %v10088
    %v10325 = vunpack.c.h.b16 %v10088
    %v10326 = vunpack.c.l.b16 %v10089
    %v10327 = vunpack.c.h.b16 %v10089
    %v10328 = vunpack.c.l.b16 %v10090
    %v10329 = vunpack.c.h.b16 %v10090
    %v10330 = vunpack.c.l.b16 %v10091
    %v10331 = vunpack.c.h.b16 %v10091
    %v10332 = vunpack.c.l.b16 %v10092
    %v10333 = vunpack.c.h.b16 %v10092
    %v10334 = vunpack.c.l.b16 %v10093
    %v10335 = vunpack.c.h.b16 %v10093
    %v10336 = vunpack.c.l.b16 %v10094
    %v10337 = vunpack.c.h.b16 %v10094
    %v10338 = vunpack.c.l.b16 %v10095
    %v10339 = vunpack.c.h.b16 %v10095
    %v10340 = vunpack.c.l.b16 %v10096
    %v10341 = vunpack.c.h.b16 %v10096
    %v10342 = vunpack.c.l.b16 %v10097
    %v10343 = vunpack.c.h.b16 %v10097
    %v10344 = vunpack.c.l.b16 %v10098
    %v10345 = vunpack.c.h.b16 %v10098
    %v10346 = vunpack.c.l.b16 %v10099
    %v10347 = vunpack.c.h.b16 %v10099
    %v10348 = vunpack.c.l.b16 %v10100
    %v10349 = vunpack.c.h.b16 %v10100
    %v10350 = vunpack.c.l.b16 %v10101
    %v10351 = vunpack.c.h.b16 %v10101
    %v10352 = vunpack.c.l.b16 %v10102
    %v10353 = vunpack.c.h.b16 %v10102
    %v10354 = vunpack.c.l.b16 %v10103
    %v10355 = vunpack.c.h.b16 %v10103
    %v10356 = vunpack.c.l.b16 %v10104
    %v10357 = vunpack.c.h.b16 %v10104
    %v10358 = vunpack.c.l.b16 %v10105
    %v10359 = vunpack.c.h.b16 %v10105
    %v10360 = vunpack.c.l.b16 %v10106
    %v10361 = vunpack.c.h.b16 %v10106
    %v10362 = vunpack.c.l.b16 %v10107
    %v10363 = vunpack.c.h.b16 %v10107
    %v10364 = vunpack.c.l.b16 %v10108
    %v10365 = vunpack.c.h.b16 %v10108
    %v10366 = vunpack.c.l.b16 %v10109
    %v10367 = vunpack.c.h.b16 %v10109
    %v10368 = vunpack.c.l.b16 %v10110
    %v10369 = vunpack.c.h.b16 %v10110
    %v10370 = vunpack.c.l.b16 %v10111
    %v10371 = vunpack.c.h.b16 %v10111
    %v10372 = vunpack.c.l.b16 %v10112
    %v10373 = vunpack.c.h.b16 %v10112
    %v10374 = vunpack.c.l.b16 %v10113
    %v10375 = vunpack.c.h.b16 %v10113
    %v10376 = vunpack.c.l.b16 %v10114
    %v10377 = vunpack.c.h.b16 %v10114
    %v10378 = vunpack.c.l.b16 %v10115
    %v10379 = vunpack.c.h.b16 %v10115
    %v10380 = vunpack.c.l.b16 %v10116
    %v10381 = vunpack.c.h.b16 %v10116
    %v10382 = vunpack.c.l.b16 %v10117
    %v10383 = vunpack.c.h.b16 %v10117
    %v10384 = vunpack.c.l.b16 %v10118
    %v10385 = vunpack.c.h.b16 %v10118
    %v10386 = vunpack.c.l.b16 %v10119
    %v10387 = vunpack.c.h.b16 %v10119
    %v10388 = vunpack.c.l.b16 %v10120
    %v10389 = vunpack.c.h.b16 %v10120
    %v10390 = vunpack.c.l.b16 %v10121
    %v10391 = vunpack.c.h.b16 %v10121
    %v10392 = vunpack.c.l.b16 %v10122
    %v10393 = vunpack.c.h.b16 %v10122
    %v10394 = vunpack.c.l.b16 %v10123
    %v10395 = vunpack.c.h.b16 %v10123
    %v10396 = vunpack.c.l.b16 %v10124
    %v10397 = vunpack.c.h.b16 %v10124
    %v10398 = vunpack.c.l.b16 %v10125
    %v10399 = vunpack.c.h.b16 %v10125
    %v10400 = vunpack.c.l.b16 %v10126
    %v10401 = vunpack.c.h.b16 %v10126
    %v10402 = vunpack.c.l.b16 %v10127
    %v10403 = vunpack.c.h.b16 %v10127
    %v10404 = vunpack.c.l.b16 %v10128
    %v10405 = vunpack.c.h.b16 %v10128
    %v10406 = vunpack.c.l.b16 %v10129
    %v10407 = vunpack.c.h.b16 %v10129
    %v10408 = vunpack.c.l.b16 %v10130
    %v10409 = vunpack.c.h.b16 %v10130
    %v10410 = vunpack.c.l.b16 %v10131
    %v10411 = vunpack.c.h.b16 %v10131
    %v10412 = vunpack.c.l.b16 %v10132
    %v10413 = vunpack.c.h.b16 %v10132
    %v10414 = vunpack.c.l.b16 %v10133
    %v10415 = vunpack.c.h.b16 %v10133
    %v10416 = vunpack.c.l.b16 %v10134
    %v10417 = vunpack.c.h.b16 %v10134
    %v10418 = vunpack.c.l.b16 %v10135
    %v10419 = vunpack.c.h.b16 %v10135
    %v10420 = vunpack.c.l.b16 %v10136
    %v10421 = vunpack.c.h.b16 %v10136
    %v10422 = vunpack.c.l.b16 %v10137
    %v10423 = vunpack.c.h.b16 %v10137
    %v10424 = vunpack.c.l.b16 %v10138
    %v10425 = vunpack.c.h.b16 %v10138
    %v10426 = vunpack.c.l.b16 %v10139
    %v10427 = vunpack.c.h.b16 %v10139
    %v10428 = vunpack.c.l.b16 %v10140
    %v10429 = vunpack.c.h.b16 %v10140
    %v10430 = vunpack.c.l.b16 %v10141
    %v10431 = vunpack.c.h.b16 %v10141
    %v10432 = vunpack.c.l.b16 %v10142
    %v10433 = vunpack.c.h.b16 %v10142
    %v10434 = vunpack.c.l.b16 %v10143
    %v10435 = vunpack.c.h.b16 %v10143
    %v10436 = vunpack.c.l.b16 %v10144
    %v10437 = vunpack.c.h.b16 %v10144
    %v10438 = vunpack.c.l.b16 %v10145
    %v10439 = vunpack.c.h.b16 %v10145
    %v10440 = vunpack.c.l.b16 %v10146
    %v10441 = vunpack.c.h.b16 %v10146
    %v10442 = vunpack.c.l.b16 %v10147
    %v10443 = vunpack.c.h.b16 %v10147
    %v10444 = vunpack.c.l.b16 %v10148
    %v10445 = vunpack.c.h.b16 %v10148
    %v10446 = vunpack.c.l.b16 %v10149
    %v10447 = vunpack.c.h.b16 %v10149
    %v10448 = vunpack.c.l.b16 %v10150
    %v10449 = vunpack.c.h.b16 %v10150
    %v10450 = vunpack.c.l.b16 %v10151
    %v10451 = vunpack.c.h.b16 %v10151
    %v10452 = vunpack.c.l.b16 %v10152
    %v10453 = vunpack.c.h.b16 %v10152
    %v10454 = vunpack.c.l.b16 %v10153
    %v10455 = vunpack.c.h.b16 %v10153
    %v10456 = vunpack.c.l.b16 %v10154
    %v10457 = vunpack.c.h.b16 %v10154
    %v10458 = vunpack.c.l.b16 %v10155
    %v10459 = vunpack.c.h.b16 %v10155
    %v10460 = vunpack.c.l.b16 %v10156
    %v10461 = vunpack.c.h.b16 %v10156
    %v10462 = vunpack.c.l.b16 %v10157
    %v10463 = vunpack.c.h.b16 %v10157
    %v10464 = vpack.c.b16 %v10266, %v10264
    %v10465 = vpack.c.b16 %v10267, %v10265
    %v10466 = vpack.c.b16 %v10270, %v10268
    %v10467 = vpack.c.b16 %v10271, %v10269
    %v10468 = vpack.c.b16 %v10274, %v10272
    %v10469 = vpack.c.b16 %v10275, %v10273
    %v10470 = vpack.c.b16 %v10278, %v10276
    %v10471 = vpack.c.b16 %v10279, %v10277
    %v10472 = vpack.c.b16 %v10282, %v10280
    %v10473 = vpack.c.b16 %v10283, %v10281
    %v10474 = vpack.c.b16 %v10286, %v10284
    %v10475 = vpack.c.b16 %v10287, %v10285
    %v10476 = vpack.c.b16 %v10290, %v10288
    %v10477 = vpack.c.b16 %v10291, %v10289
    %v10478 = vpack.c.b16 %v10294, %v10292
    %v10479 = vpack.c.b16 %v10295, %v10293
    %v10480 = vpack.c.b16 %v10298, %v10296
    %v10481 = vpack.c.b16 %v10299, %v10297
    %v10482 = vpack.c.b16 %v10302, %v10300
    %v10483 = vpack.c.b16 %v10303, %v10301
    %v10484 = vpack.c.b16 %v10306, %v10304
    %v10485 = vpack.c.b16 %v10307, %v10305
    %v10486 = vpack.c.b16 %v10310, %v10308
    %v10487 = vpack.c.b16 %v10311, %v10309
    %v10488 = vpack.c.b16 %v10314, %v10312
    %v10489 = vpack.c.b16 %v10315, %v10313
    %v10490 = vpack.c.b16 %v10318, %v10316
    %v10491 = vpack.c.b16 %v10319, %v10317
    %v10492 = vpack.c.b16 %v10322, %v10320
    %v10493 = vpack.c.b16 %v10323, %v10321
    %v10494 = vpack.c.b16 %v10326, %v10324
    %v10495 = vpack.c.b16 %v10327, %v10325
    %v10496 = vpack.c.b16 %v10330, %v10328
    %v10497 = vpack.c.b16 %v10331, %v10329
    %v10498 = vpack.c.b16 %v10334, %v10332
    %v10499 = vpack.c.b16 %v10335, %v10333
    %v10500 = vpack.c.b16 %v10338, %v10336
    %v10501 = vpack.c.b16 %v10339, %v10337
    %v10502 = vpack.c.b16 %v10342, %v10340
    %v10503 = vpack.c.b16 %v10343, %v10341
    %v10504 = vpack.c.b16 %v10346, %v10344
    %v10505 = vpack.c.b16 %v10347, %v10345
    %v10506 = vpack.c.b16 %v10350, %v10348
    %v10507 = vpack.c.b16 %v10351, %v10349
    %v10508 = vpack.c.b16 %v10354, %v10352
    %v10509 = vpack.c.b16 %v10355, %v10353
    %v10510 = vpack.c.b16 %v10358, %v10356
    %v10511 = vpack.c.b16 %v10359, %v10357
    %v10512 = vpack.c.b16 %v10362, %v10360
    %v10513 = vpack.c.b16 %v10363, %v10361
    %v10514 = vpack.c.b16 %v10366, %v10364
    %v10515 = vpack.c.b16 %v10367, %v10365
    %v10516 = vpack.c.b16 %v10370, %v10368
    %v10517 = vpack.c.b16 %v10371, %v10369
    %v10518 = vpack.c.b16 %v10374, %v10372
    %v10519 = vpack.c.b16 %v10375, %v10373
    %v10520 = vpack.c.b16 %v10378, %v10376
    %v10521 = vpack.c.b16 %v10379, %v10377
    %v10522 = vpack.c.b16 %v10382, %v10380
    %v10523 = vpack.c.b16 %v10383, %v10381
    %v10524 = vpack.c.b16 %v10386, %v10384
    %v10525 = vpack.c.b16 %v10387, %v10385
    %v10526 = vpack.c.b16 %v10390, %v10388
    %v10527 = vpack.c.b16 %v10391, %v10389
    %v10528 = vpack.c.b16 %v10394, %v10392
    %v10529 = vpack.c.b16 %v10395, %v10393
    %v10530 = vpack.c.b16 %v10398, %v10396
    %v10531 = vpack.c.b16 %v10399, %v10397
    %v10532 = vpack.c.b16 %v10402, %v10400
    %v10533 = vpack.c.b16 %v10403, %v10401
    %v10534 = vpack.c.b16 %v10406, %v10404
    %v10535 = vpack.c.b16 %v10407, %v10405
    %v10536 = vpack.c.b16 %v10410, %v10408
    %v10537 = vpack.c.b16 %v10411, %v10409
    %v10538 = vpack.c.b16 %v10414, %v10412
    %v10539 = vpack.c.b16 %v10415, %v10413
    %v10540 = vpack.c.b16 %v10418, %v10416
    %v10541 = vpack.c.b16 %v10419, %v10417
    %v10542 = vpack.c.b16 %v10422, %v10420
    %v10543 = vpack.c.b16 %v10423, %v10421
    %v10544 = vpack.c.b16 %v10426, %v10424
    %v10545 = vpack.c.b16 %v10427, %v10425
    %v10546 = vpack.c.b16 %v10430, %v10428
    %v10547 = vpack.c.b16 %v10431, %v10429
    %v10548 = vpack.c.b16 %v10434, %v10432
    %v10549 = vpack.c.b16 %v10435, %v10433
    %v10550 = vpack.c.b16 %v10438, %v10436
    %v10551 = vpack.c.b16 %v10439, %v10437
    %v10552 = vpack.c.b16 %v10442, %v10440
    %v10553 = vpack.c.b16 %v10443, %v10441
    %v10554 = vpack.c.b16 %v10446, %v10444
    %v10555 = vpack.c.b16 %v10447, %v10445
    %v10556 = vpack.c.b16 %v10450, %v10448
    %v10557 = vpack.c.b16 %v10451, %v10449
    %v10558 = vpack.c.b16 %v10454, %v10452
    %v10559 = vpack.c.b16 %v10455, %v10453
    %v10560 = vpack.c.b16 %v10458, %v10456
    %v10561 = vpack.c.b16 %v10459, %v10457
    %v10562 = vpack.c.b16 %v10462, %v10460
    %v10563 = vpack.c.b16 %v10463, %v10461
    %v10665 = vsel %vm3533, %v10057, 0
    %10667 = vmatpush.bf16.msra.mxu0 %v10478
    %10668 = vmatpush.bf16.msra.mxu0 %v10476
    %10669 = vmatpush.bf16.msra.mxu0 %v10474
    %10670 = vmatpush.bf16.msra.mxu0 %v10472
    %10671 = vmatpush.bf16.msra.mxu0 %v10470
    %10672 = vmatpush.bf16.msra.mxu0 %v10468
    %10673 = vmatpush.bf16.msra.mxu0 %v10466
    %10674 = vmatpush.bf16.msra.mxu0 %v10464
    %10675 = vmatmul.bf16.gmra.mxu0 %v10051
    %v10676 = vpop.f32.mrf.mxu0
    %v10677 = vadd.f32 %v10160, %v10676
    %v10678 = vpop.f32.mrf.mxu0
    %10679 = vdwg.mxu0
    %10680 = vmatpush.bf16.msra.mxu0 %v10494
    %10681 = vmatpush.bf16.msra.mxu0 %v10492
    %10682 = vmatpush.bf16.msra.mxu0 %v10490
    %10683 = vmatpush.bf16.msra.mxu0 %v10488
    %10684 = vmatpush.bf16.msra.mxu0 %v10486
    %10685 = vmatpush.bf16.msra.mxu0 %v10484
    %10686 = vmatpush.bf16.msra.mxu0 %v10482
    %10687 = vmatpush.bf16.msra.mxu0 %v10480
    %10688 = vmatmul.bf16.gmra.mxu0 %v10052
    %v10689 = vpop.f32.mrf.mxu0
    %v10690 = vadd.f32 %v10677, %v10689
    %v10691 = vpop.f32.mrf.mxu0
    %10692 = vdwg.mxu0
    %10693 = vmatpush.bf16.msra.mxu0 %v10510
    %10694 = vmatpush.bf16.msra.mxu0 %v10508
    %10695 = vmatpush.bf16.msra.mxu0 %v10506
    %10696 = vmatpush.bf16.msra.mxu0 %v10504
    %10697 = vmatpush.bf16.msra.mxu0 %v10502
    %10698 = vmatpush.bf16.msra.mxu0 %v10500
    %10699 = vmatpush.bf16.msra.mxu0 %v10498
    %10700 = vmatpush.bf16.msra.mxu0 %v10496
    %10701 = vmatmul.bf16.gmra.mxu0 %v10053
    %v10702 = vpop.f32.mrf.mxu0
    %v10703 = vadd.f32 %v10690, %v10702
    %v10704 = vpop.f32.mrf.mxu0
    %10705 = vdwg.mxu0
    %10706 = vmatpush.bf16.msra.mxu0 %v10526
    %10707 = vmatpush.bf16.msra.mxu0 %v10524
    %10708 = vmatpush.bf16.msra.mxu0 %v10522
    %10709 = vmatpush.bf16.msra.mxu0 %v10520
    %10710 = vmatpush.bf16.msra.mxu0 %v10518
    %10711 = vmatpush.bf16.msra.mxu0 %v10516
    %10712 = vmatpush.bf16.msra.mxu0 %v10514
    %10713 = vmatpush.bf16.msra.mxu0 %v10512
    %10714 = vmatmul.bf16.gmra.mxu0 %v10054
    %v10715 = vpop.f32.mrf.mxu0
    %v10716 = vadd.f32 %v10703, %v10715
    %v10717 = vpop.f32.mrf.mxu0
    %10718 = vdwg.mxu0
    %10719 = vmatpush.bf16.msra.mxu0 %v10542
    %10720 = vmatpush.bf16.msra.mxu0 %v10540
    %10721 = vmatpush.bf16.msra.mxu0 %v10538
    %10722 = vmatpush.bf16.msra.mxu0 %v10536
    %10723 = vmatpush.bf16.msra.mxu0 %v10534
    %10724 = vmatpush.bf16.msra.mxu0 %v10532
    %10725 = vmatpush.bf16.msra.mxu0 %v10530
    %10726 = vmatpush.bf16.msra.mxu0 %v10528
    %10727 = vmatmul.bf16.gmra.mxu0 %v10055
    %v10728 = vpop.f32.mrf.mxu0
    %v10729 = vadd.f32 %v10716, %v10728
    %v10730 = vpop.f32.mrf.mxu0
    %10731 = vdwg.mxu0
    %10732 = vmatpush.bf16.msra.mxu0 %v10558
    %10733 = vmatpush.bf16.msra.mxu0 %v10556
    %10734 = vmatpush.bf16.msra.mxu0 %v10554
    %10735 = vmatpush.bf16.msra.mxu0 %v10552
    %10736 = vmatpush.bf16.msra.mxu0 %v10550
    %10737 = vmatpush.bf16.msra.mxu0 %v10548
    %10738 = vmatpush.bf16.msra.mxu0 %v10546
    %10739 = vmatpush.bf16.msra.mxu0 %v10544
    %10740 = vmatmul.bf16.gmra.mxu0 %v10056
    %v10741 = vpop.f32.mrf.mxu0
    %v10742 = vadd.f32 %v10729, %v10741
    %v10743 = vpop.f32.mrf.mxu0
    %10744 = vdwg.mxu0
    %10745 = vmatpush.bf16.msra.mxu0 0
    %10746 = vmatpush.bf16.msra.mxu0 0
    %10747 = vmatpush.bf16.msra.mxu0 0
    %10748 = vmatpush.bf16.msra.mxu0 0
    %10749 = vmatpush.bf16.msra.mxu0 0
    %10750 = vmatpush.bf16.msra.mxu0 0
    %10751 = vmatpush.bf16.msra.mxu0 %v10562
    %10752 = vmatpush.bf16.msra.mxu0 %v10560
    %10753 = vmatmul.bf16.gmra.mxu0 %v10665
    %v10754 = vpop.f32.mrf.mxu0
    %v10755 = vadd.f32 %v10742, %v10754
    %v10756 = vpop.f32.mrf.mxu0
    %10757 = vdwg.mxu0
    %10758 = vmatpush.bf16.msra.mxu0 %v10479
    %10759 = vmatpush.bf16.msra.mxu0 %v10477
    %10760 = vmatpush.bf16.msra.mxu0 %v10475
    %10761 = vmatpush.bf16.msra.mxu0 %v10473
    %10762 = vmatpush.bf16.msra.mxu0 %v10471
    %10763 = vmatpush.bf16.msra.mxu0 %v10469
    %10764 = vmatpush.bf16.msra.mxu0 %v10467
    %10765 = vmatpush.bf16.msra.mxu0 %v10465
    %10766 = vmatmul.bf16.gmra.mxu0 %v10051
    %v10767 = vpop.f32.mrf.mxu0
    %v10768 = vadd.f32 %v10161, %v10767
    %v10769 = vpop.f32.mrf.mxu0
    %10770 = vdwg.mxu0
    %10771 = vmatpush.bf16.msra.mxu0 %v10495
    %10772 = vmatpush.bf16.msra.mxu0 %v10493
    %10773 = vmatpush.bf16.msra.mxu0 %v10491
    %10774 = vmatpush.bf16.msra.mxu0 %v10489
    %10775 = vmatpush.bf16.msra.mxu0 %v10487
    %10776 = vmatpush.bf16.msra.mxu0 %v10485
    %10777 = vmatpush.bf16.msra.mxu0 %v10483
    %10778 = vmatpush.bf16.msra.mxu0 %v10481
    %10779 = vmatmul.bf16.gmra.mxu0 %v10052
    %v10780 = vpop.f32.mrf.mxu0
    %v10781 = vadd.f32 %v10768, %v10780
    %v10782 = vpop.f32.mrf.mxu0
    %10783 = vdwg.mxu0
    %10784 = vmatpush.bf16.msra.mxu0 %v10511
    %10785 = vmatpush.bf16.msra.mxu0 %v10509
    %10786 = vmatpush.bf16.msra.mxu0 %v10507
    %10787 = vmatpush.bf16.msra.mxu0 %v10505
    %10788 = vmatpush.bf16.msra.mxu0 %v10503
    %10789 = vmatpush.bf16.msra.mxu0 %v10501
    %10790 = vmatpush.bf16.msra.mxu0 %v10499
    %10791 = vmatpush.bf16.msra.mxu0 %v10497
    %10792 = vmatmul.bf16.gmra.mxu0 %v10053
    %v10793 = vpop.f32.mrf.mxu0
    %v10794 = vadd.f32 %v10781, %v10793
    %v10795 = vpop.f32.mrf.mxu0
    %10796 = vdwg.mxu0
    %10797 = vmatpush.bf16.msra.mxu0 %v10527
    %10798 = vmatpush.bf16.msra.mxu0 %v10525
    %10799 = vmatpush.bf16.msra.mxu0 %v10523
    %10800 = vmatpush.bf16.msra.mxu0 %v10521
    %10801 = vmatpush.bf16.msra.mxu0 %v10519
    %10802 = vmatpush.bf16.msra.mxu0 %v10517
    %10803 = vmatpush.bf16.msra.mxu0 %v10515
    %10804 = vmatpush.bf16.msra.mxu0 %v10513
    %10805 = vmatmul.bf16.gmra.mxu0 %v10054
    %v10806 = vpop.f32.mrf.mxu0
    %v10807 = vadd.f32 %v10794, %v10806
    %v10808 = vpop.f32.mrf.mxu0
    %10809 = vdwg.mxu0
    %10810 = vmatpush.bf16.msra.mxu0 %v10543
    %10811 = vmatpush.bf16.msra.mxu0 %v10541
    %10812 = vmatpush.bf16.msra.mxu0 %v10539
    %10813 = vmatpush.bf16.msra.mxu0 %v10537
    %10814 = vmatpush.bf16.msra.mxu0 %v10535
    %10815 = vmatpush.bf16.msra.mxu0 %v10533
    %10816 = vmatpush.bf16.msra.mxu0 %v10531
    %10817 = vmatpush.bf16.msra.mxu0 %v10529
    %10818 = vmatmul.bf16.gmra.mxu0 %v10055
    %v10819 = vpop.f32.mrf.mxu0
    %v10820 = vadd.f32 %v10807, %v10819
    %v10821 = vpop.f32.mrf.mxu0
    %10822 = vdwg.mxu0
    %10823 = vmatpush.bf16.msra.mxu0 %v10559
    %10824 = vmatpush.bf16.msra.mxu0 %v10557
    %10825 = vmatpush.bf16.msra.mxu0 %v10555
    %10826 = vmatpush.bf16.msra.mxu0 %v10553
    %10827 = vmatpush.bf16.msra.mxu0 %v10551
    %10828 = vmatpush.bf16.msra.mxu0 %v10549
    %10829 = vmatpush.bf16.msra.mxu0 %v10547
    %10830 = vmatpush.bf16.msra.mxu0 %v10545
    %10831 = vmatmul.bf16.gmra.mxu0 %v10056
    %v10832 = vpop.f32.mrf.mxu0
    %v10833 = vadd.f32 %v10820, %v10832
    %v10834 = vpop.f32.mrf.mxu0
    %10835 = vdwg.mxu0
    %10836 = vmatpush.bf16.msra.mxu0 0
    %10837 = vmatpush.bf16.msra.mxu0 0
    %10838 = vmatpush.bf16.msra.mxu0 0
    %10839 = vmatpush.bf16.msra.mxu0 0
    %10840 = vmatpush.bf16.msra.mxu0 0
    %10841 = vmatpush.bf16.msra.mxu0 0
    %10842 = vmatpush.bf16.msra.mxu0 %v10563
    %10843 = vmatpush.bf16.msra.mxu0 %v10561
    %10844 = vmatmul.bf16.gmra.mxu0 %v10665
    %v10845 = vpop.f32.mrf.mxu0
    %v10846 = vadd.f32 %v10833, %v10845
    %v10847 = vpop.f32.mrf.mxu0
    %10848 = vdwg.mxu0
    %vm10849 = vcmask 164864
    %v10850 = vsel %vm10849, %v10755, -inf
    %10851 = vmax.xlane.f32.xlu0 %v10850
    %v10852 = vpop.xlane.xlu0 %10851
    %v10853 = vsub.f32 %v10755, %v10852
    %v10854 = vmul.f32 %v10853, 1.442695
    %v10855 = vpow.pop %v10854
    %v10856 = vsel %vm10849, %v10855, 0.0
    %10857 = vadd.xlane.f32.xlu0 %v10856
    %v10858 = vpop.xlane.xlu0 %10857
    %v10859 = vrcp.pop %v10858
    %v10860 = vmul.f32 %v10858, %v10859
    %v10861 = vsub.f32 1.0, %v10860
    %v10862 = vmul.f32 %v10859, %v10861
    %v10863 = vadd.f32 %v10859, %v10862
    %vm10864 = vweird.f32 %v10858
    %vm10865 = vweird.f32 %v10859
    %vm10866 = vmor %vm10864, %vm10865
    %v10867 = vsel %vm10866, %v10859, %v10863
    %v10868 = vand.u32 2147483647, %v10858
    %vm10869 = vcmp.eq.f32.partialorder %v10868, 8.507059e+37
    %v10870 = vand.u32 %v10858, 2147483648
    %v10871 = vor.u32 1.1754944e-38, %v10870
    %v10872 = vsel %vm10869, %v10871, %v10867
    %v10873 = vmul.f32 %v10855, %v10872
    %10874 = vst.msk [vmem:[#allocation2] sm:$0x3] %vm10849, %v10873
    %vm10875 = vcmask 337064
    %v10876 = vsel %vm10875, %v10755, -inf
    %10877 = vmax.xlane.f32.xlu0 %v10876
    %v10878 = vpop.xlane.xlu0 %10877
    %v10879 = vsub.f32 %v10755, %v10878
    %v10880 = vmul.f32 %v10879, 1.442695
    %v10881 = vpow.pop %v10880
    %10883 = vrot.lane.b32.xlu0 %v10881, 107
    %v10884 = vpop.permute.xlu0 %10883
    %v10886 = vsel %vm10849, %v10884, 0.0
    %10887 = vadd.xlane.f32.xlu0 %v10886
    %v10888 = vpop.xlane.xlu0 %10887
    %v10889 = vrcp.pop %v10888
    %v10890 = vmul.f32 %v10888, %v10889
    %v10891 = vsub.f32 1.0, %v10890
    %v10892 = vmul.f32 %v10889, %v10891
    %v10893 = vadd.f32 %v10889, %v10892
    %vm10894 = vweird.f32 %v10888
    %vm10895 = vweird.f32 %v10889
    %vm10896 = vmor %vm10894, %vm10895
    %v10897 = vsel %vm10896, %v10889, %v10893
    %v10898 = vand.u32 2147483647, %v10888
    %vm10899 = vcmp.eq.f32.partialorder %v10898, 8.507059e+37
    %v10900 = vand.u32 %v10888, 2147483648
    %v10901 = vor.u32 1.1754944e-38, %v10900
    %v10902 = vsel %vm10899, %v10901, %v10897
    %v10903 = vmul.f32 %v10881, %v10902
    %10904 = vst.msk [vmem:[#allocation2] sm:$0x3] %vm10875, %v10903
    %vm10905 = vcmask 509264
    %v10906 = vsel %vm10905, %v10755, -inf
    %10907 = vmax.xlane.f32.xlu0 %v10906
    %v10908 = vpop.xlane.xlu0 %10907
    %v10909 = vsub.f32 %v10755, %v10908
    %v10910 = vmul.f32 %v10909, 1.442695
    %v10911 = vpow.pop %v10910
    %10913 = vrot.lane.b32.xlu0 %v10911, 86
    %v10914 = vpop.permute.xlu0 %10913
    %v10916 = vsel %vm10849, %v10914, 0.0
    %10917 = vadd.xlane.f32.xlu0 %v10916
    %v10918 = vpop.xlane.xlu0 %10917
    %v10919 = vrcp.pop %v10918
    %v10920 = vmul.f32 %v10918, %v10919
    %v10921 = vsub.f32 1.0, %v10920
    %v10922 = vmul.f32 %v10919, %v10921
    %v10923 = vadd.f32 %v10919, %v10922
    %vm10924 = vweird.f32 %v10918
    %vm10925 = vweird.f32 %v10919
    %vm10926 = vmor %vm10924, %vm10925
    %v10927 = vsel %vm10926, %v10919, %v10923
    %v10928 = vand.u32 2147483647, %v10918
    %vm10929 = vcmp.eq.f32.partialorder %v10928, 8.507059e+37
    %v10930 = vand.u32 %v10918, 2147483648
    %v10931 = vor.u32 1.1754944e-38, %v10930
    %v10932 = vsel %vm10929, %v10931, %v10927
    %v10933 = vmul.f32 %v10911, %v10932
    %10934 = vst.msk [vmem:[#allocation2] sm:$0x3] %vm10905, %v10933
    %vm10935 = vcmask 681464
    %v10936 = vsel %vm10935, %v10755, -inf
    %10937 = vmax.xlane.f32.xlu0 %v10936
    %v10938 = vpop.xlane.xlu0 %10937
    %v10939 = vsub.f32 %v10755, %v10938
    %v10940 = vmul.f32 %v10939, 1.442695
    %v10941 = vpow.pop %v10940
    %10943 = vrot.lane.b32.xlu0 %v10941, 65
    %v10944 = vpop.permute.xlu0 %10943
    %v10946 = vsel %vm10849, %v10944, 0.0
    %10947 = vadd.xlane.f32.xlu0 %v10946
    %v10948 = vpop.xlane.xlu0 %10947
    %v10949 = vrcp.pop %v10948
    %v10950 = vmul.f32 %v10948, %v10949
    %v10951 = vsub.f32 1.0, %v10950
    %v10952 = vmul.f32 %v10949, %v10951
    %v10953 = vadd.f32 %v10949, %v10952
    %vm10954 = vweird.f32 %v10948
    %vm10955 = vweird.f32 %v10949
    %vm10956 = vmor %vm10954, %vm10955
    %v10957 = vsel %vm10956, %v10949, %v10953
    %v10958 = vand.u32 2147483647, %v10948
    %vm10959 = vcmp.eq.f32.partialorder %v10958, 8.507059e+37
    %v10960 = vand.u32 %v10948, 2147483648
    %v10961 = vor.u32 1.1754944e-38, %v10960
    %v10962 = vsel %vm10959, %v10961, %v10957
    %v10963 = vmul.f32 %v10941, %v10962
    %10964 = vst.msk [vmem:[#allocation2] sm:$0x3] %vm10935, %v10963
    %vm10965 = vcmask 853664
    %v10966 = vsel %vm10965, %v10755, -inf
    %10967 = vmax.xlane.f32.xlu0 %v10966
    %v10968 = vpop.xlane.xlu0 %10967
    %v10969 = vsub.f32 %v10755, %v10968
    %v10970 = vmul.f32 %v10969, 1.442695
    %v10971 = vpow.pop %v10970
    %10973 = vrot.lane.b32.xlu0 %v10971, 44
    %v10974 = vpop.permute.xlu0 %10973
    %v10976 = vsel %vm10849, %v10974, 0.0
    %10977 = vadd.xlane.f32.xlu0 %v10976
    %v10978 = vpop.xlane.xlu0 %10977
    %v10979 = vrcp.pop %v10978
    %v10980 = vmul.f32 %v10978, %v10979
    %v10981 = vsub.f32 1.0, %v10980
    %v10982 = vmul.f32 %v10979, %v10981
    %v10983 = vadd.f32 %v10979, %v10982
    %vm10984 = vweird.f32 %v10978
    %vm10985 = vweird.f32 %v10979
    %vm10986 = vmor %vm10984, %vm10985
    %v10987 = vsel %vm10986, %v10979, %v10983
    %v10988 = vand.u32 2147483647, %v10978
    %vm10989 = vcmp.eq.f32.partialorder %v10988, 8.507059e+37
    %v10990 = vand.u32 %v10978, 2147483648
    %v10991 = vor.u32 1.1754944e-38, %v10990
    %v10992 = vsel %vm10989, %v10991, %v10987
    %v10993 = vmul.f32 %v10971, %v10992
    %10994 = vst.msk [vmem:[#allocation2] sm:$0x3] %vm10965, %v10993
    %vm10995 = vcmask 1025864
    %v10996 = vsel %vm10995, %v10755, -inf
    %10997 = vmax.xlane.f32.xlu0 %v10996
    %v10998 = vpop.xlane.xlu0 %10997
    %v10999 = vsub.f32 %v10755, %v10998
    %v11000 = vmul.f32 %v10999, 1.442695
    %v11001 = vpow.pop %v11000
    %11003 = vrot.lane.b32.xlu0 %v11001, 23
    %v11004 = vpop.permute.xlu0 %11003
    %v11006 = vsel %vm10849, %v11004, 0.0
    %11007 = vadd.xlane.f32.xlu0 %v11006
    %v11008 = vpop.xlane.xlu0 %11007
    %v11009 = vrcp.pop %v11008
    %v11010 = vmul.f32 %v11008, %v11009
    %v11011 = vsub.f32 1.0, %v11010
    %v11012 = vmul.f32 %v11009, %v11011
    %v11013 = vadd.f32 %v11009, %v11012
    %vm11014 = vweird.f32 %v11008
    %vm11015 = vweird.f32 %v11009
    %vm11016 = vmor %vm11014, %vm11015
    %v11017 = vsel %vm11016, %v11009, %v11013
    %v11018 = vand.u32 2147483647, %v11008
    %vm11019 = vcmp.eq.f32.partialorder %v11018, 8.507059e+37
    %v11020 = vand.u32 %v11008, 2147483648
    %v11021 = vor.u32 1.1754944e-38, %v11020
    %v11022 = vsel %vm11019, %v11021, %v11017
    %v11023 = vmul.f32 %v11001, %v11022
    %11024 = vst.msk [vmem:[#allocation2] sm:$0x3] %vm10995, %v11023
    %vm11025 = vcmask 1042416
    %v11026 = vsel %vm11025, %v10755, -inf
    %vm11027 = vcmask 148480
    %v11028 = vsel %vm11027, %v10846, -inf
    %v11029 = vmax.f32 %v11026, %v11028
    %11030 = vmax.xlane.f32.xlu0 %v11029
    %v11031 = vpop.xlane.xlu0 %11030
    %v11032 = vsub.f32 %v10755, %v11031
    %v11033 = vsub.f32 %v10846, %v11031
    %v11034 = vmul.f32 %v11032, 1.442695
    %v11035 = vpow.pop %v11034
    %v11036 = vmul.f32 %v11033, 1.442695
    %v11037 = vpow.pop %v11036
    %11040 = vrot.lane.b32.xlu0 %v11035, 2
    %v11041 = vpop.permute.xlu0 %11040
    %11042 = vrot.lane.b32.xlu0 %v11037, 2
    %v11043 = vpop.permute.xlu0 %11042
    %vm11044 = vcmask 15360
    %v11045 = vsel %vm11044, %v11041, %v11043
    %v11047 = vsel %vm10849, %v11045, 0.0
    %11048 = vadd.xlane.f32.xlu0 %v11047
    %v11049 = vpop.xlane.xlu0 %11048
    %v11050 = vrcp.pop %v11049
    %v11051 = vmul.f32 %v11049, %v11050
    %v11052 = vsub.f32 1.0, %v11051
    %v11053 = vmul.f32 %v11050, %v11052
    %v11054 = vadd.f32 %v11050, %v11053
    %vm11055 = vweird.f32 %v11049
    %vm11056 = vweird.f32 %v11050
    %vm11057 = vmor %vm11055, %vm11056
    %v11058 = vsel %vm11057, %v11050, %v11054
    %v11059 = vand.u32 2147483647, %v11049
    %vm11060 = vcmp.eq.f32.partialorder %v11059, 8.507059e+37
    %v11061 = vand.u32 %v11049, 2147483648
    %v11062 = vor.u32 1.1754944e-38, %v11061
    %v11063 = vsel %vm11060, %v11062, %v11058
    %v11064 = vmul.f32 %v11035, %v11063
    %v11065 = vmul.f32 %v11037, %v11063
    %v11068 = vrot.slane %v11065, 6
    %vm11069 = vcmask 1041408
    %v11070 = vsel %vm11069, %v11064, %v11068
    %vm11072 = vcmask 150530
    %vm11073 = vmor %vm11072, %vm11025
    %11074 = vst.msk [vmem:[#allocation2] sm:$0xf] %vm11073, %v11070
    %vm11075 = vcmask 320664
    %v11076 = vsel %vm11075, %v10846, -inf
    %11077 = vmax.xlane.f32.xlu0 %v11076
    %v11078 = vpop.xlane.xlu0 %11077
    %v11079 = vsub.f32 %v10846, %v11078
    %v11080 = vmul.f32 %v11079, 1.442695
    %v11081 = vpow.pop %v11080
    %11083 = vrot.lane.b32.xlu0 %v11081, 109
    %v11084 = vpop.permute.xlu0 %11083
    %v11086 = vsel %vm10849, %v11084, 0.0
    %11087 = vadd.xlane.f32.xlu0 %v11086
    %v11088 = vpop.xlane.xlu0 %11087
    %v11089 = vrcp.pop %v11088
    %v11090 = vmul.f32 %v11088, %v11089
    %v11091 = vsub.f32 1.0, %v11090
    %v11092 = vmul.f32 %v11089, %v11091
    %v11093 = vadd.f32 %v11089, %v11092
    %vm11094 = vweird.f32 %v11088
    %vm11095 = vweird.f32 %v11089
    %vm11096 = vmor %vm11094, %vm11095
    %v11097 = vsel %vm11096, %v11089, %v11093
    %v11098 = vand.u32 2147483647, %v11088
    %vm11099 = vcmp.eq.f32.partialorder %v11098, 8.507059e+37
    %v11100 = vand.u32 %v11088, 2147483648
    %v11101 = vor.u32 1.1754944e-38, %v11100
    %v11102 = vsel %vm11099, %v11101, %v11097
    %v11103 = vmul.f32 %v11081, %v11102
    %11104 = vst.msk [vmem:[#allocation2 + $0x2] sm:$0x3] %vm11075, %v11103
    %vm11105 = vcmask 402752
    %v11106 = vsel %vm11105, %v10846, -inf
    %11107 = vmax.xlane.f32.xlu0 %v11106
    %v11108 = vpop.xlane.xlu0 %11107
    %v11109 = vsub.f32 %v10846, %v11108
    %v11110 = vmul.f32 %v11109, 1.442695
    %v11111 = vpow.pop %v11110
    %11113 = vrot.lane.b32.xlu0 %v11111, 88
    %v11114 = vpop.permute.xlu0 %11113
    %vm11116 = vcmask 74752
    %v11117 = vsel %vm11116, %v11114, 0.0
    %11118 = vadd.xlane.f32.xlu0 %v11117
    %v11119 = vpop.xlane.xlu0 %11118
    %v11120 = vrcp.pop %v11119
    %v11121 = vmul.f32 %v11119, %v11120
    %v11122 = vsub.f32 1.0, %v11121
    %v11123 = vmul.f32 %v11120, %v11122
    %v11124 = vadd.f32 %v11120, %v11123
    %vm11125 = vweird.f32 %v11119
    %vm11126 = vweird.f32 %v11120
    %vm11127 = vmor %vm11125, %vm11126
    %v11128 = vsel %vm11127, %v11120, %v11124
    %v11129 = vand.u32 2147483647, %v11119
    %vm11130 = vcmp.eq.f32.partialorder %v11129, 8.507059e+37
    %v11131 = vand.u32 %v11119, 2147483648
    %v11132 = vor.u32 1.1754944e-38, %v11131
    %v11133 = vsel %vm11130, %v11132, %v11128
    %v11134 = vmul.f32 %v11111, %v11133
    %11135 = vst.msk [vmem:[#allocation2 + $0x2] sm:$0x3] %vm11105, %v11134
    // Predicated region
    $region66: #{cyclic_vae_forward.1} parent=1 // pred_check
      _
    $region67: #{cyclic_vae_forward.1} parent=1 // pred_check_branch
      %11137 = sbr.rel (0) target = $region69
    $region68: #{cyclic_vae_forward.1} parent=1 // pred_region
      %11139 = vsyncadd [#allocation3], 0
      %s11141 = sshll.u32 [#allocation2], 4
      %s11142 = int_to_ptr.vmem [resolvable:$true] %s11141
      %s11143 = sshll.u32 %s16, 4
      %s11144 = int_to_ptr.hbm [resolvable:$true] %s11143
      %11146 = dma.vmem_to_hbm [thread:$0]  %s11142, 64, %s11144, [#allocation3]
    $region69: #{cyclic_vae_forward.1} parent=1 // pred_fallthru
      _
    // Predicated region
    $region70: #{cyclic_vae_forward.1} parent=1 // pred_check
      _
    $region71: #{cyclic_vae_forward.1} parent=1 // pred_check_branch
      %11148 = sbr.rel (0) target = $region73
    $region72: #{cyclic_vae_forward.1} parent=1 // pred_region
      %11150 = vsyncadd [#allocation5], 0
      %s11152 = sshll.u32 [#allocation4], 4
      %s11153 = int_to_ptr.vmem [resolvable:$true] %s11152
      %s11154 = sshll.u32 %s17, 4
      %s11155 = int_to_ptr.hbm [resolvable:$true] %s11154
      %11157 = dma.vmem_to_hbm [thread:$0]  %s11153, 32, %s11155, [#allocation5]
    $region73: #{cyclic_vae_forward.1} parent=1 // pred_fallthru
      _
    // Predicated region
    $region74: #{cyclic_vae_forward.1} parent=1 // pred_check
      _
    $region75: #{cyclic_vae_forward.1} parent=1 // pred_check_branch
      %11159 = sbr.rel (0) target = $region77
    $region76: #{cyclic_vae_forward.1} parent=1 // pred_region
      %11161 = vsyncadd [#allocation5], 0
      %s11163 = sshll.u32 [#allocation6], 4
      %s11164 = int_to_ptr.vmem [resolvable:$true] %s11163
      %s11165 = sshll.u32 %s18, 4
      %s11166 = int_to_ptr.hbm [resolvable:$true] %s11165
      %11168 = dma.vmem_to_hbm [thread:$0]  %s11164, 32, %s11166, [#allocation5]
    $region77: #{cyclic_vae_forward.1} parent=1 // pred_fallthru
      _
    // Predicated region
    $region78: #{cyclic_vae_forward.1} parent=1 // pred_check
      _
    $region79: #{cyclic_vae_forward.1} parent=1 // pred_check_branch
      %11170 = sbr.rel (0) target = $region81
    $region80: #{cyclic_vae_forward.1} parent=1 // pred_region
      %11172 = dma.done [#allocation3], 64
    $region81: #{cyclic_vae_forward.1} parent=1 // pred_fallthru
      _
    // Predicated region
    $region82: #{cyclic_vae_forward.1} parent=1 // pred_check
      _
    $region83: #{cyclic_vae_forward.1} parent=1 // pred_check_branch
      %11174 = sbr.rel (0) target = $region85
    $region84: #{cyclic_vae_forward.1} parent=1 // pred_region
      %11176 = dma.done [#allocation5], 32
    $region85: #{cyclic_vae_forward.1} parent=1 // pred_fallthru
      _
    // Predicated region
    $region86: #{cyclic_vae_forward.1} parent=1 // pred_check
      _
    $region87: #{cyclic_vae_forward.1} parent=1 // pred_check_branch
      %11178 = sbr.rel (0) target = $region89
    $region88: #{cyclic_vae_forward.1} parent=1 // pred_region
      %11180 = dma.done [#allocation5], 32
    $region89: #{cyclic_vae_forward.1} parent=1 // pred_fallthru
      _
    %11181 = vsyncpa [#allocation3], 1
    %11182 = vsyncpa [#allocation5], 1

</llo_original>
